<compile_context>
chip_gen: v5e
topology: v5e:2x2
jax: 0.10.0
libtpu: 0.0.40
codegen_flags: <defaults>
</compile_context>

<pallas_src>
import functools
import math

import jax
import jax.numpy as jnp
from jax.experimental import pallas as pl
from jax.experimental.pallas import tpu as pltpu

VMEM_SPEC = pl.BlockSpec(memory_space=pltpu.MemorySpace.VMEM)


# ----------------------------------------------------------------------------
# LSTM building blocks (PyTorch gate order i, f, g, o)
# ----------------------------------------------------------------------------
def _lstm_cell(z, c, H):
    i = jax.nn.sigmoid(z[:, 0:H])
    f = jax.nn.sigmoid(z[:, H:2 * H])
    g = jnp.tanh(z[:, 2 * H:3 * H])
    o = jax.nn.sigmoid(z[:, 3 * H:4 * H])
    c_new = f * c + i * g
    h_new = o * jnp.tanh(c_new)
    return h_new, c_new


def _bilstm_layer(xzf, xzb, whh_f, whh_b, B, T, H, emit_f, emit_b):
    """One bidirectional LSTM layer, fw/bw recurrences interleaved.

    xzf / xzb: precomputed input projections (x @ W_ih + b), time-major
    [T*B, 4H] register values, sliced per step.
    whh_f / whh_b: hoisted (weight-stationary) bf16 recurrent weights.
    emit_f(t, h) / emit_b(t, h): consume per-step hidden states.
    """
    zero = jnp.zeros((B, H), jnp.float32)
    hf, cf, hb, cb = zero, zero, zero, zero
    for t in range(T):
        tb = T - 1 - t
        zf = xzf[t * B:(t + 1) * B, :] + jnp.dot(
            hf.astype(jnp.bfloat16), whh_f, preferred_element_type=jnp.float32)
        hf, cf = _lstm_cell(zf, cf, H)
        zb = xzb[tb * B:(tb + 1) * B, :] + jnp.dot(
            hb.astype(jnp.bfloat16), whh_b, preferred_element_type=jnp.float32)
        hb, cb = _lstm_cell(zb, cb, H)
        emit_f(t, hf)
        emit_b(tb, hb)


# ----------------------------------------------------------------------------
# Fused forward kernel
# ----------------------------------------------------------------------------
def _fused_kernel(*refs, B, T, H1, H2, FCH, n1, n2):
    # ---- unpack refs (inputs, output, scratches) ---------------------------
    (x1_ref, w1_ref, b1_ref, bn1s_ref, bn1h_ref,
     w2_ref, b2_ref, bn2s_ref, bn2h_ref) = refs[0:9]
    idx = 9
    lstm1 = [refs[idx + 6 * l: idx + 6 * (l + 1)] for l in range(n1)]
    idx += 6 * n1
    lstm2 = [refs[idx + 6 * l: idx + 6 * (l + 1)] for l in range(n2)]
    idx += 6 * n2
    fc1w_ref, fc1b_ref, fc2w_ref, fc2b_ref, fc3wT_ref, fc3b_ref = refs[idx: idx + 6]
    idx += 6
    o_ref = refs[idx]
    seq1f_ref, seq1b_ref, seq2f_ref, seq2b_ref = refs[idx + 1: idx + 5]

    bf16 = jnp.bfloat16
    TB = T * B

    # ---- CNN: rows = (position, batch), lanes = channels --------------------
    # conv1 (+ bias + ReLU) as ONE im2col matmul; im2col slab built in wrapper.
    L1B = x1_ref.shape[0]                               # (L-2) * B
    y = jnp.dot(x1_ref[...].astype(bf16), w1_ref[...],
                preferred_element_type=jnp.float32) + b1_ref[...]
    y = jnp.maximum(y, 0.0)                             # [L1*B, 16]
    # MaxPool1d(2, stride=1): position shift = B rows (batch stays fixed).
    L2B = L1B - B
    y = jnp.maximum(y[:L2B, :], y[B:, :])               # [L2*B, 16]
    y = y * bn1s_ref[...] + bn1h_ref[...]               # BatchNorm1d(16), eval
    yb = y.astype(bf16)

    # conv2: three sublane-shifted tap matmuls (taps shift by k*B rows).
    L3B = L2B - 2 * B
    z = None
    for k in range(3):
        term = jnp.dot(yb[k * B: k * B + L3B, :], w2_ref[k],
                       preferred_element_type=jnp.float32)
        z = term if z is None else z + term
    z = z + b2_ref[...]                                 # [L3*B, C2]
    z = jnp.maximum(z[:TB, :], z[B:, :])                # MaxPool1d(2, stride=1)
    seq0 = jnp.maximum(z * bn2s_ref[...] + bn2h_ref[...], 0.0)   # BN + ReLU
    # seq0 is already time-major [T*B, C2] (row = t*B + b) -> no transpose.
    seq0_b = seq0.astype(bf16)

    # ---- emission helper: lane-dense per-direction stores --------------------
    def store_emit(dst_ref, relu):
        def emit(t, h):
            v = jnp.maximum(h, 0.0) if relu else h
            dst_ref[t * B:(t + 1) * B, :] = v
        return emit

    # ---- BiLSTM stack 1 ------------------------------------------------------
    for l in range(n1):
        wih_f, whh_f_ref, b_f, wih_b, whh_b_ref, b_b = lstm1[l]
        if l == 0:
            # Hoisted layer-0 input projection, kept in registers.
            xzf = jnp.dot(seq0_b, wih_f[...],
                          preferred_element_type=jnp.float32) + b_f[...]
            xzb = jnp.dot(seq0_b, wih_b[...],
                          preferred_element_type=jnp.float32) + b_b[...]
        else:
            # Split-K recombination of the per-direction sequence scratches.
            pf = seq1f_ref[...].astype(bf16)
            pb = seq1b_ref[...].astype(bf16)
            xzf = (jnp.dot(pf, wih_f[0:H1, :], preferred_element_type=jnp.float32)
                   + jnp.dot(pb, wih_f[H1:2 * H1, :], preferred_element_type=jnp.float32)
                   + b_f[...])
            xzb = (jnp.dot(pf, wih_b[0:H1, :], preferred_element_type=jnp.float32)
                   + jnp.dot(pb, wih_b[H1:2 * H1, :], preferred_element_type=jnp.float32)
                   + b_b[...])
        whh_f = whh_f_ref[...]                           # weight-stationary
        whh_b = whh_b_ref[...]
        relu_out = (l == n1 - 1)                         # F.relu after lstm1
        _bilstm_layer(xzf, xzb, whh_f, whh_b, B, T, H1,
                      store_emit(seq1f_ref, relu_out),
                      store_emit(seq1b_ref, relu_out))

    # ---- BiLSTM stack 2 (last layer feeds fc1 directly) ----------------------
    acc_box = None
    for l in range(n2):
        wih_f, whh_f_ref, b_f, wih_b, whh_b_ref, b_b = lstm2[l]
        if l == 0:
            pf, pb, split = seq1f_ref[...], seq1b_ref[...], H1
        else:
            pf, pb, split = seq2f_ref[...], seq2b_ref[...], H2
        pf, pb = pf.astype(bf16), pb.astype(bf16)
        xzf = (jnp.dot(pf, wih_f[0:split, :], preferred_element_type=jnp.float32)
               + jnp.dot(pb, wih_f[split:2 * split, :], preferred_element_type=jnp.float32)
               + b_f[...])
        xzb = (jnp.dot(pf, wih_b[0:split, :], preferred_element_type=jnp.float32)
               + jnp.dot(pb, wih_b[split:2 * split, :], preferred_element_type=jnp.float32)
               + b_b[...])
        whh_f = whh_f_ref[...]
        whh_b = whh_b_ref[...]

        if l == n2 - 1:
            # Fuse F.relu + flatten(start_dim=1) + Linear(fcn_input, 128):
            # flat[b, t*2H2 + j] -> fc1_w row t*2H2 + j, so accumulate
            # relu(h_t) @ fc1_w[row-block] per step into a REGISTER accumulator.
            acc_box = [jnp.zeros((B, FCH), jnp.float32)]

            def fc_emit(half, box=acc_box):
                def emit(t, h):
                    r0 = t * 2 * H2 + half * H2
                    blk = fc1w_ref[r0:r0 + H2, :]
                    box[0] = box[0] + jnp.dot(
                        jnp.maximum(h, 0.0).astype(bf16), blk,
                        preferred_element_type=jnp.float32)
                return emit
            emit_f, emit_b = fc_emit(0), fc_emit(1)
        else:
            emit_f = store_emit(seq2f_ref, False)
            emit_b = store_emit(seq2b_ref, False)
        _bilstm_layer(xzf, xzb, whh_f, whh_b, B, T, H2, emit_f, emit_b)

    # ---- FCN head (Dropout = identity at inference) --------------------------
    h = jnp.maximum(acc_box[0] + fc1b_ref[...], 0.0)     # Linear(fcn_in,128)+ReLU
    h = jnp.maximum(jnp.dot(h.astype(bf16), fc2w_ref[...],
                            preferred_element_type=jnp.float32)
                    + fc2b_ref[...], 0.0)                # Linear(128,32)+ReLU
    # Linear(32,1) as VPU multiply + lane reduction (fc3 weight passed transposed).
    out = jnp.sum(h * fc3wT_ref[...], axis=-1, keepdims=True) + fc3b_ref[...]
    o_ref[...] = out.astype(o_ref.dtype)


# ----------------------------------------------------------------------------
# Wrapper: layout plumbing (im2col slab, weight reshapes, bf16 casts) + launch
# ----------------------------------------------------------------------------
@jax.jit
def cnn_bilstm_forward(x, params):
    B, CIN, L = x.shape
    L1 = L - 2
    T = L - 6
    H1 = params['lstm1'][0]['whh_f'].shape[0]
    H2 = params['lstm2'][0]['whh_f'].shape[0]
    FCH = params['fc1_w'].shape[1]
    n1 = len(params['lstm1'])
    n2 = len(params['lstm2'])
    bf16 = jnp.bfloat16

    # im2col slab for conv1: rows = (position, batch), cols = (cin, tap).
    x1 = jnp.stack([x[:, :, k:k + L1] for k in range(3)], axis=-1)   # [B,CIN,L1,3]
    x1 = x1.transpose(2, 0, 1, 3).reshape(L1 * B, CIN * 3)
    # conv1 weight -> [CIN*3, 16] matching im2col column order (cin, tap).
    w1 = params['conv1_w'].transpose(1, 2, 0).reshape(CIN * 3, 16).astype(bf16)
    # conv2 weight -> [3, 16, C2]: per-tap [Cin, Cout] blocks.
    w2 = params['conv2_w'].transpose(2, 1, 0).astype(bf16)

    inputs = [x1, w1,
              params['conv1_b'], params['bn1_scale'], params['bn1_shift'],
              w2, params['conv2_b'], params['bn2_scale'], params['bn2_shift']]
    for lp in params['lstm1'] + params['lstm2']:
        inputs += [lp['wih_f'].astype(bf16), lp['whh_f'].astype(bf16), lp['b_f'],
                   lp['wih_b'].astype(bf16), lp['whh_b'].astype(bf16), lp['b_b']]
    inputs += [params['fc1_w'].astype(bf16), params['fc1_b'],
               params['fc2_w'].astype(bf16), params['fc2_b'],
               params['fc3_w'].T,            # pre-transposed (free, XLA side)
               params['fc3_b']]

    kernel = functools.partial(_fused_kernel, B=B, T=T, H1=H1, H2=H2,
                               FCH=FCH, n1=n1, n2=n2)
    return pl.pallas_call(
        kernel,
        out_shape=jax.ShapeDtypeStruct((B, 1), jnp.float32),
        in_specs=[VMEM_SPEC] * len(inputs),
        out_specs=VMEM_SPEC,
        scratch_shapes=[
            pltpu.VMEM((T * B, H1), jnp.float32),   # lstm1 fw sequence (lane offset 0)
            pltpu.VMEM((T * B, H1), jnp.float32),   # lstm1 bw sequence
            pltpu.VMEM((T * B, H2), jnp.float32),   # lstm2 inter-layer fw (n2>1 only)
            pltpu.VMEM((T * B, H2), jnp.float32),   # lstm2 inter-layer bw (n2>1 only)
        ],
    )(*inputs)


# ----------------------------------------------------------------------------
# Deterministic parameter initialization (PyTorch-style uniform bounds)
# ----------------------------------------------------------------------------
def _uniform(key, shape, bound):
    return jax.random.uniform(key, shape, jnp.float32, -bound, bound)


def init_params(key, *, in_channels=4, out_channels=8, nlayers=1,
                hidden1=64, hidden2=32, fcn_input=640):
    keys = iter(jax.random.split(key, 16))
    p = {}
    eps = 1e-5

    k1 = 1.0 / math.sqrt(in_channels * 3)
    p['conv1_w'] = _uniform(next(keys), (16, in_channels, 3), k1)   # PyTorch layout
    p['conv1_b'] = _uniform(next(keys), (1, 16), k1)
    # BN eval fold: gamma=1, beta=0, running_mean=0, running_var=1
    p['bn1_scale'] = jnp.full((1, 16), 1.0 / math.sqrt(1.0 + eps), jnp.float32)
    p['bn1_shift'] = jnp.zeros((1, 16), jnp.float32)

    k2 = 1.0 / math.sqrt(16 * 3)
    p['conv2_w'] = _uniform(next(keys), (out_channels, 16, 3), k2)
    p['conv2_b'] = _uniform(next(keys), (1, out_channels), k2)
    p['bn2_scale'] = jnp.full((1, out_channels), 1.0 / math.sqrt(1.0 + eps), jnp.float32)
    p['bn2_shift'] = jnp.zeros((1, out_channels), jnp.float32)

    def lstm_stack(k, input_size, hidden, num_layers):
        layers = []
        for layer_idx in range(num_layers):
            d = input_size if layer_idx == 0 else 2 * hidden
            bound = 1.0 / math.sqrt(hidden)
            ks = jax.random.split(k, 9)
            k = ks[0]
            layers.append({
                # stored transposed vs. PyTorch: [in, 4H] / [H, 4H], gate order i|f|g|o
                'wih_f': _uniform(ks[1], (d, 4 * hidden), bound),
                'whh_f': _uniform(ks[2], (hidden, 4 * hidden), bound),
                'b_f': _uniform(ks[3], (1, 4 * hidden), bound)
                       + _uniform(ks[4], (1, 4 * hidden), bound),
                'wih_b': _uniform(ks[5], (d, 4 * hidden), bound),
                'whh_b': _uniform(ks[6], (hidden, 4 * hidden), bound),
                'b_b': _uniform(ks[7], (1, 4 * hidden), bound)
                       + _uniform(ks[8], (1, 4 * hidden), bound),
            })
        return layers

    p['lstm1'] = lstm_stack(next(keys), out_channels, hidden1, nlayers)
    p['lstm2'] = lstm_stack(next(keys), 2 * hidden1, hidden2, nlayers)

    kf = jax.random.split(next(keys), 6)
    b1 = 1.0 / math.sqrt(fcn_input)
    p['fc1_w'] = _uniform(kf[0], (fcn_input, 128), b1)
    p['fc1_b'] = _uniform(kf[1], (1, 128), b1)
    b2 = 1.0 / math.sqrt(128)
    p['fc2_w'] = _uniform(kf[2], (128, 32), b2)
    p['fc2_b'] = _uniform(kf[3], (1, 32), b2)
    b3 = 1.0 / math.sqrt(32)
    p['fc3_w'] = _uniform(kf[4], (32, 1), b3)
    p['fc3_b'] = _uniform(kf[5], (1, 1), b3)
    return p


if __name__ == "__main__":
    # args: out_channels=8, nlayers=1, hidden_size=32, fcn_input=(L-6)*2*hidden_size
    B, CIN, L = 2, 4, 16
    OUT_CHANNELS, NLAYERS, HIDDEN_SIZE = 8, 1, 32
    T = L - 6
    FCN_INPUT = T * 2 * HIDDEN_SIZE

    key = jax.random.PRNGKey(0)
    kx, kp = jax.random.split(key)
    x = jax.random.normal(kx, (B, CIN, L), jnp.float32)
    params = init_params(kp, in_channels=CIN, out_channels=OUT_CHANNELS,
                         nlayers=NLAYERS, hidden1=64, hidden2=HIDDEN_SIZE,
                         fcn_input=FCN_INPUT)

    out = jax.block_until_ready(cnn_bilstm_forward(x, params))
    assert out.shape == (B, 1), out.shape
    assert bool(jnp.all(jnp.isfinite(out)))
    print("KERNEL_OK")
</pallas_src>

<mosaic_0001>
module attributes {stable_mosaic.version = 11 : i64} {
  func.func @_fused_kernel(%arg0: memref<28x12xf32, #tpu.memory_space<vmem>>, %arg1: memref<12x16xbf16, #tpu.memory_space<vmem>>, %arg2: memref<1x16xf32, #tpu.memory_space<vmem>>, %arg3: memref<1x16xf32, #tpu.memory_space<vmem>>, %arg4: memref<1x16xf32, #tpu.memory_space<vmem>>, %arg5: memref<3x16x8xbf16, #tpu.memory_space<vmem>>, %arg6: memref<1x8xf32, #tpu.memory_space<vmem>>, %arg7: memref<1x8xf32, #tpu.memory_space<vmem>>, %arg8: memref<1x8xf32, #tpu.memory_space<vmem>>, %arg9: memref<8x256xbf16, #tpu.memory_space<vmem>>, %arg10: memref<64x256xbf16, #tpu.memory_space<vmem>>, %arg11: memref<1x256xf32, #tpu.memory_space<vmem>>, %arg12: memref<8x256xbf16, #tpu.memory_space<vmem>>, %arg13: memref<64x256xbf16, #tpu.memory_space<vmem>>, %arg14: memref<1x256xf32, #tpu.memory_space<vmem>>, %arg15: memref<128x128xbf16, #tpu.memory_space<vmem>>, %arg16: memref<32x128xbf16, #tpu.memory_space<vmem>>, %arg17: memref<1x128xf32, #tpu.memory_space<vmem>>, %arg18: memref<128x128xbf16, #tpu.memory_space<vmem>>, %arg19: memref<32x128xbf16, #tpu.memory_space<vmem>>, %arg20: memref<1x128xf32, #tpu.memory_space<vmem>>, %arg21: memref<640x128xbf16, #tpu.memory_space<vmem>>, %arg22: memref<1x128xf32, #tpu.memory_space<vmem>>, %arg23: memref<128x32xbf16, #tpu.memory_space<vmem>>, %arg24: memref<1x32xf32, #tpu.memory_space<vmem>>, %arg25: memref<1x32xf32, #tpu.memory_space<vmem>>, %arg26: memref<1x1xf32, #tpu.memory_space<vmem>>, %arg27: memref<2x1xf32, #tpu.memory_space<vmem>>, %arg28: memref<20x64xf32, #tpu.memory_space<vmem>>, %arg29: memref<20x64xf32, #tpu.memory_space<vmem>>, %arg30: memref<20x32xf32, #tpu.memory_space<vmem>>, %arg31: memref<20x32xf32, #tpu.memory_space<vmem>>) attributes {dimension_semantics = [], scalar_prefetch = 0 : i64, scratch_operands = 4 : i64, tpu.core_type = #tpu.core_type<tc>} {
    %c0 = arith.constant 0 : index
    %c0_0 = arith.constant 0 : index
    %0 = vector.load %arg0[%c0, %c0_0] : memref<28x12xf32, #tpu.memory_space<vmem>>, vector<28x12xf32>
    %1 = arith.truncf %0 : vector<28x12xf32> to vector<28x12xbf16>
    %c0_1 = arith.constant 0 : index
    %c0_2 = arith.constant 0 : index
    %2 = vector.load %arg1[%c0_1, %c0_2] : memref<12x16xbf16, #tpu.memory_space<vmem>>, vector<12x16xbf16>
    %cst = arith.constant dense<0.000000e+00> : vector<28x16xf32>
    %3 = tpu.matmul %1, %2, %cst {dimension_numbers = #tpu.dot_dimension_numbers<[1], [0], [0], [1], [0, 0, 1, 1], [], []>} : vector<28x12xbf16>, vector<12x16xbf16>, vector<28x16xf32> -> vector<28x16xf32>
    %c0_3 = arith.constant 0 : index
    %c0_4 = arith.constant 0 : index
    %4 = vector.load %arg2[%c0_3, %c0_4] : memref<1x16xf32, #tpu.memory_space<vmem>>, vector<1x16xf32>
    %5 = vector.broadcast %4 : vector<1x16xf32> to vector<28x16xf32>
    %6 = arith.addf %3, %5 : vector<28x16xf32>
    %cst_5 = arith.constant 0.000000e+00 : f32
    %7 = vector.broadcast %cst_5 : f32 to vector<28x16xf32>
    %8 = arith.maximumf %6, %7 : vector<28x16xf32>
    %9 = vector.extract_strided_slice %8 {offsets = [0, 0], sizes = [26, 16], strides = [1, 1]} : vector<28x16xf32> to vector<26x16xf32>
    %10 = vector.extract_strided_slice %8 {offsets = [2, 0], sizes = [26, 16], strides = [1, 1]} : vector<28x16xf32> to vector<26x16xf32>
    %11 = arith.maximumf %9, %10 : vector<26x16xf32>
    %c0_6 = arith.constant 0 : index
    %c0_7 = arith.constant 0 : index
    %12 = vector.load %arg3[%c0_6, %c0_7] : memref<1x16xf32, #tpu.memory_space<vmem>>, vector<1x16xf32>
    %13 = vector.broadcast %12 : vector<1x16xf32> to vector<26x16xf32>
    %14 = arith.mulf %11, %13 : vector<26x16xf32>
    %c0_8 = arith.constant 0 : index
    %c0_9 = arith.constant 0 : index
    %15 = vector.load %arg4[%c0_8, %c0_9] : memref<1x16xf32, #tpu.memory_space<vmem>>, vector<1x16xf32>
    %16 = vector.broadcast %15 : vector<1x16xf32> to vector<26x16xf32>
    %17 = arith.addf %14, %16 : vector<26x16xf32>
    %18 = arith.truncf %17 : vector<26x16xf32> to vector<26x16xbf16>
    %19 = vector.extract_strided_slice %18 {offsets = [0, 0], sizes = [22, 16], strides = [1, 1]} : vector<26x16xbf16> to vector<22x16xbf16>
    %c0_10 = arith.constant 0 : index
    %c0_11 = arith.constant 0 : index
    %c0_12 = arith.constant 0 : index
    %20 = vector.load %arg5[%c0_10, %c0_11, %c0_12] : memref<3x16x8xbf16, #tpu.memory_space<vmem>>, vector<1x16x8xbf16>
    %21 = vector.shape_cast %20 : vector<1x16x8xbf16> to vector<16x8xbf16>
    %cst_13 = arith.constant dense<0.000000e+00> : vector<22x8xf32>
    %22 = tpu.matmul %19, %21, %cst_13 {dimension_numbers = #tpu.dot_dimension_numbers<[1], [0], [0], [1], [0, 0, 1, 1], [], []>} : vector<22x16xbf16>, vector<16x8xbf16>, vector<22x8xf32> -> vector<22x8xf32>
    %23 = vector.extract_strided_slice %18 {offsets = [2, 0], sizes = [22, 16], strides = [1, 1]} : vector<26x16xbf16> to vector<22x16xbf16>
    %c1 = arith.constant 1 : index
    %c0_14 = arith.constant 0 : index
    %c0_15 = arith.constant 0 : index
    %24 = vector.load %arg5[%c1, %c0_14, %c0_15] : memref<3x16x8xbf16, #tpu.memory_space<vmem>>, vector<1x16x8xbf16>
    %25 = vector.shape_cast %24 : vector<1x16x8xbf16> to vector<16x8xbf16>
    %cst_16 = arith.constant dense<0.000000e+00> : vector<22x8xf32>
    %26 = tpu.matmul %23, %25, %cst_16 {dimension_numbers = #tpu.dot_dimension_numbers<[1], [0], [0], [1], [0, 0, 1, 1], [], []>} : vector<22x16xbf16>, vector<16x8xbf16>, vector<22x8xf32> -> vector<22x8xf32>
    %27 = arith.addf %22, %26 : vector<22x8xf32>
    %28 = vector.extract_strided_slice %18 {offsets = [4, 0], sizes = [22, 16], strides = [1, 1]} : vector<26x16xbf16> to vector<22x16xbf16>
    %c2 = arith.constant 2 : index
    %c0_17 = arith.constant 0 : index
    %c0_18 = arith.constant 0 : index
    %29 = vector.load %arg5[%c2, %c0_17, %c0_18] : memref<3x16x8xbf16, #tpu.memory_space<vmem>>, vector<1x16x8xbf16>
    %30 = vector.shape_cast %29 : vector<1x16x8xbf16> to vector<16x8xbf16>
    %cst_19 = arith.constant dense<0.000000e+00> : vector<22x8xf32>
    %31 = tpu.matmul %28, %30, %cst_19 {dimension_numbers = #tpu.dot_dimension_numbers<[1], [0], [0], [1], [0, 0, 1, 1], [], []>} : vector<22x16xbf16>, vector<16x8xbf16>, vector<22x8xf32> -> vector<22x8xf32>
    %32 = arith.addf %27, %31 : vector<22x8xf32>
    %c0_20 = arith.constant 0 : index
    %c0_21 = arith.constant 0 : index
    %33 = vector.load %arg6[%c0_20, %c0_21] : memref<1x8xf32, #tpu.memory_space<vmem>>, vector<1x8xf32>
    %34 = vector.broadcast %33 : vector<1x8xf32> to vector<22x8xf32>
    %35 = arith.addf %32, %34 : vector<22x8xf32>
    %36 = vector.extract_strided_slice %35 {offsets = [0, 0], sizes = [20, 8], strides = [1, 1]} : vector<22x8xf32> to vector<20x8xf32>
    %37 = vector.extract_strided_slice %35 {offsets = [2, 0], sizes = [20, 8], strides = [1, 1]} : vector<22x8xf32> to vector<20x8xf32>
    %38 = arith.maximumf %36, %37 : vector<20x8xf32>
    %c0_22 = arith.constant 0 : index
    %c0_23 = arith.constant 0 : index
    %39 = vector.load %arg7[%c0_22, %c0_23] : memref<1x8xf32, #tpu.memory_space<vmem>>, vector<1x8xf32>
    %40 = vector.broadcast %39 : vector<1x8xf32> to vector<20x8xf32>
    %41 = arith.mulf %38, %40 : vector<20x8xf32>
    %c0_24 = arith.constant 0 : index
    %c0_25 = arith.constant 0 : index
    %42 = vector.load %arg8[%c0_24, %c0_25] : memref<1x8xf32, #tpu.memory_space<vmem>>, vector<1x8xf32>
    %43 = vector.broadcast %42 : vector<1x8xf32> to vector<20x8xf32>
    %44 = arith.addf %41, %43 : vector<20x8xf32>
    %cst_26 = arith.constant 0.000000e+00 : f32
    %45 = vector.broadcast %cst_26 : f32 to vector<20x8xf32>
    %46 = arith.maximumf %44, %45 : vector<20x8xf32>
    %47 = arith.truncf %46 : vector<20x8xf32> to vector<20x8xbf16>
    %c0_27 = arith.constant 0 : index
    %c0_28 = arith.constant 0 : index
    %48 = vector.load %arg9[%c0_27, %c0_28] : memref<8x256xbf16, #tpu.memory_space<vmem>>, vector<8x256xbf16>
    %cst_29 = arith.constant dense<0.000000e+00> : vector<20x256xf32>
    %49 = tpu.matmul %47, %48, %cst_29 {dimension_numbers = #tpu.dot_dimension_numbers<[1], [0], [0], [1], [0, 0, 1, 1], [], []>} : vector<20x8xbf16>, vector<8x256xbf16>, vector<20x256xf32> -> vector<20x256xf32>
    %c0_30 = arith.constant 0 : index
    %c0_31 = arith.constant 0 : index
    %50 = vector.load %arg11[%c0_30, %c0_31] : memref<1x256xf32, #tpu.memory_space<vmem>>, vector<1x256xf32>
    %51 = vector.broadcast %50 : vector<1x256xf32> to vector<20x256xf32>
    %52 = arith.addf %49, %51 : vector<20x256xf32>
    %c0_32 = arith.constant 0 : index
    %c0_33 = arith.constant 0 : index
    %53 = vector.load %arg12[%c0_32, %c0_33] : memref<8x256xbf16, #tpu.memory_space<vmem>>, vector<8x256xbf16>
    %cst_34 = arith.constant dense<0.000000e+00> : vector<20x256xf32>
    %54 = tpu.matmul %47, %53, %cst_34 {dimension_numbers = #tpu.dot_dimension_numbers<[1], [0], [0], [1], [0, 0, 1, 1], [], []>} : vector<20x8xbf16>, vector<8x256xbf16>, vector<20x256xf32> -> vector<20x256xf32>
    %c0_35 = arith.constant 0 : index
    %c0_36 = arith.constant 0 : index
    %55 = vector.load %arg14[%c0_35, %c0_36] : memref<1x256xf32, #tpu.memory_space<vmem>>, vector<1x256xf32>
    %56 = vector.broadcast %55 : vector<1x256xf32> to vector<20x256xf32>
    %57 = arith.addf %54, %56 : vector<20x256xf32>
    %c0_37 = arith.constant 0 : index
    %c0_38 = arith.constant 0 : index
    %58 = vector.load %arg10[%c0_37, %c0_38] : memref<64x256xbf16, #tpu.memory_space<vmem>>, vector<64x256xbf16>
    %c0_39 = arith.constant 0 : index
    %c0_40 = arith.constant 0 : index
    %59 = vector.load %arg13[%c0_39, %c0_40] : memref<64x256xbf16, #tpu.memory_space<vmem>>, vector<64x256xbf16>
    %cst_41 = arith.constant 0.000000e+00 : f32
    %60 = vector.broadcast %cst_41 : f32 to vector<2x64xf32>
    %61 = vector.extract_strided_slice %52 {offsets = [0, 0], sizes = [2, 256], strides = [1, 1]} : vector<20x256xf32> to vector<2x256xf32>
    %62 = arith.truncf %60 : vector<2x64xf32> to vector<2x64xbf16>
    %cst_42 = arith.constant dense<0.000000e+00> : vector<2x256xf32>
    %63 = tpu.matmul %62, %58, %cst_42 {dimension_numbers = #tpu.dot_dimension_numbers<[1], [0], [0], [1], [0, 0, 1, 1], [], []>} : vector<2x64xbf16>, vector<64x256xbf16>, vector<2x256xf32> -> vector<2x256xf32>
    %64 = arith.addf %61, %63 : vector<2x256xf32>
    %65 = vector.extract_strided_slice %64 {offsets = [0, 0], sizes = [2, 64], strides = [1, 1]} : vector<2x256xf32> to vector<2x64xf32>
    %66 = arith.negf %65 : vector<2x64xf32>
    %67 = math.exp %66 : vector<2x64xf32>
    %cst_43 = arith.constant 1.000000e+00 : f32
    %68 = vector.broadcast %cst_43 : f32 to vector<2x64xf32>
    %69 = arith.addf %68, %67 : vector<2x64xf32>
    %70 = arith.divf %68, %69 : vector<2x64xf32>
    %71 = vector.extract_strided_slice %64 {offsets = [0, 64], sizes = [2, 64], strides = [1, 1]} : vector<2x256xf32> to vector<2x64xf32>
    %72 = arith.negf %71 : vector<2x64xf32>
    %73 = math.exp %72 : vector<2x64xf32>
    %cst_44 = arith.constant 1.000000e+00 : f32
    %74 = vector.broadcast %cst_44 : f32 to vector<2x64xf32>
    %75 = arith.addf %74, %73 : vector<2x64xf32>
    %76 = arith.divf %74, %75 : vector<2x64xf32>
    %77 = vector.extract_strided_slice %64 {offsets = [0, 128], sizes = [2, 64], strides = [1, 1]} : vector<2x256xf32> to vector<2x64xf32>
    %78 = math.tanh %77 : vector<2x64xf32>
    %79 = vector.extract_strided_slice %64 {offsets = [0, 192], sizes = [2, 64], strides = [1, 1]} : vector<2x256xf32> to vector<2x64xf32>
    %80 = arith.negf %79 : vector<2x64xf32>
    %81 = math.exp %80 : vector<2x64xf32>
    %cst_45 = arith.constant 1.000000e+00 : f32
    %82 = vector.broadcast %cst_45 : f32 to vector<2x64xf32>
    %83 = arith.addf %82, %81 : vector<2x64xf32>
    %84 = arith.divf %82, %83 : vector<2x64xf32>
    %85 = arith.mulf %76, %60 : vector<2x64xf32>
    %86 = arith.mulf %70, %78 : vector<2x64xf32>
    %87 = arith.addf %85, %86 : vector<2x64xf32>
    %88 = math.tanh %87 : vector<2x64xf32>
    %89 = arith.mulf %84, %88 : vector<2x64xf32>
    %90 = vector.extract_strided_slice %57 {offsets = [18, 0], sizes = [2, 256], strides = [1, 1]} : vector<20x256xf32> to vector<2x256xf32>
    %91 = arith.truncf %60 : vector<2x64xf32> to vector<2x64xbf16>
    %cst_46 = arith.constant dense<0.000000e+00> : vector<2x256xf32>
    %92 = tpu.matmul %91, %59, %cst_46 {dimension_numbers = #tpu.dot_dimension_numbers<[1], [0], [0], [1], [0, 0, 1, 1], [], []>} : vector<2x64xbf16>, vector<64x256xbf16>, vector<2x256xf32> -> vector<2x256xf32>
    %93 = arith.addf %90, %92 : vector<2x256xf32>
    %94 = vector.extract_strided_slice %93 {offsets = [0, 0], sizes = [2, 64], strides = [1, 1]} : vector<2x256xf32> to vector<2x64xf32>
    %95 = arith.negf %94 : vector<2x64xf32>
    %96 = math.exp %95 : vector<2x64xf32>
    %cst_47 = arith.constant 1.000000e+00 : f32
    %97 = vector.broadcast %cst_47 : f32 to vector<2x64xf32>
    %98 = arith.addf %97, %96 : vector<2x64xf32>
    %99 = arith.divf %97, %98 : vector<2x64xf32>
    %100 = vector.extract_strided_slice %93 {offsets = [0, 64], sizes = [2, 64], strides = [1, 1]} : vector<2x256xf32> to vector<2x64xf32>
    %101 = arith.negf %100 : vector<2x64xf32>
    %102 = math.exp %101 : vector<2x64xf32>
    %cst_48 = arith.constant 1.000000e+00 : f32
    %103 = vector.broadcast %cst_48 : f32 to vector<2x64xf32>
    %104 = arith.addf %103, %102 : vector<2x64xf32>
    %105 = arith.divf %103, %104 : vector<2x64xf32>
    %106 = vector.extract_strided_slice %93 {offsets = [0, 128], sizes = [2, 64], strides = [1, 1]} : vector<2x256xf32> to vector<2x64xf32>
    %107 = math.tanh %106 : vector<2x64xf32>
    %108 = vector.extract_strided_slice %93 {offsets = [0, 192], sizes = [2, 64], strides = [1, 1]} : vector<2x256xf32> to vector<2x64xf32>
    %109 = arith.negf %108 : vector<2x64xf32>
    %110 = math.exp %109 : vector<2x64xf32>
    %cst_49 = arith.constant 1.000000e+00 : f32
    %111 = vector.broadcast %cst_49 : f32 to vector<2x64xf32>
    %112 = arith.addf %111, %110 : vector<2x64xf32>
    %113 = arith.divf %111, %112 : vector<2x64xf32>
    %114 = arith.mulf %105, %60 : vector<2x64xf32>
    %115 = arith.mulf %99, %107 : vector<2x64xf32>
    %116 = arith.addf %114, %115 : vector<2x64xf32>
    %117 = math.tanh %116 : vector<2x64xf32>
    %118 = arith.mulf %113, %117 : vector<2x64xf32>
    %cst_50 = arith.constant 0.000000e+00 : f32
    %119 = vector.broadcast %cst_50 : f32 to vector<2x64xf32>
    %120 = arith.maximumf %89, %119 : vector<2x64xf32>
    %c0_51 = arith.constant 0 : index
    %c0_52 = arith.constant 0 : index
    %121 = vector.load %arg28[%c0_51, %c0_52] : memref<20x64xf32, #tpu.memory_space<vmem>>, vector<2x64xf32>
    tpu.vector_store %arg28[%c0_51, %c0_52], %120 {strides = array<i32>} : memref<20x64xf32, #tpu.memory_space<vmem>>, vector<2x64xf32>,
    %cst_53 = arith.constant 0.000000e+00 : f32
    %122 = vector.broadcast %cst_53 : f32 to vector<2x64xf32>
    %123 = arith.maximumf %118, %122 : vector<2x64xf32>
    %c18 = arith.constant 18 : index
    %c0_54 = arith.constant 0 : index
    %124 = vector.load %arg29[%c18, %c0_54] : memref<20x64xf32, #tpu.memory_space<vmem>>, vector<2x64xf32>
    tpu.vector_store %arg29[%c18, %c0_54], %123 {strides = array<i32>} : memref<20x64xf32, #tpu.memory_space<vmem>>, vector<2x64xf32>,
    %125 = vector.extract_strided_slice %52 {offsets = [2, 0], sizes = [2, 256], strides = [1, 1]} : vector<20x256xf32> to vector<2x256xf32>
    %126 = arith.truncf %89 : vector<2x64xf32> to vector<2x64xbf16>
    %cst_55 = arith.constant dense<0.000000e+00> : vector<2x256xf32>
    %127 = tpu.matmul %126, %58, %cst_55 {dimension_numbers = #tpu.dot_dimension_numbers<[1], [0], [0], [1], [0, 0, 1, 1], [], []>} : vector<2x64xbf16>, vector<64x256xbf16>, vector<2x256xf32> -> vector<2x256xf32>
    %128 = arith.addf %125, %127 : vector<2x256xf32>
    %129 = vector.extract_strided_slice %128 {offsets = [0, 0], sizes = [2, 64], strides = [1, 1]} : vector<2x256xf32> to vector<2x64xf32>
    %130 = arith.negf %129 : vector<2x64xf32>
    %131 = math.exp %130 : vector<2x64xf32>
    %cst_56 = arith.constant 1.000000e+00 : f32
    %132 = vector.broadcast %cst_56 : f32 to vector<2x64xf32>
    %133 = arith.addf %132, %131 : vector<2x64xf32>
    %134 = arith.divf %132, %133 : vector<2x64xf32>
    %135 = vector.extract_strided_slice %128 {offsets = [0, 64], sizes = [2, 64], strides = [1, 1]} : vector<2x256xf32> to vector<2x64xf32>
    %136 = arith.negf %135 : vector<2x64xf32>
    %137 = math.exp %136 : vector<2x64xf32>
    %cst_57 = arith.constant 1.000000e+00 : f32
    %138 = vector.broadcast %cst_57 : f32 to vector<2x64xf32>
    %139 = arith.addf %138, %137 : vector<2x64xf32>
    %140 = arith.divf %138, %139 : vector<2x64xf32>
    %141 = vector.extract_strided_slice %128 {offsets = [0, 128], sizes = [2, 64], strides = [1, 1]} : vector<2x256xf32> to vector<2x64xf32>
    %142 = math.tanh %141 : vector<2x64xf32>
    %143 = vector.extract_strided_slice %128 {offsets = [0, 192], sizes = [2, 64], strides = [1, 1]} : vector<2x256xf32> to vector<2x64xf32>
    %144 = arith.negf %143 : vector<2x64xf32>
    %145 = math.exp %144 : vector<2x64xf32>
    %cst_58 = arith.constant 1.000000e+00 : f32
    %146 = vector.broadcast %cst_58 : f32 to vector<2x64xf32>
    %147 = arith.addf %146, %145 : vector<2x64xf32>
    %148 = arith.divf %146, %147 : vector<2x64xf32>
    %149 = arith.mulf %140, %87 : vector<2x64xf32>
    %150 = arith.mulf %134, %142 : vector<2x64xf32>
    %151 = arith.addf %149, %150 : vector<2x64xf32>
    %152 = math.tanh %151 : vector<2x64xf32>
    %153 = arith.mulf %148, %152 : vector<2x64xf32>
    %154 = vector.extract_strided_slice %57 {offsets = [16, 0], sizes = [2, 256], strides = [1, 1]} : vector<20x256xf32> to vector<2x256xf32>
    %155 = arith.truncf %118 : vector<2x64xf32> to vector<2x64xbf16>
    %cst_59 = arith.constant dense<0.000000e+00> : vector<2x256xf32>
    %156 = tpu.matmul %155, %59, %cst_59 {dimension_numbers = #tpu.dot_dimension_numbers<[1], [0], [0], [1], [0, 0, 1, 1], [], []>} : vector<2x64xbf16>, vector<64x256xbf16>, vector<2x256xf32> -> vector<2x256xf32>
    %157 = arith.addf %154, %156 : vector<2x256xf32>
    %158 = vector.extract_strided_slice %157 {offsets = [0, 0], sizes = [2, 64], strides = [1, 1]} : vector<2x256xf32> to vector<2x64xf32>
    %159 = arith.negf %158 : vector<2x64xf32>
    %160 = math.exp %159 : vector<2x64xf32>
    %cst_60 = arith.constant 1.000000e+00 : f32
    %161 = vector.broadcast %cst_60 : f32 to vector<2x64xf32>
    %162 = arith.addf %161, %160 : vector<2x64xf32>
    %163 = arith.divf %161, %162 : vector<2x64xf32>
    %164 = vector.extract_strided_slice %157 {offsets = [0, 64], sizes = [2, 64], strides = [1, 1]} : vector<2x256xf32> to vector<2x64xf32>
    %165 = arith.negf %164 : vector<2x64xf32>
    %166 = math.exp %165 : vector<2x64xf32>
    %cst_61 = arith.constant 1.000000e+00 : f32
    %167 = vector.broadcast %cst_61 : f32 to vector<2x64xf32>
    %168 = arith.addf %167, %166 : vector<2x64xf32>
    %169 = arith.divf %167, %168 : vector<2x64xf32>
    %170 = vector.extract_strided_slice %157 {offsets = [0, 128], sizes = [2, 64], strides = [1, 1]} : vector<2x256xf32> to vector<2x64xf32>
    %171 = math.tanh %170 : vector<2x64xf32>
    %172 = vector.extract_strided_slice %157 {offsets = [0, 192], sizes = [2, 64], strides = [1, 1]} : vector<2x256xf32> to vector<2x64xf32>
    %173 = arith.negf %172 : vector<2x64xf32>
    %174 = math.exp %173 : vector<2x64xf32>
    %cst_62 = arith.constant 1.000000e+00 : f32
    %175 = vector.broadcast %cst_62 : f32 to vector<2x64xf32>
    %176 = arith.addf %175, %174 : vector<2x64xf32>
    %177 = arith.divf %175, %176 : vector<2x64xf32>
    %178 = arith.mulf %169, %116 : vector<2x64xf32>
    %179 = arith.mulf %163, %171 : vector<2x64xf32>
    %180 = arith.addf %178, %179 : vector<2x64xf32>
    %181 = math.tanh %180 : vector<2x64xf32>
    %182 = arith.mulf %177, %181 : vector<2x64xf32>
    %cst_63 = arith.constant 0.000000e+00 : f32
    %183 = vector.broadcast %cst_63 : f32 to vector<2x64xf32>
    %184 = arith.maximumf %153, %183 : vector<2x64xf32>
    %c2_64 = arith.constant 2 : index
    %c0_65 = arith.constant 0 : index
    %185 = vector.load %arg28[%c2_64, %c0_65] : memref<20x64xf32, #tpu.memory_space<vmem>>, vector<2x64xf32>
    tpu.vector_store %arg28[%c2_64, %c0_65], %184 {strides = array<i32>} : memref<20x64xf32, #tpu.memory_space<vmem>>, vector<2x64xf32>,
    %cst_66 = arith.constant 0.000000e+00 : f32
    %186 = vector.broadcast %cst_66 : f32 to vector<2x64xf32>
    %187 = arith.maximumf %182, %186 : vector<2x64xf32>
    %c16 = arith.constant 16 : index
    %c0_67 = arith.constant 0 : index
    %188 = vector.load %arg29[%c16, %c0_67] : memref<20x64xf32, #tpu.memory_space<vmem>>, vector<2x64xf32>
    tpu.vector_store %arg29[%c16, %c0_67], %187 {strides = array<i32>} : memref<20x64xf32, #tpu.memory_space<vmem>>, vector<2x64xf32>,
    %189 = vector.extract_strided_slice %52 {offsets = [4, 0], sizes = [2, 256], strides = [1, 1]} : vector<20x256xf32> to vector<2x256xf32>
    %190 = arith.truncf %153 : vector<2x64xf32> to vector<2x64xbf16>
    %cst_68 = arith.constant dense<0.000000e+00> : vector<2x256xf32>
    %191 = tpu.matmul %190, %58, %cst_68 {dimension_numbers = #tpu.dot_dimension_numbers<[1], [0], [0], [1], [0, 0, 1, 1], [], []>} : vector<2x64xbf16>, vector<64x256xbf16>, vector<2x256xf32> -> vector<2x256xf32>
    %192 = arith.addf %189, %191 : vector<2x256xf32>
    %193 = vector.extract_strided_slice %192 {offsets = [0, 0], sizes = [2, 64], strides = [1, 1]} : vector<2x256xf32> to vector<2x64xf32>
    %194 = arith.negf %193 : vector<2x64xf32>
    %195 = math.exp %194 : vector<2x64xf32>
    %cst_69 = arith.constant 1.000000e+00 : f32
    %196 = vector.broadcast %cst_69 : f32 to vector<2x64xf32>
    %197 = arith.addf %196, %195 : vector<2x64xf32>
    %198 = arith.divf %196, %197 : vector<2x64xf32>
    %199 = vector.extract_strided_slice %192 {offsets = [0, 64], sizes = [2, 64], strides = [1, 1]} : vector<2x256xf32> to vector<2x64xf32>
    %200 = arith.negf %199 : vector<2x64xf32>
    %201 = math.exp %200 : vector<2x64xf32>
    %cst_70 = arith.constant 1.000000e+00 : f32
    %202 = vector.broadcast %cst_70 : f32 to vector<2x64xf32>
    %203 = arith.addf %202, %201 : vector<2x64xf32>
    %204 = arith.divf %202, %203 : vector<2x64xf32>
    %205 = vector.extract_strided_slice %192 {offsets = [0, 128], sizes = [2, 64], strides = [1, 1]} : vector<2x256xf32> to vector<2x64xf32>
    %206 = math.tanh %205 : vector<2x64xf32>
    %207 = vector.extract_strided_slice %192 {offsets = [0, 192], sizes = [2, 64], strides = [1, 1]} : vector<2x256xf32> to vector<2x64xf32>
    %208 = arith.negf %207 : vector<2x64xf32>
    %209 = math.exp %208 : vector<2x64xf32>
    %cst_71 = arith.constant 1.000000e+00 : f32
    %210 = vector.broadcast %cst_71 : f32 to vector<2x64xf32>
    %211 = arith.addf %210, %209 : vector<2x64xf32>
    %212 = arith.divf %210, %211 : vector<2x64xf32>
    %213 = arith.mulf %204, %151 : vector<2x64xf32>
    %214 = arith.mulf %198, %206 : vector<2x64xf32>
    %215 = arith.addf %213, %214 : vector<2x64xf32>
    %216 = math.tanh %215 : vector<2x64xf32>
    %217 = arith.mulf %212, %216 : vector<2x64xf32>
    %218 = vector.extract_strided_slice %57 {offsets = [14, 0], sizes = [2, 256], strides = [1, 1]} : vector<20x256xf32> to vector<2x256xf32>
    %219 = arith.truncf %182 : vector<2x64xf32> to vector<2x64xbf16>
    %cst_72 = arith.constant dense<0.000000e+00> : vector<2x256xf32>
    %220 = tpu.matmul %219, %59, %cst_72 {dimension_numbers = #tpu.dot_dimension_numbers<[1], [0], [0], [1], [0, 0, 1, 1], [], []>} : vector<2x64xbf16>, vector<64x256xbf16>, vector<2x256xf32> -> vector<2x256xf32>
    %221 = arith.addf %218, %220 : vector<2x256xf32>
    %222 = vector.extract_strided_slice %221 {offsets = [0, 0], sizes = [2, 64], strides = [1, 1]} : vector<2x256xf32> to vector<2x64xf32>
    %223 = arith.negf %222 : vector<2x64xf32>
    %224 = math.exp %223 : vector<2x64xf32>
    %cst_73 = arith.constant 1.000000e+00 : f32
    %225 = vector.broadcast %cst_73 : f32 to vector<2x64xf32>
    %226 = arith.addf %225, %224 : vector<2x64xf32>
    %227 = arith.divf %225, %226 : vector<2x64xf32>
    %228 = vector.extract_strided_slice %221 {offsets = [0, 64], sizes = [2, 64], strides = [1, 1]} : vector<2x256xf32> to vector<2x64xf32>
    %229 = arith.negf %228 : vector<2x64xf32>
    %230 = math.exp %229 : vector<2x64xf32>
    %cst_74 = arith.constant 1.000000e+00 : f32
    %231 = vector.broadcast %cst_74 : f32 to vector<2x64xf32>
    %232 = arith.addf %231, %230 : vector<2x64xf32>
    %233 = arith.divf %231, %232 : vector<2x64xf32>
    %234 = vector.extract_strided_slice %221 {offsets = [0, 128], sizes = [2, 64], strides = [1, 1]} : vector<2x256xf32> to vector<2x64xf32>
    %235 = math.tanh %234 : vector<2x64xf32>
    %236 = vector.extract_strided_slice %221 {offsets = [0, 192], sizes = [2, 64], strides = [1, 1]} : vector<2x256xf32> to vector<2x64xf32>
    %237 = arith.negf %236 : vector<2x64xf32>
    %238 = math.exp %237 : vector<2x64xf32>
    %cst_75 = arith.constant 1.000000e+00 : f32
    %239 = vector.broadcast %cst_75 : f32 to vector<2x64xf32>
    %240 = arith.addf %239, %238 : vector<2x64xf32>
    %241 = arith.divf %239, %240 : vector<2x64xf32>
    %242 = arith.mulf %233, %180 : vector<2x64xf32>
    %243 = arith.mulf %227, %235 : vector<2x64xf32>
    %244 = arith.addf %242, %243 : vector<2x64xf32>
    %245 = math.tanh %244 : vector<2x64xf32>
    %246 = arith.mulf %241, %245 : vector<2x64xf32>
    %cst_76 = arith.constant 0.000000e+00 : f32
    %247 = vector.broadcast %cst_76 : f32 to vector<2x64xf32>
    %248 = arith.maximumf %217, %247 : vector<2x64xf32>
    %c4 = arith.constant 4 : index
    %c0_77 = arith.constant 0 : index
    %249 = vector.load %arg28[%c4, %c0_77] : memref<20x64xf32, #tpu.memory_space<vmem>>, vector<2x64xf32>
    tpu.vector_store %arg28[%c4, %c0_77], %248 {strides = array<i32>} : memref<20x64xf32, #tpu.memory_space<vmem>>, vector<2x64xf32>,
    %cst_78 = arith.constant 0.000000e+00 : f32
    %250 = vector.broadcast %cst_78 : f32 to vector<2x64xf32>
    %251 = arith.maximumf %246, %250 : vector<2x64xf32>
    %c14 = arith.constant 14 : index
    %c0_79 = arith.constant 0 : index
    %252 = vector.load %arg29[%c14, %c0_79] : memref<20x64xf32, #tpu.memory_space<vmem>>, vector<2x64xf32>
    tpu.vector_store %arg29[%c14, %c0_79], %251 {strides = array<i32>} : memref<20x64xf32, #tpu.memory_space<vmem>>, vector<2x64xf32>,
    %253 = vector.extract_strided_slice %52 {offsets = [6, 0], sizes = [2, 256], strides = [1, 1]} : vector<20x256xf32> to vector<2x256xf32>
    %254 = arith.truncf %217 : vector<2x64xf32> to vector<2x64xbf16>
    %cst_80 = arith.constant dense<0.000000e+00> : vector<2x256xf32>
    %255 = tpu.matmul %254, %58, %cst_80 {dimension_numbers = #tpu.dot_dimension_numbers<[1], [0], [0], [1], [0, 0, 1, 1], [], []>} : vector<2x64xbf16>, vector<64x256xbf16>, vector<2x256xf32> -> vector<2x256xf32>
    %256 = arith.addf %253, %255 : vector<2x256xf32>
    %257 = vector.extract_strided_slice %256 {offsets = [0, 0], sizes = [2, 64], strides = [1, 1]} : vector<2x256xf32> to vector<2x64xf32>
    %258 = arith.negf %257 : vector<2x64xf32>
    %259 = math.exp %258 : vector<2x64xf32>
    %cst_81 = arith.constant 1.000000e+00 : f32
    %260 = vector.broadcast %cst_81 : f32 to vector<2x64xf32>
    %261 = arith.addf %260, %259 : vector<2x64xf32>
    %262 = arith.divf %260, %261 : vector<2x64xf32>
    %263 = vector.extract_strided_slice %256 {offsets = [0, 64], sizes = [2, 64], strides = [1, 1]} : vector<2x256xf32> to vector<2x64xf32>
    %264 = arith.negf %263 : vector<2x64xf32>
    %265 = math.exp %264 : vector<2x64xf32>
    %cst_82 = arith.constant 1.000000e+00 : f32
    %266 = vector.broadcast %cst_82 : f32 to vector<2x64xf32>
    %267 = arith.addf %266, %265 : vector<2x64xf32>
    %268 = arith.divf %266, %267 : vector<2x64xf32>
    %269 = vector.extract_strided_slice %256 {offsets = [0, 128], sizes = [2, 64], strides = [1, 1]} : vector<2x256xf32> to vector<2x64xf32>
    %270 = math.tanh %269 : vector<2x64xf32>
    %271 = vector.extract_strided_slice %256 {offsets = [0, 192], sizes = [2, 64], strides = [1, 1]} : vector<2x256xf32> to vector<2x64xf32>
    %272 = arith.negf %271 : vector<2x64xf32>
    %273 = math.exp %272 : vector<2x64xf32>
    %cst_83 = arith.constant 1.000000e+00 : f32
    %274 = vector.broadcast %cst_83 : f32 to vector<2x64xf32>
    %275 = arith.addf %274, %273 : vector<2x64xf32>
    %276 = arith.divf %274, %275 : vector<2x64xf32>
    %277 = arith.mulf %268, %215 : vector<2x64xf32>
    %278 = arith.mulf %262, %270 : vector<2x64xf32>
    %279 = arith.addf %277, %278 : vector<2x64xf32>
    %280 = math.tanh %279 : vector<2x64xf32>
    %281 = arith.mulf %276, %280 : vector<2x64xf32>
    %282 = vector.extract_strided_slice %57 {offsets = [12, 0], sizes = [2, 256], strides = [1, 1]} : vector<20x256xf32> to vector<2x256xf32>
    %283 = arith.truncf %246 : vector<2x64xf32> to vector<2x64xbf16>
    %cst_84 = arith.constant dense<0.000000e+00> : vector<2x256xf32>
    %284 = tpu.matmul %283, %59, %cst_84 {dimension_numbers = #tpu.dot_dimension_numbers<[1], [0], [0], [1], [0, 0, 1, 1], [], []>} : vector<2x64xbf16>, vector<64x256xbf16>, vector<2x256xf32> -> vector<2x256xf32>
    %285 = arith.addf %282, %284 : vector<2x256xf32>
    %286 = vector.extract_strided_slice %285 {offsets = [0, 0], sizes = [2, 64], strides = [1, 1]} : vector<2x256xf32> to vector<2x64xf32>
    %287 = arith.negf %286 : vector<2x64xf32>
    %288 = math.exp %287 : vector<2x64xf32>
    %cst_85 = arith.constant 1.000000e+00 : f32
    %289 = vector.broadcast %cst_85 : f32 to vector<2x64xf32>
    %290 = arith.addf %289, %288 : vector<2x64xf32>
    %291 = arith.divf %289, %290 : vector<2x64xf32>
    %292 = vector.extract_strided_slice %285 {offsets = [0, 64], sizes = [2, 64], strides = [1, 1]} : vector<2x256xf32> to vector<2x64xf32>
    %293 = arith.negf %292 : vector<2x64xf32>
    %294 = math.exp %293 : vector<2x64xf32>
    %cst_86 = arith.constant 1.000000e+00 : f32
    %295 = vector.broadcast %cst_86 : f32 to vector<2x64xf32>
    %296 = arith.addf %295, %294 : vector<2x64xf32>
    %297 = arith.divf %295, %296 : vector<2x64xf32>
    %298 = vector.extract_strided_slice %285 {offsets = [0, 128], sizes = [2, 64], strides = [1, 1]} : vector<2x256xf32> to vector<2x64xf32>
    %299 = math.tanh %298 : vector<2x64xf32>
    %300 = vector.extract_strided_slice %285 {offsets = [0, 192], sizes = [2, 64], strides = [1, 1]} : vector<2x256xf32> to vector<2x64xf32>
    %301 = arith.negf %300 : vector<2x64xf32>
    %302 = math.exp %301 : vector<2x64xf32>
    %cst_87 = arith.constant 1.000000e+00 : f32
    %303 = vector.broadcast %cst_87 : f32 to vector<2x64xf32>
    %304 = arith.addf %303, %302 : vector<2x64xf32>
    %305 = arith.divf %303, %304 : vector<2x64xf32>
    %306 = arith.mulf %297, %244 : vector<2x64xf32>
    %307 = arith.mulf %291, %299 : vector<2x64xf32>
    %308 = arith.addf %306, %307 : vector<2x64xf32>
    %309 = math.tanh %308 : vector<2x64xf32>
    %310 = arith.mulf %305, %309 : vector<2x64xf32>
    %cst_88 = arith.constant 0.000000e+00 : f32
    %311 = vector.broadcast %cst_88 : f32 to vector<2x64xf32>
    %312 = arith.maximumf %281, %311 : vector<2x64xf32>
    %c6 = arith.constant 6 : index
    %c0_89 = arith.constant 0 : index
    %313 = vector.load %arg28[%c6, %c0_89] : memref<20x64xf32, #tpu.memory_space<vmem>>, vector<2x64xf32>
    tpu.vector_store %arg28[%c6, %c0_89], %312 {strides = array<i32>} : memref<20x64xf32, #tpu.memory_space<vmem>>, vector<2x64xf32>,
    %cst_90 = arith.constant 0.000000e+00 : f32
    %314 = vector.broadcast %cst_90 : f32 to vector<2x64xf32>
    %315 = arith.maximumf %310, %314 : vector<2x64xf32>
    %c12 = arith.constant 12 : index
    %c0_91 = arith.constant 0 : index
    %316 = vector.load %arg29[%c12, %c0_91] : memref<20x64xf32, #tpu.memory_space<vmem>>, vector<2x64xf32>
    tpu.vector_store %arg29[%c12, %c0_91], %315 {strides = array<i32>} : memref<20x64xf32, #tpu.memory_space<vmem>>, vector<2x64xf32>,
    %317 = vector.extract_strided_slice %52 {offsets = [8, 0], sizes = [2, 256], strides = [1, 1]} : vector<20x256xf32> to vector<2x256xf32>
    %318 = arith.truncf %281 : vector<2x64xf32> to vector<2x64xbf16>
    %cst_92 = arith.constant dense<0.000000e+00> : vector<2x256xf32>
    %319 = tpu.matmul %318, %58, %cst_92 {dimension_numbers = #tpu.dot_dimension_numbers<[1], [0], [0], [1], [0, 0, 1, 1], [], []>} : vector<2x64xbf16>, vector<64x256xbf16>, vector<2x256xf32> -> vector<2x256xf32>
    %320 = arith.addf %317, %319 : vector<2x256xf32>
    %321 = vector.extract_strided_slice %320 {offsets = [0, 0], sizes = [2, 64], strides = [1, 1]} : vector<2x256xf32> to vector<2x64xf32>
    %322 = arith.negf %321 : vector<2x64xf32>
    %323 = math.exp %322 : vector<2x64xf32>
    %cst_93 = arith.constant 1.000000e+00 : f32
    %324 = vector.broadcast %cst_93 : f32 to vector<2x64xf32>
    %325 = arith.addf %324, %323 : vector<2x64xf32>
    %326 = arith.divf %324, %325 : vector<2x64xf32>
    %327 = vector.extract_strided_slice %320 {offsets = [0, 64], sizes = [2, 64], strides = [1, 1]} : vector<2x256xf32> to vector<2x64xf32>
    %328 = arith.negf %327 : vector<2x64xf32>
    %329 = math.exp %328 : vector<2x64xf32>
    %cst_94 = arith.constant 1.000000e+00 : f32
    %330 = vector.broadcast %cst_94 : f32 to vector<2x64xf32>
    %331 = arith.addf %330, %329 : vector<2x64xf32>
    %332 = arith.divf %330, %331 : vector<2x64xf32>
    %333 = vector.extract_strided_slice %320 {offsets = [0, 128], sizes = [2, 64], strides = [1, 1]} : vector<2x256xf32> to vector<2x64xf32>
    %334 = math.tanh %333 : vector<2x64xf32>
    %335 = vector.extract_strided_slice %320 {offsets = [0, 192], sizes = [2, 64], strides = [1, 1]} : vector<2x256xf32> to vector<2x64xf32>
    %336 = arith.negf %335 : vector<2x64xf32>
    %337 = math.exp %336 : vector<2x64xf32>
    %cst_95 = arith.constant 1.000000e+00 : f32
    %338 = vector.broadcast %cst_95 : f32 to vector<2x64xf32>
    %339 = arith.addf %338, %337 : vector<2x64xf32>
    %340 = arith.divf %338, %339 : vector<2x64xf32>
    %341 = arith.mulf %332, %279 : vector<2x64xf32>
    %342 = arith.mulf %326, %334 : vector<2x64xf32>
    %343 = arith.addf %341, %342 : vector<2x64xf32>
    %344 = math.tanh %343 : vector<2x64xf32>
    %345 = arith.mulf %340, %344 : vector<2x64xf32>
    %346 = vector.extract_strided_slice %57 {offsets = [10, 0], sizes = [2, 256], strides = [1, 1]} : vector<20x256xf32> to vector<2x256xf32>
    %347 = arith.truncf %310 : vector<2x64xf32> to vector<2x64xbf16>
    %cst_96 = arith.constant dense<0.000000e+00> : vector<2x256xf32>
    %348 = tpu.matmul %347, %59, %cst_96 {dimension_numbers = #tpu.dot_dimension_numbers<[1], [0], [0], [1], [0, 0, 1, 1], [], []>} : vector<2x64xbf16>, vector<64x256xbf16>, vector<2x256xf32> -> vector<2x256xf32>
    %349 = arith.addf %346, %348 : vector<2x256xf32>
    %350 = vector.extract_strided_slice %349 {offsets = [0, 0], sizes = [2, 64], strides = [1, 1]} : vector<2x256xf32> to vector<2x64xf32>
    %351 = arith.negf %350 : vector<2x64xf32>
    %352 = math.exp %351 : vector<2x64xf32>
    %cst_97 = arith.constant 1.000000e+00 : f32
    %353 = vector.broadcast %cst_97 : f32 to vector<2x64xf32>
    %354 = arith.addf %353, %352 : vector<2x64xf32>
    %355 = arith.divf %353, %354 : vector<2x64xf32>
    %356 = vector.extract_strided_slice %349 {offsets = [0, 64], sizes = [2, 64], strides = [1, 1]} : vector<2x256xf32> to vector<2x64xf32>
    %357 = arith.negf %356 : vector<2x64xf32>
    %358 = math.exp %357 : vector<2x64xf32>
    %cst_98 = arith.constant 1.000000e+00 : f32
    %359 = vector.broadcast %cst_98 : f32 to vector<2x64xf32>
    %360 = arith.addf %359, %358 : vector<2x64xf32>
    %361 = arith.divf %359, %360 : vector<2x64xf32>
    %362 = vector.extract_strided_slice %349 {offsets = [0, 128], sizes = [2, 64], strides = [1, 1]} : vector<2x256xf32> to vector<2x64xf32>
    %363 = math.tanh %362 : vector<2x64xf32>
    %364 = vector.extract_strided_slice %349 {offsets = [0, 192], sizes = [2, 64], strides = [1, 1]} : vector<2x256xf32> to vector<2x64xf32>
    %365 = arith.negf %364 : vector<2x64xf32>
    %366 = math.exp %365 : vector<2x64xf32>
    %cst_99 = arith.constant 1.000000e+00 : f32
    %367 = vector.broadcast %cst_99 : f32 to vector<2x64xf32>
    %368 = arith.addf %367, %366 : vector<2x64xf32>
    %369 = arith.divf %367, %368 : vector<2x64xf32>
    %370 = arith.mulf %361, %308 : vector<2x64xf32>
    %371 = arith.mulf %355, %363 : vector<2x64xf32>
    %372 = arith.addf %370, %371 : vector<2x64xf32>
    %373 = math.tanh %372 : vector<2x64xf32>
    %374 = arith.mulf %369, %373 : vector<2x64xf32>
    %cst_100 = arith.constant 0.000000e+00 : f32
    %375 = vector.broadcast %cst_100 : f32 to vector<2x64xf32>
    %376 = arith.maximumf %345, %375 : vector<2x64xf32>
    %c8 = arith.constant 8 : index
    %c0_101 = arith.constant 0 : index
    %377 = vector.load %arg28[%c8, %c0_101] : memref<20x64xf32, #tpu.memory_space<vmem>>, vector<2x64xf32>
    tpu.vector_store %arg28[%c8, %c0_101], %376 {strides = array<i32>} : memref<20x64xf32, #tpu.memory_space<vmem>>, vector<2x64xf32>,
    %cst_102 = arith.constant 0.000000e+00 : f32
    %378 = vector.broadcast %cst_102 : f32 to vector<2x64xf32>
    %379 = arith.maximumf %374, %378 : vector<2x64xf32>
    %c10 = arith.constant 10 : index
    %c0_103 = arith.constant 0 : index
    %380 = vector.load %arg29[%c10, %c0_103] : memref<20x64xf32, #tpu.memory_space<vmem>>, vector<2x64xf32>
    tpu.vector_store %arg29[%c10, %c0_103], %379 {strides = array<i32>} : memref<20x64xf32, #tpu.memory_space<vmem>>, vector<2x64xf32>,
    %381 = vector.extract_strided_slice %52 {offsets = [10, 0], sizes = [2, 256], strides = [1, 1]} : vector<20x256xf32> to vector<2x256xf32>
    %382 = arith.truncf %345 : vector<2x64xf32> to vector<2x64xbf16>
    %cst_104 = arith.constant dense<0.000000e+00> : vector<2x256xf32>
    %383 = tpu.matmul %382, %58, %cst_104 {dimension_numbers = #tpu.dot_dimension_numbers<[1], [0], [0], [1], [0, 0, 1, 1], [], []>} : vector<2x64xbf16>, vector<64x256xbf16>, vector<2x256xf32> -> vector<2x256xf32>
    %384 = arith.addf %381, %383 : vector<2x256xf32>
    %385 = vector.extract_strided_slice %384 {offsets = [0, 0], sizes = [2, 64], strides = [1, 1]} : vector<2x256xf32> to vector<2x64xf32>
    %386 = arith.negf %385 : vector<2x64xf32>
    %387 = math.exp %386 : vector<2x64xf32>
    %cst_105 = arith.constant 1.000000e+00 : f32
    %388 = vector.broadcast %cst_105 : f32 to vector<2x64xf32>
    %389 = arith.addf %388, %387 : vector<2x64xf32>
    %390 = arith.divf %388, %389 : vector<2x64xf32>
    %391 = vector.extract_strided_slice %384 {offsets = [0, 64], sizes = [2, 64], strides = [1, 1]} : vector<2x256xf32> to vector<2x64xf32>
    %392 = arith.negf %391 : vector<2x64xf32>
    %393 = math.exp %392 : vector<2x64xf32>
    %cst_106 = arith.constant 1.000000e+00 : f32
    %394 = vector.broadcast %cst_106 : f32 to vector<2x64xf32>
    %395 = arith.addf %394, %393 : vector<2x64xf32>
    %396 = arith.divf %394, %395 : vector<2x64xf32>
    %397 = vector.extract_strided_slice %384 {offsets = [0, 128], sizes = [2, 64], strides = [1, 1]} : vector<2x256xf32> to vector<2x64xf32>
    %398 = math.tanh %397 : vector<2x64xf32>
    %399 = vector.extract_strided_slice %384 {offsets = [0, 192], sizes = [2, 64], strides = [1, 1]} : vector<2x256xf32> to vector<2x64xf32>
    %400 = arith.negf %399 : vector<2x64xf32>
    %401 = math.exp %400 : vector<2x64xf32>
    %cst_107 = arith.constant 1.000000e+00 : f32
    %402 = vector.broadcast %cst_107 : f32 to vector<2x64xf32>
    %403 = arith.addf %402, %401 : vector<2x64xf32>
    %404 = arith.divf %402, %403 : vector<2x64xf32>
    %405 = arith.mulf %396, %343 : vector<2x64xf32>
    %406 = arith.mulf %390, %398 : vector<2x64xf32>
    %407 = arith.addf %405, %406 : vector<2x64xf32>
    %408 = math.tanh %407 : vector<2x64xf32>
    %409 = arith.mulf %404, %408 : vector<2x64xf32>
    %410 = vector.extract_strided_slice %57 {offsets = [8, 0], sizes = [2, 256], strides = [1, 1]} : vector<20x256xf32> to vector<2x256xf32>
    %411 = arith.truncf %374 : vector<2x64xf32> to vector<2x64xbf16>
    %cst_108 = arith.constant dense<0.000000e+00> : vector<2x256xf32>
    %412 = tpu.matmul %411, %59, %cst_108 {dimension_numbers = #tpu.dot_dimension_numbers<[1], [0], [0], [1], [0, 0, 1, 1], [], []>} : vector<2x64xbf16>, vector<64x256xbf16>, vector<2x256xf32> -> vector<2x256xf32>
    %413 = arith.addf %410, %412 : vector<2x256xf32>
    %414 = vector.extract_strided_slice %413 {offsets = [0, 0], sizes = [2, 64], strides = [1, 1]} : vector<2x256xf32> to vector<2x64xf32>
    %415 = arith.negf %414 : vector<2x64xf32>
    %416 = math.exp %415 : vector<2x64xf32>
    %cst_109 = arith.constant 1.000000e+00 : f32
    %417 = vector.broadcast %cst_109 : f32 to vector<2x64xf32>
    %418 = arith.addf %417, %416 : vector<2x64xf32>
    %419 = arith.divf %417, %418 : vector<2x64xf32>
    %420 = vector.extract_strided_slice %413 {offsets = [0, 64], sizes = [2, 64], strides = [1, 1]} : vector<2x256xf32> to vector<2x64xf32>
    %421 = arith.negf %420 : vector<2x64xf32>
    %422 = math.exp %421 : vector<2x64xf32>
    %cst_110 = arith.constant 1.000000e+00 : f32
    %423 = vector.broadcast %cst_110 : f32 to vector<2x64xf32>
    %424 = arith.addf %423, %422 : vector<2x64xf32>
    %425 = arith.divf %423, %424 : vector<2x64xf32>
    %426 = vector.extract_strided_slice %413 {offsets = [0, 128], sizes = [2, 64], strides = [1, 1]} : vector<2x256xf32> to vector<2x64xf32>
    %427 = math.tanh %426 : vector<2x64xf32>
    %428 = vector.extract_strided_slice %413 {offsets = [0, 192], sizes = [2, 64], strides = [1, 1]} : vector<2x256xf32> to vector<2x64xf32>
    %429 = arith.negf %428 : vector<2x64xf32>
    %430 = math.exp %429 : vector<2x64xf32>
    %cst_111 = arith.constant 1.000000e+00 : f32
    %431 = vector.broadcast %cst_111 : f32 to vector<2x64xf32>
    %432 = arith.addf %431, %430 : vector<2x64xf32>
    %433 = arith.divf %431, %432 : vector<2x64xf32>
    %434 = arith.mulf %425, %372 : vector<2x64xf32>
    %435 = arith.mulf %419, %427 : vector<2x64xf32>
    %436 = arith.addf %434, %435 : vector<2x64xf32>
    %437 = math.tanh %436 : vector<2x64xf32>
    %438 = arith.mulf %433, %437 : vector<2x64xf32>
    %cst_112 = arith.constant 0.000000e+00 : f32
    %439 = vector.broadcast %cst_112 : f32 to vector<2x64xf32>
    %440 = arith.maximumf %409, %439 : vector<2x64xf32>
    %c10_113 = arith.constant 10 : index
    %c0_114 = arith.constant 0 : index
    %441 = vector.load %arg28[%c10_113, %c0_114] : memref<20x64xf32, #tpu.memory_space<vmem>>, vector<2x64xf32>
    tpu.vector_store %arg28[%c10_113, %c0_114], %440 {strides = array<i32>} : memref<20x64xf32, #tpu.memory_space<vmem>>, vector<2x64xf32>,
    %cst_115 = arith.constant 0.000000e+00 : f32
    %442 = vector.broadcast %cst_115 : f32 to vector<2x64xf32>
    %443 = arith.maximumf %438, %442 : vector<2x64xf32>
    %c8_116 = arith.constant 8 : index
    %c0_117 = arith.constant 0 : index
    %444 = vector.load %arg29[%c8_116, %c0_117] : memref<20x64xf32, #tpu.memory_space<vmem>>, vector<2x64xf32>
    tpu.vector_store %arg29[%c8_116, %c0_117], %443 {strides = array<i32>} : memref<20x64xf32, #tpu.memory_space<vmem>>, vector<2x64xf32>,
    %445 = vector.extract_strided_slice %52 {offsets = [12, 0], sizes = [2, 256], strides = [1, 1]} : vector<20x256xf32> to vector<2x256xf32>
    %446 = arith.truncf %409 : vector<2x64xf32> to vector<2x64xbf16>
    %cst_118 = arith.constant dense<0.000000e+00> : vector<2x256xf32>
    %447 = tpu.matmul %446, %58, %cst_118 {dimension_numbers = #tpu.dot_dimension_numbers<[1], [0], [0], [1], [0, 0, 1, 1], [], []>} : vector<2x64xbf16>, vector<64x256xbf16>, vector<2x256xf32> -> vector<2x256xf32>
    %448 = arith.addf %445, %447 : vector<2x256xf32>
    %449 = vector.extract_strided_slice %448 {offsets = [0, 0], sizes = [2, 64], strides = [1, 1]} : vector<2x256xf32> to vector<2x64xf32>
    %450 = arith.negf %449 : vector<2x64xf32>
    %451 = math.exp %450 : vector<2x64xf32>
    %cst_119 = arith.constant 1.000000e+00 : f32
    %452 = vector.broadcast %cst_119 : f32 to vector<2x64xf32>
    %453 = arith.addf %452, %451 : vector<2x64xf32>
    %454 = arith.divf %452, %453 : vector<2x64xf32>
    %455 = vector.extract_strided_slice %448 {offsets = [0, 64], sizes = [2, 64], strides = [1, 1]} : vector<2x256xf32> to vector<2x64xf32>
    %456 = arith.negf %455 : vector<2x64xf32>
    %457 = math.exp %456 : vector<2x64xf32>
    %cst_120 = arith.constant 1.000000e+00 : f32
    %458 = vector.broadcast %cst_120 : f32 to vector<2x64xf32>
    %459 = arith.addf %458, %457 : vector<2x64xf32>
    %460 = arith.divf %458, %459 : vector<2x64xf32>
    %461 = vector.extract_strided_slice %448 {offsets = [0, 128], sizes = [2, 64], strides = [1, 1]} : vector<2x256xf32> to vector<2x64xf32>
    %462 = math.tanh %461 : vector<2x64xf32>
    %463 = vector.extract_strided_slice %448 {offsets = [0, 192], sizes = [2, 64], strides = [1, 1]} : vector<2x256xf32> to vector<2x64xf32>
    %464 = arith.negf %463 : vector<2x64xf32>
    %465 = math.exp %464 : vector<2x64xf32>
    %cst_121 = arith.constant 1.000000e+00 : f32
    %466 = vector.broadcast %cst_121 : f32 to vector<2x64xf32>
    %467 = arith.addf %466, %465 : vector<2x64xf32>
    %468 = arith.divf %466, %467 : vector<2x64xf32>
    %469 = arith.mulf %460, %407 : vector<2x64xf32>
    %470 = arith.mulf %454, %462 : vector<2x64xf32>
    %471 = arith.addf %469, %470 : vector<2x64xf32>
    %472 = math.tanh %471 : vector<2x64xf32>
    %473 = arith.mulf %468, %472 : vector<2x64xf32>
    %474 = vector.extract_strided_slice %57 {offsets = [6, 0], sizes = [2, 256], strides = [1, 1]} : vector<20x256xf32> to vector<2x256xf32>
    %475 = arith.truncf %438 : vector<2x64xf32> to vector<2x64xbf16>
    %cst_122 = arith.constant dense<0.000000e+00> : vector<2x256xf32>
    %476 = tpu.matmul %475, %59, %cst_122 {dimension_numbers = #tpu.dot_dimension_numbers<[1], [0], [0], [1], [0, 0, 1, 1], [], []>} : vector<2x64xbf16>, vector<64x256xbf16>, vector<2x256xf32> -> vector<2x256xf32>
    %477 = arith.addf %474, %476 : vector<2x256xf32>
    %478 = vector.extract_strided_slice %477 {offsets = [0, 0], sizes = [2, 64], strides = [1, 1]} : vector<2x256xf32> to vector<2x64xf32>
    %479 = arith.negf %478 : vector<2x64xf32>
    %480 = math.exp %479 : vector<2x64xf32>
    %cst_123 = arith.constant 1.000000e+00 : f32
    %481 = vector.broadcast %cst_123 : f32 to vector<2x64xf32>
    %482 = arith.addf %481, %480 : vector<2x64xf32>
    %483 = arith.divf %481, %482 : vector<2x64xf32>
    %484 = vector.extract_strided_slice %477 {offsets = [0, 64], sizes = [2, 64], strides = [1, 1]} : vector<2x256xf32> to vector<2x64xf32>
    %485 = arith.negf %484 : vector<2x64xf32>
    %486 = math.exp %485 : vector<2x64xf32>
    %cst_124 = arith.constant 1.000000e+00 : f32
    %487 = vector.broadcast %cst_124 : f32 to vector<2x64xf32>
    %488 = arith.addf %487, %486 : vector<2x64xf32>
    %489 = arith.divf %487, %488 : vector<2x64xf32>
    %490 = vector.extract_strided_slice %477 {offsets = [0, 128], sizes = [2, 64], strides = [1, 1]} : vector<2x256xf32> to vector<2x64xf32>
    %491 = math.tanh %490 : vector<2x64xf32>
    %492 = vector.extract_strided_slice %477 {offsets = [0, 192], sizes = [2, 64], strides = [1, 1]} : vector<2x256xf32> to vector<2x64xf32>
    %493 = arith.negf %492 : vector<2x64xf32>
    %494 = math.exp %493 : vector<2x64xf32>
    %cst_125 = arith.constant 1.000000e+00 : f32
    %495 = vector.broadcast %cst_125 : f32 to vector<2x64xf32>
    %496 = arith.addf %495, %494 : vector<2x64xf32>
    %497 = arith.divf %495, %496 : vector<2x64xf32>
    %498 = arith.mulf %489, %436 : vector<2x64xf32>
    %499 = arith.mulf %483, %491 : vector<2x64xf32>
    %500 = arith.addf %498, %499 : vector<2x64xf32>
    %501 = math.tanh %500 : vector<2x64xf32>
    %502 = arith.mulf %497, %501 : vector<2x64xf32>
    %cst_126 = arith.constant 0.000000e+00 : f32
    %503 = vector.broadcast %cst_126 : f32 to vector<2x64xf32>
    %504 = arith.maximumf %473, %503 : vector<2x64xf32>
    %c12_127 = arith.constant 12 : index
    %c0_128 = arith.constant 0 : index
    %505 = vector.load %arg28[%c12_127, %c0_128] : memref<20x64xf32, #tpu.memory_space<vmem>>, vector<2x64xf32>
    tpu.vector_store %arg28[%c12_127, %c0_128], %504 {strides = array<i32>} : memref<20x64xf32, #tpu.memory_space<vmem>>, vector<2x64xf32>,
    %cst_129 = arith.constant 0.000000e+00 : f32
    %506 = vector.broadcast %cst_129 : f32 to vector<2x64xf32>
    %507 = arith.maximumf %502, %506 : vector<2x64xf32>
    %c6_130 = arith.constant 6 : index
    %c0_131 = arith.constant 0 : index
    %508 = vector.load %arg29[%c6_130, %c0_131] : memref<20x64xf32, #tpu.memory_space<vmem>>, vector<2x64xf32>
    tpu.vector_store %arg29[%c6_130, %c0_131], %507 {strides = array<i32>} : memref<20x64xf32, #tpu.memory_space<vmem>>, vector<2x64xf32>,
    %509 = vector.extract_strided_slice %52 {offsets = [14, 0], sizes = [2, 256], strides = [1, 1]} : vector<20x256xf32> to vector<2x256xf32>
    %510 = arith.truncf %473 : vector<2x64xf32> to vector<2x64xbf16>
    %cst_132 = arith.constant dense<0.000000e+00> : vector<2x256xf32>
    %511 = tpu.matmul %510, %58, %cst_132 {dimension_numbers = #tpu.dot_dimension_numbers<[1], [0], [0], [1], [0, 0, 1, 1], [], []>} : vector<2x64xbf16>, vector<64x256xbf16>, vector<2x256xf32> -> vector<2x256xf32>
    %512 = arith.addf %509, %511 : vector<2x256xf32>
    %513 = vector.extract_strided_slice %512 {offsets = [0, 0], sizes = [2, 64], strides = [1, 1]} : vector<2x256xf32> to vector<2x64xf32>
    %514 = arith.negf %513 : vector<2x64xf32>
    %515 = math.exp %514 : vector<2x64xf32>
    %cst_133 = arith.constant 1.000000e+00 : f32
    %516 = vector.broadcast %cst_133 : f32 to vector<2x64xf32>
    %517 = arith.addf %516, %515 : vector<2x64xf32>
    %518 = arith.divf %516, %517 : vector<2x64xf32>
    %519 = vector.extract_strided_slice %512 {offsets = [0, 64], sizes = [2, 64], strides = [1, 1]} : vector<2x256xf32> to vector<2x64xf32>
    %520 = arith.negf %519 : vector<2x64xf32>
    %521 = math.exp %520 : vector<2x64xf32>
    %cst_134 = arith.constant 1.000000e+00 : f32
    %522 = vector.broadcast %cst_134 : f32 to vector<2x64xf32>
    %523 = arith.addf %522, %521 : vector<2x64xf32>
    %524 = arith.divf %522, %523 : vector<2x64xf32>
    %525 = vector.extract_strided_slice %512 {offsets = [0, 128], sizes = [2, 64], strides = [1, 1]} : vector<2x256xf32> to vector<2x64xf32>
    %526 = math.tanh %525 : vector<2x64xf32>
    %527 = vector.extract_strided_slice %512 {offsets = [0, 192], sizes = [2, 64], strides = [1, 1]} : vector<2x256xf32> to vector<2x64xf32>
    %528 = arith.negf %527 : vector<2x64xf32>
    %529 = math.exp %528 : vector<2x64xf32>
    %cst_135 = arith.constant 1.000000e+00 : f32
    %530 = vector.broadcast %cst_135 : f32 to vector<2x64xf32>
    %531 = arith.addf %530, %529 : vector<2x64xf32>
    %532 = arith.divf %530, %531 : vector<2x64xf32>
    %533 = arith.mulf %524, %471 : vector<2x64xf32>
    %534 = arith.mulf %518, %526 : vector<2x64xf32>
    %535 = arith.addf %533, %534 : vector<2x64xf32>
    %536 = math.tanh %535 : vector<2x64xf32>
    %537 = arith.mulf %532, %536 : vector<2x64xf32>
    %538 = vector.extract_strided_slice %57 {offsets = [4, 0], sizes = [2, 256], strides = [1, 1]} : vector<20x256xf32> to vector<2x256xf32>
    %539 = arith.truncf %502 : vector<2x64xf32> to vector<2x64xbf16>
    %cst_136 = arith.constant dense<0.000000e+00> : vector<2x256xf32>
    %540 = tpu.matmul %539, %59, %cst_136 {dimension_numbers = #tpu.dot_dimension_numbers<[1], [0], [0], [1], [0, 0, 1, 1], [], []>} : vector<2x64xbf16>, vector<64x256xbf16>, vector<2x256xf32> -> vector<2x256xf32>
    %541 = arith.addf %538, %540 : vector<2x256xf32>
    %542 = vector.extract_strided_slice %541 {offsets = [0, 0], sizes = [2, 64], strides = [1, 1]} : vector<2x256xf32> to vector<2x64xf32>
    %543 = arith.negf %542 : vector<2x64xf32>
    %544 = math.exp %543 : vector<2x64xf32>
    %cst_137 = arith.constant 1.000000e+00 : f32
    %545 = vector.broadcast %cst_137 : f32 to vector<2x64xf32>
    %546 = arith.addf %545, %544 : vector<2x64xf32>
    %547 = arith.divf %545, %546 : vector<2x64xf32>
    %548 = vector.extract_strided_slice %541 {offsets = [0, 64], sizes = [2, 64], strides = [1, 1]} : vector<2x256xf32> to vector<2x64xf32>
    %549 = arith.negf %548 : vector<2x64xf32>
    %550 = math.exp %549 : vector<2x64xf32>
    %cst_138 = arith.constant 1.000000e+00 : f32
    %551 = vector.broadcast %cst_138 : f32 to vector<2x64xf32>
    %552 = arith.addf %551, %550 : vector<2x64xf32>
    %553 = arith.divf %551, %552 : vector<2x64xf32>
    %554 = vector.extract_strided_slice %541 {offsets = [0, 128], sizes = [2, 64], strides = [1, 1]} : vector<2x256xf32> to vector<2x64xf32>
    %555 = math.tanh %554 : vector<2x64xf32>
    %556 = vector.extract_strided_slice %541 {offsets = [0, 192], sizes = [2, 64], strides = [1, 1]} : vector<2x256xf32> to vector<2x64xf32>
    %557 = arith.negf %556 : vector<2x64xf32>
    %558 = math.exp %557 : vector<2x64xf32>
    %cst_139 = arith.constant 1.000000e+00 : f32
    %559 = vector.broadcast %cst_139 : f32 to vector<2x64xf32>
    %560 = arith.addf %559, %558 : vector<2x64xf32>
    %561 = arith.divf %559, %560 : vector<2x64xf32>
    %562 = arith.mulf %553, %500 : vector<2x64xf32>
    %563 = arith.mulf %547, %555 : vector<2x64xf32>
    %564 = arith.addf %562, %563 : vector<2x64xf32>
    %565 = math.tanh %564 : vector<2x64xf32>
    %566 = arith.mulf %561, %565 : vector<2x64xf32>
    %cst_140 = arith.constant 0.000000e+00 : f32
    %567 = vector.broadcast %cst_140 : f32 to vector<2x64xf32>
    %568 = arith.maximumf %537, %567 : vector<2x64xf32>
    %c14_141 = arith.constant 14 : index
    %c0_142 = arith.constant 0 : index
    %569 = vector.load %arg28[%c14_141, %c0_142] : memref<20x64xf32, #tpu.memory_space<vmem>>, vector<2x64xf32>
    tpu.vector_store %arg28[%c14_141, %c0_142], %568 {strides = array<i32>} : memref<20x64xf32, #tpu.memory_space<vmem>>, vector<2x64xf32>,
    %cst_143 = arith.constant 0.000000e+00 : f32
    %570 = vector.broadcast %cst_143 : f32 to vector<2x64xf32>
    %571 = arith.maximumf %566, %570 : vector<2x64xf32>
    %c4_144 = arith.constant 4 : index
    %c0_145 = arith.constant 0 : index
    %572 = vector.load %arg29[%c4_144, %c0_145] : memref<20x64xf32, #tpu.memory_space<vmem>>, vector<2x64xf32>
    tpu.vector_store %arg29[%c4_144, %c0_145], %571 {strides = array<i32>} : memref<20x64xf32, #tpu.memory_space<vmem>>, vector<2x64xf32>,
    %573 = vector.extract_strided_slice %52 {offsets = [16, 0], sizes = [2, 256], strides = [1, 1]} : vector<20x256xf32> to vector<2x256xf32>
    %574 = arith.truncf %537 : vector<2x64xf32> to vector<2x64xbf16>
    %cst_146 = arith.constant dense<0.000000e+00> : vector<2x256xf32>
    %575 = tpu.matmul %574, %58, %cst_146 {dimension_numbers = #tpu.dot_dimension_numbers<[1], [0], [0], [1], [0, 0, 1, 1], [], []>} : vector<2x64xbf16>, vector<64x256xbf16>, vector<2x256xf32> -> vector<2x256xf32>
    %576 = arith.addf %573, %575 : vector<2x256xf32>
    %577 = vector.extract_strided_slice %576 {offsets = [0, 0], sizes = [2, 64], strides = [1, 1]} : vector<2x256xf32> to vector<2x64xf32>
    %578 = arith.negf %577 : vector<2x64xf32>
    %579 = math.exp %578 : vector<2x64xf32>
    %cst_147 = arith.constant 1.000000e+00 : f32
    %580 = vector.broadcast %cst_147 : f32 to vector<2x64xf32>
    %581 = arith.addf %580, %579 : vector<2x64xf32>
    %582 = arith.divf %580, %581 : vector<2x64xf32>
    %583 = vector.extract_strided_slice %576 {offsets = [0, 64], sizes = [2, 64], strides = [1, 1]} : vector<2x256xf32> to vector<2x64xf32>
    %584 = arith.negf %583 : vector<2x64xf32>
    %585 = math.exp %584 : vector<2x64xf32>
    %cst_148 = arith.constant 1.000000e+00 : f32
    %586 = vector.broadcast %cst_148 : f32 to vector<2x64xf32>
    %587 = arith.addf %586, %585 : vector<2x64xf32>
    %588 = arith.divf %586, %587 : vector<2x64xf32>
    %589 = vector.extract_strided_slice %576 {offsets = [0, 128], sizes = [2, 64], strides = [1, 1]} : vector<2x256xf32> to vector<2x64xf32>
    %590 = math.tanh %589 : vector<2x64xf32>
    %591 = vector.extract_strided_slice %576 {offsets = [0, 192], sizes = [2, 64], strides = [1, 1]} : vector<2x256xf32> to vector<2x64xf32>
    %592 = arith.negf %591 : vector<2x64xf32>
    %593 = math.exp %592 : vector<2x64xf32>
    %cst_149 = arith.constant 1.000000e+00 : f32
    %594 = vector.broadcast %cst_149 : f32 to vector<2x64xf32>
    %595 = arith.addf %594, %593 : vector<2x64xf32>
    %596 = arith.divf %594, %595 : vector<2x64xf32>
    %597 = arith.mulf %588, %535 : vector<2x64xf32>
    %598 = arith.mulf %582, %590 : vector<2x64xf32>
    %599 = arith.addf %597, %598 : vector<2x64xf32>
    %600 = math.tanh %599 : vector<2x64xf32>
    %601 = arith.mulf %596, %600 : vector<2x64xf32>
    %602 = vector.extract_strided_slice %57 {offsets = [2, 0], sizes = [2, 256], strides = [1, 1]} : vector<20x256xf32> to vector<2x256xf32>
    %603 = arith.truncf %566 : vector<2x64xf32> to vector<2x64xbf16>
    %cst_150 = arith.constant dense<0.000000e+00> : vector<2x256xf32>
    %604 = tpu.matmul %603, %59, %cst_150 {dimension_numbers = #tpu.dot_dimension_numbers<[1], [0], [0], [1], [0, 0, 1, 1], [], []>} : vector<2x64xbf16>, vector<64x256xbf16>, vector<2x256xf32> -> vector<2x256xf32>
    %605 = arith.addf %602, %604 : vector<2x256xf32>
    %606 = vector.extract_strided_slice %605 {offsets = [0, 0], sizes = [2, 64], strides = [1, 1]} : vector<2x256xf32> to vector<2x64xf32>
    %607 = arith.negf %606 : vector<2x64xf32>
    %608 = math.exp %607 : vector<2x64xf32>
    %cst_151 = arith.constant 1.000000e+00 : f32
    %609 = vector.broadcast %cst_151 : f32 to vector<2x64xf32>
    %610 = arith.addf %609, %608 : vector<2x64xf32>
    %611 = arith.divf %609, %610 : vector<2x64xf32>
    %612 = vector.extract_strided_slice %605 {offsets = [0, 64], sizes = [2, 64], strides = [1, 1]} : vector<2x256xf32> to vector<2x64xf32>
    %613 = arith.negf %612 : vector<2x64xf32>
    %614 = math.exp %613 : vector<2x64xf32>
    %cst_152 = arith.constant 1.000000e+00 : f32
    %615 = vector.broadcast %cst_152 : f32 to vector<2x64xf32>
    %616 = arith.addf %615, %614 : vector<2x64xf32>
    %617 = arith.divf %615, %616 : vector<2x64xf32>
    %618 = vector.extract_strided_slice %605 {offsets = [0, 128], sizes = [2, 64], strides = [1, 1]} : vector<2x256xf32> to vector<2x64xf32>
    %619 = math.tanh %618 : vector<2x64xf32>
    %620 = vector.extract_strided_slice %605 {offsets = [0, 192], sizes = [2, 64], strides = [1, 1]} : vector<2x256xf32> to vector<2x64xf32>
    %621 = arith.negf %620 : vector<2x64xf32>
    %622 = math.exp %621 : vector<2x64xf32>
    %cst_153 = arith.constant 1.000000e+00 : f32
    %623 = vector.broadcast %cst_153 : f32 to vector<2x64xf32>
    %624 = arith.addf %623, %622 : vector<2x64xf32>
    %625 = arith.divf %623, %624 : vector<2x64xf32>
    %626 = arith.mulf %617, %564 : vector<2x64xf32>
    %627 = arith.mulf %611, %619 : vector<2x64xf32>
    %628 = arith.addf %626, %627 : vector<2x64xf32>
    %629 = math.tanh %628 : vector<2x64xf32>
    %630 = arith.mulf %625, %629 : vector<2x64xf32>
    %cst_154 = arith.constant 0.000000e+00 : f32
    %631 = vector.broadcast %cst_154 : f32 to vector<2x64xf32>
    %632 = arith.maximumf %601, %631 : vector<2x64xf32>
    %c16_155 = arith.constant 16 : index
    %c0_156 = arith.constant 0 : index
    %633 = vector.load %arg28[%c16_155, %c0_156] : memref<20x64xf32, #tpu.memory_space<vmem>>, vector<2x64xf32>
    tpu.vector_store %arg28[%c16_155, %c0_156], %632 {strides = array<i32>} : memref<20x64xf32, #tpu.memory_space<vmem>>, vector<2x64xf32>,
    %cst_157 = arith.constant 0.000000e+00 : f32
    %634 = vector.broadcast %cst_157 : f32 to vector<2x64xf32>
    %635 = arith.maximumf %630, %634 : vector<2x64xf32>
    %c2_158 = arith.constant 2 : index
    %c0_159 = arith.constant 0 : index
    %636 = vector.load %arg29[%c2_158, %c0_159] : memref<20x64xf32, #tpu.memory_space<vmem>>, vector<2x64xf32>
    tpu.vector_store %arg29[%c2_158, %c0_159], %635 {strides = array<i32>} : memref<20x64xf32, #tpu.memory_space<vmem>>, vector<2x64xf32>,
    %637 = vector.extract_strided_slice %52 {offsets = [18, 0], sizes = [2, 256], strides = [1, 1]} : vector<20x256xf32> to vector<2x256xf32>
    %638 = arith.truncf %601 : vector<2x64xf32> to vector<2x64xbf16>
    %cst_160 = arith.constant dense<0.000000e+00> : vector<2x256xf32>
    %639 = tpu.matmul %638, %58, %cst_160 {dimension_numbers = #tpu.dot_dimension_numbers<[1], [0], [0], [1], [0, 0, 1, 1], [], []>} : vector<2x64xbf16>, vector<64x256xbf16>, vector<2x256xf32> -> vector<2x256xf32>
    %640 = arith.addf %637, %639 : vector<2x256xf32>
    %641 = vector.extract_strided_slice %640 {offsets = [0, 0], sizes = [2, 64], strides = [1, 1]} : vector<2x256xf32> to vector<2x64xf32>
    %642 = arith.negf %641 : vector<2x64xf32>
    %643 = math.exp %642 : vector<2x64xf32>
    %cst_161 = arith.constant 1.000000e+00 : f32
    %644 = vector.broadcast %cst_161 : f32 to vector<2x64xf32>
    %645 = arith.addf %644, %643 : vector<2x64xf32>
    %646 = arith.divf %644, %645 : vector<2x64xf32>
    %647 = vector.extract_strided_slice %640 {offsets = [0, 64], sizes = [2, 64], strides = [1, 1]} : vector<2x256xf32> to vector<2x64xf32>
    %648 = arith.negf %647 : vector<2x64xf32>
    %649 = math.exp %648 : vector<2x64xf32>
    %cst_162 = arith.constant 1.000000e+00 : f32
    %650 = vector.broadcast %cst_162 : f32 to vector<2x64xf32>
    %651 = arith.addf %650, %649 : vector<2x64xf32>
    %652 = arith.divf %650, %651 : vector<2x64xf32>
    %653 = vector.extract_strided_slice %640 {offsets = [0, 128], sizes = [2, 64], strides = [1, 1]} : vector<2x256xf32> to vector<2x64xf32>
    %654 = math.tanh %653 : vector<2x64xf32>
    %655 = vector.extract_strided_slice %640 {offsets = [0, 192], sizes = [2, 64], strides = [1, 1]} : vector<2x256xf32> to vector<2x64xf32>
    %656 = arith.negf %655 : vector<2x64xf32>
    %657 = math.exp %656 : vector<2x64xf32>
    %cst_163 = arith.constant 1.000000e+00 : f32
    %658 = vector.broadcast %cst_163 : f32 to vector<2x64xf32>
    %659 = arith.addf %658, %657 : vector<2x64xf32>
    %660 = arith.divf %658, %659 : vector<2x64xf32>
    %661 = arith.mulf %652, %599 : vector<2x64xf32>
    %662 = arith.mulf %646, %654 : vector<2x64xf32>
    %663 = arith.addf %661, %662 : vector<2x64xf32>
    %664 = math.tanh %663 : vector<2x64xf32>
    %665 = arith.mulf %660, %664 : vector<2x64xf32>
    %666 = vector.extract_strided_slice %57 {offsets = [0, 0], sizes = [2, 256], strides = [1, 1]} : vector<20x256xf32> to vector<2x256xf32>
    %667 = arith.truncf %630 : vector<2x64xf32> to vector<2x64xbf16>
    %cst_164 = arith.constant dense<0.000000e+00> : vector<2x256xf32>
    %668 = tpu.matmul %667, %59, %cst_164 {dimension_numbers = #tpu.dot_dimension_numbers<[1], [0], [0], [1], [0, 0, 1, 1], [], []>} : vector<2x64xbf16>, vector<64x256xbf16>, vector<2x256xf32> -> vector<2x256xf32>
    %669 = arith.addf %666, %668 : vector<2x256xf32>
    %670 = vector.extract_strided_slice %669 {offsets = [0, 0], sizes = [2, 64], strides = [1, 1]} : vector<2x256xf32> to vector<2x64xf32>
    %671 = arith.negf %670 : vector<2x64xf32>
    %672 = math.exp %671 : vector<2x64xf32>
    %cst_165 = arith.constant 1.000000e+00 : f32
    %673 = vector.broadcast %cst_165 : f32 to vector<2x64xf32>
    %674 = arith.addf %673, %672 : vector<2x64xf32>
    %675 = arith.divf %673, %674 : vector<2x64xf32>
    %676 = vector.extract_strided_slice %669 {offsets = [0, 64], sizes = [2, 64], strides = [1, 1]} : vector<2x256xf32> to vector<2x64xf32>
    %677 = arith.negf %676 : vector<2x64xf32>
    %678 = math.exp %677 : vector<2x64xf32>
    %cst_166 = arith.constant 1.000000e+00 : f32
    %679 = vector.broadcast %cst_166 : f32 to vector<2x64xf32>
    %680 = arith.addf %679, %678 : vector<2x64xf32>
    %681 = arith.divf %679, %680 : vector<2x64xf32>
    %682 = vector.extract_strided_slice %669 {offsets = [0, 128], sizes = [2, 64], strides = [1, 1]} : vector<2x256xf32> to vector<2x64xf32>
    %683 = math.tanh %682 : vector<2x64xf32>
    %684 = vector.extract_strided_slice %669 {offsets = [0, 192], sizes = [2, 64], strides = [1, 1]} : vector<2x256xf32> to vector<2x64xf32>
    %685 = arith.negf %684 : vector<2x64xf32>
    %686 = math.exp %685 : vector<2x64xf32>
    %cst_167 = arith.constant 1.000000e+00 : f32
    %687 = vector.broadcast %cst_167 : f32 to vector<2x64xf32>
    %688 = arith.addf %687, %686 : vector<2x64xf32>
    %689 = arith.divf %687, %688 : vector<2x64xf32>
    %690 = arith.mulf %681, %628 : vector<2x64xf32>
    %691 = arith.mulf %675, %683 : vector<2x64xf32>
    %692 = arith.addf %690, %691 : vector<2x64xf32>
    %693 = math.tanh %692 : vector<2x64xf32>
    %694 = arith.mulf %689, %693 : vector<2x64xf32>
    %cst_168 = arith.constant 0.000000e+00 : f32
    %695 = vector.broadcast %cst_168 : f32 to vector<2x64xf32>
    %696 = arith.maximumf %665, %695 : vector<2x64xf32>
    %c18_169 = arith.constant 18 : index
    %c0_170 = arith.constant 0 : index
    %697 = vector.load %arg28[%c18_169, %c0_170] : memref<20x64xf32, #tpu.memory_space<vmem>>, vector<2x64xf32>
    tpu.vector_store %arg28[%c18_169, %c0_170], %696 {strides = array<i32>} : memref<20x64xf32, #tpu.memory_space<vmem>>, vector<2x64xf32>,
    %cst_171 = arith.constant 0.000000e+00 : f32
    %698 = vector.broadcast %cst_171 : f32 to vector<2x64xf32>
    %699 = arith.maximumf %694, %698 : vector<2x64xf32>
    %c0_172 = arith.constant 0 : index
    %c0_173 = arith.constant 0 : index
    %700 = vector.load %arg29[%c0_172, %c0_173] : memref<20x64xf32, #tpu.memory_space<vmem>>, vector<2x64xf32>
    tpu.vector_store %arg29[%c0_172, %c0_173], %699 {strides = array<i32>} : memref<20x64xf32, #tpu.memory_space<vmem>>, vector<2x64xf32>,
    %c0_174 = arith.constant 0 : index
    %c0_175 = arith.constant 0 : index
    %701 = vector.load %arg28[%c0_174, %c0_175] : memref<20x64xf32, #tpu.memory_space<vmem>>, vector<20x64xf32>
    %c0_176 = arith.constant 0 : index
    %c0_177 = arith.constant 0 : index
    %702 = vector.load %arg29[%c0_176, %c0_177] : memref<20x64xf32, #tpu.memory_space<vmem>>, vector<20x64xf32>
    %703 = arith.truncf %701 : vector<20x64xf32> to vector<20x64xbf16>
    %704 = arith.truncf %702 : vector<20x64xf32> to vector<20x64xbf16>
    %c0_178 = arith.constant 0 : index
    %c0_179 = arith.constant 0 : index
    %705 = vector.load %arg15[%c0_178, %c0_179] : memref<128x128xbf16, #tpu.memory_space<vmem>>, vector<64x128xbf16>
    %cst_180 = arith.constant dense<0.000000e+00> : vector<20x128xf32>
    %706 = tpu.matmul %703, %705, %cst_180 {dimension_numbers = #tpu.dot_dimension_numbers<[1], [0], [0], [1], [0, 0, 1, 1], [], []>} : vector<20x64xbf16>, vector<64x128xbf16>, vector<20x128xf32> -> vector<20x128xf32>
    %c64 = arith.constant 64 : index
    %c0_181 = arith.constant 0 : index
    %707 = vector.load %arg15[%c64, %c0_181] : memref<128x128xbf16, #tpu.memory_space<vmem>>, vector<64x128xbf16>
    %cst_182 = arith.constant dense<0.000000e+00> : vector<20x128xf32>
    %708 = tpu.matmul %704, %707, %cst_182 {dimension_numbers = #tpu.dot_dimension_numbers<[1], [0], [0], [1], [0, 0, 1, 1], [], []>} : vector<20x64xbf16>, vector<64x128xbf16>, vector<20x128xf32> -> vector<20x128xf32>
    %709 = arith.addf %706, %708 : vector<20x128xf32>
    %c0_183 = arith.constant 0 : index
    %c0_184 = arith.constant 0 : index
    %710 = vector.load %arg17[%c0_183, %c0_184] : memref<1x128xf32, #tpu.memory_space<vmem>>, vector<1x128xf32>
    %711 = vector.broadcast %710 : vector<1x128xf32> to vector<20x128xf32>
    %712 = arith.addf %709, %711 : vector<20x128xf32>
    %c0_185 = arith.constant 0 : index
    %c0_186 = arith.constant 0 : index
    %713 = vector.load %arg18[%c0_185, %c0_186] : memref<128x128xbf16, #tpu.memory_space<vmem>>, vector<64x128xbf16>
    %cst_187 = arith.constant dense<0.000000e+00> : vector<20x128xf32>
    %714 = tpu.matmul %703, %713, %cst_187 {dimension_numbers = #tpu.dot_dimension_numbers<[1], [0], [0], [1], [0, 0, 1, 1], [], []>} : vector<20x64xbf16>, vector<64x128xbf16>, vector<20x128xf32> -> vector<20x128xf32>
    %c64_188 = arith.constant 64 : index
    %c0_189 = arith.constant 0 : index
    %715 = vector.load %arg18[%c64_188, %c0_189] : memref<128x128xbf16, #tpu.memory_space<vmem>>, vector<64x128xbf16>
    %cst_190 = arith.constant dense<0.000000e+00> : vector<20x128xf32>
    %716 = tpu.matmul %704, %715, %cst_190 {dimension_numbers = #tpu.dot_dimension_numbers<[1], [0], [0], [1], [0, 0, 1, 1], [], []>} : vector<20x64xbf16>, vector<64x128xbf16>, vector<20x128xf32> -> vector<20x128xf32>
    %717 = arith.addf %714, %716 : vector<20x128xf32>
    %c0_191 = arith.constant 0 : index
    %c0_192 = arith.constant 0 : index
    %718 = vector.load %arg20[%c0_191, %c0_192] : memref<1x128xf32, #tpu.memory_space<vmem>>, vector<1x128xf32>
    %719 = vector.broadcast %718 : vector<1x128xf32> to vector<20x128xf32>
    %720 = arith.addf %717, %719 : vector<20x128xf32>
    %c0_193 = arith.constant 0 : index
    %c0_194 = arith.constant 0 : index
    %721 = vector.load %arg16[%c0_193, %c0_194] : memref<32x128xbf16, #tpu.memory_space<vmem>>, vector<32x128xbf16>
    %c0_195 = arith.constant 0 : index
    %c0_196 = arith.constant 0 : index
    %722 = vector.load %arg19[%c0_195, %c0_196] : memref<32x128xbf16, #tpu.memory_space<vmem>>, vector<32x128xbf16>
    %cst_197 = arith.constant 0.000000e+00 : f32
    %723 = vector.broadcast %cst_197 : f32 to vector<2x128xf32>
    %cst_198 = arith.constant 0.000000e+00 : f32
    %724 = vector.broadcast %cst_198 : f32 to vector<2x32xf32>
    %725 = vector.extract_strided_slice %712 {offsets = [0, 0], sizes = [2, 128], strides = [1, 1]} : vector<20x128xf32> to vector<2x128xf32>
    %726 = arith.truncf %724 : vector<2x32xf32> to vector<2x32xbf16>
    %cst_199 = arith.constant dense<0.000000e+00> : vector<2x128xf32>
    %727 = tpu.matmul %726, %721, %cst_199 {dimension_numbers = #tpu.dot_dimension_numbers<[1], [0], [0], [1], [0, 0, 1, 1], [], []>} : vector<2x32xbf16>, vector<32x128xbf16>, vector<2x128xf32> -> vector<2x128xf32>
    %728 = arith.addf %725, %727 : vector<2x128xf32>
    %729 = vector.extract_strided_slice %728 {offsets = [0, 0], sizes = [2, 32], strides = [1, 1]} : vector<2x128xf32> to vector<2x32xf32>
    %730 = arith.negf %729 : vector<2x32xf32>
    %731 = math.exp %730 : vector<2x32xf32>
    %cst_200 = arith.constant 1.000000e+00 : f32
    %732 = vector.broadcast %cst_200 : f32 to vector<2x32xf32>
    %733 = arith.addf %732, %731 : vector<2x32xf32>
    %734 = arith.divf %732, %733 : vector<2x32xf32>
    %735 = vector.extract_strided_slice %728 {offsets = [0, 32], sizes = [2, 32], strides = [1, 1]} : vector<2x128xf32> to vector<2x32xf32>
    %736 = arith.negf %735 : vector<2x32xf32>
    %737 = math.exp %736 : vector<2x32xf32>
    %cst_201 = arith.constant 1.000000e+00 : f32
    %738 = vector.broadcast %cst_201 : f32 to vector<2x32xf32>
    %739 = arith.addf %738, %737 : vector<2x32xf32>
    %740 = arith.divf %738, %739 : vector<2x32xf32>
    %741 = vector.extract_strided_slice %728 {offsets = [0, 64], sizes = [2, 32], strides = [1, 1]} : vector<2x128xf32> to vector<2x32xf32>
    %742 = math.tanh %741 : vector<2x32xf32>
    %743 = vector.extract_strided_slice %728 {offsets = [0, 96], sizes = [2, 32], strides = [1, 1]} : vector<2x128xf32> to vector<2x32xf32>
    %744 = arith.negf %743 : vector<2x32xf32>
    %745 = math.exp %744 : vector<2x32xf32>
    %cst_202 = arith.constant 1.000000e+00 : f32
    %746 = vector.broadcast %cst_202 : f32 to vector<2x32xf32>
    %747 = arith.addf %746, %745 : vector<2x32xf32>
    %748 = arith.divf %746, %747 : vector<2x32xf32>
    %749 = arith.mulf %740, %724 : vector<2x32xf32>
    %750 = arith.mulf %734, %742 : vector<2x32xf32>
    %751 = arith.addf %749, %750 : vector<2x32xf32>
    %752 = math.tanh %751 : vector<2x32xf32>
    %753 = arith.mulf %748, %752 : vector<2x32xf32>
    %754 = vector.extract_strided_slice %720 {offsets = [18, 0], sizes = [2, 128], strides = [1, 1]} : vector<20x128xf32> to vector<2x128xf32>
    %755 = arith.truncf %724 : vector<2x32xf32> to vector<2x32xbf16>
    %cst_203 = arith.constant dense<0.000000e+00> : vector<2x128xf32>
    %756 = tpu.matmul %755, %722, %cst_203 {dimension_numbers = #tpu.dot_dimension_numbers<[1], [0], [0], [1], [0, 0, 1, 1], [], []>} : vector<2x32xbf16>, vector<32x128xbf16>, vector<2x128xf32> -> vector<2x128xf32>
    %757 = arith.addf %754, %756 : vector<2x128xf32>
    %758 = vector.extract_strided_slice %757 {offsets = [0, 0], sizes = [2, 32], strides = [1, 1]} : vector<2x128xf32> to vector<2x32xf32>
    %759 = arith.negf %758 : vector<2x32xf32>
    %760 = math.exp %759 : vector<2x32xf32>
    %cst_204 = arith.constant 1.000000e+00 : f32
    %761 = vector.broadcast %cst_204 : f32 to vector<2x32xf32>
    %762 = arith.addf %761, %760 : vector<2x32xf32>
    %763 = arith.divf %761, %762 : vector<2x32xf32>
    %764 = vector.extract_strided_slice %757 {offsets = [0, 32], sizes = [2, 32], strides = [1, 1]} : vector<2x128xf32> to vector<2x32xf32>
    %765 = arith.negf %764 : vector<2x32xf32>
    %766 = math.exp %765 : vector<2x32xf32>
    %cst_205 = arith.constant 1.000000e+00 : f32
    %767 = vector.broadcast %cst_205 : f32 to vector<2x32xf32>
    %768 = arith.addf %767, %766 : vector<2x32xf32>
    %769 = arith.divf %767, %768 : vector<2x32xf32>
    %770 = vector.extract_strided_slice %757 {offsets = [0, 64], sizes = [2, 32], strides = [1, 1]} : vector<2x128xf32> to vector<2x32xf32>
    %771 = math.tanh %770 : vector<2x32xf32>
    %772 = vector.extract_strided_slice %757 {offsets = [0, 96], sizes = [2, 32], strides = [1, 1]} : vector<2x128xf32> to vector<2x32xf32>
    %773 = arith.negf %772 : vector<2x32xf32>
    %774 = math.exp %773 : vector<2x32xf32>
    %cst_206 = arith.constant 1.000000e+00 : f32
    %775 = vector.broadcast %cst_206 : f32 to vector<2x32xf32>
    %776 = arith.addf %775, %774 : vector<2x32xf32>
    %777 = arith.divf %775, %776 : vector<2x32xf32>
    %778 = arith.mulf %769, %724 : vector<2x32xf32>
    %779 = arith.mulf %763, %771 : vector<2x32xf32>
    %780 = arith.addf %778, %779 : vector<2x32xf32>
    %781 = math.tanh %780 : vector<2x32xf32>
    %782 = arith.mulf %777, %781 : vector<2x32xf32>
    %c0_207 = arith.constant 0 : index
    %c0_208 = arith.constant 0 : index
    %783 = vector.load %arg21[%c0_207, %c0_208] : memref<640x128xbf16, #tpu.memory_space<vmem>>, vector<32x128xbf16>
    %cst_209 = arith.constant 0.000000e+00 : f32
    %784 = vector.broadcast %cst_209 : f32 to vector<2x32xf32>
    %785 = arith.maximumf %753, %784 : vector<2x32xf32>
    %786 = arith.truncf %785 : vector<2x32xf32> to vector<2x32xbf16>
    %cst_210 = arith.constant dense<0.000000e+00> : vector<2x128xf32>
    %787 = tpu.matmul %786, %783, %cst_210 {dimension_numbers = #tpu.dot_dimension_numbers<[1], [0], [0], [1], [0, 0, 1, 1], [], []>} : vector<2x32xbf16>, vector<32x128xbf16>, vector<2x128xf32> -> vector<2x128xf32>
    %788 = arith.addf %723, %787 : vector<2x128xf32>
    %c608 = arith.constant 608 : index
    %c0_211 = arith.constant 0 : index
    %789 = vector.load %arg21[%c608, %c0_211] : memref<640x128xbf16, #tpu.memory_space<vmem>>, vector<32x128xbf16>
    %cst_212 = arith.constant 0.000000e+00 : f32
    %790 = vector.broadcast %cst_212 : f32 to vector<2x32xf32>
    %791 = arith.maximumf %782, %790 : vector<2x32xf32>
    %792 = arith.truncf %791 : vector<2x32xf32> to vector<2x32xbf16>
    %cst_213 = arith.constant dense<0.000000e+00> : vector<2x128xf32>
    %793 = tpu.matmul %792, %789, %cst_213 {dimension_numbers = #tpu.dot_dimension_numbers<[1], [0], [0], [1], [0, 0, 1, 1], [], []>} : vector<2x32xbf16>, vector<32x128xbf16>, vector<2x128xf32> -> vector<2x128xf32>
    %794 = arith.addf %788, %793 : vector<2x128xf32>
    %795 = vector.extract_strided_slice %712 {offsets = [2, 0], sizes = [2, 128], strides = [1, 1]} : vector<20x128xf32> to vector<2x128xf32>
    %796 = arith.truncf %753 : vector<2x32xf32> to vector<2x32xbf16>
    %cst_214 = arith.constant dense<0.000000e+00> : vector<2x128xf32>
    %797 = tpu.matmul %796, %721, %cst_214 {dimension_numbers = #tpu.dot_dimension_numbers<[1], [0], [0], [1], [0, 0, 1, 1], [], []>} : vector<2x32xbf16>, vector<32x128xbf16>, vector<2x128xf32> -> vector<2x128xf32>
    %798 = arith.addf %795, %797 : vector<2x128xf32>
    %799 = vector.extract_strided_slice %798 {offsets = [0, 0], sizes = [2, 32], strides = [1, 1]} : vector<2x128xf32> to vector<2x32xf32>
    %800 = arith.negf %799 : vector<2x32xf32>
    %801 = math.exp %800 : vector<2x32xf32>
    %cst_215 = arith.constant 1.000000e+00 : f32
    %802 = vector.broadcast %cst_215 : f32 to vector<2x32xf32>
    %803 = arith.addf %802, %801 : vector<2x32xf32>
    %804 = arith.divf %802, %803 : vector<2x32xf32>
    %805 = vector.extract_strided_slice %798 {offsets = [0, 32], sizes = [2, 32], strides = [1, 1]} : vector<2x128xf32> to vector<2x32xf32>
    %806 = arith.negf %805 : vector<2x32xf32>
    %807 = math.exp %806 : vector<2x32xf32>
    %cst_216 = arith.constant 1.000000e+00 : f32
    %808 = vector.broadcast %cst_216 : f32 to vector<2x32xf32>
    %809 = arith.addf %808, %807 : vector<2x32xf32>
    %810 = arith.divf %808, %809 : vector<2x32xf32>
    %811 = vector.extract_strided_slice %798 {offsets = [0, 64], sizes = [2, 32], strides = [1, 1]} : vector<2x128xf32> to vector<2x32xf32>
    %812 = math.tanh %811 : vector<2x32xf32>
    %813 = vector.extract_strided_slice %798 {offsets = [0, 96], sizes = [2, 32], strides = [1, 1]} : vector<2x128xf32> to vector<2x32xf32>
    %814 = arith.negf %813 : vector<2x32xf32>
    %815 = math.exp %814 : vector<2x32xf32>
    %cst_217 = arith.constant 1.000000e+00 : f32
    %816 = vector.broadcast %cst_217 : f32 to vector<2x32xf32>
    %817 = arith.addf %816, %815 : vector<2x32xf32>
    %818 = arith.divf %816, %817 : vector<2x32xf32>
    %819 = arith.mulf %810, %751 : vector<2x32xf32>
    %820 = arith.mulf %804, %812 : vector<2x32xf32>
    %821 = arith.addf %819, %820 : vector<2x32xf32>
    %822 = math.tanh %821 : vector<2x32xf32>
    %823 = arith.mulf %818, %822 : vector<2x32xf32>
    %824 = vector.extract_strided_slice %720 {offsets = [16, 0], sizes = [2, 128], strides = [1, 1]} : vector<20x128xf32> to vector<2x128xf32>
    %825 = arith.truncf %782 : vector<2x32xf32> to vector<2x32xbf16>
    %cst_218 = arith.constant dense<0.000000e+00> : vector<2x128xf32>
    %826 = tpu.matmul %825, %722, %cst_218 {dimension_numbers = #tpu.dot_dimension_numbers<[1], [0], [0], [1], [0, 0, 1, 1], [], []>} : vector<2x32xbf16>, vector<32x128xbf16>, vector<2x128xf32> -> vector<2x128xf32>
    %827 = arith.addf %824, %826 : vector<2x128xf32>
    %828 = vector.extract_strided_slice %827 {offsets = [0, 0], sizes = [2, 32], strides = [1, 1]} : vector<2x128xf32> to vector<2x32xf32>
    %829 = arith.negf %828 : vector<2x32xf32>
    %830 = math.exp %829 : vector<2x32xf32>
    %cst_219 = arith.constant 1.000000e+00 : f32
    %831 = vector.broadcast %cst_219 : f32 to vector<2x32xf32>
    %832 = arith.addf %831, %830 : vector<2x32xf32>
    %833 = arith.divf %831, %832 : vector<2x32xf32>
    %834 = vector.extract_strided_slice %827 {offsets = [0, 32], sizes = [2, 32], strides = [1, 1]} : vector<2x128xf32> to vector<2x32xf32>
    %835 = arith.negf %834 : vector<2x32xf32>
    %836 = math.exp %835 : vector<2x32xf32>
    %cst_220 = arith.constant 1.000000e+00 : f32
    %837 = vector.broadcast %cst_220 : f32 to vector<2x32xf32>
    %838 = arith.addf %837, %836 : vector<2x32xf32>
    %839 = arith.divf %837, %838 : vector<2x32xf32>
    %840 = vector.extract_strided_slice %827 {offsets = [0, 64], sizes = [2, 32], strides = [1, 1]} : vector<2x128xf32> to vector<2x32xf32>
    %841 = math.tanh %840 : vector<2x32xf32>
    %842 = vector.extract_strided_slice %827 {offsets = [0, 96], sizes = [2, 32], strides = [1, 1]} : vector<2x128xf32> to vector<2x32xf32>
    %843 = arith.negf %842 : vector<2x32xf32>
    %844 = math.exp %843 : vector<2x32xf32>
    %cst_221 = arith.constant 1.000000e+00 : f32
    %845 = vector.broadcast %cst_221 : f32 to vector<2x32xf32>
    %846 = arith.addf %845, %844 : vector<2x32xf32>
    %847 = arith.divf %845, %846 : vector<2x32xf32>
    %848 = arith.mulf %839, %780 : vector<2x32xf32>
    %849 = arith.mulf %833, %841 : vector<2x32xf32>
    %850 = arith.addf %848, %849 : vector<2x32xf32>
    %851 = math.tanh %850 : vector<2x32xf32>
    %852 = arith.mulf %847, %851 : vector<2x32xf32>
    %c64_222 = arith.constant 64 : index
    %c0_223 = arith.constant 0 : index
    %853 = vector.load %arg21[%c64_222, %c0_223] : memref<640x128xbf16, #tpu.memory_space<vmem>>, vector<32x128xbf16>
    %cst_224 = arith.constant 0.000000e+00 : f32
    %854 = vector.broadcast %cst_224 : f32 to vector<2x32xf32>
    %855 = arith.maximumf %823, %854 : vector<2x32xf32>
    %856 = arith.truncf %855 : vector<2x32xf32> to vector<2x32xbf16>
    %cst_225 = arith.constant dense<0.000000e+00> : vector<2x128xf32>
    %857 = tpu.matmul %856, %853, %cst_225 {dimension_numbers = #tpu.dot_dimension_numbers<[1], [0], [0], [1], [0, 0, 1, 1], [], []>} : vector<2x32xbf16>, vector<32x128xbf16>, vector<2x128xf32> -> vector<2x128xf32>
    %858 = arith.addf %794, %857 : vector<2x128xf32>
    %c544 = arith.constant 544 : index
    %c0_226 = arith.constant 0 : index
    %859 = vector.load %arg21[%c544, %c0_226] : memref<640x128xbf16, #tpu.memory_space<vmem>>, vector<32x128xbf16>
    %cst_227 = arith.constant 0.000000e+00 : f32
    %860 = vector.broadcast %cst_227 : f32 to vector<2x32xf32>
    %861 = arith.maximumf %852, %860 : vector<2x32xf32>
    %862 = arith.truncf %861 : vector<2x32xf32> to vector<2x32xbf16>
    %cst_228 = arith.constant dense<0.000000e+00> : vector<2x128xf32>
    %863 = tpu.matmul %862, %859, %cst_228 {dimension_numbers = #tpu.dot_dimension_numbers<[1], [0], [0], [1], [0, 0, 1, 1], [], []>} : vector<2x32xbf16>, vector<32x128xbf16>, vector<2x128xf32> -> vector<2x128xf32>
    %864 = arith.addf %858, %863 : vector<2x128xf32>
    %865 = vector.extract_strided_slice %712 {offsets = [4, 0], sizes = [2, 128], strides = [1, 1]} : vector<20x128xf32> to vector<2x128xf32>
    %866 = arith.truncf %823 : vector<2x32xf32> to vector<2x32xbf16>
    %cst_229 = arith.constant dense<0.000000e+00> : vector<2x128xf32>
    %867 = tpu.matmul %866, %721, %cst_229 {dimension_numbers = #tpu.dot_dimension_numbers<[1], [0], [0], [1], [0, 0, 1, 1], [], []>} : vector<2x32xbf16>, vector<32x128xbf16>, vector<2x128xf32> -> vector<2x128xf32>
    %868 = arith.addf %865, %867 : vector<2x128xf32>
    %869 = vector.extract_strided_slice %868 {offsets = [0, 0], sizes = [2, 32], strides = [1, 1]} : vector<2x128xf32> to vector<2x32xf32>
    %870 = arith.negf %869 : vector<2x32xf32>
    %871 = math.exp %870 : vector<2x32xf32>
    %cst_230 = arith.constant 1.000000e+00 : f32
    %872 = vector.broadcast %cst_230 : f32 to vector<2x32xf32>
    %873 = arith.addf %872, %871 : vector<2x32xf32>
    %874 = arith.divf %872, %873 : vector<2x32xf32>
    %875 = vector.extract_strided_slice %868 {offsets = [0, 32], sizes = [2, 32], strides = [1, 1]} : vector<2x128xf32> to vector<2x32xf32>
    %876 = arith.negf %875 : vector<2x32xf32>
    %877 = math.exp %876 : vector<2x32xf32>
    %cst_231 = arith.constant 1.000000e+00 : f32
    %878 = vector.broadcast %cst_231 : f32 to vector<2x32xf32>
    %879 = arith.addf %878, %877 : vector<2x32xf32>
    %880 = arith.divf %878, %879 : vector<2x32xf32>
    %881 = vector.extract_strided_slice %868 {offsets = [0, 64], sizes = [2, 32], strides = [1, 1]} : vector<2x128xf32> to vector<2x32xf32>
    %882 = math.tanh %881 : vector<2x32xf32>
    %883 = vector.extract_strided_slice %868 {offsets = [0, 96], sizes = [2, 32], strides = [1, 1]} : vector<2x128xf32> to vector<2x32xf32>
    %884 = arith.negf %883 : vector<2x32xf32>
    %885 = math.exp %884 : vector<2x32xf32>
    %cst_232 = arith.constant 1.000000e+00 : f32
    %886 = vector.broadcast %cst_232 : f32 to vector<2x32xf32>
    %887 = arith.addf %886, %885 : vector<2x32xf32>
    %888 = arith.divf %886, %887 : vector<2x32xf32>
    %889 = arith.mulf %880, %821 : vector<2x32xf32>
    %890 = arith.mulf %874, %882 : vector<2x32xf32>
    %891 = arith.addf %889, %890 : vector<2x32xf32>
    %892 = math.tanh %891 : vector<2x32xf32>
    %893 = arith.mulf %888, %892 : vector<2x32xf32>
    %894 = vector.extract_strided_slice %720 {offsets = [14, 0], sizes = [2, 128], strides = [1, 1]} : vector<20x128xf32> to vector<2x128xf32>
    %895 = arith.truncf %852 : vector<2x32xf32> to vector<2x32xbf16>
    %cst_233 = arith.constant dense<0.000000e+00> : vector<2x128xf32>
    %896 = tpu.matmul %895, %722, %cst_233 {dimension_numbers = #tpu.dot_dimension_numbers<[1], [0], [0], [1], [0, 0, 1, 1], [], []>} : vector<2x32xbf16>, vector<32x128xbf16>, vector<2x128xf32> -> vector<2x128xf32>
    %897 = arith.addf %894, %896 : vector<2x128xf32>
    %898 = vector.extract_strided_slice %897 {offsets = [0, 0], sizes = [2, 32], strides = [1, 1]} : vector<2x128xf32> to vector<2x32xf32>
    %899 = arith.negf %898 : vector<2x32xf32>
    %900 = math.exp %899 : vector<2x32xf32>
    %cst_234 = arith.constant 1.000000e+00 : f32
    %901 = vector.broadcast %cst_234 : f32 to vector<2x32xf32>
    %902 = arith.addf %901, %900 : vector<2x32xf32>
    %903 = arith.divf %901, %902 : vector<2x32xf32>
    %904 = vector.extract_strided_slice %897 {offsets = [0, 32], sizes = [2, 32], strides = [1, 1]} : vector<2x128xf32> to vector<2x32xf32>
    %905 = arith.negf %904 : vector<2x32xf32>
    %906 = math.exp %905 : vector<2x32xf32>
    %cst_235 = arith.constant 1.000000e+00 : f32
    %907 = vector.broadcast %cst_235 : f32 to vector<2x32xf32>
    %908 = arith.addf %907, %906 : vector<2x32xf32>
    %909 = arith.divf %907, %908 : vector<2x32xf32>
    %910 = vector.extract_strided_slice %897 {offsets = [0, 64], sizes = [2, 32], strides = [1, 1]} : vector<2x128xf32> to vector<2x32xf32>
    %911 = math.tanh %910 : vector<2x32xf32>
    %912 = vector.extract_strided_slice %897 {offsets = [0, 96], sizes = [2, 32], strides = [1, 1]} : vector<2x128xf32> to vector<2x32xf32>
    %913 = arith.negf %912 : vector<2x32xf32>
    %914 = math.exp %913 : vector<2x32xf32>
    %cst_236 = arith.constant 1.000000e+00 : f32
    %915 = vector.broadcast %cst_236 : f32 to vector<2x32xf32>
    %916 = arith.addf %915, %914 : vector<2x32xf32>
    %917 = arith.divf %915, %916 : vector<2x32xf32>
    %918 = arith.mulf %909, %850 : vector<2x32xf32>
    %919 = arith.mulf %903, %911 : vector<2x32xf32>
    %920 = arith.addf %918, %919 : vector<2x32xf32>
    %921 = math.tanh %920 : vector<2x32xf32>
    %922 = arith.mulf %917, %921 : vector<2x32xf32>
    %c128 = arith.constant 128 : index
    %c0_237 = arith.constant 0 : index
    %923 = vector.load %arg21[%c128, %c0_237] : memref<640x128xbf16, #tpu.memory_space<vmem>>, vector<32x128xbf16>
    %cst_238 = arith.constant 0.000000e+00 : f32
    %924 = vector.broadcast %cst_238 : f32 to vector<2x32xf32>
    %925 = arith.maximumf %893, %924 : vector<2x32xf32>
    %926 = arith.truncf %925 : vector<2x32xf32> to vector<2x32xbf16>
    %cst_239 = arith.constant dense<0.000000e+00> : vector<2x128xf32>
    %927 = tpu.matmul %926, %923, %cst_239 {dimension_numbers = #tpu.dot_dimension_numbers<[1], [0], [0], [1], [0, 0, 1, 1], [], []>} : vector<2x32xbf16>, vector<32x128xbf16>, vector<2x128xf32> -> vector<2x128xf32>
    %928 = arith.addf %864, %927 : vector<2x128xf32>
    %c480 = arith.constant 480 : index
    %c0_240 = arith.constant 0 : index
    %929 = vector.load %arg21[%c480, %c0_240] : memref<640x128xbf16, #tpu.memory_space<vmem>>, vector<32x128xbf16>
    %cst_241 = arith.constant 0.000000e+00 : f32
    %930 = vector.broadcast %cst_241 : f32 to vector<2x32xf32>
    %931 = arith.maximumf %922, %930 : vector<2x32xf32>
    %932 = arith.truncf %931 : vector<2x32xf32> to vector<2x32xbf16>
    %cst_242 = arith.constant dense<0.000000e+00> : vector<2x128xf32>
    %933 = tpu.matmul %932, %929, %cst_242 {dimension_numbers = #tpu.dot_dimension_numbers<[1], [0], [0], [1], [0, 0, 1, 1], [], []>} : vector<2x32xbf16>, vector<32x128xbf16>, vector<2x128xf32> -> vector<2x128xf32>
    %934 = arith.addf %928, %933 : vector<2x128xf32>
    %935 = vector.extract_strided_slice %712 {offsets = [6, 0], sizes = [2, 128], strides = [1, 1]} : vector<20x128xf32> to vector<2x128xf32>
    %936 = arith.truncf %893 : vector<2x32xf32> to vector<2x32xbf16>
    %cst_243 = arith.constant dense<0.000000e+00> : vector<2x128xf32>
    %937 = tpu.matmul %936, %721, %cst_243 {dimension_numbers = #tpu.dot_dimension_numbers<[1], [0], [0], [1], [0, 0, 1, 1], [], []>} : vector<2x32xbf16>, vector<32x128xbf16>, vector<2x128xf32> -> vector<2x128xf32>
    %938 = arith.addf %935, %937 : vector<2x128xf32>
    %939 = vector.extract_strided_slice %938 {offsets = [0, 0], sizes = [2, 32], strides = [1, 1]} : vector<2x128xf32> to vector<2x32xf32>
    %940 = arith.negf %939 : vector<2x32xf32>
    %941 = math.exp %940 : vector<2x32xf32>
    %cst_244 = arith.constant 1.000000e+00 : f32
    %942 = vector.broadcast %cst_244 : f32 to vector<2x32xf32>
    %943 = arith.addf %942, %941 : vector<2x32xf32>
    %944 = arith.divf %942, %943 : vector<2x32xf32>
    %945 = vector.extract_strided_slice %938 {offsets = [0, 32], sizes = [2, 32], strides = [1, 1]} : vector<2x128xf32> to vector<2x32xf32>
    %946 = arith.negf %945 : vector<2x32xf32>
    %947 = math.exp %946 : vector<2x32xf32>
    %cst_245 = arith.constant 1.000000e+00 : f32
    %948 = vector.broadcast %cst_245 : f32 to vector<2x32xf32>
    %949 = arith.addf %948, %947 : vector<2x32xf32>
    %950 = arith.divf %948, %949 : vector<2x32xf32>
    %951 = vector.extract_strided_slice %938 {offsets = [0, 64], sizes = [2, 32], strides = [1, 1]} : vector<2x128xf32> to vector<2x32xf32>
    %952 = math.tanh %951 : vector<2x32xf32>
    %953 = vector.extract_strided_slice %938 {offsets = [0, 96], sizes = [2, 32], strides = [1, 1]} : vector<2x128xf32> to vector<2x32xf32>
    %954 = arith.negf %953 : vector<2x32xf32>
    %955 = math.exp %954 : vector<2x32xf32>
    %cst_246 = arith.constant 1.000000e+00 : f32
    %956 = vector.broadcast %cst_246 : f32 to vector<2x32xf32>
    %957 = arith.addf %956, %955 : vector<2x32xf32>
    %958 = arith.divf %956, %957 : vector<2x32xf32>
    %959 = arith.mulf %950, %891 : vector<2x32xf32>
    %960 = arith.mulf %944, %952 : vector<2x32xf32>
    %961 = arith.addf %959, %960 : vector<2x32xf32>
    %962 = math.tanh %961 : vector<2x32xf32>
    %963 = arith.mulf %958, %962 : vector<2x32xf32>
    %964 = vector.extract_strided_slice %720 {offsets = [12, 0], sizes = [2, 128], strides = [1, 1]} : vector<20x128xf32> to vector<2x128xf32>
    %965 = arith.truncf %922 : vector<2x32xf32> to vector<2x32xbf16>
    %cst_247 = arith.constant dense<0.000000e+00> : vector<2x128xf32>
    %966 = tpu.matmul %965, %722, %cst_247 {dimension_numbers = #tpu.dot_dimension_numbers<[1], [0], [0], [1], [0, 0, 1, 1], [], []>} : vector<2x32xbf16>, vector<32x128xbf16>, vector<2x128xf32> -> vector<2x128xf32>
    %967 = arith.addf %964, %966 : vector<2x128xf32>
    %968 = vector.extract_strided_slice %967 {offsets = [0, 0], sizes = [2, 32], strides = [1, 1]} : vector<2x128xf32> to vector<2x32xf32>
    %969 = arith.negf %968 : vector<2x32xf32>
    %970 = math.exp %969 : vector<2x32xf32>
    %cst_248 = arith.constant 1.000000e+00 : f32
    %971 = vector.broadcast %cst_248 : f32 to vector<2x32xf32>
    %972 = arith.addf %971, %970 : vector<2x32xf32>
    %973 = arith.divf %971, %972 : vector<2x32xf32>
    %974 = vector.extract_strided_slice %967 {offsets = [0, 32], sizes = [2, 32], strides = [1, 1]} : vector<2x128xf32> to vector<2x32xf32>
    %975 = arith.negf %974 : vector<2x32xf32>
    %976 = math.exp %975 : vector<2x32xf32>
    %cst_249 = arith.constant 1.000000e+00 : f32
    %977 = vector.broadcast %cst_249 : f32 to vector<2x32xf32>
    %978 = arith.addf %977, %976 : vector<2x32xf32>
    %979 = arith.divf %977, %978 : vector<2x32xf32>
    %980 = vector.extract_strided_slice %967 {offsets = [0, 64], sizes = [2, 32], strides = [1, 1]} : vector<2x128xf32> to vector<2x32xf32>
    %981 = math.tanh %980 : vector<2x32xf32>
    %982 = vector.extract_strided_slice %967 {offsets = [0, 96], sizes = [2, 32], strides = [1, 1]} : vector<2x128xf32> to vector<2x32xf32>
    %983 = arith.negf %982 : vector<2x32xf32>
    %984 = math.exp %983 : vector<2x32xf32>
    %cst_250 = arith.constant 1.000000e+00 : f32
    %985 = vector.broadcast %cst_250 : f32 to vector<2x32xf32>
    %986 = arith.addf %985, %984 : vector<2x32xf32>
    %987 = arith.divf %985, %986 : vector<2x32xf32>
    %988 = arith.mulf %979, %920 : vector<2x32xf32>
    %989 = arith.mulf %973, %981 : vector<2x32xf32>
    %990 = arith.addf %988, %989 : vector<2x32xf32>
    %991 = math.tanh %990 : vector<2x32xf32>
    %992 = arith.mulf %987, %991 : vector<2x32xf32>
    %c192 = arith.constant 192 : index
    %c0_251 = arith.constant 0 : index
    %993 = vector.load %arg21[%c192, %c0_251] : memref<640x128xbf16, #tpu.memory_space<vmem>>, vector<32x128xbf16>
    %cst_252 = arith.constant 0.000000e+00 : f32
    %994 = vector.broadcast %cst_252 : f32 to vector<2x32xf32>
    %995 = arith.maximumf %963, %994 : vector<2x32xf32>
    %996 = arith.truncf %995 : vector<2x32xf32> to vector<2x32xbf16>
    %cst_253 = arith.constant dense<0.000000e+00> : vector<2x128xf32>
    %997 = tpu.matmul %996, %993, %cst_253 {dimension_numbers = #tpu.dot_dimension_numbers<[1], [0], [0], [1], [0, 0, 1, 1], [], []>} : vector<2x32xbf16>, vector<32x128xbf16>, vector<2x128xf32> -> vector<2x128xf32>
    %998 = arith.addf %934, %997 : vector<2x128xf32>
    %c416 = arith.constant 416 : index
    %c0_254 = arith.constant 0 : index
    %999 = vector.load %arg21[%c416, %c0_254] : memref<640x128xbf16, #tpu.memory_space<vmem>>, vector<32x128xbf16>
    %cst_255 = arith.constant 0.000000e+00 : f32
    %1000 = vector.broadcast %cst_255 : f32 to vector<2x32xf32>
    %1001 = arith.maximumf %992, %1000 : vector<2x32xf32>
    %1002 = arith.truncf %1001 : vector<2x32xf32> to vector<2x32xbf16>
    %cst_256 = arith.constant dense<0.000000e+00> : vector<2x128xf32>
    %1003 = tpu.matmul %1002, %999, %cst_256 {dimension_numbers = #tpu.dot_dimension_numbers<[1], [0], [0], [1], [0, 0, 1, 1], [], []>} : vector<2x32xbf16>, vector<32x128xbf16>, vector<2x128xf32> -> vector<2x128xf32>
    %1004 = arith.addf %998, %1003 : vector<2x128xf32>
    %1005 = vector.extract_strided_slice %712 {offsets = [8, 0], sizes = [2, 128], strides = [1, 1]} : vector<20x128xf32> to vector<2x128xf32>
    %1006 = arith.truncf %963 : vector<2x32xf32> to vector<2x32xbf16>
    %cst_257 = arith.constant dense<0.000000e+00> : vector<2x128xf32>
    %1007 = tpu.matmul %1006, %721, %cst_257 {dimension_numbers = #tpu.dot_dimension_numbers<[1], [0], [0], [1], [0, 0, 1, 1], [], []>} : vector<2x32xbf16>, vector<32x128xbf16>, vector<2x128xf32> -> vector<2x128xf32>
    %1008 = arith.addf %1005, %1007 : vector<2x128xf32>
    %1009 = vector.extract_strided_slice %1008 {offsets = [0, 0], sizes = [2, 32], strides = [1, 1]} : vector<2x128xf32> to vector<2x32xf32>
    %1010 = arith.negf %1009 : vector<2x32xf32>
    %1011 = math.exp %1010 : vector<2x32xf32>
    %cst_258 = arith.constant 1.000000e+00 : f32
    %1012 = vector.broadcast %cst_258 : f32 to vector<2x32xf32>
    %1013 = arith.addf %1012, %1011 : vector<2x32xf32>
    %1014 = arith.divf %1012, %1013 : vector<2x32xf32>
    %1015 = vector.extract_strided_slice %1008 {offsets = [0, 32], sizes = [2, 32], strides = [1, 1]} : vector<2x128xf32> to vector<2x32xf32>
    %1016 = arith.negf %1015 : vector<2x32xf32>
    %1017 = math.exp %1016 : vector<2x32xf32>
    %cst_259 = arith.constant 1.000000e+00 : f32
    %1018 = vector.broadcast %cst_259 : f32 to vector<2x32xf32>
    %1019 = arith.addf %1018, %1017 : vector<2x32xf32>
    %1020 = arith.divf %1018, %1019 : vector<2x32xf32>
    %1021 = vector.extract_strided_slice %1008 {offsets = [0, 64], sizes = [2, 32], strides = [1, 1]} : vector<2x128xf32> to vector<2x32xf32>
    %1022 = math.tanh %1021 : vector<2x32xf32>
    %1023 = vector.extract_strided_slice %1008 {offsets = [0, 96], sizes = [2, 32], strides = [1, 1]} : vector<2x128xf32> to vector<2x32xf32>
    %1024 = arith.negf %1023 : vector<2x32xf32>
    %1025 = math.exp %1024 : vector<2x32xf32>
    %cst_260 = arith.constant 1.000000e+00 : f32
    %1026 = vector.broadcast %cst_260 : f32 to vector<2x32xf32>
    %1027 = arith.addf %1026, %1025 : vector<2x32xf32>
    %1028 = arith.divf %1026, %1027 : vector<2x32xf32>
    %1029 = arith.mulf %1020, %961 : vector<2x32xf32>
    %1030 = arith.mulf %1014, %1022 : vector<2x32xf32>
    %1031 = arith.addf %1029, %1030 : vector<2x32xf32>
    %1032 = math.tanh %1031 : vector<2x32xf32>
    %1033 = arith.mulf %1028, %1032 : vector<2x32xf32>
    %1034 = vector.extract_strided_slice %720 {offsets = [10, 0], sizes = [2, 128], strides = [1, 1]} : vector<20x128xf32> to vector<2x128xf32>
    %1035 = arith.truncf %992 : vector<2x32xf32> to vector<2x32xbf16>
    %cst_261 = arith.constant dense<0.000000e+00> : vector<2x128xf32>
    %1036 = tpu.matmul %1035, %722, %cst_261 {dimension_numbers = #tpu.dot_dimension_numbers<[1], [0], [0], [1], [0, 0, 1, 1], [], []>} : vector<2x32xbf16>, vector<32x128xbf16>, vector<2x128xf32> -> vector<2x128xf32>
    %1037 = arith.addf %1034, %1036 : vector<2x128xf32>
    %1038 = vector.extract_strided_slice %1037 {offsets = [0, 0], sizes = [2, 32], strides = [1, 1]} : vector<2x128xf32> to vector<2x32xf32>
    %1039 = arith.negf %1038 : vector<2x32xf32>
    %1040 = math.exp %1039 : vector<2x32xf32>
    %cst_262 = arith.constant 1.000000e+00 : f32
    %1041 = vector.broadcast %cst_262 : f32 to vector<2x32xf32>
    %1042 = arith.addf %1041, %1040 : vector<2x32xf32>
    %1043 = arith.divf %1041, %1042 : vector<2x32xf32>
    %1044 = vector.extract_strided_slice %1037 {offsets = [0, 32], sizes = [2, 32], strides = [1, 1]} : vector<2x128xf32> to vector<2x32xf32>
    %1045 = arith.negf %1044 : vector<2x32xf32>
    %1046 = math.exp %1045 : vector<2x32xf32>
    %cst_263 = arith.constant 1.000000e+00 : f32
    %1047 = vector.broadcast %cst_263 : f32 to vector<2x32xf32>
    %1048 = arith.addf %1047, %1046 : vector<2x32xf32>
    %1049 = arith.divf %1047, %1048 : vector<2x32xf32>
    %1050 = vector.extract_strided_slice %1037 {offsets = [0, 64], sizes = [2, 32], strides = [1, 1]} : vector<2x128xf32> to vector<2x32xf32>
    %1051 = math.tanh %1050 : vector<2x32xf32>
    %1052 = vector.extract_strided_slice %1037 {offsets = [0, 96], sizes = [2, 32], strides = [1, 1]} : vector<2x128xf32> to vector<2x32xf32>
    %1053 = arith.negf %1052 : vector<2x32xf32>
    %1054 = math.exp %1053 : vector<2x32xf32>
    %cst_264 = arith.constant 1.000000e+00 : f32
    %1055 = vector.broadcast %cst_264 : f32 to vector<2x32xf32>
    %1056 = arith.addf %1055, %1054 : vector<2x32xf32>
    %1057 = arith.divf %1055, %1056 : vector<2x32xf32>
    %1058 = arith.mulf %1049, %990 : vector<2x32xf32>
    %1059 = arith.mulf %1043, %1051 : vector<2x32xf32>
    %1060 = arith.addf %1058, %1059 : vector<2x32xf32>
    %1061 = math.tanh %1060 : vector<2x32xf32>
    %1062 = arith.mulf %1057, %1061 : vector<2x32xf32>
    %c256 = arith.constant 256 : index
    %c0_265 = arith.constant 0 : index
    %1063 = vector.load %arg21[%c256, %c0_265] : memref<640x128xbf16, #tpu.memory_space<vmem>>, vector<32x128xbf16>
    %cst_266 = arith.constant 0.000000e+00 : f32
    %1064 = vector.broadcast %cst_266 : f32 to vector<2x32xf32>
    %1065 = arith.maximumf %1033, %1064 : vector<2x32xf32>
    %1066 = arith.truncf %1065 : vector<2x32xf32> to vector<2x32xbf16>
    %cst_267 = arith.constant dense<0.000000e+00> : vector<2x128xf32>
    %1067 = tpu.matmul %1066, %1063, %cst_267 {dimension_numbers = #tpu.dot_dimension_numbers<[1], [0], [0], [1], [0, 0, 1, 1], [], []>} : vector<2x32xbf16>, vector<32x128xbf16>, vector<2x128xf32> -> vector<2x128xf32>
    %1068 = arith.addf %1004, %1067 : vector<2x128xf32>
    %c352 = arith.constant 352 : index
    %c0_268 = arith.constant 0 : index
    %1069 = vector.load %arg21[%c352, %c0_268] : memref<640x128xbf16, #tpu.memory_space<vmem>>, vector<32x128xbf16>
    %cst_269 = arith.constant 0.000000e+00 : f32
    %1070 = vector.broadcast %cst_269 : f32 to vector<2x32xf32>
    %1071 = arith.maximumf %1062, %1070 : vector<2x32xf32>
    %1072 = arith.truncf %1071 : vector<2x32xf32> to vector<2x32xbf16>
    %cst_270 = arith.constant dense<0.000000e+00> : vector<2x128xf32>
    %1073 = tpu.matmul %1072, %1069, %cst_270 {dimension_numbers = #tpu.dot_dimension_numbers<[1], [0], [0], [1], [0, 0, 1, 1], [], []>} : vector<2x32xbf16>, vector<32x128xbf16>, vector<2x128xf32> -> vector<2x128xf32>
    %1074 = arith.addf %1068, %1073 : vector<2x128xf32>
    %1075 = vector.extract_strided_slice %712 {offsets = [10, 0], sizes = [2, 128], strides = [1, 1]} : vector<20x128xf32> to vector<2x128xf32>
    %1076 = arith.truncf %1033 : vector<2x32xf32> to vector<2x32xbf16>
    %cst_271 = arith.constant dense<0.000000e+00> : vector<2x128xf32>
    %1077 = tpu.matmul %1076, %721, %cst_271 {dimension_numbers = #tpu.dot_dimension_numbers<[1], [0], [0], [1], [0, 0, 1, 1], [], []>} : vector<2x32xbf16>, vector<32x128xbf16>, vector<2x128xf32> -> vector<2x128xf32>
    %1078 = arith.addf %1075, %1077 : vector<2x128xf32>
    %1079 = vector.extract_strided_slice %1078 {offsets = [0, 0], sizes = [2, 32], strides = [1, 1]} : vector<2x128xf32> to vector<2x32xf32>
    %1080 = arith.negf %1079 : vector<2x32xf32>
    %1081 = math.exp %1080 : vector<2x32xf32>
    %cst_272 = arith.constant 1.000000e+00 : f32
    %1082 = vector.broadcast %cst_272 : f32 to vector<2x32xf32>
    %1083 = arith.addf %1082, %1081 : vector<2x32xf32>
    %1084 = arith.divf %1082, %1083 : vector<2x32xf32>
    %1085 = vector.extract_strided_slice %1078 {offsets = [0, 32], sizes = [2, 32], strides = [1, 1]} : vector<2x128xf32> to vector<2x32xf32>
    %1086 = arith.negf %1085 : vector<2x32xf32>
    %1087 = math.exp %1086 : vector<2x32xf32>
    %cst_273 = arith.constant 1.000000e+00 : f32
    %1088 = vector.broadcast %cst_273 : f32 to vector<2x32xf32>
    %1089 = arith.addf %1088, %1087 : vector<2x32xf32>
    %1090 = arith.divf %1088, %1089 : vector<2x32xf32>
    %1091 = vector.extract_strided_slice %1078 {offsets = [0, 64], sizes = [2, 32], strides = [1, 1]} : vector<2x128xf32> to vector<2x32xf32>
    %1092 = math.tanh %1091 : vector<2x32xf32>
    %1093 = vector.extract_strided_slice %1078 {offsets = [0, 96], sizes = [2, 32], strides = [1, 1]} : vector<2x128xf32> to vector<2x32xf32>
    %1094 = arith.negf %1093 : vector<2x32xf32>
    %1095 = math.exp %1094 : vector<2x32xf32>
    %cst_274 = arith.constant 1.000000e+00 : f32
    %1096 = vector.broadcast %cst_274 : f32 to vector<2x32xf32>
    %1097 = arith.addf %1096, %1095 : vector<2x32xf32>
    %1098 = arith.divf %1096, %1097 : vector<2x32xf32>
    %1099 = arith.mulf %1090, %1031 : vector<2x32xf32>
    %1100 = arith.mulf %1084, %1092 : vector<2x32xf32>
    %1101 = arith.addf %1099, %1100 : vector<2x32xf32>
    %1102 = math.tanh %1101 : vector<2x32xf32>
    %1103 = arith.mulf %1098, %1102 : vector<2x32xf32>
    %1104 = vector.extract_strided_slice %720 {offsets = [8, 0], sizes = [2, 128], strides = [1, 1]} : vector<20x128xf32> to vector<2x128xf32>
    %1105 = arith.truncf %1062 : vector<2x32xf32> to vector<2x32xbf16>
    %cst_275 = arith.constant dense<0.000000e+00> : vector<2x128xf32>
    %1106 = tpu.matmul %1105, %722, %cst_275 {dimension_numbers = #tpu.dot_dimension_numbers<[1], [0], [0], [1], [0, 0, 1, 1], [], []>} : vector<2x32xbf16>, vector<32x128xbf16>, vector<2x128xf32> -> vector<2x128xf32>
    %1107 = arith.addf %1104, %1106 : vector<2x128xf32>
    %1108 = vector.extract_strided_slice %1107 {offsets = [0, 0], sizes = [2, 32], strides = [1, 1]} : vector<2x128xf32> to vector<2x32xf32>
    %1109 = arith.negf %1108 : vector<2x32xf32>
    %1110 = math.exp %1109 : vector<2x32xf32>
    %cst_276 = arith.constant 1.000000e+00 : f32
    %1111 = vector.broadcast %cst_276 : f32 to vector<2x32xf32>
    %1112 = arith.addf %1111, %1110 : vector<2x32xf32>
    %1113 = arith.divf %1111, %1112 : vector<2x32xf32>
    %1114 = vector.extract_strided_slice %1107 {offsets = [0, 32], sizes = [2, 32], strides = [1, 1]} : vector<2x128xf32> to vector<2x32xf32>
    %1115 = arith.negf %1114 : vector<2x32xf32>
    %1116 = math.exp %1115 : vector<2x32xf32>
    %cst_277 = arith.constant 1.000000e+00 : f32
    %1117 = vector.broadcast %cst_277 : f32 to vector<2x32xf32>
    %1118 = arith.addf %1117, %1116 : vector<2x32xf32>
    %1119 = arith.divf %1117, %1118 : vector<2x32xf32>
    %1120 = vector.extract_strided_slice %1107 {offsets = [0, 64], sizes = [2, 32], strides = [1, 1]} : vector<2x128xf32> to vector<2x32xf32>
    %1121 = math.tanh %1120 : vector<2x32xf32>
    %1122 = vector.extract_strided_slice %1107 {offsets = [0, 96], sizes = [2, 32], strides = [1, 1]} : vector<2x128xf32> to vector<2x32xf32>
    %1123 = arith.negf %1122 : vector<2x32xf32>
    %1124 = math.exp %1123 : vector<2x32xf32>
    %cst_278 = arith.constant 1.000000e+00 : f32
    %1125 = vector.broadcast %cst_278 : f32 to vector<2x32xf32>
    %1126 = arith.addf %1125, %1124 : vector<2x32xf32>
    %1127 = arith.divf %1125, %1126 : vector<2x32xf32>
    %1128 = arith.mulf %1119, %1060 : vector<2x32xf32>
    %1129 = arith.mulf %1113, %1121 : vector<2x32xf32>
    %1130 = arith.addf %1128, %1129 : vector<2x32xf32>
    %1131 = math.tanh %1130 : vector<2x32xf32>
    %1132 = arith.mulf %1127, %1131 : vector<2x32xf32>
    %c320 = arith.constant 320 : index
    %c0_279 = arith.constant 0 : index
    %1133 = vector.load %arg21[%c320, %c0_279] : memref<640x128xbf16, #tpu.memory_space<vmem>>, vector<32x128xbf16>
    %cst_280 = arith.constant 0.000000e+00 : f32
    %1134 = vector.broadcast %cst_280 : f32 to vector<2x32xf32>
    %1135 = arith.maximumf %1103, %1134 : vector<2x32xf32>
    %1136 = arith.truncf %1135 : vector<2x32xf32> to vector<2x32xbf16>
    %cst_281 = arith.constant dense<0.000000e+00> : vector<2x128xf32>
    %1137 = tpu.matmul %1136, %1133, %cst_281 {dimension_numbers = #tpu.dot_dimension_numbers<[1], [0], [0], [1], [0, 0, 1, 1], [], []>} : vector<2x32xbf16>, vector<32x128xbf16>, vector<2x128xf32> -> vector<2x128xf32>
    %1138 = arith.addf %1074, %1137 : vector<2x128xf32>
    %c288 = arith.constant 288 : index
    %c0_282 = arith.constant 0 : index
    %1139 = vector.load %arg21[%c288, %c0_282] : memref<640x128xbf16, #tpu.memory_space<vmem>>, vector<32x128xbf16>
    %cst_283 = arith.constant 0.000000e+00 : f32
    %1140 = vector.broadcast %cst_283 : f32 to vector<2x32xf32>
    %1141 = arith.maximumf %1132, %1140 : vector<2x32xf32>
    %1142 = arith.truncf %1141 : vector<2x32xf32> to vector<2x32xbf16>
    %cst_284 = arith.constant dense<0.000000e+00> : vector<2x128xf32>
    %1143 = tpu.matmul %1142, %1139, %cst_284 {dimension_numbers = #tpu.dot_dimension_numbers<[1], [0], [0], [1], [0, 0, 1, 1], [], []>} : vector<2x32xbf16>, vector<32x128xbf16>, vector<2x128xf32> -> vector<2x128xf32>
    %1144 = arith.addf %1138, %1143 : vector<2x128xf32>
    %1145 = vector.extract_strided_slice %712 {offsets = [12, 0], sizes = [2, 128], strides = [1, 1]} : vector<20x128xf32> to vector<2x128xf32>
    %1146 = arith.truncf %1103 : vector<2x32xf32> to vector<2x32xbf16>
    %cst_285 = arith.constant dense<0.000000e+00> : vector<2x128xf32>
    %1147 = tpu.matmul %1146, %721, %cst_285 {dimension_numbers = #tpu.dot_dimension_numbers<[1], [0], [0], [1], [0, 0, 1, 1], [], []>} : vector<2x32xbf16>, vector<32x128xbf16>, vector<2x128xf32> -> vector<2x128xf32>
    %1148 = arith.addf %1145, %1147 : vector<2x128xf32>
    %1149 = vector.extract_strided_slice %1148 {offsets = [0, 0], sizes = [2, 32], strides = [1, 1]} : vector<2x128xf32> to vector<2x32xf32>
    %1150 = arith.negf %1149 : vector<2x32xf32>
    %1151 = math.exp %1150 : vector<2x32xf32>
    %cst_286 = arith.constant 1.000000e+00 : f32
    %1152 = vector.broadcast %cst_286 : f32 to vector<2x32xf32>
    %1153 = arith.addf %1152, %1151 : vector<2x32xf32>
    %1154 = arith.divf %1152, %1153 : vector<2x32xf32>
    %1155 = vector.extract_strided_slice %1148 {offsets = [0, 32], sizes = [2, 32], strides = [1, 1]} : vector<2x128xf32> to vector<2x32xf32>
    %1156 = arith.negf %1155 : vector<2x32xf32>
    %1157 = math.exp %1156 : vector<2x32xf32>
    %cst_287 = arith.constant 1.000000e+00 : f32
    %1158 = vector.broadcast %cst_287 : f32 to vector<2x32xf32>
    %1159 = arith.addf %1158, %1157 : vector<2x32xf32>
    %1160 = arith.divf %1158, %1159 : vector<2x32xf32>
    %1161 = vector.extract_strided_slice %1148 {offsets = [0, 64], sizes = [2, 32], strides = [1, 1]} : vector<2x128xf32> to vector<2x32xf32>
    %1162 = math.tanh %1161 : vector<2x32xf32>
    %1163 = vector.extract_strided_slice %1148 {offsets = [0, 96], sizes = [2, 32], strides = [1, 1]} : vector<2x128xf32> to vector<2x32xf32>
    %1164 = arith.negf %1163 : vector<2x32xf32>
    %1165 = math.exp %1164 : vector<2x32xf32>
    %cst_288 = arith.constant 1.000000e+00 : f32
    %1166 = vector.broadcast %cst_288 : f32 to vector<2x32xf32>
    %1167 = arith.addf %1166, %1165 : vector<2x32xf32>
    %1168 = arith.divf %1166, %1167 : vector<2x32xf32>
    %1169 = arith.mulf %1160, %1101 : vector<2x32xf32>
    %1170 = arith.mulf %1154, %1162 : vector<2x32xf32>
    %1171 = arith.addf %1169, %1170 : vector<2x32xf32>
    %1172 = math.tanh %1171 : vector<2x32xf32>
    %1173 = arith.mulf %1168, %1172 : vector<2x32xf32>
    %1174 = vector.extract_strided_slice %720 {offsets = [6, 0], sizes = [2, 128], strides = [1, 1]} : vector<20x128xf32> to vector<2x128xf32>
    %1175 = arith.truncf %1132 : vector<2x32xf32> to vector<2x32xbf16>
    %cst_289 = arith.constant dense<0.000000e+00> : vector<2x128xf32>
    %1176 = tpu.matmul %1175, %722, %cst_289 {dimension_numbers = #tpu.dot_dimension_numbers<[1], [0], [0], [1], [0, 0, 1, 1], [], []>} : vector<2x32xbf16>, vector<32x128xbf16>, vector<2x128xf32> -> vector<2x128xf32>
    %1177 = arith.addf %1174, %1176 : vector<2x128xf32>
    %1178 = vector.extract_strided_slice %1177 {offsets = [0, 0], sizes = [2, 32], strides = [1, 1]} : vector<2x128xf32> to vector<2x32xf32>
    %1179 = arith.negf %1178 : vector<2x32xf32>
    %1180 = math.exp %1179 : vector<2x32xf32>
    %cst_290 = arith.constant 1.000000e+00 : f32
    %1181 = vector.broadcast %cst_290 : f32 to vector<2x32xf32>
    %1182 = arith.addf %1181, %1180 : vector<2x32xf32>
    %1183 = arith.divf %1181, %1182 : vector<2x32xf32>
    %1184 = vector.extract_strided_slice %1177 {offsets = [0, 32], sizes = [2, 32], strides = [1, 1]} : vector<2x128xf32> to vector<2x32xf32>
    %1185 = arith.negf %1184 : vector<2x32xf32>
    %1186 = math.exp %1185 : vector<2x32xf32>
    %cst_291 = arith.constant 1.000000e+00 : f32
    %1187 = vector.broadcast %cst_291 : f32 to vector<2x32xf32>
    %1188 = arith.addf %1187, %1186 : vector<2x32xf32>
    %1189 = arith.divf %1187, %1188 : vector<2x32xf32>
    %1190 = vector.extract_strided_slice %1177 {offsets = [0, 64], sizes = [2, 32], strides = [1, 1]} : vector<2x128xf32> to vector<2x32xf32>
    %1191 = math.tanh %1190 : vector<2x32xf32>
    %1192 = vector.extract_strided_slice %1177 {offsets = [0, 96], sizes = [2, 32], strides = [1, 1]} : vector<2x128xf32> to vector<2x32xf32>
    %1193 = arith.negf %1192 : vector<2x32xf32>
    %1194 = math.exp %1193 : vector<2x32xf32>
    %cst_292 = arith.constant 1.000000e+00 : f32
    %1195 = vector.broadcast %cst_292 : f32 to vector<2x32xf32>
    %1196 = arith.addf %1195, %1194 : vector<2x32xf32>
    %1197 = arith.divf %1195, %1196 : vector<2x32xf32>
    %1198 = arith.mulf %1189, %1130 : vector<2x32xf32>
    %1199 = arith.mulf %1183, %1191 : vector<2x32xf32>
    %1200 = arith.addf %1198, %1199 : vector<2x32xf32>
    %1201 = math.tanh %1200 : vector<2x32xf32>
    %1202 = arith.mulf %1197, %1201 : vector<2x32xf32>
    %c384 = arith.constant 384 : index
    %c0_293 = arith.constant 0 : index
    %1203 = vector.load %arg21[%c384, %c0_293] : memref<640x128xbf16, #tpu.memory_space<vmem>>, vector<32x128xbf16>
    %cst_294 = arith.constant 0.000000e+00 : f32
    %1204 = vector.broadcast %cst_294 : f32 to vector<2x32xf32>
    %1205 = arith.maximumf %1173, %1204 : vector<2x32xf32>
    %1206 = arith.truncf %1205 : vector<2x32xf32> to vector<2x32xbf16>
    %cst_295 = arith.constant dense<0.000000e+00> : vector<2x128xf32>
    %1207 = tpu.matmul %1206, %1203, %cst_295 {dimension_numbers = #tpu.dot_dimension_numbers<[1], [0], [0], [1], [0, 0, 1, 1], [], []>} : vector<2x32xbf16>, vector<32x128xbf16>, vector<2x128xf32> -> vector<2x128xf32>
    %1208 = arith.addf %1144, %1207 : vector<2x128xf32>
    %c224 = arith.constant 224 : index
    %c0_296 = arith.constant 0 : index
    %1209 = vector.load %arg21[%c224, %c0_296] : memref<640x128xbf16, #tpu.memory_space<vmem>>, vector<32x128xbf16>
    %cst_297 = arith.constant 0.000000e+00 : f32
    %1210 = vector.broadcast %cst_297 : f32 to vector<2x32xf32>
    %1211 = arith.maximumf %1202, %1210 : vector<2x32xf32>
    %1212 = arith.truncf %1211 : vector<2x32xf32> to vector<2x32xbf16>
    %cst_298 = arith.constant dense<0.000000e+00> : vector<2x128xf32>
    %1213 = tpu.matmul %1212, %1209, %cst_298 {dimension_numbers = #tpu.dot_dimension_numbers<[1], [0], [0], [1], [0, 0, 1, 1], [], []>} : vector<2x32xbf16>, vector<32x128xbf16>, vector<2x128xf32> -> vector<2x128xf32>
    %1214 = arith.addf %1208, %1213 : vector<2x128xf32>
    %1215 = vector.extract_strided_slice %712 {offsets = [14, 0], sizes = [2, 128], strides = [1, 1]} : vector<20x128xf32> to vector<2x128xf32>
    %1216 = arith.truncf %1173 : vector<2x32xf32> to vector<2x32xbf16>
    %cst_299 = arith.constant dense<0.000000e+00> : vector<2x128xf32>
    %1217 = tpu.matmul %1216, %721, %cst_299 {dimension_numbers = #tpu.dot_dimension_numbers<[1], [0], [0], [1], [0, 0, 1, 1], [], []>} : vector<2x32xbf16>, vector<32x128xbf16>, vector<2x128xf32> -> vector<2x128xf32>
    %1218 = arith.addf %1215, %1217 : vector<2x128xf32>
    %1219 = vector.extract_strided_slice %1218 {offsets = [0, 0], sizes = [2, 32], strides = [1, 1]} : vector<2x128xf32> to vector<2x32xf32>
    %1220 = arith.negf %1219 : vector<2x32xf32>
    %1221 = math.exp %1220 : vector<2x32xf32>
    %cst_300 = arith.constant 1.000000e+00 : f32
    %1222 = vector.broadcast %cst_300 : f32 to vector<2x32xf32>
    %1223 = arith.addf %1222, %1221 : vector<2x32xf32>
    %1224 = arith.divf %1222, %1223 : vector<2x32xf32>
    %1225 = vector.extract_strided_slice %1218 {offsets = [0, 32], sizes = [2, 32], strides = [1, 1]} : vector<2x128xf32> to vector<2x32xf32>
    %1226 = arith.negf %1225 : vector<2x32xf32>
    %1227 = math.exp %1226 : vector<2x32xf32>
    %cst_301 = arith.constant 1.000000e+00 : f32
    %1228 = vector.broadcast %cst_301 : f32 to vector<2x32xf32>
    %1229 = arith.addf %1228, %1227 : vector<2x32xf32>
    %1230 = arith.divf %1228, %1229 : vector<2x32xf32>
    %1231 = vector.extract_strided_slice %1218 {offsets = [0, 64], sizes = [2, 32], strides = [1, 1]} : vector<2x128xf32> to vector<2x32xf32>
    %1232 = math.tanh %1231 : vector<2x32xf32>
    %1233 = vector.extract_strided_slice %1218 {offsets = [0, 96], sizes = [2, 32], strides = [1, 1]} : vector<2x128xf32> to vector<2x32xf32>
    %1234 = arith.negf %1233 : vector<2x32xf32>
    %1235 = math.exp %1234 : vector<2x32xf32>
    %cst_302 = arith.constant 1.000000e+00 : f32
    %1236 = vector.broadcast %cst_302 : f32 to vector<2x32xf32>
    %1237 = arith.addf %1236, %1235 : vector<2x32xf32>
    %1238 = arith.divf %1236, %1237 : vector<2x32xf32>
    %1239 = arith.mulf %1230, %1171 : vector<2x32xf32>
    %1240 = arith.mulf %1224, %1232 : vector<2x32xf32>
    %1241 = arith.addf %1239, %1240 : vector<2x32xf32>
    %1242 = math.tanh %1241 : vector<2x32xf32>
    %1243 = arith.mulf %1238, %1242 : vector<2x32xf32>
    %1244 = vector.extract_strided_slice %720 {offsets = [4, 0], sizes = [2, 128], strides = [1, 1]} : vector<20x128xf32> to vector<2x128xf32>
    %1245 = arith.truncf %1202 : vector<2x32xf32> to vector<2x32xbf16>
    %cst_303 = arith.constant dense<0.000000e+00> : vector<2x128xf32>
    %1246 = tpu.matmul %1245, %722, %cst_303 {dimension_numbers = #tpu.dot_dimension_numbers<[1], [0], [0], [1], [0, 0, 1, 1], [], []>} : vector<2x32xbf16>, vector<32x128xbf16>, vector<2x128xf32> -> vector<2x128xf32>
    %1247 = arith.addf %1244, %1246 : vector<2x128xf32>
    %1248 = vector.extract_strided_slice %1247 {offsets = [0, 0], sizes = [2, 32], strides = [1, 1]} : vector<2x128xf32> to vector<2x32xf32>
    %1249 = arith.negf %1248 : vector<2x32xf32>
    %1250 = math.exp %1249 : vector<2x32xf32>
    %cst_304 = arith.constant 1.000000e+00 : f32
    %1251 = vector.broadcast %cst_304 : f32 to vector<2x32xf32>
    %1252 = arith.addf %1251, %1250 : vector<2x32xf32>
    %1253 = arith.divf %1251, %1252 : vector<2x32xf32>
    %1254 = vector.extract_strided_slice %1247 {offsets = [0, 32], sizes = [2, 32], strides = [1, 1]} : vector<2x128xf32> to vector<2x32xf32>
    %1255 = arith.negf %1254 : vector<2x32xf32>
    %1256 = math.exp %1255 : vector<2x32xf32>
    %cst_305 = arith.constant 1.000000e+00 : f32
    %1257 = vector.broadcast %cst_305 : f32 to vector<2x32xf32>
    %1258 = arith.addf %1257, %1256 : vector<2x32xf32>
    %1259 = arith.divf %1257, %1258 : vector<2x32xf32>
    %1260 = vector.extract_strided_slice %1247 {offsets = [0, 64], sizes = [2, 32], strides = [1, 1]} : vector<2x128xf32> to vector<2x32xf32>
    %1261 = math.tanh %1260 : vector<2x32xf32>
    %1262 = vector.extract_strided_slice %1247 {offsets = [0, 96], sizes = [2, 32], strides = [1, 1]} : vector<2x128xf32> to vector<2x32xf32>
    %1263 = arith.negf %1262 : vector<2x32xf32>
    %1264 = math.exp %1263 : vector<2x32xf32>
    %cst_306 = arith.constant 1.000000e+00 : f32
    %1265 = vector.broadcast %cst_306 : f32 to vector<2x32xf32>
    %1266 = arith.addf %1265, %1264 : vector<2x32xf32>
    %1267 = arith.divf %1265, %1266 : vector<2x32xf32>
    %1268 = arith.mulf %1259, %1200 : vector<2x32xf32>
    %1269 = arith.mulf %1253, %1261 : vector<2x32xf32>
    %1270 = arith.addf %1268, %1269 : vector<2x32xf32>
    %1271 = math.tanh %1270 : vector<2x32xf32>
    %1272 = arith.mulf %1267, %1271 : vector<2x32xf32>
    %c448 = arith.constant 448 : index
    %c0_307 = arith.constant 0 : index
    %1273 = vector.load %arg21[%c448, %c0_307] : memref<640x128xbf16, #tpu.memory_space<vmem>>, vector<32x128xbf16>
    %cst_308 = arith.constant 0.000000e+00 : f32
    %1274 = vector.broadcast %cst_308 : f32 to vector<2x32xf32>
    %1275 = arith.maximumf %1243, %1274 : vector<2x32xf32>
    %1276 = arith.truncf %1275 : vector<2x32xf32> to vector<2x32xbf16>
    %cst_309 = arith.constant dense<0.000000e+00> : vector<2x128xf32>
    %1277 = tpu.matmul %1276, %1273, %cst_309 {dimension_numbers = #tpu.dot_dimension_numbers<[1], [0], [0], [1], [0, 0, 1, 1], [], []>} : vector<2x32xbf16>, vector<32x128xbf16>, vector<2x128xf32> -> vector<2x128xf32>
    %1278 = arith.addf %1214, %1277 : vector<2x128xf32>
    %c160 = arith.constant 160 : index
    %c0_310 = arith.constant 0 : index
    %1279 = vector.load %arg21[%c160, %c0_310] : memref<640x128xbf16, #tpu.memory_space<vmem>>, vector<32x128xbf16>
    %cst_311 = arith.constant 0.000000e+00 : f32
    %1280 = vector.broadcast %cst_311 : f32 to vector<2x32xf32>
    %1281 = arith.maximumf %1272, %1280 : vector<2x32xf32>
    %1282 = arith.truncf %1281 : vector<2x32xf32> to vector<2x32xbf16>
    %cst_312 = arith.constant dense<0.000000e+00> : vector<2x128xf32>
    %1283 = tpu.matmul %1282, %1279, %cst_312 {dimension_numbers = #tpu.dot_dimension_numbers<[1], [0], [0], [1], [0, 0, 1, 1], [], []>} : vector<2x32xbf16>, vector<32x128xbf16>, vector<2x128xf32> -> vector<2x128xf32>
    %1284 = arith.addf %1278, %1283 : vector<2x128xf32>
    %1285 = vector.extract_strided_slice %712 {offsets = [16, 0], sizes = [2, 128], strides = [1, 1]} : vector<20x128xf32> to vector<2x128xf32>
    %1286 = arith.truncf %1243 : vector<2x32xf32> to vector<2x32xbf16>
    %cst_313 = arith.constant dense<0.000000e+00> : vector<2x128xf32>
    %1287 = tpu.matmul %1286, %721, %cst_313 {dimension_numbers = #tpu.dot_dimension_numbers<[1], [0], [0], [1], [0, 0, 1, 1], [], []>} : vector<2x32xbf16>, vector<32x128xbf16>, vector<2x128xf32> -> vector<2x128xf32>
    %1288 = arith.addf %1285, %1287 : vector<2x128xf32>
    %1289 = vector.extract_strided_slice %1288 {offsets = [0, 0], sizes = [2, 32], strides = [1, 1]} : vector<2x128xf32> to vector<2x32xf32>
    %1290 = arith.negf %1289 : vector<2x32xf32>
    %1291 = math.exp %1290 : vector<2x32xf32>
    %cst_314 = arith.constant 1.000000e+00 : f32
    %1292 = vector.broadcast %cst_314 : f32 to vector<2x32xf32>
    %1293 = arith.addf %1292, %1291 : vector<2x32xf32>
    %1294 = arith.divf %1292, %1293 : vector<2x32xf32>
    %1295 = vector.extract_strided_slice %1288 {offsets = [0, 32], sizes = [2, 32], strides = [1, 1]} : vector<2x128xf32> to vector<2x32xf32>
    %1296 = arith.negf %1295 : vector<2x32xf32>
    %1297 = math.exp %1296 : vector<2x32xf32>
    %cst_315 = arith.constant 1.000000e+00 : f32
    %1298 = vector.broadcast %cst_315 : f32 to vector<2x32xf32>
    %1299 = arith.addf %1298, %1297 : vector<2x32xf32>
    %1300 = arith.divf %1298, %1299 : vector<2x32xf32>
    %1301 = vector.extract_strided_slice %1288 {offsets = [0, 64], sizes = [2, 32], strides = [1, 1]} : vector<2x128xf32> to vector<2x32xf32>
    %1302 = math.tanh %1301 : vector<2x32xf32>
    %1303 = vector.extract_strided_slice %1288 {offsets = [0, 96], sizes = [2, 32], strides = [1, 1]} : vector<2x128xf32> to vector<2x32xf32>
    %1304 = arith.negf %1303 : vector<2x32xf32>
    %1305 = math.exp %1304 : vector<2x32xf32>
    %cst_316 = arith.constant 1.000000e+00 : f32
    %1306 = vector.broadcast %cst_316 : f32 to vector<2x32xf32>
    %1307 = arith.addf %1306, %1305 : vector<2x32xf32>
    %1308 = arith.divf %1306, %1307 : vector<2x32xf32>
    %1309 = arith.mulf %1300, %1241 : vector<2x32xf32>
    %1310 = arith.mulf %1294, %1302 : vector<2x32xf32>
    %1311 = arith.addf %1309, %1310 : vector<2x32xf32>
    %1312 = math.tanh %1311 : vector<2x32xf32>
    %1313 = arith.mulf %1308, %1312 : vector<2x32xf32>
    %1314 = vector.extract_strided_slice %720 {offsets = [2, 0], sizes = [2, 128], strides = [1, 1]} : vector<20x128xf32> to vector<2x128xf32>
    %1315 = arith.truncf %1272 : vector<2x32xf32> to vector<2x32xbf16>
    %cst_317 = arith.constant dense<0.000000e+00> : vector<2x128xf32>
    %1316 = tpu.matmul %1315, %722, %cst_317 {dimension_numbers = #tpu.dot_dimension_numbers<[1], [0], [0], [1], [0, 0, 1, 1], [], []>} : vector<2x32xbf16>, vector<32x128xbf16>, vector<2x128xf32> -> vector<2x128xf32>
    %1317 = arith.addf %1314, %1316 : vector<2x128xf32>
    %1318 = vector.extract_strided_slice %1317 {offsets = [0, 0], sizes = [2, 32], strides = [1, 1]} : vector<2x128xf32> to vector<2x32xf32>
    %1319 = arith.negf %1318 : vector<2x32xf32>
    %1320 = math.exp %1319 : vector<2x32xf32>
    %cst_318 = arith.constant 1.000000e+00 : f32
    %1321 = vector.broadcast %cst_318 : f32 to vector<2x32xf32>
    %1322 = arith.addf %1321, %1320 : vector<2x32xf32>
    %1323 = arith.divf %1321, %1322 : vector<2x32xf32>
    %1324 = vector.extract_strided_slice %1317 {offsets = [0, 32], sizes = [2, 32], strides = [1, 1]} : vector<2x128xf32> to vector<2x32xf32>
    %1325 = arith.negf %1324 : vector<2x32xf32>
    %1326 = math.exp %1325 : vector<2x32xf32>
    %cst_319 = arith.constant 1.000000e+00 : f32
    %1327 = vector.broadcast %cst_319 : f32 to vector<2x32xf32>
    %1328 = arith.addf %1327, %1326 : vector<2x32xf32>
    %1329 = arith.divf %1327, %1328 : vector<2x32xf32>
    %1330 = vector.extract_strided_slice %1317 {offsets = [0, 64], sizes = [2, 32], strides = [1, 1]} : vector<2x128xf32> to vector<2x32xf32>
    %1331 = math.tanh %1330 : vector<2x32xf32>
    %1332 = vector.extract_strided_slice %1317 {offsets = [0, 96], sizes = [2, 32], strides = [1, 1]} : vector<2x128xf32> to vector<2x32xf32>
    %1333 = arith.negf %1332 : vector<2x32xf32>
    %1334 = math.exp %1333 : vector<2x32xf32>
    %cst_320 = arith.constant 1.000000e+00 : f32
    %1335 = vector.broadcast %cst_320 : f32 to vector<2x32xf32>
    %1336 = arith.addf %1335, %1334 : vector<2x32xf32>
    %1337 = arith.divf %1335, %1336 : vector<2x32xf32>
    %1338 = arith.mulf %1329, %1270 : vector<2x32xf32>
    %1339 = arith.mulf %1323, %1331 : vector<2x32xf32>
    %1340 = arith.addf %1338, %1339 : vector<2x32xf32>
    %1341 = math.tanh %1340 : vector<2x32xf32>
    %1342 = arith.mulf %1337, %1341 : vector<2x32xf32>
    %c512 = arith.constant 512 : index
    %c0_321 = arith.constant 0 : index
    %1343 = vector.load %arg21[%c512, %c0_321] : memref<640x128xbf16, #tpu.memory_space<vmem>>, vector<32x128xbf16>
    %cst_322 = arith.constant 0.000000e+00 : f32
    %1344 = vector.broadcast %cst_322 : f32 to vector<2x32xf32>
    %1345 = arith.maximumf %1313, %1344 : vector<2x32xf32>
    %1346 = arith.truncf %1345 : vector<2x32xf32> to vector<2x32xbf16>
    %cst_323 = arith.constant dense<0.000000e+00> : vector<2x128xf32>
    %1347 = tpu.matmul %1346, %1343, %cst_323 {dimension_numbers = #tpu.dot_dimension_numbers<[1], [0], [0], [1], [0, 0, 1, 1], [], []>} : vector<2x32xbf16>, vector<32x128xbf16>, vector<2x128xf32> -> vector<2x128xf32>
    %1348 = arith.addf %1284, %1347 : vector<2x128xf32>
    %c96 = arith.constant 96 : index
    %c0_324 = arith.constant 0 : index
    %1349 = vector.load %arg21[%c96, %c0_324] : memref<640x128xbf16, #tpu.memory_space<vmem>>, vector<32x128xbf16>
    %cst_325 = arith.constant 0.000000e+00 : f32
    %1350 = vector.broadcast %cst_325 : f32 to vector<2x32xf32>
    %1351 = arith.maximumf %1342, %1350 : vector<2x32xf32>
    %1352 = arith.truncf %1351 : vector<2x32xf32> to vector<2x32xbf16>
    %cst_326 = arith.constant dense<0.000000e+00> : vector<2x128xf32>
    %1353 = tpu.matmul %1352, %1349, %cst_326 {dimension_numbers = #tpu.dot_dimension_numbers<[1], [0], [0], [1], [0, 0, 1, 1], [], []>} : vector<2x32xbf16>, vector<32x128xbf16>, vector<2x128xf32> -> vector<2x128xf32>
    %1354 = arith.addf %1348, %1353 : vector<2x128xf32>
    %1355 = vector.extract_strided_slice %712 {offsets = [18, 0], sizes = [2, 128], strides = [1, 1]} : vector<20x128xf32> to vector<2x128xf32>
    %1356 = arith.truncf %1313 : vector<2x32xf32> to vector<2x32xbf16>
    %cst_327 = arith.constant dense<0.000000e+00> : vector<2x128xf32>
    %1357 = tpu.matmul %1356, %721, %cst_327 {dimension_numbers = #tpu.dot_dimension_numbers<[1], [0], [0], [1], [0, 0, 1, 1], [], []>} : vector<2x32xbf16>, vector<32x128xbf16>, vector<2x128xf32> -> vector<2x128xf32>
    %1358 = arith.addf %1355, %1357 : vector<2x128xf32>
    %1359 = vector.extract_strided_slice %1358 {offsets = [0, 0], sizes = [2, 32], strides = [1, 1]} : vector<2x128xf32> to vector<2x32xf32>
    %1360 = arith.negf %1359 : vector<2x32xf32>
    %1361 = math.exp %1360 : vector<2x32xf32>
    %cst_328 = arith.constant 1.000000e+00 : f32
    %1362 = vector.broadcast %cst_328 : f32 to vector<2x32xf32>
    %1363 = arith.addf %1362, %1361 : vector<2x32xf32>
    %1364 = arith.divf %1362, %1363 : vector<2x32xf32>
    %1365 = vector.extract_strided_slice %1358 {offsets = [0, 32], sizes = [2, 32], strides = [1, 1]} : vector<2x128xf32> to vector<2x32xf32>
    %1366 = arith.negf %1365 : vector<2x32xf32>
    %1367 = math.exp %1366 : vector<2x32xf32>
    %cst_329 = arith.constant 1.000000e+00 : f32
    %1368 = vector.broadcast %cst_329 : f32 to vector<2x32xf32>
    %1369 = arith.addf %1368, %1367 : vector<2x32xf32>
    %1370 = arith.divf %1368, %1369 : vector<2x32xf32>
    %1371 = vector.extract_strided_slice %1358 {offsets = [0, 64], sizes = [2, 32], strides = [1, 1]} : vector<2x128xf32> to vector<2x32xf32>
    %1372 = math.tanh %1371 : vector<2x32xf32>
    %1373 = vector.extract_strided_slice %1358 {offsets = [0, 96], sizes = [2, 32], strides = [1, 1]} : vector<2x128xf32> to vector<2x32xf32>
    %1374 = arith.negf %1373 : vector<2x32xf32>
    %1375 = math.exp %1374 : vector<2x32xf32>
    %cst_330 = arith.constant 1.000000e+00 : f32
    %1376 = vector.broadcast %cst_330 : f32 to vector<2x32xf32>
    %1377 = arith.addf %1376, %1375 : vector<2x32xf32>
    %1378 = arith.divf %1376, %1377 : vector<2x32xf32>
    %1379 = arith.mulf %1370, %1311 : vector<2x32xf32>
    %1380 = arith.mulf %1364, %1372 : vector<2x32xf32>
    %1381 = arith.addf %1379, %1380 : vector<2x32xf32>
    %1382 = math.tanh %1381 : vector<2x32xf32>
    %1383 = arith.mulf %1378, %1382 : vector<2x32xf32>
    %1384 = vector.extract_strided_slice %720 {offsets = [0, 0], sizes = [2, 128], strides = [1, 1]} : vector<20x128xf32> to vector<2x128xf32>
    %1385 = arith.truncf %1342 : vector<2x32xf32> to vector<2x32xbf16>
    %cst_331 = arith.constant dense<0.000000e+00> : vector<2x128xf32>
    %1386 = tpu.matmul %1385, %722, %cst_331 {dimension_numbers = #tpu.dot_dimension_numbers<[1], [0], [0], [1], [0, 0, 1, 1], [], []>} : vector<2x32xbf16>, vector<32x128xbf16>, vector<2x128xf32> -> vector<2x128xf32>
    %1387 = arith.addf %1384, %1386 : vector<2x128xf32>
    %1388 = vector.extract_strided_slice %1387 {offsets = [0, 0], sizes = [2, 32], strides = [1, 1]} : vector<2x128xf32> to vector<2x32xf32>
    %1389 = arith.negf %1388 : vector<2x32xf32>
    %1390 = math.exp %1389 : vector<2x32xf32>
    %cst_332 = arith.constant 1.000000e+00 : f32
    %1391 = vector.broadcast %cst_332 : f32 to vector<2x32xf32>
    %1392 = arith.addf %1391, %1390 : vector<2x32xf32>
    %1393 = arith.divf %1391, %1392 : vector<2x32xf32>
    %1394 = vector.extract_strided_slice %1387 {offsets = [0, 32], sizes = [2, 32], strides = [1, 1]} : vector<2x128xf32> to vector<2x32xf32>
    %1395 = arith.negf %1394 : vector<2x32xf32>
    %1396 = math.exp %1395 : vector<2x32xf32>
    %cst_333 = arith.constant 1.000000e+00 : f32
    %1397 = vector.broadcast %cst_333 : f32 to vector<2x32xf32>
    %1398 = arith.addf %1397, %1396 : vector<2x32xf32>
    %1399 = arith.divf %1397, %1398 : vector<2x32xf32>
    %1400 = vector.extract_strided_slice %1387 {offsets = [0, 64], sizes = [2, 32], strides = [1, 1]} : vector<2x128xf32> to vector<2x32xf32>
    %1401 = math.tanh %1400 : vector<2x32xf32>
    %1402 = vector.extract_strided_slice %1387 {offsets = [0, 96], sizes = [2, 32], strides = [1, 1]} : vector<2x128xf32> to vector<2x32xf32>
    %1403 = arith.negf %1402 : vector<2x32xf32>
    %1404 = math.exp %1403 : vector<2x32xf32>
    %cst_334 = arith.constant 1.000000e+00 : f32
    %1405 = vector.broadcast %cst_334 : f32 to vector<2x32xf32>
    %1406 = arith.addf %1405, %1404 : vector<2x32xf32>
    %1407 = arith.divf %1405, %1406 : vector<2x32xf32>
    %1408 = arith.mulf %1399, %1340 : vector<2x32xf32>
    %1409 = arith.mulf %1393, %1401 : vector<2x32xf32>
    %1410 = arith.addf %1408, %1409 : vector<2x32xf32>
    %1411 = math.tanh %1410 : vector<2x32xf32>
    %1412 = arith.mulf %1407, %1411 : vector<2x32xf32>
    %c576 = arith.constant 576 : index
    %c0_335 = arith.constant 0 : index
    %1413 = vector.load %arg21[%c576, %c0_335] : memref<640x128xbf16, #tpu.memory_space<vmem>>, vector<32x128xbf16>
    %cst_336 = arith.constant 0.000000e+00 : f32
    %1414 = vector.broadcast %cst_336 : f32 to vector<2x32xf32>
    %1415 = arith.maximumf %1383, %1414 : vector<2x32xf32>
    %1416 = arith.truncf %1415 : vector<2x32xf32> to vector<2x32xbf16>
    %cst_337 = arith.constant dense<0.000000e+00> : vector<2x128xf32>
    %1417 = tpu.matmul %1416, %1413, %cst_337 {dimension_numbers = #tpu.dot_dimension_numbers<[1], [0], [0], [1], [0, 0, 1, 1], [], []>} : vector<2x32xbf16>, vector<32x128xbf16>, vector<2x128xf32> -> vector<2x128xf32>
    %1418 = arith.addf %1354, %1417 : vector<2x128xf32>
    %c32 = arith.constant 32 : index
    %c0_338 = arith.constant 0 : index
    %1419 = vector.load %arg21[%c32, %c0_338] : memref<640x128xbf16, #tpu.memory_space<vmem>>, vector<32x128xbf16>
    %cst_339 = arith.constant 0.000000e+00 : f32
    %1420 = vector.broadcast %cst_339 : f32 to vector<2x32xf32>
    %1421 = arith.maximumf %1412, %1420 : vector<2x32xf32>
    %1422 = arith.truncf %1421 : vector<2x32xf32> to vector<2x32xbf16>
    %cst_340 = arith.constant dense<0.000000e+00> : vector<2x128xf32>
    %1423 = tpu.matmul %1422, %1419, %cst_340 {dimension_numbers = #tpu.dot_dimension_numbers<[1], [0], [0], [1], [0, 0, 1, 1], [], []>} : vector<2x32xbf16>, vector<32x128xbf16>, vector<2x128xf32> -> vector<2x128xf32>
    %1424 = arith.addf %1418, %1423 : vector<2x128xf32>
    %c0_341 = arith.constant 0 : index
    %c0_342 = arith.constant 0 : index
    %1425 = vector.load %arg22[%c0_341, %c0_342] : memref<1x128xf32, #tpu.memory_space<vmem>>, vector<1x128xf32>
    %1426 = vector.broadcast %1425 : vector<1x128xf32> to vector<2x128xf32>
    %1427 = arith.addf %1424, %1426 : vector<2x128xf32>
    %cst_343 = arith.constant 0.000000e+00 : f32
    %1428 = vector.broadcast %cst_343 : f32 to vector<2x128xf32>
    %1429 = arith.maximumf %1427, %1428 : vector<2x128xf32>
    %1430 = arith.truncf %1429 : vector<2x128xf32> to vector<2x128xbf16>
    %c0_344 = arith.constant 0 : index
    %c0_345 = arith.constant 0 : index
    %1431 = vector.load %arg23[%c0_344, %c0_345] : memref<128x32xbf16, #tpu.memory_space<vmem>>, vector<128x32xbf16>
    %cst_346 = arith.constant dense<0.000000e+00> : vector<2x32xf32>
    %1432 = tpu.matmul %1430, %1431, %cst_346 {dimension_numbers = #tpu.dot_dimension_numbers<[1], [0], [0], [1], [0, 0, 1, 1], [], []>} : vector<2x128xbf16>, vector<128x32xbf16>, vector<2x32xf32> -> vector<2x32xf32>
    %c0_347 = arith.constant 0 : index
    %c0_348 = arith.constant 0 : index
    %1433 = vector.load %arg24[%c0_347, %c0_348] : memref<1x32xf32, #tpu.memory_space<vmem>>, vector<1x32xf32>
    %1434 = vector.broadcast %1433 : vector<1x32xf32> to vector<2x32xf32>
    %1435 = arith.addf %1432, %1434 : vector<2x32xf32>
    %cst_349 = arith.constant 0.000000e+00 : f32
    %1436 = vector.broadcast %cst_349 : f32 to vector<2x32xf32>
    %1437 = arith.maximumf %1435, %1436 : vector<2x32xf32>
    %c0_350 = arith.constant 0 : index
    %c0_351 = arith.constant 0 : index
    %1438 = vector.load %arg25[%c0_350, %c0_351] : memref<1x32xf32, #tpu.memory_space<vmem>>, vector<1x32xf32>
    %1439 = vector.broadcast %1438 : vector<1x32xf32> to vector<2x32xf32>
    %1440 = arith.mulf %1437, %1439 : vector<2x32xf32>
    %cst_352 = arith.constant dense<0.000000e+00> : vector<2xf32>
    %1441 = vector.multi_reduction <add>, %1440, %cst_352 [1] : vector<2x32xf32> to vector<2xf32>
    %1442 = vector.shape_cast %1441 : vector<2xf32> to vector<2x1xf32>
    %c0_353 = arith.constant 0 : index
    %c0_354 = arith.constant 0 : index
    %1443 = vector.load %arg26[%c0_353, %c0_354] : memref<1x1xf32, #tpu.memory_space<vmem>>, vector<1x1xf32>
    %1444 = vector.broadcast %1443 : vector<1x1xf32> to vector<2x1xf32>
    %1445 = arith.addf %1442, %1444 : vector<2x1xf32>
    %c0_355 = arith.constant 0 : index
    %c0_356 = arith.constant 0 : index
    %1446 = vector.load %arg27[%c0_355, %c0_356] : memref<2x1xf32, #tpu.memory_space<vmem>>, vector<2x1xf32>
    tpu.vector_store %arg27[%c0_355, %c0_356], %1445 {strides = array<i32>} : memref<2x1xf32, #tpu.memory_space<vmem>>, vector<2x1xf32>,
    return
  }
}

</mosaic_0001>

<llo_original>
// kernel: cnn_bilstm_forward.1
$region0: #{cnn_bilstm_forward.1}
  #allocation0 [shape = 'u32[]', space=smem, size = 0x4, offset = 0x4, fixed_abs, tag = 'smem constant byte address 0x4 - core index']
  #allocation1 [shape = 'u32[72,128]{1,0:T(1,128)}', space=vmem, size = 0x9000, scoped, tag = 'internal scratch']
  #allocation2 [shape = 'f32[20,64]{1,0:T(8,128)}', space=vmem, size = 0x3000, scoped, tag = 'scratch operand']
  #allocation3 [shape = 'f32[20,64]{1,0:T(8,128)}', space=vmem, size = 0x3000, scoped, tag = 'scratch operand']
  #allocation4 [shape = 'f32[20,32]{1,0:T(8,128)}', space=vmem, size = 0x3000, scoped, tag = 'scratch operand']
  #allocation5 [shape = 'f32[20,32]{1,0:T(8,128)}', space=vmem, size = 0x3000, scoped, tag = 'scratch operand']
  #allocation6 [shape = 'f32[1,1]{1,0:T(1,128)S(1)}', space=vmem, size = 0x200, scoped, tag = 'scoped memory for cnn_bilstm_forward.1']
  %s0 = inlined_call_operand.vmem [shape: f32[28,12], index: 0, kind: input, shape index: {}]
  %s1 = inlined_call_operand.vmem [shape: bf16[12,16], index: 1, kind: input, shape index: {}]
  %s2 = inlined_call_operand.vmem [shape: f32[1,16], index: 2, kind: input, shape index: {}]
  %s3 = inlined_call_operand.vmem [shape: f32[1,16], index: 3, kind: input, shape index: {}]
  %s4 = inlined_call_operand.vmem [shape: f32[1,16], index: 4, kind: input, shape index: {}]
  %s5 = inlined_call_operand.vmem [shape: bf16[3,16,8], index: 5, kind: input, shape index: {}]
  %s6 = inlined_call_operand.vmem [shape: f32[1,8], index: 6, kind: input, shape index: {}]
  %s7 = inlined_call_operand.vmem [shape: f32[1,8], index: 7, kind: input, shape index: {}]
  %s8 = inlined_call_operand.vmem [shape: f32[1,8], index: 8, kind: input, shape index: {}]
  %s9 = inlined_call_operand.vmem [shape: bf16[8,256], index: 9, kind: input, shape index: {}]
  %s10 = inlined_call_operand.vmem [shape: bf16[64,256], index: 10, kind: input, shape index: {}]
  %s11 = inlined_call_operand.vmem [shape: f32[1,256], index: 11, kind: input, shape index: {}]
  %s12 = inlined_call_operand.vmem [shape: bf16[8,256], index: 12, kind: input, shape index: {}]
  %s13 = inlined_call_operand.vmem [shape: bf16[64,256], index: 13, kind: input, shape index: {}]
  %s14 = inlined_call_operand.vmem [shape: f32[1,256], index: 14, kind: input, shape index: {}]
  %s15 = inlined_call_operand.vmem [shape: bf16[128,128], index: 15, kind: input, shape index: {}]
  %s16 = inlined_call_operand.vmem [shape: bf16[32,128], index: 16, kind: input, shape index: {}]
  %s17 = inlined_call_operand.vmem [shape: f32[1,128], index: 17, kind: input, shape index: {}]
  %s18 = inlined_call_operand.vmem [shape: bf16[128,128], index: 18, kind: input, shape index: {}]
  %s19 = inlined_call_operand.vmem [shape: bf16[32,128], index: 19, kind: input, shape index: {}]
  %s20 = inlined_call_operand.vmem [shape: f32[1,128], index: 20, kind: input, shape index: {}]
  %s21 = inlined_call_operand.vmem [shape: bf16[640,128], index: 21, kind: input, shape index: {}]
  %s22 = inlined_call_operand.vmem [shape: f32[1,128], index: 22, kind: input, shape index: {}]
  %s23 = inlined_call_operand.vmem [shape: bf16[128,32], index: 23, kind: input, shape index: {}]
  %s24 = inlined_call_operand.vmem [shape: f32[1,32], index: 24, kind: input, shape index: {}]
  %s25 = inlined_call_operand.vmem [shape: f32[1,32], index: 25, kind: input, shape index: {}]
  %s26 = inlined_call_operand.<no memory space> [shape: f32[1,1], index: 26, kind: input, shape index: {}]
  %s27 = inlined_call_operand.vmem [shape: f32[2,1], index: 27, kind: output, shape index: {}]
  %s28 = sld [smem:[#allocation0]]
  $region118: #{cnn_bilstm_forward.1} parent=0
    _
  %s30 = ssub.s32 1, %s28
  %s31 = scalar_select 0, %s30, %s28
  %v32 = vstv %s26
  %33 = vst [vmem:[#allocation6] sm:$0x1] %v32
  // Predicated region
  $region2: #{cnn_bilstm_forward.1} parent=0 // pred_check
    _
  $region3: #{cnn_bilstm_forward.1} parent=0 // pred_check_branch
    %35 = sbr.rel (0) target = $region5
  $region4: #{cnn_bilstm_forward.1} parent=0 // pred_region
    _
  $region5: #{cnn_bilstm_forward.1} parent=0 // pred_fallthru
    _
  // Predicated region
  $region6: #{cnn_bilstm_forward.1} parent=0 // pred_check
    _
  $region7: #{cnn_bilstm_forward.1} parent=0 // pred_check_branch
    %37 = sbr.rel (0) target = $region9
  $region8: #{cnn_bilstm_forward.1} parent=0 // pred_region
    _
  $region9: #{cnn_bilstm_forward.1} parent=0 // pred_fallthru
    _
  // Predicated region
  $region10: #{cnn_bilstm_forward.1} parent=0 // pred_check
    _
  $region11: #{cnn_bilstm_forward.1} parent=0 // pred_check_branch
    %39 = sbr.rel (0) target = $region13
  $region12: #{cnn_bilstm_forward.1} parent=0 // pred_region
    _
  $region13: #{cnn_bilstm_forward.1} parent=0 // pred_fallthru
    _
  // Predicated region
  $region14: #{cnn_bilstm_forward.1} parent=0 // pred_check
    _
  $region15: #{cnn_bilstm_forward.1} parent=0 // pred_check_branch
    %41 = sbr.rel (0) target = $region17
  $region16: #{cnn_bilstm_forward.1} parent=0 // pred_region
    _
  $region17: #{cnn_bilstm_forward.1} parent=0 // pred_fallthru
    _
  // Predicated region
  $region18: #{cnn_bilstm_forward.1} parent=0 // pred_check
    _
  $region19: #{cnn_bilstm_forward.1} parent=0 // pred_check_branch
    %43 = sbr.rel (0) target = $region21
  $region20: #{cnn_bilstm_forward.1} parent=0 // pred_region
    _
  $region21: #{cnn_bilstm_forward.1} parent=0 // pred_fallthru
    _
  // Predicated region
  $region22: #{cnn_bilstm_forward.1} parent=0 // pred_check
    _
  $region23: #{cnn_bilstm_forward.1} parent=0 // pred_check_branch
    %45 = sbr.rel (0) target = $region25
  $region24: #{cnn_bilstm_forward.1} parent=0 // pred_region
    _
  $region25: #{cnn_bilstm_forward.1} parent=0 // pred_fallthru
    _
  // Predicated region
  $region26: #{cnn_bilstm_forward.1} parent=0 // pred_check
    _
  $region27: #{cnn_bilstm_forward.1} parent=0 // pred_check_branch
    %47 = sbr.rel (0) target = $region29
  $region28: #{cnn_bilstm_forward.1} parent=0 // pred_region
    _
  $region29: #{cnn_bilstm_forward.1} parent=0 // pred_fallthru
    _
  // Predicated region
  $region30: #{cnn_bilstm_forward.1} parent=0 // pred_check
    _
  $region31: #{cnn_bilstm_forward.1} parent=0 // pred_check_branch
    %49 = sbr.rel (0) target = $region33
  $region32: #{cnn_bilstm_forward.1} parent=0 // pred_region
    _
  $region33: #{cnn_bilstm_forward.1} parent=0 // pred_fallthru
    _
  // Predicated region
  $region34: #{cnn_bilstm_forward.1} parent=0 // pred_check
    _
  $region35: #{cnn_bilstm_forward.1} parent=0 // pred_check_branch
    %51 = sbr.rel (0) target = $region37
  $region36: #{cnn_bilstm_forward.1} parent=0 // pred_region
    _
  $region37: #{cnn_bilstm_forward.1} parent=0 // pred_fallthru
    _
  // Predicated region
  $region38: #{cnn_bilstm_forward.1} parent=0 // pred_check
    _
  $region39: #{cnn_bilstm_forward.1} parent=0 // pred_check_branch
    %53 = sbr.rel (0) target = $region41
  $region40: #{cnn_bilstm_forward.1} parent=0 // pred_region
    _
  $region41: #{cnn_bilstm_forward.1} parent=0 // pred_fallthru
    _
  // Predicated region
  $region42: #{cnn_bilstm_forward.1} parent=0 // pred_check
    _
  $region43: #{cnn_bilstm_forward.1} parent=0 // pred_check_branch
    %55 = sbr.rel (0) target = $region45
  $region44: #{cnn_bilstm_forward.1} parent=0 // pred_region
    _
  $region45: #{cnn_bilstm_forward.1} parent=0 // pred_fallthru
    _
  // Predicated region
  $region46: #{cnn_bilstm_forward.1} parent=0 // pred_check
    _
  $region47: #{cnn_bilstm_forward.1} parent=0 // pred_check_branch
    %57 = sbr.rel (0) target = $region49
  $region48: #{cnn_bilstm_forward.1} parent=0 // pred_region
    _
  $region49: #{cnn_bilstm_forward.1} parent=0 // pred_fallthru
    _
  // Predicated region
  $region50: #{cnn_bilstm_forward.1} parent=0 // pred_check
    _
  $region51: #{cnn_bilstm_forward.1} parent=0 // pred_check_branch
    %59 = sbr.rel (0) target = $region53
  $region52: #{cnn_bilstm_forward.1} parent=0 // pred_region
    _
  $region53: #{cnn_bilstm_forward.1} parent=0 // pred_fallthru
    _
  // Predicated region
  $region54: #{cnn_bilstm_forward.1} parent=0 // pred_check
    _
  $region55: #{cnn_bilstm_forward.1} parent=0 // pred_check_branch
    %61 = sbr.rel (0) target = $region57
  $region56: #{cnn_bilstm_forward.1} parent=0 // pred_region
    _
  $region57: #{cnn_bilstm_forward.1} parent=0 // pred_fallthru
    _
  // Predicated region
  $region58: #{cnn_bilstm_forward.1} parent=0 // pred_check
    _
  $region59: #{cnn_bilstm_forward.1} parent=0 // pred_check_branch
    %63 = sbr.rel (0) target = $region61
  $region60: #{cnn_bilstm_forward.1} parent=0 // pred_region
    _
  $region61: #{cnn_bilstm_forward.1} parent=0 // pred_fallthru
    _
  // Predicated region
  $region62: #{cnn_bilstm_forward.1} parent=0 // pred_check
    _
  $region63: #{cnn_bilstm_forward.1} parent=0 // pred_check_branch
    %65 = sbr.rel (0) target = $region65
  $region64: #{cnn_bilstm_forward.1} parent=0 // pred_region
    _
  $region65: #{cnn_bilstm_forward.1} parent=0 // pred_fallthru
    _
  // Predicated region
  $region66: #{cnn_bilstm_forward.1} parent=0 // pred_check
    _
  $region67: #{cnn_bilstm_forward.1} parent=0 // pred_check_branch
    %67 = sbr.rel (0) target = $region69
  $region68: #{cnn_bilstm_forward.1} parent=0 // pred_region
    _
  $region69: #{cnn_bilstm_forward.1} parent=0 // pred_fallthru
    _
  // Predicated region
  $region70: #{cnn_bilstm_forward.1} parent=0 // pred_check
    _
  $region71: #{cnn_bilstm_forward.1} parent=0 // pred_check_branch
    %69 = sbr.rel (0) target = $region73
  $region72: #{cnn_bilstm_forward.1} parent=0 // pred_region
    _
  $region73: #{cnn_bilstm_forward.1} parent=0 // pred_fallthru
    _
  // Predicated region
  $region74: #{cnn_bilstm_forward.1} parent=0 // pred_check
    _
  $region75: #{cnn_bilstm_forward.1} parent=0 // pred_check_branch
    %71 = sbr.rel (0) target = $region77
  $region76: #{cnn_bilstm_forward.1} parent=0 // pred_region
    _
  $region77: #{cnn_bilstm_forward.1} parent=0 // pred_fallthru
    _
  // Predicated region
  $region78: #{cnn_bilstm_forward.1} parent=0 // pred_check
    _
  $region79: #{cnn_bilstm_forward.1} parent=0 // pred_check_branch
    %73 = sbr.rel (0) target = $region81
  $region80: #{cnn_bilstm_forward.1} parent=0 // pred_region
    _
  $region81: #{cnn_bilstm_forward.1} parent=0 // pred_fallthru
    _
  // Predicated region
  $region82: #{cnn_bilstm_forward.1} parent=0 // pred_check
    _
  $region83: #{cnn_bilstm_forward.1} parent=0 // pred_check_branch
    %75 = sbr.rel (0) target = $region85
  $region84: #{cnn_bilstm_forward.1} parent=0 // pred_region
    _
  $region85: #{cnn_bilstm_forward.1} parent=0 // pred_fallthru
    _
  // Predicated region
  $region86: #{cnn_bilstm_forward.1} parent=0 // pred_check
    _
  $region87: #{cnn_bilstm_forward.1} parent=0 // pred_check_branch
    %77 = sbr.rel (0) target = $region89
  $region88: #{cnn_bilstm_forward.1} parent=0 // pred_region
    _
  $region89: #{cnn_bilstm_forward.1} parent=0 // pred_fallthru
    _
  // Predicated region
  $region90: #{cnn_bilstm_forward.1} parent=0 // pred_check
    _
  $region91: #{cnn_bilstm_forward.1} parent=0 // pred_check_branch
    %79 = sbr.rel (0) target = $region93
  $region92: #{cnn_bilstm_forward.1} parent=0 // pred_region
    _
  $region93: #{cnn_bilstm_forward.1} parent=0 // pred_fallthru
    _
  // Predicated region
  $region94: #{cnn_bilstm_forward.1} parent=0 // pred_check
    _
  $region95: #{cnn_bilstm_forward.1} parent=0 // pred_check_branch
    %81 = sbr.rel (0) target = $region97
  $region96: #{cnn_bilstm_forward.1} parent=0 // pred_region
    _
  $region97: #{cnn_bilstm_forward.1} parent=0 // pred_fallthru
    _
  // Predicated region
  $region98: #{cnn_bilstm_forward.1} parent=0 // pred_check
    _
  $region99: #{cnn_bilstm_forward.1} parent=0 // pred_check_branch
    %83 = sbr.rel (0) target = $region101
  $region100: #{cnn_bilstm_forward.1} parent=0 // pred_region
    _
  $region101: #{cnn_bilstm_forward.1} parent=0 // pred_fallthru
    _
  // Predicated region
  $region102: #{cnn_bilstm_forward.1} parent=0 // pred_check
    _
  $region103: #{cnn_bilstm_forward.1} parent=0 // pred_check_branch
    %85 = sbr.rel (0) target = $region105
  $region104: #{cnn_bilstm_forward.1} parent=0 // pred_region
    _
  $region105: #{cnn_bilstm_forward.1} parent=0 // pred_fallthru
    _
  // Predicated region
  $region106: #{cnn_bilstm_forward.1} parent=0 // pred_check
    _
  $region107: #{cnn_bilstm_forward.1} parent=0 // pred_check_branch
    %87 = sbr.rel (0) target = $region109
  $region108: #{cnn_bilstm_forward.1} parent=0 // pred_region
    _
  $region109: #{cnn_bilstm_forward.1} parent=0 // pred_fallthru
    _
  %v89 = vld [vmem:[%s0] sm:$0xff]
  %v90 = vld [vmem:[%s0 + $0x8] sm:$0xff]
  %v91 = vld [vmem:[%s0 + $0x10] sm:$0xff]
  %v92 = vld [vmem:[%s0 + $0x18] sm:$0xf]
  %v93 = vpack.c.bf16 %v90, %v89
  %v94 = vpack.c.bf16 %v92, %v91
  %v95 = vld [vmem:[%s1] sm:$0xf]
  %v96 = vld [vmem:[%s1 + $0x4] sm:$0x3]
  %v97 = vld [vmem:[%s2] sm:$0x1]
  %v99 = vperm.slane %v97, 0
  %v103 = vunpack.c.l.b16 %v95
  %v104 = vunpack.c.l.b16 %v96
  %v105 = vpack.c.b16 %v104, %v103
  %vm106 = vcmask 97280
  %v108 = vsel %vm106, %v93, 0
  %v111 = vsel %vm106, %v94, 0
  %vm113 = vcmask 1045504
  %v115 = vsel %vm113, %v105, 0
  %117 = vmatpush.bf16.msra.mxu0 0
  %118 = vmatpush.bf16.msra.mxu0 0
  %119 = vmatpush.bf16.msra.mxu0 0
  %120 = vmatpush.bf16.msra.mxu0 0
  %121 = vmatpush.bf16.msra.mxu0 0
  %122 = vmatpush.bf16.msra.mxu0 0
  %123 = vmatpush.bf16.msra.mxu0 0
  %124 = vmatpush.bf16.msra.mxu0 %v115
  %125 = vmatmul.bf16.gmra.mxu0 %v108
  %v126 = vpop.f32.mrf.mxu0
  %v127 = vadd.f32 %v99, %v126
  %v128 = vpop.f32.mrf.mxu0
  %v129 = vadd.f32 %v99, %v128
  %130 = vmatmul.bf16.gmra.mxu0 %v111
  %v131 = vpop.f32.mrf.mxu0
  %v132 = vadd.f32 %v99, %v131
  %v133 = vpop.f32.mrf.mxu0
  %v134 = vadd.f32 %v99, %v133
  %135 = vdwg.mxu0
  %v136 = vmax.f32 %v127, 0.0
  %v137 = vmax.f32 %v129, 0.0
  %v138 = vmax.f32 %v132, 0.0
  %v139 = vmax.f32 %v134, 0.0
  %v144 = vrot.slane %v136, 2
  %v145 = vrot.slane %v137, 2
  %v146 = vsel %vm113, %v144, %v145
  %v147 = vrot.slane %v138, 2
  %v148 = vsel %vm113, %v145, %v147
  %v149 = vrot.slane %v139, 2
  %v150 = vsel %vm113, %v147, %v149
  %v155 = vmax.f32 %v136, %v146
  %v156 = vmax.f32 %v137, %v148
  %v157 = vmax.f32 %v138, %v150
  %v158 = vmax.f32 %v139, %v149
  %v159 = vld [vmem:[%s3] sm:$0x1]
  %v161 = vperm.slane %v159, 0
  %v163 = vmul.f32 %v155, %v161
  %v164 = vmul.f32 %v156, %v161
  %v165 = vmul.f32 %v157, %v161
  %v166 = vmul.f32 %v158, %v161
  %v167 = vld [vmem:[%s4] sm:$0x1]
  %v169 = vperm.slane %v167, 0
  %v171 = vadd.f32 %v163, %v169
  %v172 = vadd.f32 %v164, %v169
  %v173 = vadd.f32 %v165, %v169
  %v174 = vadd.f32 %v166, %v169
  %v175 = vpack.c.bf16 %v171, %v171
  %v176 = vpack.c.bf16 %v172, %v172
  %v177 = vpack.c.bf16 %v173, %v173
  %v178 = vpack.c.bf16 %v174, %v174
  %v179 = vld [vmem:[%s5] sm:$0xf]
  %v180 = vld [vmem:[%s5 + $0x4] sm:$0xf]
  %s181 = scalar_lea.vmem %s5, 8
  %v182 = vld [vmem:[%s181] sm:$0xf]
  %v183 = vld [vmem:[%s181 + $0x4] sm:$0xf]
  %v187 = vunpack.c.l.b16 %v175
  %v188 = vunpack.c.l.b16 %v176
  %v189 = vunpack.c.l.b16 %v177
  %v190 = vpack.c.b16 %v188, %v187
  %v191 = vpack.c.b16 %v189, %v189
  %vm192 = vcmask 1046528
  %v193 = vrot.slane %v190, 1
  %v194 = vrot.slane %v191, 1
  %v195 = vsel %vm192, %v193, %v194
  %v198 = vunpack.c.l.b16 %v182
  %v199 = vunpack.c.l.b16 %v183
  %v200 = vpack.c.b16 %v199, %v198
  %vm202 = vcmask 130048
  %v204 = vsel %vm202, %v195, 0
  %v207 = vsel %vm202, %v194, 0
  %209 = vmatpush.bf16.msra.mxu0 0
  %210 = vmatpush.bf16.msra.mxu0 0
  %211 = vmatpush.bf16.msra.mxu0 0
  %212 = vmatpush.bf16.msra.mxu0 0
  %213 = vmatpush.bf16.msra.mxu0 0
  %214 = vmatpush.bf16.msra.mxu0 0
  %215 = vmatpush.bf16.msra.mxu0 0
  %216 = vmatpush.bf16.msra.mxu0 %v200
  %217 = vmatmul.bf16.gmra.mxu0 %v204
  %v218 = vpop.f32.mrf.mxu0
  %v219 = vadd.f32 0.0, %v218
  %v220 = vpop.f32.mrf.mxu0
  %v221 = vadd.f32 0.0, %v220
  %222 = vmatmul.bf16.gmra.mxu0 %v207
  %v223 = vpop.f32.mrf.mxu0
  %v224 = vadd.f32 0.0, %v223
  %v225 = vpop.f32.mrf.mxu0
  %226 = vdwg.mxu0
  %v229 = vunpack.c.l.b16 %v179
  %v230 = vunpack.c.l.b16 %v180
  %v231 = vpack.c.b16 %v230, %v229
  %v234 = vsel %vm202, %v190, 0
  %v237 = vsel %vm202, %v191, 0
  %239 = vmatpush.bf16.msra.mxu0 0
  %240 = vmatpush.bf16.msra.mxu0 0
  %241 = vmatpush.bf16.msra.mxu0 0
  %242 = vmatpush.bf16.msra.mxu0 0
  %243 = vmatpush.bf16.msra.mxu0 0
  %244 = vmatpush.bf16.msra.mxu0 0
  %245 = vmatpush.bf16.msra.mxu0 0
  %246 = vmatpush.bf16.msra.mxu0 %v231
  %247 = vmatmul.bf16.gmra.mxu0 %v234
  %v248 = vpop.f32.mrf.mxu0
  %v249 = vadd.f32 %v219, %v248
  %v250 = vpop.f32.mrf.mxu0
  %v251 = vadd.f32 %v221, %v250
  %252 = vmatmul.bf16.gmra.mxu0 %v237
  %v253 = vpop.f32.mrf.mxu0
  %v254 = vadd.f32 %v224, %v253
  %v255 = vpop.f32.mrf.mxu0
  %256 = vdwg.mxu0
  %s257 = scalar_lea.vmem %s5, 16
  %v258 = vld [vmem:[%s257] sm:$0xf]
  %v259 = vld [vmem:[%s257 + $0x4] sm:$0xf]
  %v261 = vunpack.c.l.b16 %v178
  %v262 = vpack.c.b16 %v261, %v189
  %vm263 = vcmask 1045504
  %v264 = vrot.slane %v190, 2
  %v265 = vrot.slane %v262, 2
  %v266 = vsel %vm263, %v264, %v265
  %v269 = vunpack.c.l.b16 %v258
  %v270 = vunpack.c.l.b16 %v259
  %v271 = vpack.c.b16 %v270, %v269
  %v274 = vsel %vm202, %v266, 0
  %v277 = vsel %vm202, %v265, 0
  %279 = vmatpush.bf16.msra.mxu0 0
  %280 = vmatpush.bf16.msra.mxu0 0
  %281 = vmatpush.bf16.msra.mxu0 0
  %282 = vmatpush.bf16.msra.mxu0 0
  %283 = vmatpush.bf16.msra.mxu0 0
  %284 = vmatpush.bf16.msra.mxu0 0
  %285 = vmatpush.bf16.msra.mxu0 0
  %286 = vmatpush.bf16.msra.mxu0 %v271
  %287 = vmatmul.bf16.gmra.mxu0 %v274
  %v288 = vpop.f32.mrf.mxu0
  %v289 = vadd.f32 0.0, %v288
  %v290 = vpop.f32.mrf.mxu0
  %v291 = vadd.f32 0.0, %v290
  %292 = vmatmul.bf16.gmra.mxu0 %v277
  %v293 = vpop.f32.mrf.mxu0
  %v294 = vadd.f32 0.0, %v293
  %v295 = vpop.f32.mrf.mxu0
  %296 = vdwg.mxu0
  %v297 = vadd.f32 %v249, %v289
  %v298 = vadd.f32 %v251, %v291
  %v299 = vadd.f32 %v254, %v294
  %v300 = vld [vmem:[%s6] sm:$0x1]
  %v302 = vperm.slane %v300, 0
  %v304 = vadd.f32 %v297, %v302
  %v305 = vadd.f32 %v298, %v302
  %v306 = vadd.f32 %v299, %v302
  %v310 = vrot.slane %v304, 2
  %v311 = vrot.slane %v305, 2
  %v312 = vsel %vm113, %v310, %v311
  %v313 = vrot.slane %v306, 2
  %v314 = vsel %vm113, %v311, %v313
  %v318 = vmax.f32 %v304, %v312
  %v319 = vmax.f32 %v305, %v314
  %v320 = vmax.f32 %v306, %v313
  %v321 = vld [vmem:[%s7] sm:$0x1]
  %v323 = vperm.slane %v321, 0
  %v325 = vmul.f32 %v318, %v323
  %v326 = vmul.f32 %v319, %v323
  %v327 = vmul.f32 %v320, %v323
  %v328 = vld [vmem:[%s8] sm:$0x1]
  %v330 = vperm.slane %v328, 0
  %v332 = vadd.f32 %v325, %v330
  %v333 = vadd.f32 %v326, %v330
  %v334 = vadd.f32 %v327, %v330
  %v335 = vmax.f32 %v332, 0.0
  %v336 = vmax.f32 %v333, 0.0
  %v337 = vmax.f32 %v334, 0.0
  %v338 = vpack.c.bf16 %v336, %v335
  %v339 = vpack.c.bf16 %v337, %v337
  %v340 = vld [vmem:[%s9] sm:$0xff]
  %v341 = vld [vmem:[%s11] sm:$0x3]
  %v343 = vperm.slane %v341, 0
  %v344 = vperm.slane %v341, 1
  %v348 = vunpack.c.l.b16 %v340
  %v349 = vunpack.c.h.b16 %v340
  %v350 = vpack.c.b16 %v348, %v348
  %v351 = vpack.c.b16 %v349, %v349
  %vm352 = vcmask 64512
  %v354 = vsel %vm352, %v338, 0
  %v357 = vsel %vm352, %v339, 0
  %vm359 = vcmask 1043456
  %v361 = vsel %vm359, %v350, 0
  %v364 = vsel %vm359, %v351, 0
  %366 = vmatpush.bf16.msra.mxu0 0
  %367 = vmatpush.bf16.msra.mxu0 0
  %368 = vmatpush.bf16.msra.mxu0 0
  %369 = vmatpush.bf16.msra.mxu0 0
  %370 = vmatpush.bf16.msra.mxu0 0
  %371 = vmatpush.bf16.msra.mxu0 0
  %372 = vmatpush.bf16.msra.mxu0 0
  %373 = vmatpush.bf16.msra.mxu0 %v361
  %374 = vmatmul.bf16.gmra.mxu0 %v354
  %v375 = vpop.f32.mrf.mxu0
  %v376 = vadd.f32 %v343, %v375
  %v377 = vpop.f32.mrf.mxu0
  %v378 = vadd.f32 %v343, %v377
  %379 = vmatmul.bf16.gmra.mxu0 %v357
  %v380 = vpop.f32.mrf.mxu0
  %v381 = vadd.f32 %v343, %v380
  %v382 = vpop.f32.mrf.mxu0
  %383 = vdwg.mxu0
  %384 = vmatpush.bf16.msra.mxu0 0
  %385 = vmatpush.bf16.msra.mxu0 0
  %386 = vmatpush.bf16.msra.mxu0 0
  %387 = vmatpush.bf16.msra.mxu0 0
  %388 = vmatpush.bf16.msra.mxu0 0
  %389 = vmatpush.bf16.msra.mxu0 0
  %390 = vmatpush.bf16.msra.mxu0 0
  %391 = vmatpush.bf16.msra.mxu0 %v364
  %392 = vmatmul.bf16.gmra.mxu0 %v354
  %v393 = vpop.f32.mrf.mxu0
  %v394 = vadd.f32 %v344, %v393
  %v395 = vpop.f32.mrf.mxu0
  %v396 = vadd.f32 %v344, %v395
  %397 = vmatmul.bf16.gmra.mxu0 %v357
  %v398 = vpop.f32.mrf.mxu0
  %v399 = vadd.f32 %v344, %v398
  %v400 = vpop.f32.mrf.mxu0
  %401 = vdwg.mxu0
  %v402 = vld [vmem:[%s12] sm:$0xff]
  %v403 = vld [vmem:[%s14] sm:$0x3]
  %v405 = vperm.slane %v403, 0
  %v406 = vperm.slane %v403, 1
  %v410 = vunpack.c.l.b16 %v402
  %v411 = vunpack.c.h.b16 %v402
  %v412 = vpack.c.b16 %v410, %v410
  %v413 = vpack.c.b16 %v411, %v411
  %v415 = vsel %vm359, %v412, 0
  %v418 = vsel %vm359, %v413, 0
  %420 = vmatpush.bf16.msra.mxu0 0
  %421 = vmatpush.bf16.msra.mxu0 0
  %422 = vmatpush.bf16.msra.mxu0 0
  %423 = vmatpush.bf16.msra.mxu0 0
  %424 = vmatpush.bf16.msra.mxu0 0
  %425 = vmatpush.bf16.msra.mxu0 0
  %426 = vmatpush.bf16.msra.mxu0 0
  %427 = vmatpush.bf16.msra.mxu0 %v415
  %428 = vmatmul.bf16.gmra.mxu0 %v354
  %v429 = vpop.f32.mrf.mxu0
  %v430 = vadd.f32 %v405, %v429
  %v431 = vpop.f32.mrf.mxu0
  %v432 = vadd.f32 %v405, %v431
  %433 = vmatmul.bf16.gmra.mxu0 %v357
  %v434 = vpop.f32.mrf.mxu0
  %v435 = vadd.f32 %v405, %v434
  %v436 = vpop.f32.mrf.mxu0
  %437 = vdwg.mxu0
  %438 = vmatpush.bf16.msra.mxu0 0
  %439 = vmatpush.bf16.msra.mxu0 0
  %440 = vmatpush.bf16.msra.mxu0 0
  %441 = vmatpush.bf16.msra.mxu0 0
  %442 = vmatpush.bf16.msra.mxu0 0
  %443 = vmatpush.bf16.msra.mxu0 0
  %444 = vmatpush.bf16.msra.mxu0 0
  %445 = vmatpush.bf16.msra.mxu0 %v418
  %446 = vmatmul.bf16.gmra.mxu0 %v354
  %v447 = vpop.f32.mrf.mxu0
  %v448 = vadd.f32 %v406, %v447
  %v449 = vpop.f32.mrf.mxu0
  %v450 = vadd.f32 %v406, %v449
  %451 = vmatmul.bf16.gmra.mxu0 %v357
  %v452 = vpop.f32.mrf.mxu0
  %v453 = vadd.f32 %v406, %v452
  %v454 = vpop.f32.mrf.mxu0
  %455 = vdwg.mxu0
  %v456 = vld [vmem:[%s10] sm:$0xff]
  %v457 = vld [vmem:[%s10 + $0x8] sm:$0xff]
  %v458 = vld [vmem:[%s10 + $0x10] sm:$0xff]
  %v459 = vld [vmem:[%s10 + $0x18] sm:$0xff]
  %v460 = vld [vmem:[%s10 + $0x20] sm:$0xff]
  %v461 = vld [vmem:[%s10 + $0x28] sm:$0xff]
  %v462 = vld [vmem:[%s10 + $0x30] sm:$0xff]
  %v463 = vld [vmem:[%s10 + $0x38] sm:$0xff]
  %v464 = vld [vmem:[%s13] sm:$0xff]
  %v465 = vld [vmem:[%s13 + $0x8] sm:$0xff]
  %v466 = vld [vmem:[%s13 + $0x10] sm:$0xff]
  %v467 = vld [vmem:[%s13 + $0x18] sm:$0xff]
  %v468 = vld [vmem:[%s13 + $0x20] sm:$0xff]
  %v469 = vld [vmem:[%s13 + $0x28] sm:$0xff]
  %v470 = vld [vmem:[%s13 + $0x30] sm:$0xff]
  %v471 = vld [vmem:[%s13 + $0x38] sm:$0xff]
  %v480 = vunpack.c.l.b16 %v456
  %v481 = vunpack.c.h.b16 %v456
  %v482 = vunpack.c.l.b16 %v457
  %v483 = vunpack.c.h.b16 %v457
  %v484 = vunpack.c.l.b16 %v458
  %v485 = vunpack.c.h.b16 %v458
  %v486 = vunpack.c.l.b16 %v459
  %v487 = vunpack.c.h.b16 %v459
  %v488 = vunpack.c.l.b16 %v460
  %v489 = vunpack.c.h.b16 %v460
  %v490 = vunpack.c.l.b16 %v461
  %v491 = vunpack.c.h.b16 %v461
  %v492 = vunpack.c.l.b16 %v462
  %v493 = vunpack.c.h.b16 %v462
  %v494 = vunpack.c.l.b16 %v463
  %v495 = vunpack.c.h.b16 %v463
  %v496 = vpack.c.b16 %v482, %v480
  %v497 = vpack.c.b16 %v483, %v481
  %v498 = vpack.c.b16 %v486, %v484
  %v499 = vpack.c.b16 %v487, %v485
  %v500 = vpack.c.b16 %v490, %v488
  %v501 = vpack.c.b16 %v491, %v489
  %v502 = vpack.c.b16 %v494, %v492
  %v503 = vpack.c.b16 %v495, %v493
  %vm512 = vcmask 523264
  %v514 = vsel %vm512, 0, 0
  %516 = vmatpush.bf16.msra.mxu0 0
  %517 = vmatpush.bf16.msra.mxu0 0
  %518 = vmatpush.bf16.msra.mxu0 0
  %519 = vmatpush.bf16.msra.mxu0 0
  %520 = vmatpush.bf16.msra.mxu0 %v502
  %521 = vmatpush.bf16.msra.mxu0 %v500
  %522 = vmatpush.bf16.msra.mxu0 %v498
  %523 = vmatpush.bf16.msra.mxu0 %v496
  %524 = vmatmul.bf16.gmra.mxu0 %v514
  %v525 = vpop.f32.mrf.mxu0
  %v526 = vadd.f32 0.0, %v525
  %v527 = vpop.f32.mrf.mxu0
  %528 = vdwg.mxu0
  %529 = vmatpush.bf16.msra.mxu0 0
  %530 = vmatpush.bf16.msra.mxu0 0
  %531 = vmatpush.bf16.msra.mxu0 0
  %532 = vmatpush.bf16.msra.mxu0 0
  %533 = vmatpush.bf16.msra.mxu0 %v503
  %534 = vmatpush.bf16.msra.mxu0 %v501
  %535 = vmatpush.bf16.msra.mxu0 %v499
  %536 = vmatpush.bf16.msra.mxu0 %v497
  %537 = vmatmul.bf16.gmra.mxu0 %v514
  %v538 = vpop.f32.mrf.mxu0
  %v539 = vadd.f32 0.0, %v538
  %v540 = vpop.f32.mrf.mxu0
  %541 = vdwg.mxu0
  %v542 = vadd.f32 %v376, %v526
  %v543 = vadd.f32 %v394, %v539
  %v544 = vxor.u32 %v542, 2147483648
  %v545 = vmul.f32 %v544, 1.442695
  %v546 = vpow.pop %v545
  %v547 = vadd.f32 %v546, 1.0
  %v548 = vrcp.pop %v547
  %v549 = vmul.f32 %v547, %v548
  %v550 = vsub.f32 1.0, %v549
  %v551 = vmul.f32 %v548, %v550
  %v552 = vadd.f32 %v548, %v551
  %vm553 = vweird.f32 %v547
  %vm554 = vweird.f32 %v548
  %vm555 = vmor %vm553, %vm554
  %v556 = vsel %vm555, %v548, %v552
  %v557 = vand.u32 2147483647, %v547
  %vm558 = vcmp.eq.f32.partialorder %v557, 8.507059e+37
  %v559 = vand.u32 %v547, 2147483648
  %v560 = vor.u32 1.1754944e-38, %v559
  %v561 = vsel %vm558, %v560, %v556
  %v562 = vmul.f32 1.0, %v561
  %v563 = vtanh.pop %v543
  %v564 = vxor.u32 %v543, 2147483648
  %v565 = vmul.f32 %v564, 1.442695
  %v566 = vpow.pop %v565
  %v567 = vadd.f32 %v566, 1.0
  %v568 = vrcp.pop %v567
  %v569 = vmul.f32 %v567, %v568
  %v570 = vsub.f32 1.0, %v569
  %v571 = vmul.f32 %v568, %v570
  %v572 = vadd.f32 %v568, %v571
  %vm573 = vweird.f32 %v567
  %vm574 = vweird.f32 %v568
  %vm575 = vmor %vm573, %vm574
  %v576 = vsel %vm575, %v568, %v572
  %v577 = vand.u32 2147483647, %v567
  %vm578 = vcmp.eq.f32.partialorder %v577, 8.507059e+37
  %v579 = vand.u32 %v567, 2147483648
  %v580 = vor.u32 1.1754944e-38, %v579
  %v581 = vsel %vm578, %v580, %v576
  %v582 = vmul.f32 1.0, %v581
  %v583 = vmul.f32 %v562, 0.0
  %v584 = vmul.f32 %v562, %v563
  %586 = vrot.lane.b32.xlu0 %v584, 64
  %v587 = vpop.permute.xlu0 %586
  %v589 = vadd.f32 %v583, %v587
  %v590 = vtanh.pop %v589
  %v591 = vmul.f32 %v582, %v590
  %v600 = vunpack.c.l.b16 %v464
  %v601 = vunpack.c.h.b16 %v464
  %v602 = vunpack.c.l.b16 %v465
  %v603 = vunpack.c.h.b16 %v465
  %v604 = vunpack.c.l.b16 %v466
  %v605 = vunpack.c.h.b16 %v466
  %v606 = vunpack.c.l.b16 %v467
  %v607 = vunpack.c.h.b16 %v467
  %v608 = vunpack.c.l.b16 %v468
  %v609 = vunpack.c.h.b16 %v468
  %v610 = vunpack.c.l.b16 %v469
  %v611 = vunpack.c.h.b16 %v469
  %v612 = vunpack.c.l.b16 %v470
  %v613 = vunpack.c.h.b16 %v470
  %v614 = vunpack.c.l.b16 %v471
  %v615 = vunpack.c.h.b16 %v471
  %v616 = vpack.c.b16 %v602, %v600
  %v617 = vpack.c.b16 %v603, %v601
  %v618 = vpack.c.b16 %v606, %v604
  %v619 = vpack.c.b16 %v607, %v605
  %v620 = vpack.c.b16 %v610, %v608
  %v621 = vpack.c.b16 %v611, %v609
  %v622 = vpack.c.b16 %v614, %v612
  %v623 = vpack.c.b16 %v615, %v613
  %632 = vmatpush.bf16.msra.mxu0 0
  %633 = vmatpush.bf16.msra.mxu0 0
  %634 = vmatpush.bf16.msra.mxu0 0
  %635 = vmatpush.bf16.msra.mxu0 0
  %636 = vmatpush.bf16.msra.mxu0 %v622
  %637 = vmatpush.bf16.msra.mxu0 %v620
  %638 = vmatpush.bf16.msra.mxu0 %v618
  %639 = vmatpush.bf16.msra.mxu0 %v616
  %640 = vmatmul.bf16.gmra.mxu0 %v514
  %v641 = vpop.f32.mrf.mxu0
  %v642 = vadd.f32 0.0, %v641
  %v643 = vpop.f32.mrf.mxu0
  %644 = vdwg.mxu0
  %645 = vmatpush.bf16.msra.mxu0 0
  %646 = vmatpush.bf16.msra.mxu0 0
  %647 = vmatpush.bf16.msra.mxu0 0
  %648 = vmatpush.bf16.msra.mxu0 0
  %649 = vmatpush.bf16.msra.mxu0 %v623
  %650 = vmatpush.bf16.msra.mxu0 %v621
  %651 = vmatpush.bf16.msra.mxu0 %v619
  %652 = vmatpush.bf16.msra.mxu0 %v617
  %653 = vmatmul.bf16.gmra.mxu0 %v514
  %v654 = vpop.f32.mrf.mxu0
  %v655 = vadd.f32 0.0, %v654
  %v656 = vpop.f32.mrf.mxu0
  %657 = vdwg.mxu0
  %v660 = vrot.slane %v642, 6
  %v661 = vrot.slane %v655, 6
  %v664 = vadd.f32 %v435, %v660
  %v665 = vadd.f32 %v453, %v661
  %v666 = vxor.u32 %v664, 2147483648
  %v667 = vmul.f32 %v666, 1.442695
  %v668 = vpow.pop %v667
  %v669 = vadd.f32 %v668, 1.0
  %v670 = vrcp.pop %v669
  %v671 = vmul.f32 %v669, %v670
  %v672 = vsub.f32 1.0, %v671
  %v673 = vmul.f32 %v670, %v672
  %v674 = vadd.f32 %v670, %v673
  %vm675 = vweird.f32 %v669
  %vm676 = vweird.f32 %v670
  %vm677 = vmor %vm675, %vm676
  %v678 = vsel %vm677, %v670, %v674
  %v679 = vand.u32 2147483647, %v669
  %vm680 = vcmp.eq.f32.partialorder %v679, 8.507059e+37
  %v681 = vand.u32 %v669, 2147483648
  %v682 = vor.u32 1.1754944e-38, %v681
  %v683 = vsel %vm680, %v682, %v678
  %v684 = vmul.f32 1.0, %v683
  %v685 = vtanh.pop %v665
  %v686 = vxor.u32 %v665, 2147483648
  %v687 = vmul.f32 %v686, 1.442695
  %v688 = vpow.pop %v687
  %v689 = vadd.f32 %v688, 1.0
  %v690 = vrcp.pop %v689
  %v691 = vmul.f32 %v689, %v690
  %v692 = vsub.f32 1.0, %v691
  %v693 = vmul.f32 %v690, %v692
  %v694 = vadd.f32 %v690, %v693
  %vm695 = vweird.f32 %v689
  %vm696 = vweird.f32 %v690
  %vm697 = vmor %vm695, %vm696
  %v698 = vsel %vm697, %v690, %v694
  %v699 = vand.u32 2147483647, %v689
  %vm700 = vcmp.eq.f32.partialorder %v699, 8.507059e+37
  %v701 = vand.u32 %v689, 2147483648
  %v702 = vor.u32 1.1754944e-38, %v701
  %v703 = vsel %vm700, %v702, %v698
  %v704 = vmul.f32 1.0, %v703
  %v705 = vmul.f32 %v684, 0.0
  %v706 = vmul.f32 %v684, %v685
  %708 = vrot.lane.b32.xlu0 %v706, 64
  %v709 = vpop.permute.xlu0 %708
  %v711 = vadd.f32 %v705, %v709
  %v712 = vtanh.pop %v711
  %v713 = vmul.f32 %v704, %v712
  %v714 = vmax.f32 %v591, 0.0
  %716 = vrot.lane.b32.xlu0 %v714, 64
  %v717 = vpop.permute.xlu0 %716
  %vm719 = vcmask 517120
  %720 = vst.msk [vmem:[#allocation2] sm:$0x3] %vm719, %v717
  %v721 = vmax.f32 %v713, 0.0
  %723 = vrot.lane.b32.xlu0 %v721, 64
  %v724 = vpop.permute.xlu0 %723
  %vm726 = vcmask 519170
  %727 = vst.msk [vmem:[#allocation3 + $0x10] sm:$0xc] %vm726, %v724
  %v728 = vpack.c.bf16 %v591, %v591
  %730 = vrot.lane.b32.xlu0 %v728, 64
  %v731 = vpop.permute.xlu0 %730
  %v733 = vsel %vm512, %v731, 0
  %735 = vmatpush.bf16.msra.mxu0 0
  %736 = vmatpush.bf16.msra.mxu0 0
  %737 = vmatpush.bf16.msra.mxu0 0
  %738 = vmatpush.bf16.msra.mxu0 0
  %739 = vmatpush.bf16.msra.mxu0 %v502
  %740 = vmatpush.bf16.msra.mxu0 %v500
  %741 = vmatpush.bf16.msra.mxu0 %v498
  %742 = vmatpush.bf16.msra.mxu0 %v496
  %743 = vmatmul.bf16.gmra.mxu0 %v733
  %v744 = vpop.f32.mrf.mxu0
  %v745 = vadd.f32 0.0, %v744
  %v746 = vpop.f32.mrf.mxu0
  %747 = vdwg.mxu0
  %748 = vmatpush.bf16.msra.mxu0 0
  %749 = vmatpush.bf16.msra.mxu0 0
  %750 = vmatpush.bf16.msra.mxu0 0
  %751 = vmatpush.bf16.msra.mxu0 0
  %752 = vmatpush.bf16.msra.mxu0 %v503
  %753 = vmatpush.bf16.msra.mxu0 %v501
  %754 = vmatpush.bf16.msra.mxu0 %v499
  %755 = vmatpush.bf16.msra.mxu0 %v497
  %756 = vmatmul.bf16.gmra.mxu0 %v733
  %v757 = vpop.f32.mrf.mxu0
  %v758 = vadd.f32 0.0, %v757
  %v759 = vpop.f32.mrf.mxu0
  %760 = vdwg.mxu0
  %v763 = vrot.slane %v745, 6
  %v764 = vrot.slane %v758, 6
  %v767 = vadd.f32 %v376, %v763
  %v768 = vadd.f32 %v394, %v764
  %v769 = vxor.u32 %v767, 2147483648
  %v770 = vmul.f32 %v769, 1.442695
  %v771 = vpow.pop %v770
  %v772 = vadd.f32 %v771, 1.0
  %v773 = vrcp.pop %v772
  %v774 = vmul.f32 %v772, %v773
  %v775 = vsub.f32 1.0, %v774
  %v776 = vmul.f32 %v773, %v775
  %v777 = vadd.f32 %v773, %v776
  %vm778 = vweird.f32 %v772
  %vm779 = vweird.f32 %v773
  %vm780 = vmor %vm778, %vm779
  %v781 = vsel %vm780, %v773, %v777
  %v782 = vand.u32 2147483647, %v772
  %vm783 = vcmp.eq.f32.partialorder %v782, 8.507059e+37
  %v784 = vand.u32 %v772, 2147483648
  %v785 = vor.u32 1.1754944e-38, %v784
  %v786 = vsel %vm783, %v785, %v781
  %v787 = vmul.f32 1.0, %v786
  %v788 = vtanh.pop %v768
  %v789 = vxor.u32 %v768, 2147483648
  %v790 = vmul.f32 %v789, 1.442695
  %v791 = vpow.pop %v790
  %v792 = vadd.f32 %v791, 1.0
  %v793 = vrcp.pop %v792
  %v794 = vmul.f32 %v792, %v793
  %v795 = vsub.f32 1.0, %v794
  %v796 = vmul.f32 %v793, %v795
  %v797 = vadd.f32 %v793, %v796
  %vm798 = vweird.f32 %v792
  %vm799 = vweird.f32 %v793
  %vm800 = vmor %vm798, %vm799
  %v801 = vsel %vm800, %v793, %v797
  %v802 = vand.u32 2147483647, %v792
  %vm803 = vcmp.eq.f32.partialorder %v802, 8.507059e+37
  %v804 = vand.u32 %v792, 2147483648
  %v805 = vor.u32 1.1754944e-38, %v804
  %v806 = vsel %vm803, %v805, %v801
  %v807 = vmul.f32 1.0, %v806
  %v809 = vrot.slane %v589, 6
  %v811 = vmul.f32 %v787, %v809
  %v812 = vmul.f32 %v787, %v788
  %814 = vrot.lane.b32.xlu0 %v812, 64
  %v815 = vpop.permute.xlu0 %814
  %v817 = vadd.f32 %v811, %v815
  %v818 = vtanh.pop %v817
  %v819 = vmul.f32 %v807, %v818
  %v820 = vpack.c.bf16 %v713, %v713
  %v822 = vrot.slane %v820, 1
  %823 = vrot.lane.b32.xlu0 %v822, 64
  %v824 = vpop.permute.xlu0 %823
  %v826 = vsel %vm512, %v824, 0
  %828 = vmatpush.bf16.msra.mxu0 0
  %829 = vmatpush.bf16.msra.mxu0 0
  %830 = vmatpush.bf16.msra.mxu0 0
  %831 = vmatpush.bf16.msra.mxu0 0
  %832 = vmatpush.bf16.msra.mxu0 %v622
  %833 = vmatpush.bf16.msra.mxu0 %v620
  %834 = vmatpush.bf16.msra.mxu0 %v618
  %835 = vmatpush.bf16.msra.mxu0 %v616
  %836 = vmatmul.bf16.gmra.mxu0 %v826
  %v837 = vpop.f32.mrf.mxu0
  %v838 = vadd.f32 0.0, %v837
  %v839 = vpop.f32.mrf.mxu0
  %840 = vdwg.mxu0
  %841 = vmatpush.bf16.msra.mxu0 0
  %842 = vmatpush.bf16.msra.mxu0 0
  %843 = vmatpush.bf16.msra.mxu0 0
  %844 = vmatpush.bf16.msra.mxu0 0
  %845 = vmatpush.bf16.msra.mxu0 %v623
  %846 = vmatpush.bf16.msra.mxu0 %v621
  %847 = vmatpush.bf16.msra.mxu0 %v619
  %848 = vmatpush.bf16.msra.mxu0 %v617
  %849 = vmatmul.bf16.gmra.mxu0 %v826
  %v850 = vpop.f32.mrf.mxu0
  %v851 = vadd.f32 0.0, %v850
  %v852 = vpop.f32.mrf.mxu0
  %853 = vdwg.mxu0
  %v854 = vadd.f32 %v435, %v838
  %v855 = vadd.f32 %v453, %v851
  %v856 = vxor.u32 %v854, 2147483648
  %v857 = vmul.f32 %v856, 1.442695
  %v858 = vpow.pop %v857
  %v859 = vadd.f32 %v858, 1.0
  %v860 = vrcp.pop %v859
  %v861 = vmul.f32 %v859, %v860
  %v862 = vsub.f32 1.0, %v861
  %v863 = vmul.f32 %v860, %v862
  %v864 = vadd.f32 %v860, %v863
  %vm865 = vweird.f32 %v859
  %vm866 = vweird.f32 %v860
  %vm867 = vmor %vm865, %vm866
  %v868 = vsel %vm867, %v860, %v864
  %v869 = vand.u32 2147483647, %v859
  %vm870 = vcmp.eq.f32.partialorder %v869, 8.507059e+37
  %v871 = vand.u32 %v859, 2147483648
  %v872 = vor.u32 1.1754944e-38, %v871
  %v873 = vsel %vm870, %v872, %v868
  %v874 = vmul.f32 1.0, %v873
  %v875 = vtanh.pop %v855
  %v876 = vxor.u32 %v855, 2147483648
  %v877 = vmul.f32 %v876, 1.442695
  %v878 = vpow.pop %v877
  %v879 = vadd.f32 %v878, 1.0
  %v880 = vrcp.pop %v879
  %v881 = vmul.f32 %v879, %v880
  %v882 = vsub.f32 1.0, %v881
  %v883 = vmul.f32 %v880, %v882
  %v884 = vadd.f32 %v880, %v883
  %vm885 = vweird.f32 %v879
  %vm886 = vweird.f32 %v880
  %vm887 = vmor %vm885, %vm886
  %v888 = vsel %vm887, %v880, %v884
  %v889 = vand.u32 2147483647, %v879
  %vm890 = vcmp.eq.f32.partialorder %v889, 8.507059e+37
  %v891 = vand.u32 %v879, 2147483648
  %v892 = vor.u32 1.1754944e-38, %v891
  %v893 = vsel %vm890, %v892, %v888
  %v894 = vmul.f32 1.0, %v893
  %v896 = vrot.slane %v711, 2
  %v898 = vmul.f32 %v874, %v896
  %v899 = vmul.f32 %v874, %v875
  %901 = vrot.lane.b32.xlu0 %v899, 64
  %v902 = vpop.permute.xlu0 %901
  %v904 = vadd.f32 %v898, %v902
  %v905 = vtanh.pop %v904
  %v906 = vmul.f32 %v894, %v905
  %v907 = vmax.f32 %v819, 0.0
  %909 = vrot.lane.b32.xlu0 %v907, 64
  %v910 = vpop.permute.xlu0 %909
  %912 = vst.msk [vmem:[#allocation2] sm:$0xc] %vm726, %v910
  %v913 = vmax.f32 %v906, 0.0
  %915 = vrot.lane.b32.xlu0 %v913, 64
  %v916 = vpop.permute.xlu0 %915
  %918 = vst.msk [vmem:[#allocation3 + $0x10] sm:$0x3] %vm719, %v916
  %v919 = vpack.c.bf16 %v819, %v819
  %v921 = vrot.slane %v919, 1
  %922 = vrot.lane.b32.xlu0 %v921, 64
  %v923 = vpop.permute.xlu0 %922
  %v925 = vsel %vm512, %v923, 0
  %927 = vmatpush.bf16.msra.mxu0 0
  %928 = vmatpush.bf16.msra.mxu0 0
  %929 = vmatpush.bf16.msra.mxu0 0
  %930 = vmatpush.bf16.msra.mxu0 0
  %931 = vmatpush.bf16.msra.mxu0 %v502
  %932 = vmatpush.bf16.msra.mxu0 %v500
  %933 = vmatpush.bf16.msra.mxu0 %v498
  %934 = vmatpush.bf16.msra.mxu0 %v496
  %935 = vmatmul.bf16.gmra.mxu0 %v925
  %v936 = vpop.f32.mrf.mxu0
  %v937 = vadd.f32 0.0, %v936
  %v938 = vpop.f32.mrf.mxu0
  %939 = vdwg.mxu0
  %940 = vmatpush.bf16.msra.mxu0 0
  %941 = vmatpush.bf16.msra.mxu0 0
  %942 = vmatpush.bf16.msra.mxu0 0
  %943 = vmatpush.bf16.msra.mxu0 0
  %944 = vmatpush.bf16.msra.mxu0 %v503
  %945 = vmatpush.bf16.msra.mxu0 %v501
  %946 = vmatpush.bf16.msra.mxu0 %v499
  %947 = vmatpush.bf16.msra.mxu0 %v497
  %948 = vmatmul.bf16.gmra.mxu0 %v925
  %v949 = vpop.f32.mrf.mxu0
  %v950 = vadd.f32 0.0, %v949
  %v951 = vpop.f32.mrf.mxu0
  %952 = vdwg.mxu0
  %v955 = vrot.slane %v937, 4
  %v956 = vrot.slane %v950, 4
  %v959 = vadd.f32 %v376, %v955
  %v960 = vadd.f32 %v394, %v956
  %v961 = vxor.u32 %v959, 2147483648
  %v962 = vmul.f32 %v961, 1.442695
  %v963 = vpow.pop %v962
  %v964 = vadd.f32 %v963, 1.0
  %v965 = vrcp.pop %v964
  %v966 = vmul.f32 %v964, %v965
  %v967 = vsub.f32 1.0, %v966
  %v968 = vmul.f32 %v965, %v967
  %v969 = vadd.f32 %v965, %v968
  %vm970 = vweird.f32 %v964
  %vm971 = vweird.f32 %v965
  %vm972 = vmor %vm970, %vm971
  %v973 = vsel %vm972, %v965, %v969
  %v974 = vand.u32 2147483647, %v964
  %vm975 = vcmp.eq.f32.partialorder %v974, 8.507059e+37
  %v976 = vand.u32 %v964, 2147483648
  %v977 = vor.u32 1.1754944e-38, %v976
  %v978 = vsel %vm975, %v977, %v973
  %v979 = vmul.f32 1.0, %v978
  %v980 = vtanh.pop %v960
  %v981 = vxor.u32 %v960, 2147483648
  %v982 = vmul.f32 %v981, 1.442695
  %v983 = vpow.pop %v982
  %v984 = vadd.f32 %v983, 1.0
  %v985 = vrcp.pop %v984
  %v986 = vmul.f32 %v984, %v985
  %v987 = vsub.f32 1.0, %v986
  %v988 = vmul.f32 %v985, %v987
  %v989 = vadd.f32 %v985, %v988
  %vm990 = vweird.f32 %v984
  %vm991 = vweird.f32 %v985
  %vm992 = vmor %vm990, %vm991
  %v993 = vsel %vm992, %v985, %v989
  %v994 = vand.u32 2147483647, %v984
  %vm995 = vcmp.eq.f32.partialorder %v994, 8.507059e+37
  %v996 = vand.u32 %v984, 2147483648
  %v997 = vor.u32 1.1754944e-38, %v996
  %v998 = vsel %vm995, %v997, %v993
  %v999 = vmul.f32 1.0, %v998
  %v1001 = vrot.slane %v817, 6
  %v1003 = vmul.f32 %v979, %v1001
  %v1004 = vmul.f32 %v979, %v980
  %1006 = vrot.lane.b32.xlu0 %v1004, 64
  %v1007 = vpop.permute.xlu0 %1006
  %v1009 = vadd.f32 %v1003, %v1007
  %v1010 = vtanh.pop %v1009
  %v1011 = vmul.f32 %v999, %v1010
  %v1012 = vpack.c.bf16 %v906, %v906
  %1014 = vrot.lane.b32.xlu0 %v1012, 64
  %v1015 = vpop.permute.xlu0 %1014
  %v1017 = vsel %vm512, %v1015, 0
  %1019 = vmatpush.bf16.msra.mxu0 0
  %1020 = vmatpush.bf16.msra.mxu0 0
  %1021 = vmatpush.bf16.msra.mxu0 0
  %1022 = vmatpush.bf16.msra.mxu0 0
  %1023 = vmatpush.bf16.msra.mxu0 %v622
  %1024 = vmatpush.bf16.msra.mxu0 %v620
  %1025 = vmatpush.bf16.msra.mxu0 %v618
  %1026 = vmatpush.bf16.msra.mxu0 %v616
  %1027 = vmatmul.bf16.gmra.mxu0 %v1017
  %v1028 = vpop.f32.mrf.mxu0
  %v1029 = vadd.f32 0.0, %v1028
  %v1030 = vpop.f32.mrf.mxu0
  %1031 = vdwg.mxu0
  %1032 = vmatpush.bf16.msra.mxu0 0
  %1033 = vmatpush.bf16.msra.mxu0 0
  %1034 = vmatpush.bf16.msra.mxu0 0
  %1035 = vmatpush.bf16.msra.mxu0 0
  %1036 = vmatpush.bf16.msra.mxu0 %v623
  %1037 = vmatpush.bf16.msra.mxu0 %v621
  %1038 = vmatpush.bf16.msra.mxu0 %v619
  %1039 = vmatpush.bf16.msra.mxu0 %v617
  %1040 = vmatmul.bf16.gmra.mxu0 %v1017
  %v1041 = vpop.f32.mrf.mxu0
  %v1042 = vadd.f32 0.0, %v1041
  %v1043 = vpop.f32.mrf.mxu0
  %1044 = vdwg.mxu0
  %v1047 = vrot.slane %v1029, 2
  %v1048 = vrot.slane %v1042, 2
  %v1051 = vadd.f32 %v432, %v1047
  %v1052 = vadd.f32 %v450, %v1048
  %v1053 = vxor.u32 %v1051, 2147483648
  %v1054 = vmul.f32 %v1053, 1.442695
  %v1055 = vpow.pop %v1054
  %v1056 = vadd.f32 %v1055, 1.0
  %v1057 = vrcp.pop %v1056
  %v1058 = vmul.f32 %v1056, %v1057
  %v1059 = vsub.f32 1.0, %v1058
  %v1060 = vmul.f32 %v1057, %v1059
  %v1061 = vadd.f32 %v1057, %v1060
  %vm1062 = vweird.f32 %v1056
  %vm1063 = vweird.f32 %v1057
  %vm1064 = vmor %vm1062, %vm1063
  %v1065 = vsel %vm1064, %v1057, %v1061
  %v1066 = vand.u32 2147483647, %v1056
  %vm1067 = vcmp.eq.f32.partialorder %v1066, 8.507059e+37
  %v1068 = vand.u32 %v1056, 2147483648
  %v1069 = vor.u32 1.1754944e-38, %v1068
  %v1070 = vsel %vm1067, %v1069, %v1065
  %v1071 = vmul.f32 1.0, %v1070
  %v1072 = vtanh.pop %v1052
  %v1073 = vxor.u32 %v1052, 2147483648
  %v1074 = vmul.f32 %v1073, 1.442695
  %v1075 = vpow.pop %v1074
  %v1076 = vadd.f32 %v1075, 1.0
  %v1077 = vrcp.pop %v1076
  %v1078 = vmul.f32 %v1076, %v1077
  %v1079 = vsub.f32 1.0, %v1078
  %v1080 = vmul.f32 %v1077, %v1079
  %v1081 = vadd.f32 %v1077, %v1080
  %vm1082 = vweird.f32 %v1076
  %vm1083 = vweird.f32 %v1077
  %vm1084 = vmor %vm1082, %vm1083
  %v1085 = vsel %vm1084, %v1077, %v1081
  %v1086 = vand.u32 2147483647, %v1076
  %vm1087 = vcmp.eq.f32.partialorder %v1086, 8.507059e+37
  %v1088 = vand.u32 %v1076, 2147483648
  %v1089 = vor.u32 1.1754944e-38, %v1088
  %v1090 = vsel %vm1087, %v1089, %v1085
  %v1091 = vmul.f32 1.0, %v1090
  %v1093 = vrot.slane %v904, 2
  %v1095 = vmul.f32 %v1071, %v1093
  %v1096 = vmul.f32 %v1071, %v1072
  %1098 = vrot.lane.b32.xlu0 %v1096, 64
  %v1099 = vpop.permute.xlu0 %1098
  %v1101 = vadd.f32 %v1095, %v1099
  %v1102 = vtanh.pop %v1101
  %v1103 = vmul.f32 %v1091, %v1102
  %v1104 = vmax.f32 %v1011, 0.0
  %1106 = vrot.lane.b32.xlu0 %v1104, 64
  %v1107 = vpop.permute.xlu0 %1106
  %vm1109 = vcmask 521220
  %1110 = vst.msk [vmem:[#allocation2] sm:$0x30] %vm1109, %v1107
  %v1111 = vmax.f32 %v1103, 0.0
  %1113 = vrot.lane.b32.xlu0 %v1111, 64
  %v1114 = vpop.permute.xlu0 %1113
  %vm1116 = vcmask 523270
  %1117 = vst.msk [vmem:[#allocation3 + $0x8] sm:$0xc0] %vm1116, %v1114
  %v1118 = vpack.c.bf16 %v1011, %v1011
  %v1120 = vrot.slane %v1118, 2
  %1121 = vrot.lane.b32.xlu0 %v1120, 64
  %v1122 = vpop.permute.xlu0 %1121
  %v1124 = vsel %vm512, %v1122, 0
  %1126 = vmatpush.bf16.msra.mxu0 0
  %1127 = vmatpush.bf16.msra.mxu0 0
  %1128 = vmatpush.bf16.msra.mxu0 0
  %1129 = vmatpush.bf16.msra.mxu0 0
  %1130 = vmatpush.bf16.msra.mxu0 %v502
  %1131 = vmatpush.bf16.msra.mxu0 %v500
  %1132 = vmatpush.bf16.msra.mxu0 %v498
  %1133 = vmatpush.bf16.msra.mxu0 %v496
  %1134 = vmatmul.bf16.gmra.mxu0 %v1124
  %v1135 = vpop.f32.mrf.mxu0
  %v1136 = vadd.f32 0.0, %v1135
  %v1137 = vpop.f32.mrf.mxu0
  %1138 = vdwg.mxu0
  %1139 = vmatpush.bf16.msra.mxu0 0
  %1140 = vmatpush.bf16.msra.mxu0 0
  %1141 = vmatpush.bf16.msra.mxu0 0
  %1142 = vmatpush.bf16.msra.mxu0 0
  %1143 = vmatpush.bf16.msra.mxu0 %v503
  %1144 = vmatpush.bf16.msra.mxu0 %v501
  %1145 = vmatpush.bf16.msra.mxu0 %v499
  %1146 = vmatpush.bf16.msra.mxu0 %v497
  %1147 = vmatmul.bf16.gmra.mxu0 %v1124
  %v1148 = vpop.f32.mrf.mxu0
  %v1149 = vadd.f32 0.0, %v1148
  %v1150 = vpop.f32.mrf.mxu0
  %1151 = vdwg.mxu0
  %v1154 = vrot.slane %v1136, 2
  %v1155 = vrot.slane %v1149, 2
  %v1158 = vadd.f32 %v376, %v1154
  %v1159 = vadd.f32 %v394, %v1155
  %v1160 = vxor.u32 %v1158, 2147483648
  %v1161 = vmul.f32 %v1160, 1.442695
  %v1162 = vpow.pop %v1161
  %v1163 = vadd.f32 %v1162, 1.0
  %v1164 = vrcp.pop %v1163
  %v1165 = vmul.f32 %v1163, %v1164
  %v1166 = vsub.f32 1.0, %v1165
  %v1167 = vmul.f32 %v1164, %v1166
  %v1168 = vadd.f32 %v1164, %v1167
  %vm1169 = vweird.f32 %v1163
  %vm1170 = vweird.f32 %v1164
  %vm1171 = vmor %vm1169, %vm1170
  %v1172 = vsel %vm1171, %v1164, %v1168
  %v1173 = vand.u32 2147483647, %v1163
  %vm1174 = vcmp.eq.f32.partialorder %v1173, 8.507059e+37
  %v1175 = vand.u32 %v1163, 2147483648
  %v1176 = vor.u32 1.1754944e-38, %v1175
  %v1177 = vsel %vm1174, %v1176, %v1172
  %v1178 = vmul.f32 1.0, %v1177
  %v1179 = vtanh.pop %v1159
  %v1180 = vxor.u32 %v1159, 2147483648
  %v1181 = vmul.f32 %v1180, 1.442695
  %v1182 = vpow.pop %v1181
  %v1183 = vadd.f32 %v1182, 1.0
  %v1184 = vrcp.pop %v1183
  %v1185 = vmul.f32 %v1183, %v1184
  %v1186 = vsub.f32 1.0, %v1185
  %v1187 = vmul.f32 %v1184, %v1186
  %v1188 = vadd.f32 %v1184, %v1187
  %vm1189 = vweird.f32 %v1183
  %vm1190 = vweird.f32 %v1184
  %vm1191 = vmor %vm1189, %vm1190
  %v1192 = vsel %vm1191, %v1184, %v1188
  %v1193 = vand.u32 2147483647, %v1183
  %vm1194 = vcmp.eq.f32.partialorder %v1193, 8.507059e+37
  %v1195 = vand.u32 %v1183, 2147483648
  %v1196 = vor.u32 1.1754944e-38, %v1195
  %v1197 = vsel %vm1194, %v1196, %v1192
  %v1198 = vmul.f32 1.0, %v1197
  %v1200 = vrot.slane %v1009, 6
  %v1202 = vmul.f32 %v1178, %v1200
  %v1203 = vmul.f32 %v1178, %v1179
  %1205 = vrot.lane.b32.xlu0 %v1203, 64
  %v1206 = vpop.permute.xlu0 %1205
  %v1208 = vadd.f32 %v1202, %v1206
  %v1209 = vtanh.pop %v1208
  %v1210 = vmul.f32 %v1198, %v1209
  %v1211 = vpack.c.bf16 %v1103, %v1103
  %v1213 = vrot.slane %v1211, 3
  %1214 = vrot.lane.b32.xlu0 %v1213, 64
  %v1215 = vpop.permute.xlu0 %1214
  %v1217 = vsel %vm512, %v1215, 0
  %1219 = vmatpush.bf16.msra.mxu0 0
  %1220 = vmatpush.bf16.msra.mxu0 0
  %1221 = vmatpush.bf16.msra.mxu0 0
  %1222 = vmatpush.bf16.msra.mxu0 0
  %1223 = vmatpush.bf16.msra.mxu0 %v622
  %1224 = vmatpush.bf16.msra.mxu0 %v620
  %1225 = vmatpush.bf16.msra.mxu0 %v618
  %1226 = vmatpush.bf16.msra.mxu0 %v616
  %1227 = vmatmul.bf16.gmra.mxu0 %v1217
  %v1228 = vpop.f32.mrf.mxu0
  %v1229 = vadd.f32 0.0, %v1228
  %v1230 = vpop.f32.mrf.mxu0
  %1231 = vdwg.mxu0
  %1232 = vmatpush.bf16.msra.mxu0 0
  %1233 = vmatpush.bf16.msra.mxu0 0
  %1234 = vmatpush.bf16.msra.mxu0 0
  %1235 = vmatpush.bf16.msra.mxu0 0
  %1236 = vmatpush.bf16.msra.mxu0 %v623
  %1237 = vmatpush.bf16.msra.mxu0 %v621
  %1238 = vmatpush.bf16.msra.mxu0 %v619
  %1239 = vmatpush.bf16.msra.mxu0 %v617
  %1240 = vmatmul.bf16.gmra.mxu0 %v1217
  %v1241 = vpop.f32.mrf.mxu0
  %v1242 = vadd.f32 0.0, %v1241
  %v1243 = vpop.f32.mrf.mxu0
  %1244 = vdwg.mxu0
  %v1247 = vrot.slane %v1229, 4
  %v1248 = vrot.slane %v1242, 4
  %v1251 = vadd.f32 %v432, %v1247
  %v1252 = vadd.f32 %v450, %v1248
  %v1253 = vxor.u32 %v1251, 2147483648
  %v1254 = vmul.f32 %v1253, 1.442695
  %v1255 = vpow.pop %v1254
  %v1256 = vadd.f32 %v1255, 1.0
  %v1257 = vrcp.pop %v1256
  %v1258 = vmul.f32 %v1256, %v1257
  %v1259 = vsub.f32 1.0, %v1258
  %v1260 = vmul.f32 %v1257, %v1259
  %v1261 = vadd.f32 %v1257, %v1260
  %vm1262 = vweird.f32 %v1256
  %vm1263 = vweird.f32 %v1257
  %vm1264 = vmor %vm1262, %vm1263
  %v1265 = vsel %vm1264, %v1257, %v1261
  %v1266 = vand.u32 2147483647, %v1256
  %vm1267 = vcmp.eq.f32.partialorder %v1266, 8.507059e+37
  %v1268 = vand.u32 %v1256, 2147483648
  %v1269 = vor.u32 1.1754944e-38, %v1268
  %v1270 = vsel %vm1267, %v1269, %v1265
  %v1271 = vmul.f32 1.0, %v1270
  %v1272 = vtanh.pop %v1252
  %v1273 = vxor.u32 %v1252, 2147483648
  %v1274 = vmul.f32 %v1273, 1.442695
  %v1275 = vpow.pop %v1274
  %v1276 = vadd.f32 %v1275, 1.0
  %v1277 = vrcp.pop %v1276
  %v1278 = vmul.f32 %v1276, %v1277
  %v1279 = vsub.f32 1.0, %v1278
  %v1280 = vmul.f32 %v1277, %v1279
  %v1281 = vadd.f32 %v1277, %v1280
  %vm1282 = vweird.f32 %v1276
  %vm1283 = vweird.f32 %v1277
  %vm1284 = vmor %vm1282, %vm1283
  %v1285 = vsel %vm1284, %v1277, %v1281
  %v1286 = vand.u32 2147483647, %v1276
  %vm1287 = vcmp.eq.f32.partialorder %v1286, 8.507059e+37
  %v1288 = vand.u32 %v1276, 2147483648
  %v1289 = vor.u32 1.1754944e-38, %v1288
  %v1290 = vsel %vm1287, %v1289, %v1285
  %v1291 = vmul.f32 1.0, %v1290
  %v1293 = vrot.slane %v1101, 2
  %v1295 = vmul.f32 %v1271, %v1293
  %v1296 = vmul.f32 %v1271, %v1272
  %1298 = vrot.lane.b32.xlu0 %v1296, 64
  %v1299 = vpop.permute.xlu0 %1298
  %v1301 = vadd.f32 %v1295, %v1299
  %v1302 = vtanh.pop %v1301
  %v1303 = vmul.f32 %v1291, %v1302
  %v1304 = vmax.f32 %v1210, 0.0
  %1306 = vrot.lane.b32.xlu0 %v1304, 64
  %v1307 = vpop.permute.xlu0 %1306
  %1309 = vst.msk [vmem:[#allocation2] sm:$0xc0] %vm1116, %v1307
  %v1310 = vmax.f32 %v1303, 0.0
  %1312 = vrot.lane.b32.xlu0 %v1310, 64
  %v1313 = vpop.permute.xlu0 %1312
  %1315 = vst.msk [vmem:[#allocation3 + $0x8] sm:$0x30] %vm1109, %v1313
  %v1316 = vpack.c.bf16 %v1210, %v1210
  %v1318 = vrot.slane %v1316, 3
  %1319 = vrot.lane.b32.xlu0 %v1318, 64
  %v1320 = vpop.permute.xlu0 %1319
  %v1322 = vsel %vm512, %v1320, 0
  %1324 = vmatpush.bf16.msra.mxu0 0
  %1325 = vmatpush.bf16.msra.mxu0 0
  %1326 = vmatpush.bf16.msra.mxu0 0
  %1327 = vmatpush.bf16.msra.mxu0 0
  %1328 = vmatpush.bf16.msra.mxu0 %v502
  %1329 = vmatpush.bf16.msra.mxu0 %v500
  %1330 = vmatpush.bf16.msra.mxu0 %v498
  %1331 = vmatpush.bf16.msra.mxu0 %v496
  %1332 = vmatmul.bf16.gmra.mxu0 %v1322
  %v1333 = vpop.f32.mrf.mxu0
  %v1334 = vadd.f32 0.0, %v1333
  %v1335 = vpop.f32.mrf.mxu0
  %1336 = vdwg.mxu0
  %1337 = vmatpush.bf16.msra.mxu0 0
  %1338 = vmatpush.bf16.msra.mxu0 0
  %1339 = vmatpush.bf16.msra.mxu0 0
  %1340 = vmatpush.bf16.msra.mxu0 0
  %1341 = vmatpush.bf16.msra.mxu0 %v503
  %1342 = vmatpush.bf16.msra.mxu0 %v501
  %1343 = vmatpush.bf16.msra.mxu0 %v499
  %1344 = vmatpush.bf16.msra.mxu0 %v497
  %1345 = vmatmul.bf16.gmra.mxu0 %v1322
  %v1346 = vpop.f32.mrf.mxu0
  %v1347 = vadd.f32 0.0, %v1346
  %v1348 = vpop.f32.mrf.mxu0
  %1349 = vdwg.mxu0
  %v1350 = vadd.f32 %v378, %v1334
  %v1351 = vadd.f32 %v396, %v1347
  %v1352 = vxor.u32 %v1350, 2147483648
  %v1353 = vmul.f32 %v1352, 1.442695
  %v1354 = vpow.pop %v1353
  %v1355 = vadd.f32 %v1354, 1.0
  %v1356 = vrcp.pop %v1355
  %v1357 = vmul.f32 %v1355, %v1356
  %v1358 = vsub.f32 1.0, %v1357
  %v1359 = vmul.f32 %v1356, %v1358
  %v1360 = vadd.f32 %v1356, %v1359
  %vm1361 = vweird.f32 %v1355
  %vm1362 = vweird.f32 %v1356
  %vm1363 = vmor %vm1361, %vm1362
  %v1364 = vsel %vm1363, %v1356, %v1360
  %v1365 = vand.u32 2147483647, %v1355
  %vm1366 = vcmp.eq.f32.partialorder %v1365, 8.507059e+37
  %v1367 = vand.u32 %v1355, 2147483648
  %v1368 = vor.u32 1.1754944e-38, %v1367
  %v1369 = vsel %vm1366, %v1368, %v1364
  %v1370 = vmul.f32 1.0, %v1369
  %v1371 = vtanh.pop %v1351
  %v1372 = vxor.u32 %v1351, 2147483648
  %v1373 = vmul.f32 %v1372, 1.442695
  %v1374 = vpow.pop %v1373
  %v1375 = vadd.f32 %v1374, 1.0
  %v1376 = vrcp.pop %v1375
  %v1377 = vmul.f32 %v1375, %v1376
  %v1378 = vsub.f32 1.0, %v1377
  %v1379 = vmul.f32 %v1376, %v1378
  %v1380 = vadd.f32 %v1376, %v1379
  %vm1381 = vweird.f32 %v1375
  %vm1382 = vweird.f32 %v1376
  %vm1383 = vmor %vm1381, %vm1382
  %v1384 = vsel %vm1383, %v1376, %v1380
  %v1385 = vand.u32 2147483647, %v1375
  %vm1386 = vcmp.eq.f32.partialorder %v1385, 8.507059e+37
  %v1387 = vand.u32 %v1375, 2147483648
  %v1388 = vor.u32 1.1754944e-38, %v1387
  %v1389 = vsel %vm1386, %v1388, %v1384
  %v1390 = vmul.f32 1.0, %v1389
  %v1392 = vrot.slane %v1208, 6
  %v1394 = vmul.f32 %v1370, %v1392
  %v1395 = vmul.f32 %v1370, %v1371
  %1397 = vrot.lane.b32.xlu0 %v1395, 64
  %v1398 = vpop.permute.xlu0 %1397
  %v1400 = vadd.f32 %v1394, %v1398
  %v1401 = vtanh.pop %v1400
  %v1402 = vmul.f32 %v1390, %v1401
  %v1403 = vpack.c.bf16 %v1303, %v1303
  %v1405 = vrot.slane %v1403, 2
  %1406 = vrot.lane.b32.xlu0 %v1405, 64
  %v1407 = vpop.permute.xlu0 %1406
  %v1409 = vsel %vm512, %v1407, 0
  %1411 = vmatpush.bf16.msra.mxu0 0
  %1412 = vmatpush.bf16.msra.mxu0 0
  %1413 = vmatpush.bf16.msra.mxu0 0
  %1414 = vmatpush.bf16.msra.mxu0 0
  %1415 = vmatpush.bf16.msra.mxu0 %v622
  %1416 = vmatpush.bf16.msra.mxu0 %v620
  %1417 = vmatpush.bf16.msra.mxu0 %v618
  %1418 = vmatpush.bf16.msra.mxu0 %v616
  %1419 = vmatmul.bf16.gmra.mxu0 %v1409
  %v1420 = vpop.f32.mrf.mxu0
  %v1421 = vadd.f32 0.0, %v1420
  %v1422 = vpop.f32.mrf.mxu0
  %1423 = vdwg.mxu0
  %1424 = vmatpush.bf16.msra.mxu0 0
  %1425 = vmatpush.bf16.msra.mxu0 0
  %1426 = vmatpush.bf16.msra.mxu0 0
  %1427 = vmatpush.bf16.msra.mxu0 0
  %1428 = vmatpush.bf16.msra.mxu0 %v623
  %1429 = vmatpush.bf16.msra.mxu0 %v621
  %1430 = vmatpush.bf16.msra.mxu0 %v619
  %1431 = vmatpush.bf16.msra.mxu0 %v617
  %1432 = vmatmul.bf16.gmra.mxu0 %v1409
  %v1433 = vpop.f32.mrf.mxu0
  %v1434 = vadd.f32 0.0, %v1433
  %v1435 = vpop.f32.mrf.mxu0
  %1436 = vdwg.mxu0
  %v1439 = vrot.slane %v1421, 6
  %v1440 = vrot.slane %v1434, 6
  %v1443 = vadd.f32 %v432, %v1439
  %v1444 = vadd.f32 %v450, %v1440
  %v1445 = vxor.u32 %v1443, 2147483648
  %v1446 = vmul.f32 %v1445, 1.442695
  %v1447 = vpow.pop %v1446
  %v1448 = vadd.f32 %v1447, 1.0
  %v1449 = vrcp.pop %v1448
  %v1450 = vmul.f32 %v1448, %v1449
  %v1451 = vsub.f32 1.0, %v1450
  %v1452 = vmul.f32 %v1449, %v1451
  %v1453 = vadd.f32 %v1449, %v1452
  %vm1454 = vweird.f32 %v1448
  %vm1455 = vweird.f32 %v1449
  %vm1456 = vmor %vm1454, %vm1455
  %v1457 = vsel %vm1456, %v1449, %v1453
  %v1458 = vand.u32 2147483647, %v1448
  %vm1459 = vcmp.eq.f32.partialorder %v1458, 8.507059e+37
  %v1460 = vand.u32 %v1448, 2147483648
  %v1461 = vor.u32 1.1754944e-38, %v1460
  %v1462 = vsel %vm1459, %v1461, %v1457
  %v1463 = vmul.f32 1.0, %v1462
  %v1464 = vtanh.pop %v1444
  %v1465 = vxor.u32 %v1444, 2147483648
  %v1466 = vmul.f32 %v1465, 1.442695
  %v1467 = vpow.pop %v1466
  %v1468 = vadd.f32 %v1467, 1.0
  %v1469 = vrcp.pop %v1468
  %v1470 = vmul.f32 %v1468, %v1469
  %v1471 = vsub.f32 1.0, %v1470
  %v1472 = vmul.f32 %v1469, %v1471
  %v1473 = vadd.f32 %v1469, %v1472
  %vm1474 = vweird.f32 %v1468
  %vm1475 = vweird.f32 %v1469
  %vm1476 = vmor %vm1474, %vm1475
  %v1477 = vsel %vm1476, %v1469, %v1473
  %v1478 = vand.u32 2147483647, %v1468
  %vm1479 = vcmp.eq.f32.partialorder %v1478, 8.507059e+37
  %v1480 = vand.u32 %v1468, 2147483648
  %v1481 = vor.u32 1.1754944e-38, %v1480
  %v1482 = vsel %vm1479, %v1481, %v1477
  %v1483 = vmul.f32 1.0, %v1482
  %v1485 = vrot.slane %v1301, 2
  %v1487 = vmul.f32 %v1463, %v1485
  %v1488 = vmul.f32 %v1463, %v1464
  %1490 = vrot.lane.b32.xlu0 %v1488, 64
  %v1491 = vpop.permute.xlu0 %1490
  %v1493 = vadd.f32 %v1487, %v1491
  %v1494 = vtanh.pop %v1493
  %v1495 = vmul.f32 %v1483, %v1494
  %v1496 = vmax.f32 %v1402, 0.0
  %1498 = vrot.lane.b32.xlu0 %v1496, 64
  %v1499 = vpop.permute.xlu0 %1498
  %1501 = vst.msk [vmem:[#allocation2 + $0x8] sm:$0x3] %vm719, %v1499
  %v1502 = vmax.f32 %v1495, 0.0
  %1504 = vrot.lane.b32.xlu0 %v1502, 64
  %v1505 = vpop.permute.xlu0 %1504
  %1507 = vst.msk [vmem:[#allocation3 + $0x8] sm:$0xc] %vm726, %v1505
  %v1508 = vpack.c.bf16 %v1402, %v1402
  %1510 = vrot.lane.b32.xlu0 %v1508, 64
  %v1511 = vpop.permute.xlu0 %1510
  %v1513 = vsel %vm512, %v1511, 0
  %1515 = vmatpush.bf16.msra.mxu0 0
  %1516 = vmatpush.bf16.msra.mxu0 0
  %1517 = vmatpush.bf16.msra.mxu0 0
  %1518 = vmatpush.bf16.msra.mxu0 0
  %1519 = vmatpush.bf16.msra.mxu0 %v502
  %1520 = vmatpush.bf16.msra.mxu0 %v500
  %1521 = vmatpush.bf16.msra.mxu0 %v498
  %1522 = vmatpush.bf16.msra.mxu0 %v496
  %1523 = vmatmul.bf16.gmra.mxu0 %v1513
  %v1524 = vpop.f32.mrf.mxu0
  %v1525 = vadd.f32 0.0, %v1524
  %v1526 = vpop.f32.mrf.mxu0
  %1527 = vdwg.mxu0
  %1528 = vmatpush.bf16.msra.mxu0 0
  %1529 = vmatpush.bf16.msra.mxu0 0
  %1530 = vmatpush.bf16.msra.mxu0 0
  %1531 = vmatpush.bf16.msra.mxu0 0
  %1532 = vmatpush.bf16.msra.mxu0 %v503
  %1533 = vmatpush.bf16.msra.mxu0 %v501
  %1534 = vmatpush.bf16.msra.mxu0 %v499
  %1535 = vmatpush.bf16.msra.mxu0 %v497
  %1536 = vmatmul.bf16.gmra.mxu0 %v1513
  %v1537 = vpop.f32.mrf.mxu0
  %v1538 = vadd.f32 0.0, %v1537
  %v1539 = vpop.f32.mrf.mxu0
  %1540 = vdwg.mxu0
  %v1543 = vrot.slane %v1525, 6
  %v1544 = vrot.slane %v1538, 6
  %v1547 = vadd.f32 %v378, %v1543
  %v1548 = vadd.f32 %v396, %v1544
  %v1549 = vxor.u32 %v1547, 2147483648
  %v1550 = vmul.f32 %v1549, 1.442695
  %v1551 = vpow.pop %v1550
  %v1552 = vadd.f32 %v1551, 1.0
  %v1553 = vrcp.pop %v1552
  %v1554 = vmul.f32 %v1552, %v1553
  %v1555 = vsub.f32 1.0, %v1554
  %v1556 = vmul.f32 %v1553, %v1555
  %v1557 = vadd.f32 %v1553, %v1556
  %vm1558 = vweird.f32 %v1552
  %vm1559 = vweird.f32 %v1553
  %vm1560 = vmor %vm1558, %vm1559
  %v1561 = vsel %vm1560, %v1553, %v1557
  %v1562 = vand.u32 2147483647, %v1552
  %vm1563 = vcmp.eq.f32.partialorder %v1562, 8.507059e+37
  %v1564 = vand.u32 %v1552, 2147483648
  %v1565 = vor.u32 1.1754944e-38, %v1564
  %v1566 = vsel %vm1563, %v1565, %v1561
  %v1567 = vmul.f32 1.0, %v1566
  %v1568 = vtanh.pop %v1548
  %v1569 = vxor.u32 %v1548, 2147483648
  %v1570 = vmul.f32 %v1569, 1.442695
  %v1571 = vpow.pop %v1570
  %v1572 = vadd.f32 %v1571, 1.0
  %v1573 = vrcp.pop %v1572
  %v1574 = vmul.f32 %v1572, %v1573
  %v1575 = vsub.f32 1.0, %v1574
  %v1576 = vmul.f32 %v1573, %v1575
  %v1577 = vadd.f32 %v1573, %v1576
  %vm1578 = vweird.f32 %v1572
  %vm1579 = vweird.f32 %v1573
  %vm1580 = vmor %vm1578, %vm1579
  %v1581 = vsel %vm1580, %v1573, %v1577
  %v1582 = vand.u32 2147483647, %v1572
  %vm1583 = vcmp.eq.f32.partialorder %v1582, 8.507059e+37
  %v1584 = vand.u32 %v1572, 2147483648
  %v1585 = vor.u32 1.1754944e-38, %v1584
  %v1586 = vsel %vm1583, %v1585, %v1581
  %v1587 = vmul.f32 1.0, %v1586
  %v1589 = vrot.slane %v1400, 6
  %v1591 = vmul.f32 %v1567, %v1589
  %v1592 = vmul.f32 %v1567, %v1568
  %1594 = vrot.lane.b32.xlu0 %v1592, 64
  %v1595 = vpop.permute.xlu0 %1594
  %v1597 = vadd.f32 %v1591, %v1595
  %v1598 = vtanh.pop %v1597
  %v1599 = vmul.f32 %v1587, %v1598
  %v1600 = vpack.c.bf16 %v1495, %v1495
  %v1602 = vrot.slane %v1600, 1
  %1603 = vrot.lane.b32.xlu0 %v1602, 64
  %v1604 = vpop.permute.xlu0 %1603
  %v1606 = vsel %vm512, %v1604, 0
  %1608 = vmatpush.bf16.msra.mxu0 0
  %1609 = vmatpush.bf16.msra.mxu0 0
  %1610 = vmatpush.bf16.msra.mxu0 0
  %1611 = vmatpush.bf16.msra.mxu0 0
  %1612 = vmatpush.bf16.msra.mxu0 %v622
  %1613 = vmatpush.bf16.msra.mxu0 %v620
  %1614 = vmatpush.bf16.msra.mxu0 %v618
  %1615 = vmatpush.bf16.msra.mxu0 %v616
  %1616 = vmatmul.bf16.gmra.mxu0 %v1606
  %v1617 = vpop.f32.mrf.mxu0
  %v1618 = vadd.f32 0.0, %v1617
  %v1619 = vpop.f32.mrf.mxu0
  %1620 = vdwg.mxu0
  %1621 = vmatpush.bf16.msra.mxu0 0
  %1622 = vmatpush.bf16.msra.mxu0 0
  %1623 = vmatpush.bf16.msra.mxu0 0
  %1624 = vmatpush.bf16.msra.mxu0 0
  %1625 = vmatpush.bf16.msra.mxu0 %v623
  %1626 = vmatpush.bf16.msra.mxu0 %v621
  %1627 = vmatpush.bf16.msra.mxu0 %v619
  %1628 = vmatpush.bf16.msra.mxu0 %v617
  %1629 = vmatmul.bf16.gmra.mxu0 %v1606
  %v1630 = vpop.f32.mrf.mxu0
  %v1631 = vadd.f32 0.0, %v1630
  %v1632 = vpop.f32.mrf.mxu0
  %1633 = vdwg.mxu0
  %v1634 = vadd.f32 %v432, %v1618
  %v1635 = vadd.f32 %v450, %v1631
  %v1636 = vxor.u32 %v1634, 2147483648
  %v1637 = vmul.f32 %v1636, 1.442695
  %v1638 = vpow.pop %v1637
  %v1639 = vadd.f32 %v1638, 1.0
  %v1640 = vrcp.pop %v1639
  %v1641 = vmul.f32 %v1639, %v1640
  %v1642 = vsub.f32 1.0, %v1641
  %v1643 = vmul.f32 %v1640, %v1642
  %v1644 = vadd.f32 %v1640, %v1643
  %vm1645 = vweird.f32 %v1639
  %vm1646 = vweird.f32 %v1640
  %vm1647 = vmor %vm1645, %vm1646
  %v1648 = vsel %vm1647, %v1640, %v1644
  %v1649 = vand.u32 2147483647, %v1639
  %vm1650 = vcmp.eq.f32.partialorder %v1649, 8.507059e+37
  %v1651 = vand.u32 %v1639, 2147483648
  %v1652 = vor.u32 1.1754944e-38, %v1651
  %v1653 = vsel %vm1650, %v1652, %v1648
  %v1654 = vmul.f32 1.0, %v1653
  %v1655 = vtanh.pop %v1635
  %v1656 = vxor.u32 %v1635, 2147483648
  %v1657 = vmul.f32 %v1656, 1.442695
  %v1658 = vpow.pop %v1657
  %v1659 = vadd.f32 %v1658, 1.0
  %v1660 = vrcp.pop %v1659
  %v1661 = vmul.f32 %v1659, %v1660
  %v1662 = vsub.f32 1.0, %v1661
  %v1663 = vmul.f32 %v1660, %v1662
  %v1664 = vadd.f32 %v1660, %v1663
  %vm1665 = vweird.f32 %v1659
  %vm1666 = vweird.f32 %v1660
  %vm1667 = vmor %vm1665, %vm1666
  %v1668 = vsel %vm1667, %v1660, %v1664
  %v1669 = vand.u32 2147483647, %v1659
  %vm1670 = vcmp.eq.f32.partialorder %v1669, 8.507059e+37
  %v1671 = vand.u32 %v1659, 2147483648
  %v1672 = vor.u32 1.1754944e-38, %v1671
  %v1673 = vsel %vm1670, %v1672, %v1668
  %v1674 = vmul.f32 1.0, %v1673
  %v1676 = vrot.slane %v1493, 2
  %v1678 = vmul.f32 %v1654, %v1676
  %v1679 = vmul.f32 %v1654, %v1655
  %1681 = vrot.lane.b32.xlu0 %v1679, 64
  %v1682 = vpop.permute.xlu0 %1681
  %v1684 = vadd.f32 %v1678, %v1682
  %v1685 = vtanh.pop %v1684
  %v1686 = vmul.f32 %v1674, %v1685
  %v1687 = vmax.f32 %v1599, 0.0
  %1689 = vrot.lane.b32.xlu0 %v1687, 64
  %v1690 = vpop.permute.xlu0 %1689
  %1692 = vst.msk [vmem:[#allocation2 + $0x8] sm:$0xc] %vm726, %v1690
  %v1693 = vmax.f32 %v1686, 0.0
  %1695 = vrot.lane.b32.xlu0 %v1693, 64
  %v1696 = vpop.permute.xlu0 %1695
  %1698 = vst.msk [vmem:[#allocation3 + $0x8] sm:$0x3] %vm719, %v1696
  %v1699 = vpack.c.bf16 %v1599, %v1599
  %v1701 = vrot.slane %v1699, 1
  %1702 = vrot.lane.b32.xlu0 %v1701, 64
  %v1703 = vpop.permute.xlu0 %1702
  %v1705 = vsel %vm512, %v1703, 0
  %1707 = vmatpush.bf16.msra.mxu0 0
  %1708 = vmatpush.bf16.msra.mxu0 0
  %1709 = vmatpush.bf16.msra.mxu0 0
  %1710 = vmatpush.bf16.msra.mxu0 0
  %1711 = vmatpush.bf16.msra.mxu0 %v502
  %1712 = vmatpush.bf16.msra.mxu0 %v500
  %1713 = vmatpush.bf16.msra.mxu0 %v498
  %1714 = vmatpush.bf16.msra.mxu0 %v496
  %1715 = vmatmul.bf16.gmra.mxu0 %v1705
  %v1716 = vpop.f32.mrf.mxu0
  %v1717 = vadd.f32 0.0, %v1716
  %v1718 = vpop.f32.mrf.mxu0
  %1719 = vdwg.mxu0
  %1720 = vmatpush.bf16.msra.mxu0 0
  %1721 = vmatpush.bf16.msra.mxu0 0
  %1722 = vmatpush.bf16.msra.mxu0 0
  %1723 = vmatpush.bf16.msra.mxu0 0
  %1724 = vmatpush.bf16.msra.mxu0 %v503
  %1725 = vmatpush.bf16.msra.mxu0 %v501
  %1726 = vmatpush.bf16.msra.mxu0 %v499
  %1727 = vmatpush.bf16.msra.mxu0 %v497
  %1728 = vmatmul.bf16.gmra.mxu0 %v1705
  %v1729 = vpop.f32.mrf.mxu0
  %v1730 = vadd.f32 0.0, %v1729
  %v1731 = vpop.f32.mrf.mxu0
  %1732 = vdwg.mxu0
  %v1735 = vrot.slane %v1717, 4
  %v1736 = vrot.slane %v1730, 4
  %v1739 = vadd.f32 %v378, %v1735
  %v1740 = vadd.f32 %v396, %v1736
  %v1741 = vxor.u32 %v1739, 2147483648
  %v1742 = vmul.f32 %v1741, 1.442695
  %v1743 = vpow.pop %v1742
  %v1744 = vadd.f32 %v1743, 1.0
  %v1745 = vrcp.pop %v1744
  %v1746 = vmul.f32 %v1744, %v1745
  %v1747 = vsub.f32 1.0, %v1746
  %v1748 = vmul.f32 %v1745, %v1747
  %v1749 = vadd.f32 %v1745, %v1748
  %vm1750 = vweird.f32 %v1744
  %vm1751 = vweird.f32 %v1745
  %vm1752 = vmor %vm1750, %vm1751
  %v1753 = vsel %vm1752, %v1745, %v1749
  %v1754 = vand.u32 2147483647, %v1744
  %vm1755 = vcmp.eq.f32.partialorder %v1754, 8.507059e+37
  %v1756 = vand.u32 %v1744, 2147483648
  %v1757 = vor.u32 1.1754944e-38, %v1756
  %v1758 = vsel %vm1755, %v1757, %v1753
  %v1759 = vmul.f32 1.0, %v1758
  %v1760 = vtanh.pop %v1740
  %v1761 = vxor.u32 %v1740, 2147483648
  %v1762 = vmul.f32 %v1761, 1.442695
  %v1763 = vpow.pop %v1762
  %v1764 = vadd.f32 %v1763, 1.0
  %v1765 = vrcp.pop %v1764
  %v1766 = vmul.f32 %v1764, %v1765
  %v1767 = vsub.f32 1.0, %v1766
  %v1768 = vmul.f32 %v1765, %v1767
  %v1769 = vadd.f32 %v1765, %v1768
  %vm1770 = vweird.f32 %v1764
  %vm1771 = vweird.f32 %v1765
  %vm1772 = vmor %vm1770, %vm1771
  %v1773 = vsel %vm1772, %v1765, %v1769
  %v1774 = vand.u32 2147483647, %v1764
  %vm1775 = vcmp.eq.f32.partialorder %v1774, 8.507059e+37
  %v1776 = vand.u32 %v1764, 2147483648
  %v1777 = vor.u32 1.1754944e-38, %v1776
  %v1778 = vsel %vm1775, %v1777, %v1773
  %v1779 = vmul.f32 1.0, %v1778
  %v1781 = vrot.slane %v1597, 6
  %v1783 = vmul.f32 %v1759, %v1781
  %v1784 = vmul.f32 %v1759, %v1760
  %1786 = vrot.lane.b32.xlu0 %v1784, 64
  %v1787 = vpop.permute.xlu0 %1786
  %v1789 = vadd.f32 %v1783, %v1787
  %v1790 = vtanh.pop %v1789
  %v1791 = vmul.f32 %v1779, %v1790
  %v1792 = vpack.c.bf16 %v1686, %v1686
  %1794 = vrot.lane.b32.xlu0 %v1792, 64
  %v1795 = vpop.permute.xlu0 %1794
  %v1797 = vsel %vm512, %v1795, 0
  %1799 = vmatpush.bf16.msra.mxu0 0
  %1800 = vmatpush.bf16.msra.mxu0 0
  %1801 = vmatpush.bf16.msra.mxu0 0
  %1802 = vmatpush.bf16.msra.mxu0 0
  %1803 = vmatpush.bf16.msra.mxu0 %v622
  %1804 = vmatpush.bf16.msra.mxu0 %v620
  %1805 = vmatpush.bf16.msra.mxu0 %v618
  %1806 = vmatpush.bf16.msra.mxu0 %v616
  %1807 = vmatmul.bf16.gmra.mxu0 %v1797
  %v1808 = vpop.f32.mrf.mxu0
  %v1809 = vadd.f32 0.0, %v1808
  %v1810 = vpop.f32.mrf.mxu0
  %1811 = vdwg.mxu0
  %1812 = vmatpush.bf16.msra.mxu0 0
  %1813 = vmatpush.bf16.msra.mxu0 0
  %1814 = vmatpush.bf16.msra.mxu0 0
  %1815 = vmatpush.bf16.msra.mxu0 0
  %1816 = vmatpush.bf16.msra.mxu0 %v623
  %1817 = vmatpush.bf16.msra.mxu0 %v621
  %1818 = vmatpush.bf16.msra.mxu0 %v619
  %1819 = vmatpush.bf16.msra.mxu0 %v617
  %1820 = vmatmul.bf16.gmra.mxu0 %v1797
  %v1821 = vpop.f32.mrf.mxu0
  %v1822 = vadd.f32 0.0, %v1821
  %v1823 = vpop.f32.mrf.mxu0
  %1824 = vdwg.mxu0
  %v1827 = vrot.slane %v1809, 2
  %v1828 = vrot.slane %v1822, 2
  %v1831 = vadd.f32 %v430, %v1827
  %v1832 = vadd.f32 %v448, %v1828
  %v1833 = vxor.u32 %v1831, 2147483648
  %v1834 = vmul.f32 %v1833, 1.442695
  %v1835 = vpow.pop %v1834
  %v1836 = vadd.f32 %v1835, 1.0
  %v1837 = vrcp.pop %v1836
  %v1838 = vmul.f32 %v1836, %v1837
  %v1839 = vsub.f32 1.0, %v1838
  %v1840 = vmul.f32 %v1837, %v1839
  %v1841 = vadd.f32 %v1837, %v1840
  %vm1842 = vweird.f32 %v1836
  %vm1843 = vweird.f32 %v1837
  %vm1844 = vmor %vm1842, %vm1843
  %v1845 = vsel %vm1844, %v1837, %v1841
  %v1846 = vand.u32 2147483647, %v1836
  %vm1847 = vcmp.eq.f32.partialorder %v1846, 8.507059e+37
  %v1848 = vand.u32 %v1836, 2147483648
  %v1849 = vor.u32 1.1754944e-38, %v1848
  %v1850 = vsel %vm1847, %v1849, %v1845
  %v1851 = vmul.f32 1.0, %v1850
  %v1852 = vtanh.pop %v1832
  %v1853 = vxor.u32 %v1832, 2147483648
  %v1854 = vmul.f32 %v1853, 1.442695
  %v1855 = vpow.pop %v1854
  %v1856 = vadd.f32 %v1855, 1.0
  %v1857 = vrcp.pop %v1856
  %v1858 = vmul.f32 %v1856, %v1857
  %v1859 = vsub.f32 1.0, %v1858
  %v1860 = vmul.f32 %v1857, %v1859
  %v1861 = vadd.f32 %v1857, %v1860
  %vm1862 = vweird.f32 %v1856
  %vm1863 = vweird.f32 %v1857
  %vm1864 = vmor %vm1862, %vm1863
  %v1865 = vsel %vm1864, %v1857, %v1861
  %v1866 = vand.u32 2147483647, %v1856
  %vm1867 = vcmp.eq.f32.partialorder %v1866, 8.507059e+37
  %v1868 = vand.u32 %v1856, 2147483648
  %v1869 = vor.u32 1.1754944e-38, %v1868
  %v1870 = vsel %vm1867, %v1869, %v1865
  %v1871 = vmul.f32 1.0, %v1870
  %v1873 = vrot.slane %v1684, 2
  %v1875 = vmul.f32 %v1851, %v1873
  %v1876 = vmul.f32 %v1851, %v1852
  %1878 = vrot.lane.b32.xlu0 %v1876, 64
  %v1879 = vpop.permute.xlu0 %1878
  %v1881 = vadd.f32 %v1875, %v1879
  %v1882 = vtanh.pop %v1881
  %v1883 = vmul.f32 %v1871, %v1882
  %v1884 = vmax.f32 %v1791, 0.0
  %1886 = vrot.lane.b32.xlu0 %v1884, 64
  %v1887 = vpop.permute.xlu0 %1886
  %1889 = vst.msk [vmem:[#allocation2 + $0x8] sm:$0x30] %vm1109, %v1887
  %v1890 = vmax.f32 %v1883, 0.0
  %1892 = vrot.lane.b32.xlu0 %v1890, 64
  %v1893 = vpop.permute.xlu0 %1892
  %1895 = vst.msk [vmem:[#allocation3] sm:$0xc0] %vm1116, %v1893
  %v1896 = vpack.c.bf16 %v1791, %v1791
  %v1898 = vrot.slane %v1896, 2
  %1899 = vrot.lane.b32.xlu0 %v1898, 64
  %v1900 = vpop.permute.xlu0 %1899
  %v1902 = vsel %vm512, %v1900, 0
  %1904 = vmatpush.bf16.msra.mxu0 0
  %1905 = vmatpush.bf16.msra.mxu0 0
  %1906 = vmatpush.bf16.msra.mxu0 0
  %1907 = vmatpush.bf16.msra.mxu0 0
  %1908 = vmatpush.bf16.msra.mxu0 %v502
  %1909 = vmatpush.bf16.msra.mxu0 %v500
  %1910 = vmatpush.bf16.msra.mxu0 %v498
  %1911 = vmatpush.bf16.msra.mxu0 %v496
  %1912 = vmatmul.bf16.gmra.mxu0 %v1902
  %v1913 = vpop.f32.mrf.mxu0
  %v1914 = vadd.f32 0.0, %v1913
  %v1915 = vpop.f32.mrf.mxu0
  %1916 = vdwg.mxu0
  %1917 = vmatpush.bf16.msra.mxu0 0
  %1918 = vmatpush.bf16.msra.mxu0 0
  %1919 = vmatpush.bf16.msra.mxu0 0
  %1920 = vmatpush.bf16.msra.mxu0 0
  %1921 = vmatpush.bf16.msra.mxu0 %v503
  %1922 = vmatpush.bf16.msra.mxu0 %v501
  %1923 = vmatpush.bf16.msra.mxu0 %v499
  %1924 = vmatpush.bf16.msra.mxu0 %v497
  %1925 = vmatmul.bf16.gmra.mxu0 %v1902
  %v1926 = vpop.f32.mrf.mxu0
  %v1927 = vadd.f32 0.0, %v1926
  %v1928 = vpop.f32.mrf.mxu0
  %1929 = vdwg.mxu0
  %v1932 = vrot.slane %v1914, 2
  %v1933 = vrot.slane %v1927, 2
  %v1936 = vadd.f32 %v378, %v1932
  %v1937 = vadd.f32 %v396, %v1933
  %v1938 = vxor.u32 %v1936, 2147483648
  %v1939 = vmul.f32 %v1938, 1.442695
  %v1940 = vpow.pop %v1939
  %v1941 = vadd.f32 %v1940, 1.0
  %v1942 = vrcp.pop %v1941
  %v1943 = vmul.f32 %v1941, %v1942
  %v1944 = vsub.f32 1.0, %v1943
  %v1945 = vmul.f32 %v1942, %v1944
  %v1946 = vadd.f32 %v1942, %v1945
  %vm1947 = vweird.f32 %v1941
  %vm1948 = vweird.f32 %v1942
  %vm1949 = vmor %vm1947, %vm1948
  %v1950 = vsel %vm1949, %v1942, %v1946
  %v1951 = vand.u32 2147483647, %v1941
  %vm1952 = vcmp.eq.f32.partialorder %v1951, 8.507059e+37
  %v1953 = vand.u32 %v1941, 2147483648
  %v1954 = vor.u32 1.1754944e-38, %v1953
  %v1955 = vsel %vm1952, %v1954, %v1950
  %v1956 = vmul.f32 1.0, %v1955
  %v1957 = vtanh.pop %v1937
  %v1958 = vxor.u32 %v1937, 2147483648
  %v1959 = vmul.f32 %v1958, 1.442695
  %v1960 = vpow.pop %v1959
  %v1961 = vadd.f32 %v1960, 1.0
  %v1962 = vrcp.pop %v1961
  %v1963 = vmul.f32 %v1961, %v1962
  %v1964 = vsub.f32 1.0, %v1963
  %v1965 = vmul.f32 %v1962, %v1964
  %v1966 = vadd.f32 %v1962, %v1965
  %vm1967 = vweird.f32 %v1961
  %vm1968 = vweird.f32 %v1962
  %vm1969 = vmor %vm1967, %vm1968
  %v1970 = vsel %vm1969, %v1962, %v1966
  %v1971 = vand.u32 2147483647, %v1961
  %vm1972 = vcmp.eq.f32.partialorder %v1971, 8.507059e+37
  %v1973 = vand.u32 %v1961, 2147483648
  %v1974 = vor.u32 1.1754944e-38, %v1973
  %v1975 = vsel %vm1972, %v1974, %v1970
  %v1976 = vmul.f32 1.0, %v1975
  %v1978 = vrot.slane %v1789, 6
  %v1980 = vmul.f32 %v1956, %v1978
  %v1981 = vmul.f32 %v1956, %v1957
  %1983 = vrot.lane.b32.xlu0 %v1981, 64
  %v1984 = vpop.permute.xlu0 %1983
  %v1986 = vadd.f32 %v1980, %v1984
  %v1987 = vtanh.pop %v1986
  %v1988 = vmul.f32 %v1976, %v1987
  %v1989 = vpack.c.bf16 %v1883, %v1883
  %v1991 = vrot.slane %v1989, 3
  %1992 = vrot.lane.b32.xlu0 %v1991, 64
  %v1993 = vpop.permute.xlu0 %1992
  %v1995 = vsel %vm512, %v1993, 0
  %1997 = vmatpush.bf16.msra.mxu0 0
  %1998 = vmatpush.bf16.msra.mxu0 0
  %1999 = vmatpush.bf16.msra.mxu0 0
  %2000 = vmatpush.bf16.msra.mxu0 0
  %2001 = vmatpush.bf16.msra.mxu0 %v622
  %2002 = vmatpush.bf16.msra.mxu0 %v620
  %2003 = vmatpush.bf16.msra.mxu0 %v618
  %2004 = vmatpush.bf16.msra.mxu0 %v616
  %2005 = vmatmul.bf16.gmra.mxu0 %v1995
  %v2006 = vpop.f32.mrf.mxu0
  %v2007 = vadd.f32 0.0, %v2006
  %v2008 = vpop.f32.mrf.mxu0
  %2009 = vdwg.mxu0
  %2010 = vmatpush.bf16.msra.mxu0 0
  %2011 = vmatpush.bf16.msra.mxu0 0
  %2012 = vmatpush.bf16.msra.mxu0 0
  %2013 = vmatpush.bf16.msra.mxu0 0
  %2014 = vmatpush.bf16.msra.mxu0 %v623
  %2015 = vmatpush.bf16.msra.mxu0 %v621
  %2016 = vmatpush.bf16.msra.mxu0 %v619
  %2017 = vmatpush.bf16.msra.mxu0 %v617
  %2018 = vmatmul.bf16.gmra.mxu0 %v1995
  %v2019 = vpop.f32.mrf.mxu0
  %v2020 = vadd.f32 0.0, %v2019
  %v2021 = vpop.f32.mrf.mxu0
  %2022 = vdwg.mxu0
  %v2025 = vrot.slane %v2007, 4
  %v2026 = vrot.slane %v2020, 4
  %v2029 = vadd.f32 %v430, %v2025
  %v2030 = vadd.f32 %v448, %v2026
  %v2031 = vxor.u32 %v2029, 2147483648
  %v2032 = vmul.f32 %v2031, 1.442695
  %v2033 = vpow.pop %v2032
  %v2034 = vadd.f32 %v2033, 1.0
  %v2035 = vrcp.pop %v2034
  %v2036 = vmul.f32 %v2034, %v2035
  %v2037 = vsub.f32 1.0, %v2036
  %v2038 = vmul.f32 %v2035, %v2037
  %v2039 = vadd.f32 %v2035, %v2038
  %vm2040 = vweird.f32 %v2034
  %vm2041 = vweird.f32 %v2035
  %vm2042 = vmor %vm2040, %vm2041
  %v2043 = vsel %vm2042, %v2035, %v2039
  %v2044 = vand.u32 2147483647, %v2034
  %vm2045 = vcmp.eq.f32.partialorder %v2044, 8.507059e+37
  %v2046 = vand.u32 %v2034, 2147483648
  %v2047 = vor.u32 1.1754944e-38, %v2046
  %v2048 = vsel %vm2045, %v2047, %v2043
  %v2049 = vmul.f32 1.0, %v2048
  %v2050 = vtanh.pop %v2030
  %v2051 = vxor.u32 %v2030, 2147483648
  %v2052 = vmul.f32 %v2051, 1.442695
  %v2053 = vpow.pop %v2052
  %v2054 = vadd.f32 %v2053, 1.0
  %v2055 = vrcp.pop %v2054
  %v2056 = vmul.f32 %v2054, %v2055
  %v2057 = vsub.f32 1.0, %v2056
  %v2058 = vmul.f32 %v2055, %v2057
  %v2059 = vadd.f32 %v2055, %v2058
  %vm2060 = vweird.f32 %v2054
  %vm2061 = vweird.f32 %v2055
  %vm2062 = vmor %vm2060, %vm2061
  %v2063 = vsel %vm2062, %v2055, %v2059
  %v2064 = vand.u32 2147483647, %v2054
  %vm2065 = vcmp.eq.f32.partialorder %v2064, 8.507059e+37
  %v2066 = vand.u32 %v2054, 2147483648
  %v2067 = vor.u32 1.1754944e-38, %v2066
  %v2068 = vsel %vm2065, %v2067, %v2063
  %v2069 = vmul.f32 1.0, %v2068
  %v2071 = vrot.slane %v1881, 2
  %v2073 = vmul.f32 %v2049, %v2071
  %v2074 = vmul.f32 %v2049, %v2050
  %2076 = vrot.lane.b32.xlu0 %v2074, 64
  %v2077 = vpop.permute.xlu0 %2076
  %v2079 = vadd.f32 %v2073, %v2077
  %v2080 = vtanh.pop %v2079
  %v2081 = vmul.f32 %v2069, %v2080
  %v2082 = vmax.f32 %v1988, 0.0
  %2084 = vrot.lane.b32.xlu0 %v2082, 64
  %v2085 = vpop.permute.xlu0 %2084
  %2087 = vst.msk [vmem:[#allocation2 + $0x8] sm:$0xc0] %vm1116, %v2085
  %v2088 = vmax.f32 %v2081, 0.0
  %2090 = vrot.lane.b32.xlu0 %v2088, 64
  %v2091 = vpop.permute.xlu0 %2090
  %2093 = vst.msk [vmem:[#allocation3] sm:$0x30] %vm1109, %v2091
  %v2094 = vpack.c.bf16 %v1988, %v1988
  %v2096 = vrot.slane %v2094, 3
  %2097 = vrot.lane.b32.xlu0 %v2096, 64
  %v2098 = vpop.permute.xlu0 %2097
  %v2100 = vsel %vm512, %v2098, 0
  %2102 = vmatpush.bf16.msra.mxu0 0
  %2103 = vmatpush.bf16.msra.mxu0 0
  %2104 = vmatpush.bf16.msra.mxu0 0
  %2105 = vmatpush.bf16.msra.mxu0 0
  %2106 = vmatpush.bf16.msra.mxu0 %v502
  %2107 = vmatpush.bf16.msra.mxu0 %v500
  %2108 = vmatpush.bf16.msra.mxu0 %v498
  %2109 = vmatpush.bf16.msra.mxu0 %v496
  %2110 = vmatmul.bf16.gmra.mxu0 %v2100
  %v2111 = vpop.f32.mrf.mxu0
  %v2112 = vadd.f32 0.0, %v2111
  %v2113 = vpop.f32.mrf.mxu0
  %2114 = vdwg.mxu0
  %2115 = vmatpush.bf16.msra.mxu0 0
  %2116 = vmatpush.bf16.msra.mxu0 0
  %2117 = vmatpush.bf16.msra.mxu0 0
  %2118 = vmatpush.bf16.msra.mxu0 0
  %2119 = vmatpush.bf16.msra.mxu0 %v503
  %2120 = vmatpush.bf16.msra.mxu0 %v501
  %2121 = vmatpush.bf16.msra.mxu0 %v499
  %2122 = vmatpush.bf16.msra.mxu0 %v497
  %2123 = vmatmul.bf16.gmra.mxu0 %v2100
  %v2124 = vpop.f32.mrf.mxu0
  %v2125 = vadd.f32 0.0, %v2124
  %v2126 = vpop.f32.mrf.mxu0
  %2127 = vdwg.mxu0
  %v2128 = vadd.f32 %v381, %v2112
  %v2129 = vadd.f32 %v399, %v2125
  %v2130 = vxor.u32 %v2128, 2147483648
  %v2131 = vmul.f32 %v2130, 1.442695
  %v2132 = vpow.pop %v2131
  %v2133 = vadd.f32 %v2132, 1.0
  %v2134 = vrcp.pop %v2133
  %v2135 = vmul.f32 %v2133, %v2134
  %v2136 = vsub.f32 1.0, %v2135
  %v2137 = vmul.f32 %v2134, %v2136
  %v2138 = vadd.f32 %v2134, %v2137
  %vm2139 = vweird.f32 %v2133
  %vm2140 = vweird.f32 %v2134
  %vm2141 = vmor %vm2139, %vm2140
  %v2142 = vsel %vm2141, %v2134, %v2138
  %v2143 = vand.u32 2147483647, %v2133
  %vm2144 = vcmp.eq.f32.partialorder %v2143, 8.507059e+37
  %v2145 = vand.u32 %v2133, 2147483648
  %v2146 = vor.u32 1.1754944e-38, %v2145
  %v2147 = vsel %vm2144, %v2146, %v2142
  %v2148 = vmul.f32 1.0, %v2147
  %v2149 = vtanh.pop %v2129
  %v2150 = vxor.u32 %v2129, 2147483648
  %v2151 = vmul.f32 %v2150, 1.442695
  %v2152 = vpow.pop %v2151
  %v2153 = vadd.f32 %v2152, 1.0
  %v2154 = vrcp.pop %v2153
  %v2155 = vmul.f32 %v2153, %v2154
  %v2156 = vsub.f32 1.0, %v2155
  %v2157 = vmul.f32 %v2154, %v2156
  %v2158 = vadd.f32 %v2154, %v2157
  %vm2159 = vweird.f32 %v2153
  %vm2160 = vweird.f32 %v2154
  %vm2161 = vmor %vm2159, %vm2160
  %v2162 = vsel %vm2161, %v2154, %v2158
  %v2163 = vand.u32 2147483647, %v2153
  %vm2164 = vcmp.eq.f32.partialorder %v2163, 8.507059e+37
  %v2165 = vand.u32 %v2153, 2147483648
  %v2166 = vor.u32 1.1754944e-38, %v2165
  %v2167 = vsel %vm2164, %v2166, %v2162
  %v2168 = vmul.f32 1.0, %v2167
  %v2170 = vrot.slane %v1986, 6
  %v2172 = vmul.f32 %v2148, %v2170
  %v2173 = vmul.f32 %v2148, %v2149
  %2175 = vrot.lane.b32.xlu0 %v2173, 64
  %v2176 = vpop.permute.xlu0 %2175
  %v2178 = vadd.f32 %v2172, %v2176
  %v2179 = vtanh.pop %v2178
  %v2180 = vmul.f32 %v2168, %v2179
  %v2181 = vpack.c.bf16 %v2081, %v2081
  %v2183 = vrot.slane %v2181, 2
  %2184 = vrot.lane.b32.xlu0 %v2183, 64
  %v2185 = vpop.permute.xlu0 %2184
  %v2187 = vsel %vm512, %v2185, 0
  %2189 = vmatpush.bf16.msra.mxu0 0
  %2190 = vmatpush.bf16.msra.mxu0 0
  %2191 = vmatpush.bf16.msra.mxu0 0
  %2192 = vmatpush.bf16.msra.mxu0 0
  %2193 = vmatpush.bf16.msra.mxu0 %v622
  %2194 = vmatpush.bf16.msra.mxu0 %v620
  %2195 = vmatpush.bf16.msra.mxu0 %v618
  %2196 = vmatpush.bf16.msra.mxu0 %v616
  %2197 = vmatmul.bf16.gmra.mxu0 %v2187
  %v2198 = vpop.f32.mrf.mxu0
  %v2199 = vadd.f32 0.0, %v2198
  %v2200 = vpop.f32.mrf.mxu0
  %2201 = vdwg.mxu0
  %2202 = vmatpush.bf16.msra.mxu0 0
  %2203 = vmatpush.bf16.msra.mxu0 0
  %2204 = vmatpush.bf16.msra.mxu0 0
  %2205 = vmatpush.bf16.msra.mxu0 0
  %2206 = vmatpush.bf16.msra.mxu0 %v623
  %2207 = vmatpush.bf16.msra.mxu0 %v621
  %2208 = vmatpush.bf16.msra.mxu0 %v619
  %2209 = vmatpush.bf16.msra.mxu0 %v617
  %2210 = vmatmul.bf16.gmra.mxu0 %v2187
  %v2211 = vpop.f32.mrf.mxu0
  %v2212 = vadd.f32 0.0, %v2211
  %v2213 = vpop.f32.mrf.mxu0
  %2214 = vdwg.mxu0
  %v2217 = vrot.slane %v2199, 6
  %v2218 = vrot.slane %v2212, 6
  %v2221 = vadd.f32 %v430, %v2217
  %v2222 = vadd.f32 %v448, %v2218
  %v2223 = vxor.u32 %v2221, 2147483648
  %v2224 = vmul.f32 %v2223, 1.442695
  %v2225 = vpow.pop %v2224
  %v2226 = vadd.f32 %v2225, 1.0
  %v2227 = vrcp.pop %v2226
  %v2228 = vmul.f32 %v2226, %v2227
  %v2229 = vsub.f32 1.0, %v2228
  %v2230 = vmul.f32 %v2227, %v2229
  %v2231 = vadd.f32 %v2227, %v2230
  %vm2232 = vweird.f32 %v2226
  %vm2233 = vweird.f32 %v2227
  %vm2234 = vmor %vm2232, %vm2233
  %v2235 = vsel %vm2234, %v2227, %v2231
  %v2236 = vand.u32 2147483647, %v2226
  %vm2237 = vcmp.eq.f32.partialorder %v2236, 8.507059e+37
  %v2238 = vand.u32 %v2226, 2147483648
  %v2239 = vor.u32 1.1754944e-38, %v2238
  %v2240 = vsel %vm2237, %v2239, %v2235
  %v2241 = vmul.f32 1.0, %v2240
  %v2242 = vtanh.pop %v2222
  %v2243 = vxor.u32 %v2222, 2147483648
  %v2244 = vmul.f32 %v2243, 1.442695
  %v2245 = vpow.pop %v2244
  %v2246 = vadd.f32 %v2245, 1.0
  %v2247 = vrcp.pop %v2246
  %v2248 = vmul.f32 %v2246, %v2247
  %v2249 = vsub.f32 1.0, %v2248
  %v2250 = vmul.f32 %v2247, %v2249
  %v2251 = vadd.f32 %v2247, %v2250
  %vm2252 = vweird.f32 %v2246
  %vm2253 = vweird.f32 %v2247
  %vm2254 = vmor %vm2252, %vm2253
  %v2255 = vsel %vm2254, %v2247, %v2251
  %v2256 = vand.u32 2147483647, %v2246
  %vm2257 = vcmp.eq.f32.partialorder %v2256, 8.507059e+37
  %v2258 = vand.u32 %v2246, 2147483648
  %v2259 = vor.u32 1.1754944e-38, %v2258
  %v2260 = vsel %vm2257, %v2259, %v2255
  %v2261 = vmul.f32 1.0, %v2260
  %v2263 = vrot.slane %v2079, 2
  %v2265 = vmul.f32 %v2241, %v2263
  %v2266 = vmul.f32 %v2241, %v2242
  %2268 = vrot.lane.b32.xlu0 %v2266, 64
  %v2269 = vpop.permute.xlu0 %2268
  %v2271 = vadd.f32 %v2265, %v2269
  %v2272 = vtanh.pop %v2271
  %v2273 = vmul.f32 %v2261, %v2272
  %v2274 = vmax.f32 %v2180, 0.0
  %2276 = vrot.lane.b32.xlu0 %v2274, 64
  %v2277 = vpop.permute.xlu0 %2276
  %2279 = vst.msk [vmem:[#allocation2 + $0x10] sm:$0x3] %vm719, %v2277
  %v2280 = vmax.f32 %v2273, 0.0
  %2282 = vrot.lane.b32.xlu0 %v2280, 64
  %v2283 = vpop.permute.xlu0 %2282
  %2285 = vst.msk [vmem:[#allocation3] sm:$0xc] %vm726, %v2283
  %v2286 = vpack.c.bf16 %v2180, %v2180
  %2288 = vrot.lane.b32.xlu0 %v2286, 64
  %v2289 = vpop.permute.xlu0 %2288
  %v2291 = vsel %vm512, %v2289, 0
  %2293 = vmatpush.bf16.msra.mxu0 0
  %2294 = vmatpush.bf16.msra.mxu0 0
  %2295 = vmatpush.bf16.msra.mxu0 0
  %2296 = vmatpush.bf16.msra.mxu0 0
  %2297 = vmatpush.bf16.msra.mxu0 %v502
  %2298 = vmatpush.bf16.msra.mxu0 %v500
  %2299 = vmatpush.bf16.msra.mxu0 %v498
  %2300 = vmatpush.bf16.msra.mxu0 %v496
  %2301 = vmatmul.bf16.gmra.mxu0 %v2291
  %v2302 = vpop.f32.mrf.mxu0
  %v2303 = vadd.f32 0.0, %v2302
  %v2304 = vpop.f32.mrf.mxu0
  %2305 = vdwg.mxu0
  %2306 = vmatpush.bf16.msra.mxu0 0
  %2307 = vmatpush.bf16.msra.mxu0 0
  %2308 = vmatpush.bf16.msra.mxu0 0
  %2309 = vmatpush.bf16.msra.mxu0 0
  %2310 = vmatpush.bf16.msra.mxu0 %v503
  %2311 = vmatpush.bf16.msra.mxu0 %v501
  %2312 = vmatpush.bf16.msra.mxu0 %v499
  %2313 = vmatpush.bf16.msra.mxu0 %v497
  %2314 = vmatmul.bf16.gmra.mxu0 %v2291
  %v2315 = vpop.f32.mrf.mxu0
  %v2316 = vadd.f32 0.0, %v2315
  %v2317 = vpop.f32.mrf.mxu0
  %2318 = vdwg.mxu0
  %v2321 = vrot.slane %v2303, 6
  %v2322 = vrot.slane %v2316, 6
  %v2325 = vadd.f32 %v381, %v2321
  %v2326 = vadd.f32 %v399, %v2322
  %v2327 = vxor.u32 %v2325, 2147483648
  %v2328 = vmul.f32 %v2327, 1.442695
  %v2329 = vpow.pop %v2328
  %v2330 = vadd.f32 %v2329, 1.0
  %v2331 = vrcp.pop %v2330
  %v2332 = vmul.f32 %v2330, %v2331
  %v2333 = vsub.f32 1.0, %v2332
  %v2334 = vmul.f32 %v2331, %v2333
  %v2335 = vadd.f32 %v2331, %v2334
  %vm2336 = vweird.f32 %v2330
  %vm2337 = vweird.f32 %v2331
  %vm2338 = vmor %vm2336, %vm2337
  %v2339 = vsel %vm2338, %v2331, %v2335
  %v2340 = vand.u32 2147483647, %v2330
  %vm2341 = vcmp.eq.f32.partialorder %v2340, 8.507059e+37
  %v2342 = vand.u32 %v2330, 2147483648
  %v2343 = vor.u32 1.1754944e-38, %v2342
  %v2344 = vsel %vm2341, %v2343, %v2339
  %v2345 = vmul.f32 1.0, %v2344
  %v2346 = vtanh.pop %v2326
  %v2347 = vxor.u32 %v2326, 2147483648
  %v2348 = vmul.f32 %v2347, 1.442695
  %v2349 = vpow.pop %v2348
  %v2350 = vadd.f32 %v2349, 1.0
  %v2351 = vrcp.pop %v2350
  %v2352 = vmul.f32 %v2350, %v2351
  %v2353 = vsub.f32 1.0, %v2352
  %v2354 = vmul.f32 %v2351, %v2353
  %v2355 = vadd.f32 %v2351, %v2354
  %vm2356 = vweird.f32 %v2350
  %vm2357 = vweird.f32 %v2351
  %vm2358 = vmor %vm2356, %vm2357
  %v2359 = vsel %vm2358, %v2351, %v2355
  %v2360 = vand.u32 2147483647, %v2350
  %vm2361 = vcmp.eq.f32.partialorder %v2360, 8.507059e+37
  %v2362 = vand.u32 %v2350, 2147483648
  %v2363 = vor.u32 1.1754944e-38, %v2362
  %v2364 = vsel %vm2361, %v2363, %v2359
  %v2365 = vmul.f32 1.0, %v2364
  %v2367 = vrot.slane %v2178, 6
  %v2369 = vmul.f32 %v2345, %v2367
  %v2370 = vmul.f32 %v2345, %v2346
  %2372 = vrot.lane.b32.xlu0 %v2370, 64
  %v2373 = vpop.permute.xlu0 %2372
  %v2375 = vadd.f32 %v2369, %v2373
  %v2376 = vtanh.pop %v2375
  %v2377 = vmul.f32 %v2365, %v2376
  %v2378 = vpack.c.bf16 %v2273, %v2273
  %v2380 = vrot.slane %v2378, 1
  %2381 = vrot.lane.b32.xlu0 %v2380, 64
  %v2382 = vpop.permute.xlu0 %2381
  %v2384 = vsel %vm512, %v2382, 0
  %2386 = vmatpush.bf16.msra.mxu0 0
  %2387 = vmatpush.bf16.msra.mxu0 0
  %2388 = vmatpush.bf16.msra.mxu0 0
  %2389 = vmatpush.bf16.msra.mxu0 0
  %2390 = vmatpush.bf16.msra.mxu0 %v622
  %2391 = vmatpush.bf16.msra.mxu0 %v620
  %2392 = vmatpush.bf16.msra.mxu0 %v618
  %2393 = vmatpush.bf16.msra.mxu0 %v616
  %2394 = vmatmul.bf16.gmra.mxu0 %v2384
  %v2395 = vpop.f32.mrf.mxu0
  %v2396 = vadd.f32 0.0, %v2395
  %v2397 = vpop.f32.mrf.mxu0
  %2398 = vdwg.mxu0
  %2399 = vmatpush.bf16.msra.mxu0 0
  %2400 = vmatpush.bf16.msra.mxu0 0
  %2401 = vmatpush.bf16.msra.mxu0 0
  %2402 = vmatpush.bf16.msra.mxu0 0
  %2403 = vmatpush.bf16.msra.mxu0 %v623
  %2404 = vmatpush.bf16.msra.mxu0 %v621
  %2405 = vmatpush.bf16.msra.mxu0 %v619
  %2406 = vmatpush.bf16.msra.mxu0 %v617
  %2407 = vmatmul.bf16.gmra.mxu0 %v2384
  %v2408 = vpop.f32.mrf.mxu0
  %v2409 = vadd.f32 0.0, %v2408
  %v2410 = vpop.f32.mrf.mxu0
  %2411 = vdwg.mxu0
  %v2412 = vadd.f32 %v430, %v2396
  %v2413 = vadd.f32 %v448, %v2409
  %v2414 = vxor.u32 %v2412, 2147483648
  %v2415 = vmul.f32 %v2414, 1.442695
  %v2416 = vpow.pop %v2415
  %v2417 = vadd.f32 %v2416, 1.0
  %v2418 = vrcp.pop %v2417
  %v2419 = vmul.f32 %v2417, %v2418
  %v2420 = vsub.f32 1.0, %v2419
  %v2421 = vmul.f32 %v2418, %v2420
  %v2422 = vadd.f32 %v2418, %v2421
  %vm2423 = vweird.f32 %v2417
  %vm2424 = vweird.f32 %v2418
  %vm2425 = vmor %vm2423, %vm2424
  %v2426 = vsel %vm2425, %v2418, %v2422
  %v2427 = vand.u32 2147483647, %v2417
  %vm2428 = vcmp.eq.f32.partialorder %v2427, 8.507059e+37
  %v2429 = vand.u32 %v2417, 2147483648
  %v2430 = vor.u32 1.1754944e-38, %v2429
  %v2431 = vsel %vm2428, %v2430, %v2426
  %v2432 = vmul.f32 1.0, %v2431
  %v2433 = vtanh.pop %v2413
  %v2434 = vxor.u32 %v2413, 2147483648
  %v2435 = vmul.f32 %v2434, 1.442695
  %v2436 = vpow.pop %v2435
  %v2437 = vadd.f32 %v2436, 1.0
  %v2438 = vrcp.pop %v2437
  %v2439 = vmul.f32 %v2437, %v2438
  %v2440 = vsub.f32 1.0, %v2439
  %v2441 = vmul.f32 %v2438, %v2440
  %v2442 = vadd.f32 %v2438, %v2441
  %vm2443 = vweird.f32 %v2437
  %vm2444 = vweird.f32 %v2438
  %vm2445 = vmor %vm2443, %vm2444
  %v2446 = vsel %vm2445, %v2438, %v2442
  %v2447 = vand.u32 2147483647, %v2437
  %vm2448 = vcmp.eq.f32.partialorder %v2447, 8.507059e+37
  %v2449 = vand.u32 %v2437, 2147483648
  %v2450 = vor.u32 1.1754944e-38, %v2449
  %v2451 = vsel %vm2448, %v2450, %v2446
  %v2452 = vmul.f32 1.0, %v2451
  %v2454 = vrot.slane %v2271, 2
  %v2456 = vmul.f32 %v2432, %v2454
  %v2457 = vmul.f32 %v2432, %v2433
  %2459 = vrot.lane.b32.xlu0 %v2457, 64
  %v2460 = vpop.permute.xlu0 %2459
  %v2462 = vadd.f32 %v2456, %v2460
  %v2463 = vtanh.pop %v2462
  %v2464 = vmul.f32 %v2452, %v2463
  %v2465 = vmax.f32 %v2377, 0.0
  %2467 = vrot.lane.b32.xlu0 %v2465, 64
  %v2468 = vpop.permute.xlu0 %2467
  %2470 = vst.msk [vmem:[#allocation2 + $0x10] sm:$0xc] %vm726, %v2468
  %v2471 = vmax.f32 %v2464, 0.0
  %2473 = vrot.lane.b32.xlu0 %v2471, 64
  %v2474 = vpop.permute.xlu0 %2473
  %2476 = vst.msk [vmem:[#allocation3] sm:$0x3] %vm719, %v2474
  %v2477 = vld [vmem:[#allocation2] sm:$0xff]
  %v2478 = vld [vmem:[#allocation2 + $0x8] sm:$0xff]
  %v2479 = vld [vmem:[#allocation2 + $0x10] sm:$0xf]
  %v2480 = vld [vmem:[#allocation3] sm:$0xff]
  %v2481 = vld [vmem:[#allocation3 + $0x8] sm:$0xff]
  %v2482 = vld [vmem:[#allocation3 + $0x10] sm:$0xf]
  %v2483 = vpack.c.bf16 %v2478, %v2477
  %v2484 = vpack.c.bf16 %v2479, %v2479
  %v2485 = vpack.c.bf16 %v2481, %v2480
  %v2486 = vpack.c.bf16 %v2482, %v2482
  %v2487 = vld [vmem:[%s15] sm:$0xf]
  %v2488 = vld [vmem:[%s15 + $0x4] sm:$0xf]
  %v2489 = vld [vmem:[%s15 + $0x8] sm:$0xf]
  %v2490 = vld [vmem:[%s15 + $0xc] sm:$0xf]
  %v2491 = vld [vmem:[%s15 + $0x10] sm:$0xf]
  %v2492 = vld [vmem:[%s15 + $0x14] sm:$0xf]
  %v2493 = vld [vmem:[%s15 + $0x18] sm:$0xf]
  %v2494 = vld [vmem:[%s15 + $0x1c] sm:$0xf]
  %v2495 = vld [vmem:[%s15 + $0x20] sm:$0xf]
  %v2496 = vld [vmem:[%s15 + $0x24] sm:$0xf]
  %v2497 = vld [vmem:[%s15 + $0x28] sm:$0xf]
  %v2498 = vld [vmem:[%s15 + $0x2c] sm:$0xf]
  %v2499 = vld [vmem:[%s15 + $0x30] sm:$0xf]
  %v2500 = vld [vmem:[%s15 + $0x34] sm:$0xf]
  %v2501 = vld [vmem:[%s15 + $0x38] sm:$0xf]
  %v2502 = vld [vmem:[%s15 + $0x3c] sm:$0xf]
  %v2511 = vunpack.c.l.b16 %v2495
  %v2512 = vunpack.c.l.b16 %v2496
  %v2513 = vunpack.c.l.b16 %v2497
  %v2514 = vunpack.c.l.b16 %v2498
  %v2515 = vunpack.c.l.b16 %v2499
  %v2516 = vunpack.c.l.b16 %v2500
  %v2517 = vunpack.c.l.b16 %v2501
  %v2518 = vunpack.c.l.b16 %v2502
  %v2519 = vpack.c.b16 %v2512, %v2511
  %v2520 = vpack.c.b16 %v2514, %v2513
  %v2521 = vpack.c.b16 %v2516, %v2515
  %v2522 = vpack.c.b16 %v2518, %v2517
  %v2528 = vsel %vm512, %v2485, 0
  %v2531 = vsel %vm512, %v2486, 0
  %2533 = vmatpush.bf16.msra.mxu0 0
  %2534 = vmatpush.bf16.msra.mxu0 0
  %2535 = vmatpush.bf16.msra.mxu0 0
  %2536 = vmatpush.bf16.msra.mxu0 0
  %2537 = vmatpush.bf16.msra.mxu0 %v2522
  %2538 = vmatpush.bf16.msra.mxu0 %v2521
  %2539 = vmatpush.bf16.msra.mxu0 %v2520
  %2540 = vmatpush.bf16.msra.mxu0 %v2519
  %2541 = vmatmul.bf16.gmra.mxu0 %v2528
  %v2542 = vpop.f32.mrf.mxu0
  %v2543 = vadd.f32 0.0, %v2542
  %v2544 = vpop.f32.mrf.mxu0
  %v2545 = vadd.f32 0.0, %v2544
  %2546 = vmatmul.bf16.gmra.mxu0 %v2531
  %v2547 = vpop.f32.mrf.mxu0
  %v2548 = vadd.f32 0.0, %v2547
  %v2549 = vpop.f32.mrf.mxu0
  %2550 = vdwg.mxu0
  %v2559 = vunpack.c.l.b16 %v2487
  %v2560 = vunpack.c.l.b16 %v2488
  %v2561 = vunpack.c.l.b16 %v2489
  %v2562 = vunpack.c.l.b16 %v2490
  %v2563 = vunpack.c.l.b16 %v2491
  %v2564 = vunpack.c.l.b16 %v2492
  %v2565 = vunpack.c.l.b16 %v2493
  %v2566 = vunpack.c.l.b16 %v2494
  %v2567 = vpack.c.b16 %v2560, %v2559
  %v2568 = vpack.c.b16 %v2562, %v2561
  %v2569 = vpack.c.b16 %v2564, %v2563
  %v2570 = vpack.c.b16 %v2566, %v2565
  %v2576 = vsel %vm512, %v2483, 0
  %v2579 = vsel %vm512, %v2484, 0
  %2581 = vmatpush.bf16.msra.mxu0 0
  %2582 = vmatpush.bf16.msra.mxu0 0
  %2583 = vmatpush.bf16.msra.mxu0 0
  %2584 = vmatpush.bf16.msra.mxu0 0
  %2585 = vmatpush.bf16.msra.mxu0 %v2570
  %2586 = vmatpush.bf16.msra.mxu0 %v2569
  %2587 = vmatpush.bf16.msra.mxu0 %v2568
  %2588 = vmatpush.bf16.msra.mxu0 %v2567
  %2589 = vmatmul.bf16.gmra.mxu0 %v2576
  %v2590 = vpop.f32.mrf.mxu0
  %v2591 = vadd.f32 %v2543, %v2590
  %v2592 = vpop.f32.mrf.mxu0
  %v2593 = vadd.f32 %v2545, %v2592
  %2594 = vmatmul.bf16.gmra.mxu0 %v2579
  %v2595 = vpop.f32.mrf.mxu0
  %v2596 = vadd.f32 %v2548, %v2595
  %v2597 = vpop.f32.mrf.mxu0
  %2598 = vdwg.mxu0
  %v2599 = vld [vmem:[%s17] sm:$0x1]
  %v2601 = vperm.slane %v2599, 0
  %v2603 = vadd.f32 %v2591, %v2601
  %v2604 = vadd.f32 %v2593, %v2601
  %v2605 = vadd.f32 %v2596, %v2601
  %v2606 = vld [vmem:[%s18] sm:$0xf]
  %v2607 = vld [vmem:[%s18 + $0x4] sm:$0xf]
  %v2608 = vld [vmem:[%s18 + $0x8] sm:$0xf]
  %v2609 = vld [vmem:[%s18 + $0xc] sm:$0xf]
  %v2610 = vld [vmem:[%s18 + $0x10] sm:$0xf]
  %v2611 = vld [vmem:[%s18 + $0x14] sm:$0xf]
  %v2612 = vld [vmem:[%s18 + $0x18] sm:$0xf]
  %v2613 = vld [vmem:[%s18 + $0x1c] sm:$0xf]
  %v2614 = vld [vmem:[%s18 + $0x20] sm:$0xf]
  %v2615 = vld [vmem:[%s18 + $0x24] sm:$0xf]
  %v2616 = vld [vmem:[%s18 + $0x28] sm:$0xf]
  %v2617 = vld [vmem:[%s18 + $0x2c] sm:$0xf]
  %v2618 = vld [vmem:[%s18 + $0x30] sm:$0xf]
  %v2619 = vld [vmem:[%s18 + $0x34] sm:$0xf]
  %v2620 = vld [vmem:[%s18 + $0x38] sm:$0xf]
  %v2621 = vld [vmem:[%s18 + $0x3c] sm:$0xf]
  %v2630 = vunpack.c.l.b16 %v2614
  %v2631 = vunpack.c.l.b16 %v2615
  %v2632 = vunpack.c.l.b16 %v2616
  %v2633 = vunpack.c.l.b16 %v2617
  %v2634 = vunpack.c.l.b16 %v2618
  %v2635 = vunpack.c.l.b16 %v2619
  %v2636 = vunpack.c.l.b16 %v2620
  %v2637 = vunpack.c.l.b16 %v2621
  %v2638 = vpack.c.b16 %v2631, %v2630
  %v2639 = vpack.c.b16 %v2633, %v2632
  %v2640 = vpack.c.b16 %v2635, %v2634
  %v2641 = vpack.c.b16 %v2637, %v2636
  %2646 = vmatpush.bf16.msra.mxu0 0
  %2647 = vmatpush.bf16.msra.mxu0 0
  %2648 = vmatpush.bf16.msra.mxu0 0
  %2649 = vmatpush.bf16.msra.mxu0 0
  %2650 = vmatpush.bf16.msra.mxu0 %v2641
  %2651 = vmatpush.bf16.msra.mxu0 %v2640
  %2652 = vmatpush.bf16.msra.mxu0 %v2639
  %2653 = vmatpush.bf16.msra.mxu0 %v2638
  %2654 = vmatmul.bf16.gmra.mxu0 %v2528
  %v2655 = vpop.f32.mrf.mxu0
  %v2656 = vadd.f32 0.0, %v2655
  %v2657 = vpop.f32.mrf.mxu0
  %v2658 = vadd.f32 0.0, %v2657
  %2659 = vmatmul.bf16.gmra.mxu0 %v2531
  %v2660 = vpop.f32.mrf.mxu0
  %v2661 = vadd.f32 0.0, %v2660
  %v2662 = vpop.f32.mrf.mxu0
  %2663 = vdwg.mxu0
  %v2672 = vunpack.c.l.b16 %v2606
  %v2673 = vunpack.c.l.b16 %v2607
  %v2674 = vunpack.c.l.b16 %v2608
  %v2675 = vunpack.c.l.b16 %v2609
  %v2676 = vunpack.c.l.b16 %v2610
  %v2677 = vunpack.c.l.b16 %v2611
  %v2678 = vunpack.c.l.b16 %v2612
  %v2679 = vunpack.c.l.b16 %v2613
  %v2680 = vpack.c.b16 %v2673, %v2672
  %v2681 = vpack.c.b16 %v2675, %v2674
  %v2682 = vpack.c.b16 %v2677, %v2676
  %v2683 = vpack.c.b16 %v2679, %v2678
  %2688 = vmatpush.bf16.msra.mxu0 0
  %2689 = vmatpush.bf16.msra.mxu0 0
  %2690 = vmatpush.bf16.msra.mxu0 0
  %2691 = vmatpush.bf16.msra.mxu0 0
  %2692 = vmatpush.bf16.msra.mxu0 %v2683
  %2693 = vmatpush.bf16.msra.mxu0 %v2682
  %2694 = vmatpush.bf16.msra.mxu0 %v2681
  %2695 = vmatpush.bf16.msra.mxu0 %v2680
  %2696 = vmatmul.bf16.gmra.mxu0 %v2576
  %v2697 = vpop.f32.mrf.mxu0
  %v2698 = vadd.f32 %v2656, %v2697
  %v2699 = vpop.f32.mrf.mxu0
  %v2700 = vadd.f32 %v2658, %v2699
  %2701 = vmatmul.bf16.gmra.mxu0 %v2579
  %v2702 = vpop.f32.mrf.mxu0
  %v2703 = vadd.f32 %v2661, %v2702
  %v2704 = vpop.f32.mrf.mxu0
  %2705 = vdwg.mxu0
  %v2706 = vld [vmem:[%s20] sm:$0x1]
  %v2708 = vperm.slane %v2706, 0
  %v2710 = vadd.f32 %v2698, %v2708
  %v2711 = vadd.f32 %v2700, %v2708
  %v2712 = vadd.f32 %v2703, %v2708
  %v2713 = vld [vmem:[%s16] sm:$0xf]
  %v2714 = vld [vmem:[%s16 + $0x4] sm:$0xf]
  %v2715 = vld [vmem:[%s16 + $0x8] sm:$0xf]
  %v2716 = vld [vmem:[%s16 + $0xc] sm:$0xf]
  %v2717 = vld [vmem:[%s19] sm:$0xf]
  %v2718 = vld [vmem:[%s19 + $0x4] sm:$0xf]
  %v2719 = vld [vmem:[%s19 + $0x8] sm:$0xf]
  %v2720 = vld [vmem:[%s19 + $0xc] sm:$0xf]
  %v2725 = vunpack.c.l.b16 %v2713
  %v2726 = vunpack.c.l.b16 %v2714
  %v2727 = vunpack.c.l.b16 %v2715
  %v2728 = vunpack.c.l.b16 %v2716
  %v2729 = vpack.c.b16 %v2726, %v2725
  %v2730 = vpack.c.b16 %v2728, %v2727
  %vm2733 = vcmask 261120
  %v2734 = vsel %vm2733, 0, 0
  %2736 = vmatpush.bf16.msra.mxu0 0
  %2737 = vmatpush.bf16.msra.mxu0 0
  %2738 = vmatpush.bf16.msra.mxu0 0
  %2739 = vmatpush.bf16.msra.mxu0 0
  %2740 = vmatpush.bf16.msra.mxu0 0
  %2741 = vmatpush.bf16.msra.mxu0 0
  %2742 = vmatpush.bf16.msra.mxu0 %v2730
  %2743 = vmatpush.bf16.msra.mxu0 %v2729
  %2744 = vmatmul.bf16.gmra.mxu0 %v2734
  %v2745 = vpop.f32.mrf.mxu0
  %v2746 = vadd.f32 0.0, %v2745
  %v2747 = vpop.f32.mrf.mxu0
  %2748 = vdwg.mxu0
  %v2749 = vadd.f32 %v2603, %v2746
  %v2750 = vxor.u32 %v2749, 2147483648
  %v2751 = vmul.f32 %v2750, 1.442695
  %v2752 = vpow.pop %v2751
  %v2753 = vadd.f32 %v2752, 1.0
  %v2754 = vrcp.pop %v2753
  %v2755 = vmul.f32 %v2753, %v2754
  %v2756 = vsub.f32 1.0, %v2755
  %v2757 = vmul.f32 %v2754, %v2756
  %v2758 = vadd.f32 %v2754, %v2757
  %vm2759 = vweird.f32 %v2753
  %vm2760 = vweird.f32 %v2754
  %vm2761 = vmor %vm2759, %vm2760
  %v2762 = vsel %vm2761, %v2754, %v2758
  %v2763 = vand.u32 2147483647, %v2753
  %vm2764 = vcmp.eq.f32.partialorder %v2763, 8.507059e+37
  %v2765 = vand.u32 %v2753, 2147483648
  %v2766 = vor.u32 1.1754944e-38, %v2765
  %v2767 = vsel %vm2764, %v2766, %v2762
  %v2768 = vmul.f32 1.0, %v2767
  %v2769 = vtanh.pop %v2749
  %v2770 = vmul.f32 %v2768, 0.0
  %2772 = vrot.lane.b32.xlu0 %v2769, 64
  %v2773 = vpop.permute.xlu0 %2772
  %v2775 = vmul.f32 %v2768, %v2773
  %2777 = vrot.lane.b32.xlu0 %v2775, 32
  %v2778 = vpop.permute.xlu0 %2777
  %v2780 = vadd.f32 %v2770, %v2778
  %v2781 = vtanh.pop %v2780
  %2783 = vrot.lane.b32.xlu0 %v2781, 64
  %v2784 = vpop.permute.xlu0 %2783
  %v2786 = vmul.f32 %v2768, %v2784
  %v2791 = vunpack.c.l.b16 %v2717
  %v2792 = vunpack.c.l.b16 %v2718
  %v2793 = vunpack.c.l.b16 %v2719
  %v2794 = vunpack.c.l.b16 %v2720
  %v2795 = vpack.c.b16 %v2792, %v2791
  %v2796 = vpack.c.b16 %v2794, %v2793
  %2799 = vmatpush.bf16.msra.mxu0 0
  %2800 = vmatpush.bf16.msra.mxu0 0
  %2801 = vmatpush.bf16.msra.mxu0 0
  %2802 = vmatpush.bf16.msra.mxu0 0
  %2803 = vmatpush.bf16.msra.mxu0 0
  %2804 = vmatpush.bf16.msra.mxu0 0
  %2805 = vmatpush.bf16.msra.mxu0 %v2796
  %2806 = vmatpush.bf16.msra.mxu0 %v2795
  %2807 = vmatmul.bf16.gmra.mxu0 %v2734
  %v2808 = vpop.f32.mrf.mxu0
  %v2809 = vadd.f32 0.0, %v2808
  %v2810 = vpop.f32.mrf.mxu0
  %2811 = vdwg.mxu0
  %v2813 = vrot.slane %v2809, 6
  %v2815 = vadd.f32 %v2712, %v2813
  %v2816 = vxor.u32 %v2815, 2147483648
  %v2817 = vmul.f32 %v2816, 1.442695
  %v2818 = vpow.pop %v2817
  %v2819 = vadd.f32 %v2818, 1.0
  %v2820 = vrcp.pop %v2819
  %v2821 = vmul.f32 %v2819, %v2820
  %v2822 = vsub.f32 1.0, %v2821
  %v2823 = vmul.f32 %v2820, %v2822
  %v2824 = vadd.f32 %v2820, %v2823
  %vm2825 = vweird.f32 %v2819
  %vm2826 = vweird.f32 %v2820
  %vm2827 = vmor %vm2825, %vm2826
  %v2828 = vsel %vm2827, %v2820, %v2824
  %v2829 = vand.u32 2147483647, %v2819
  %vm2830 = vcmp.eq.f32.partialorder %v2829, 8.507059e+37
  %v2831 = vand.u32 %v2819, 2147483648
  %v2832 = vor.u32 1.1754944e-38, %v2831
  %v2833 = vsel %vm2830, %v2832, %v2828
  %v2834 = vmul.f32 1.0, %v2833
  %v2835 = vtanh.pop %v2815
  %v2836 = vmul.f32 %v2834, 0.0
  %2838 = vrot.lane.b32.xlu0 %v2835, 64
  %v2839 = vpop.permute.xlu0 %2838
  %v2841 = vmul.f32 %v2834, %v2839
  %2843 = vrot.lane.b32.xlu0 %v2841, 32
  %v2844 = vpop.permute.xlu0 %2843
  %v2846 = vadd.f32 %v2836, %v2844
  %v2847 = vtanh.pop %v2846
  %2849 = vrot.lane.b32.xlu0 %v2847, 64
  %v2850 = vpop.permute.xlu0 %2849
  %v2852 = vmul.f32 %v2834, %v2850
  %v2853 = vld [vmem:[%s21] sm:$0xf]
  %v2854 = vld [vmem:[%s21 + $0x4] sm:$0xf]
  %v2855 = vld [vmem:[%s21 + $0x8] sm:$0xf]
  %v2856 = vld [vmem:[%s21 + $0xc] sm:$0xf]
  %v2857 = vmax.f32 %v2786, 0.0
  %v2858 = vpack.c.bf16 %v2857, %v2857
  %v2859 = vld [vmem:[%s21 + $0x130] sm:$0xf]
  %v2860 = vld [vmem:[%s21 + $0x134] sm:$0xf]
  %v2861 = vld [vmem:[%s21 + $0x138] sm:$0xf]
  %v2862 = vld [vmem:[%s21 + $0x13c] sm:$0xf]
  %v2863 = vmax.f32 %v2852, 0.0
  %v2864 = vpack.c.bf16 %v2863, %v2863
  %v2866 = vrot.slane %v2864, 1
  %2867 = vrot.lane.b32.xlu0 %v2866, 32
  %v2868 = vpop.permute.xlu0 %2867
  %v2873 = vunpack.c.l.b16 %v2859
  %v2874 = vunpack.c.l.b16 %v2860
  %v2875 = vunpack.c.l.b16 %v2861
  %v2876 = vunpack.c.l.b16 %v2862
  %v2877 = vpack.c.b16 %v2874, %v2873
  %v2878 = vpack.c.b16 %v2876, %v2875
  %v2882 = vsel %vm2733, %v2868, 0
  %2884 = vmatpush.bf16.msra.mxu0 0
  %2885 = vmatpush.bf16.msra.mxu0 0
  %2886 = vmatpush.bf16.msra.mxu0 0
  %2887 = vmatpush.bf16.msra.mxu0 0
  %2888 = vmatpush.bf16.msra.mxu0 0
  %2889 = vmatpush.bf16.msra.mxu0 0
  %2890 = vmatpush.bf16.msra.mxu0 %v2878
  %2891 = vmatpush.bf16.msra.mxu0 %v2877
  %2892 = vmatmul.bf16.gmra.mxu0 %v2882
  %v2893 = vpop.f32.mrf.mxu0
  %v2894 = vadd.f32 0.0, %v2893
  %v2895 = vpop.f32.mrf.mxu0
  %2896 = vdwg.mxu0
  %2898 = vrot.lane.b32.xlu0 %v2858, 32
  %v2899 = vpop.permute.xlu0 %2898
  %v2904 = vunpack.c.l.b16 %v2853
  %v2905 = vunpack.c.l.b16 %v2854
  %v2906 = vunpack.c.l.b16 %v2855
  %v2907 = vunpack.c.l.b16 %v2856
  %v2908 = vpack.c.b16 %v2905, %v2904
  %v2909 = vpack.c.b16 %v2907, %v2906
  %v2913 = vsel %vm2733, %v2899, 0
  %2915 = vmatpush.bf16.msra.mxu0 0
  %2916 = vmatpush.bf16.msra.mxu0 0
  %2917 = vmatpush.bf16.msra.mxu0 0
  %2918 = vmatpush.bf16.msra.mxu0 0
  %2919 = vmatpush.bf16.msra.mxu0 0
  %2920 = vmatpush.bf16.msra.mxu0 0
  %2921 = vmatpush.bf16.msra.mxu0 %v2909
  %2922 = vmatpush.bf16.msra.mxu0 %v2908
  %2923 = vmatmul.bf16.gmra.mxu0 %v2913
  %v2924 = vpop.f32.mrf.mxu0
  %v2925 = vadd.f32 %v2894, %v2924
  %v2926 = vpop.f32.mrf.mxu0
  %2927 = vdwg.mxu0
  %v2928 = vpack.c.bf16 %v2786, %v2786
  %2930 = vrot.lane.b32.xlu0 %v2928, 32
  %v2931 = vpop.permute.xlu0 %2930
  %v2933 = vsel %vm2733, %v2931, 0
  %2935 = vmatpush.bf16.msra.mxu0 0
  %2936 = vmatpush.bf16.msra.mxu0 0
  %2937 = vmatpush.bf16.msra.mxu0 0
  %2938 = vmatpush.bf16.msra.mxu0 0
  %2939 = vmatpush.bf16.msra.mxu0 0
  %2940 = vmatpush.bf16.msra.mxu0 0
  %2941 = vmatpush.bf16.msra.mxu0 %v2730
  %2942 = vmatpush.bf16.msra.mxu0 %v2729
  %2943 = vmatmul.bf16.gmra.mxu0 %v2933
  %v2944 = vpop.f32.mrf.mxu0
  %v2945 = vadd.f32 0.0, %v2944
  %v2946 = vpop.f32.mrf.mxu0
  %2947 = vdwg.mxu0
  %v2949 = vrot.slane %v2945, 6
  %v2951 = vadd.f32 %v2603, %v2949
  %v2952 = vxor.u32 %v2951, 2147483648
  %v2953 = vmul.f32 %v2952, 1.442695
  %v2954 = vpow.pop %v2953
  %v2955 = vadd.f32 %v2954, 1.0
  %v2956 = vrcp.pop %v2955
  %v2957 = vmul.f32 %v2955, %v2956
  %v2958 = vsub.f32 1.0, %v2957
  %v2959 = vmul.f32 %v2956, %v2958
  %v2960 = vadd.f32 %v2956, %v2959
  %vm2961 = vweird.f32 %v2955
  %vm2962 = vweird.f32 %v2956
  %vm2963 = vmor %vm2961, %vm2962
  %v2964 = vsel %vm2963, %v2956, %v2960
  %v2965 = vand.u32 2147483647, %v2955
  %vm2966 = vcmp.eq.f32.partialorder %v2965, 8.507059e+37
  %v2967 = vand.u32 %v2955, 2147483648
  %v2968 = vor.u32 1.1754944e-38, %v2967
  %v2969 = vsel %vm2966, %v2968, %v2964
  %v2970 = vmul.f32 1.0, %v2969
  %v2971 = vtanh.pop %v2951
  %v2973 = vrot.slane %v2780, 6
  %v2975 = vmul.f32 %v2970, %v2973
  %2977 = vrot.lane.b32.xlu0 %v2971, 64
  %v2978 = vpop.permute.xlu0 %2977
  %v2980 = vmul.f32 %v2970, %v2978
  %2982 = vrot.lane.b32.xlu0 %v2980, 32
  %v2983 = vpop.permute.xlu0 %2982
  %v2985 = vadd.f32 %v2975, %v2983
  %v2986 = vtanh.pop %v2985
  %2988 = vrot.lane.b32.xlu0 %v2986, 64
  %v2989 = vpop.permute.xlu0 %2988
  %v2991 = vmul.f32 %v2970, %v2989
  %v2992 = vpack.c.bf16 %v2852, %v2852
  %v2994 = vrot.slane %v2992, 1
  %2995 = vrot.lane.b32.xlu0 %v2994, 32
  %v2996 = vpop.permute.xlu0 %2995
  %v2998 = vsel %vm2733, %v2996, 0
  %3000 = vmatpush.bf16.msra.mxu0 0
  %3001 = vmatpush.bf16.msra.mxu0 0
  %3002 = vmatpush.bf16.msra.mxu0 0
  %3003 = vmatpush.bf16.msra.mxu0 0
  %3004 = vmatpush.bf16.msra.mxu0 0
  %3005 = vmatpush.bf16.msra.mxu0 0
  %3006 = vmatpush.bf16.msra.mxu0 %v2796
  %3007 = vmatpush.bf16.msra.mxu0 %v2795
  %3008 = vmatmul.bf16.gmra.mxu0 %v2998
  %v3009 = vpop.f32.mrf.mxu0
  %v3010 = vadd.f32 0.0, %v3009
  %v3011 = vpop.f32.mrf.mxu0
  %3012 = vdwg.mxu0
  %v3013 = vadd.f32 %v2712, %v3010
  %v3014 = vxor.u32 %v3013, 2147483648
  %v3015 = vmul.f32 %v3014, 1.442695
  %v3016 = vpow.pop %v3015
  %v3017 = vadd.f32 %v3016, 1.0
  %v3018 = vrcp.pop %v3017
  %v3019 = vmul.f32 %v3017, %v3018
  %v3020 = vsub.f32 1.0, %v3019
  %v3021 = vmul.f32 %v3018, %v3020
  %v3022 = vadd.f32 %v3018, %v3021
  %vm3023 = vweird.f32 %v3017
  %vm3024 = vweird.f32 %v3018
  %vm3025 = vmor %vm3023, %vm3024
  %v3026 = vsel %vm3025, %v3018, %v3022
  %v3027 = vand.u32 2147483647, %v3017
  %vm3028 = vcmp.eq.f32.partialorder %v3027, 8.507059e+37
  %v3029 = vand.u32 %v3017, 2147483648
  %v3030 = vor.u32 1.1754944e-38, %v3029
  %v3031 = vsel %vm3028, %v3030, %v3026
  %v3032 = vmul.f32 1.0, %v3031
  %v3033 = vtanh.pop %v3013
  %v3035 = vrot.slane %v2846, 2
  %v3037 = vmul.f32 %v3032, %v3035
  %3039 = vrot.lane.b32.xlu0 %v3033, 64
  %v3040 = vpop.permute.xlu0 %3039
  %v3042 = vmul.f32 %v3032, %v3040
  %3044 = vrot.lane.b32.xlu0 %v3042, 32
  %v3045 = vpop.permute.xlu0 %3044
  %v3047 = vadd.f32 %v3037, %v3045
  %v3048 = vtanh.pop %v3047
  %3050 = vrot.lane.b32.xlu0 %v3048, 64
  %v3051 = vpop.permute.xlu0 %3050
  %v3053 = vmul.f32 %v3032, %v3051
  %v3054 = vld [vmem:[%s21 + $0x20] sm:$0xf]
  %v3055 = vld [vmem:[%s21 + $0x24] sm:$0xf]
  %v3056 = vld [vmem:[%s21 + $0x28] sm:$0xf]
  %v3057 = vld [vmem:[%s21 + $0x2c] sm:$0xf]
  %v3058 = vmax.f32 %v2991, 0.0
  %v3059 = vpack.c.bf16 %v3058, %v3058
  %v3061 = vrot.slane %v3059, 1
  %3062 = vrot.lane.b32.xlu0 %v3061, 32
  %v3063 = vpop.permute.xlu0 %3062
  %v3068 = vunpack.c.l.b16 %v3054
  %v3069 = vunpack.c.l.b16 %v3055
  %v3070 = vunpack.c.l.b16 %v3056
  %v3071 = vunpack.c.l.b16 %v3057
  %v3072 = vpack.c.b16 %v3069, %v3068
  %v3073 = vpack.c.b16 %v3071, %v3070
  %v3077 = vsel %vm2733, %v3063, 0
  %3079 = vmatpush.bf16.msra.mxu0 0
  %3080 = vmatpush.bf16.msra.mxu0 0
  %3081 = vmatpush.bf16.msra.mxu0 0
  %3082 = vmatpush.bf16.msra.mxu0 0
  %3083 = vmatpush.bf16.msra.mxu0 0
  %3084 = vmatpush.bf16.msra.mxu0 0
  %3085 = vmatpush.bf16.msra.mxu0 %v3073
  %3086 = vmatpush.bf16.msra.mxu0 %v3072
  %3087 = vmatmul.bf16.gmra.mxu0 %v3077
  %v3088 = vpop.f32.mrf.mxu0
  %v3089 = vadd.f32 0.0, %v3088
  %v3090 = vpop.f32.mrf.mxu0
  %3091 = vdwg.mxu0
  %v3092 = vadd.f32 %v2925, %v3089
  %v3093 = vld [vmem:[%s21 + $0x110] sm:$0xf]
  %v3094 = vld [vmem:[%s21 + $0x114] sm:$0xf]
  %v3095 = vld [vmem:[%s21 + $0x118] sm:$0xf]
  %v3096 = vld [vmem:[%s21 + $0x11c] sm:$0xf]
  %v3097 = vmax.f32 %v3053, 0.0
  %v3098 = vpack.c.bf16 %v3097, %v3097
  %3100 = vrot.lane.b32.xlu0 %v3098, 32
  %v3101 = vpop.permute.xlu0 %3100
  %v3106 = vunpack.c.l.b16 %v3093
  %v3107 = vunpack.c.l.b16 %v3094
  %v3108 = vunpack.c.l.b16 %v3095
  %v3109 = vunpack.c.l.b16 %v3096
  %v3110 = vpack.c.b16 %v3107, %v3106
  %v3111 = vpack.c.b16 %v3109, %v3108
  %v3115 = vsel %vm2733, %v3101, 0
  %3117 = vmatpush.bf16.msra.mxu0 0
  %3118 = vmatpush.bf16.msra.mxu0 0
  %3119 = vmatpush.bf16.msra.mxu0 0
  %3120 = vmatpush.bf16.msra.mxu0 0
  %3121 = vmatpush.bf16.msra.mxu0 0
  %3122 = vmatpush.bf16.msra.mxu0 0
  %3123 = vmatpush.bf16.msra.mxu0 %v3111
  %3124 = vmatpush.bf16.msra.mxu0 %v3110
  %3125 = vmatmul.bf16.gmra.mxu0 %v3115
  %v3126 = vpop.f32.mrf.mxu0
  %v3127 = vadd.f32 0.0, %v3126
  %v3128 = vpop.f32.mrf.mxu0
  %3129 = vdwg.mxu0
  %v3130 = vadd.f32 %v3092, %v3127
  %v3131 = vpack.c.bf16 %v2991, %v2991
  %v3133 = vrot.slane %v3131, 1
  %3134 = vrot.lane.b32.xlu0 %v3133, 32
  %v3135 = vpop.permute.xlu0 %3134
  %v3137 = vsel %vm2733, %v3135, 0
  %3139 = vmatpush.bf16.msra.mxu0 0
  %3140 = vmatpush.bf16.msra.mxu0 0
  %3141 = vmatpush.bf16.msra.mxu0 0
  %3142 = vmatpush.bf16.msra.mxu0 0
  %3143 = vmatpush.bf16.msra.mxu0 0
  %3144 = vmatpush.bf16.msra.mxu0 0
  %3145 = vmatpush.bf16.msra.mxu0 %v2730
  %3146 = vmatpush.bf16.msra.mxu0 %v2729
  %3147 = vmatmul.bf16.gmra.mxu0 %v3137
  %v3148 = vpop.f32.mrf.mxu0
  %v3149 = vadd.f32 0.0, %v3148
  %v3150 = vpop.f32.mrf.mxu0
  %3151 = vdwg.mxu0
  %v3153 = vrot.slane %v3149, 4
  %v3155 = vadd.f32 %v2603, %v3153
  %v3156 = vxor.u32 %v3155, 2147483648
  %v3157 = vmul.f32 %v3156, 1.442695
  %v3158 = vpow.pop %v3157
  %v3159 = vadd.f32 %v3158, 1.0
  %v3160 = vrcp.pop %v3159
  %v3161 = vmul.f32 %v3159, %v3160
  %v3162 = vsub.f32 1.0, %v3161
  %v3163 = vmul.f32 %v3160, %v3162
  %v3164 = vadd.f32 %v3160, %v3163
  %vm3165 = vweird.f32 %v3159
  %vm3166 = vweird.f32 %v3160
  %vm3167 = vmor %vm3165, %vm3166
  %v3168 = vsel %vm3167, %v3160, %v3164
  %v3169 = vand.u32 2147483647, %v3159
  %vm3170 = vcmp.eq.f32.partialorder %v3169, 8.507059e+37
  %v3171 = vand.u32 %v3159, 2147483648
  %v3172 = vor.u32 1.1754944e-38, %v3171
  %v3173 = vsel %vm3170, %v3172, %v3168
  %v3174 = vmul.f32 1.0, %v3173
  %v3175 = vtanh.pop %v3155
  %v3177 = vrot.slane %v2985, 6
  %v3179 = vmul.f32 %v3174, %v3177
  %3181 = vrot.lane.b32.xlu0 %v3175, 64
  %v3182 = vpop.permute.xlu0 %3181
  %v3184 = vmul.f32 %v3174, %v3182
  %3186 = vrot.lane.b32.xlu0 %v3184, 32
  %v3187 = vpop.permute.xlu0 %3186
  %v3189 = vadd.f32 %v3179, %v3187
  %v3190 = vtanh.pop %v3189
  %3192 = vrot.lane.b32.xlu0 %v3190, 64
  %v3193 = vpop.permute.xlu0 %3192
  %v3195 = vmul.f32 %v3174, %v3193
  %v3196 = vpack.c.bf16 %v3053, %v3053
  %3198 = vrot.lane.b32.xlu0 %v3196, 32
  %v3199 = vpop.permute.xlu0 %3198
  %v3201 = vsel %vm2733, %v3199, 0
  %3203 = vmatpush.bf16.msra.mxu0 0
  %3204 = vmatpush.bf16.msra.mxu0 0
  %3205 = vmatpush.bf16.msra.mxu0 0
  %3206 = vmatpush.bf16.msra.mxu0 0
  %3207 = vmatpush.bf16.msra.mxu0 0
  %3208 = vmatpush.bf16.msra.mxu0 0
  %3209 = vmatpush.bf16.msra.mxu0 %v2796
  %3210 = vmatpush.bf16.msra.mxu0 %v2795
  %3211 = vmatmul.bf16.gmra.mxu0 %v3201
  %v3212 = vpop.f32.mrf.mxu0
  %v3213 = vadd.f32 0.0, %v3212
  %v3214 = vpop.f32.mrf.mxu0
  %3215 = vdwg.mxu0
  %v3217 = vrot.slane %v3213, 2
  %v3219 = vadd.f32 %v2711, %v3217
  %v3220 = vxor.u32 %v3219, 2147483648
  %v3221 = vmul.f32 %v3220, 1.442695
  %v3222 = vpow.pop %v3221
  %v3223 = vadd.f32 %v3222, 1.0
  %v3224 = vrcp.pop %v3223
  %v3225 = vmul.f32 %v3223, %v3224
  %v3226 = vsub.f32 1.0, %v3225
  %v3227 = vmul.f32 %v3224, %v3226
  %v3228 = vadd.f32 %v3224, %v3227
  %vm3229 = vweird.f32 %v3223
  %vm3230 = vweird.f32 %v3224
  %vm3231 = vmor %vm3229, %vm3230
  %v3232 = vsel %vm3231, %v3224, %v3228
  %v3233 = vand.u32 2147483647, %v3223
  %vm3234 = vcmp.eq.f32.partialorder %v3233, 8.507059e+37
  %v3235 = vand.u32 %v3223, 2147483648
  %v3236 = vor.u32 1.1754944e-38, %v3235
  %v3237 = vsel %vm3234, %v3236, %v3232
  %v3238 = vmul.f32 1.0, %v3237
  %v3239 = vtanh.pop %v3219
  %v3241 = vrot.slane %v3047, 2
  %v3243 = vmul.f32 %v3238, %v3241
  %3245 = vrot.lane.b32.xlu0 %v3239, 64
  %v3246 = vpop.permute.xlu0 %3245
  %v3248 = vmul.f32 %v3238, %v3246
  %3250 = vrot.lane.b32.xlu0 %v3248, 32
  %v3251 = vpop.permute.xlu0 %3250
  %v3253 = vadd.f32 %v3243, %v3251
  %v3254 = vtanh.pop %v3253
  %3256 = vrot.lane.b32.xlu0 %v3254, 64
  %v3257 = vpop.permute.xlu0 %3256
  %v3259 = vmul.f32 %v3238, %v3257
  %v3260 = vld [vmem:[%s21 + $0x40] sm:$0xf]
  %v3261 = vld [vmem:[%s21 + $0x44] sm:$0xf]
  %v3262 = vld [vmem:[%s21 + $0x48] sm:$0xf]
  %v3263 = vld [vmem:[%s21 + $0x4c] sm:$0xf]
  %v3264 = vmax.f32 %v3195, 0.0
  %v3265 = vpack.c.bf16 %v3264, %v3264
  %v3267 = vrot.slane %v3265, 2
  %3268 = vrot.lane.b32.xlu0 %v3267, 32
  %v3269 = vpop.permute.xlu0 %3268
  %v3274 = vunpack.c.l.b16 %v3260
  %v3275 = vunpack.c.l.b16 %v3261
  %v3276 = vunpack.c.l.b16 %v3262
  %v3277 = vunpack.c.l.b16 %v3263
  %v3278 = vpack.c.b16 %v3275, %v3274
  %v3279 = vpack.c.b16 %v3277, %v3276
  %v3283 = vsel %vm2733, %v3269, 0
  %3285 = vmatpush.bf16.msra.mxu0 0
  %3286 = vmatpush.bf16.msra.mxu0 0
  %3287 = vmatpush.bf16.msra.mxu0 0
  %3288 = vmatpush.bf16.msra.mxu0 0
  %3289 = vmatpush.bf16.msra.mxu0 0
  %3290 = vmatpush.bf16.msra.mxu0 0
  %3291 = vmatpush.bf16.msra.mxu0 %v3279
  %3292 = vmatpush.bf16.msra.mxu0 %v3278
  %3293 = vmatmul.bf16.gmra.mxu0 %v3283
  %v3294 = vpop.f32.mrf.mxu0
  %v3295 = vadd.f32 0.0, %v3294
  %v3296 = vpop.f32.mrf.mxu0
  %3297 = vdwg.mxu0
  %v3298 = vadd.f32 %v3130, %v3295
  %v3299 = vld [vmem:[%s21 + $0xf0] sm:$0xf]
  %v3300 = vld [vmem:[%s21 + $0xf4] sm:$0xf]
  %v3301 = vld [vmem:[%s21 + $0xf8] sm:$0xf]
  %v3302 = vld [vmem:[%s21 + $0xfc] sm:$0xf]
  %v3303 = vmax.f32 %v3259, 0.0
  %v3304 = vpack.c.bf16 %v3303, %v3303
  %v3306 = vrot.slane %v3304, 3
  %3307 = vrot.lane.b32.xlu0 %v3306, 32
  %v3308 = vpop.permute.xlu0 %3307
  %v3313 = vunpack.c.l.b16 %v3299
  %v3314 = vunpack.c.l.b16 %v3300
  %v3315 = vunpack.c.l.b16 %v3301
  %v3316 = vunpack.c.l.b16 %v3302
  %v3317 = vpack.c.b16 %v3314, %v3313
  %v3318 = vpack.c.b16 %v3316, %v3315
  %v3322 = vsel %vm2733, %v3308, 0
  %3324 = vmatpush.bf16.msra.mxu0 0
  %3325 = vmatpush.bf16.msra.mxu0 0
  %3326 = vmatpush.bf16.msra.mxu0 0
  %3327 = vmatpush.bf16.msra.mxu0 0
  %3328 = vmatpush.bf16.msra.mxu0 0
  %3329 = vmatpush.bf16.msra.mxu0 0
  %3330 = vmatpush.bf16.msra.mxu0 %v3318
  %3331 = vmatpush.bf16.msra.mxu0 %v3317
  %3332 = vmatmul.bf16.gmra.mxu0 %v3322
  %v3333 = vpop.f32.mrf.mxu0
  %v3334 = vadd.f32 0.0, %v3333
  %v3335 = vpop.f32.mrf.mxu0
  %3336 = vdwg.mxu0
  %v3337 = vadd.f32 %v3298, %v3334
  %v3338 = vpack.c.bf16 %v3195, %v3195
  %v3340 = vrot.slane %v3338, 2
  %3341 = vrot.lane.b32.xlu0 %v3340, 32
  %v3342 = vpop.permute.xlu0 %3341
  %v3344 = vsel %vm2733, %v3342, 0
  %3346 = vmatpush.bf16.msra.mxu0 0
  %3347 = vmatpush.bf16.msra.mxu0 0
  %3348 = vmatpush.bf16.msra.mxu0 0
  %3349 = vmatpush.bf16.msra.mxu0 0
  %3350 = vmatpush.bf16.msra.mxu0 0
  %3351 = vmatpush.bf16.msra.mxu0 0
  %3352 = vmatpush.bf16.msra.mxu0 %v2730
  %3353 = vmatpush.bf16.msra.mxu0 %v2729
  %3354 = vmatmul.bf16.gmra.mxu0 %v3344
  %v3355 = vpop.f32.mrf.mxu0
  %v3356 = vadd.f32 0.0, %v3355
  %v3357 = vpop.f32.mrf.mxu0
  %3358 = vdwg.mxu0
  %v3360 = vrot.slane %v3356, 2
  %v3362 = vadd.f32 %v2603, %v3360
  %v3363 = vxor.u32 %v3362, 2147483648
  %v3364 = vmul.f32 %v3363, 1.442695
  %v3365 = vpow.pop %v3364
  %v3366 = vadd.f32 %v3365, 1.0
  %v3367 = vrcp.pop %v3366
  %v3368 = vmul.f32 %v3366, %v3367
  %v3369 = vsub.f32 1.0, %v3368
  %v3370 = vmul.f32 %v3367, %v3369
  %v3371 = vadd.f32 %v3367, %v3370
  %vm3372 = vweird.f32 %v3366
  %vm3373 = vweird.f32 %v3367
  %vm3374 = vmor %vm3372, %vm3373
  %v3375 = vsel %vm3374, %v3367, %v3371
  %v3376 = vand.u32 2147483647, %v3366
  %vm3377 = vcmp.eq.f32.partialorder %v3376, 8.507059e+37
  %v3378 = vand.u32 %v3366, 2147483648
  %v3379 = vor.u32 1.1754944e-38, %v3378
  %v3380 = vsel %vm3377, %v3379, %v3375
  %v3381 = vmul.f32 1.0, %v3380
  %v3382 = vtanh.pop %v3362
  %v3384 = vrot.slane %v3189, 6
  %v3386 = vmul.f32 %v3381, %v3384
  %3388 = vrot.lane.b32.xlu0 %v3382, 64
  %v3389 = vpop.permute.xlu0 %3388
  %v3391 = vmul.f32 %v3381, %v3389
  %3393 = vrot.lane.b32.xlu0 %v3391, 32
  %v3394 = vpop.permute.xlu0 %3393
  %v3396 = vadd.f32 %v3386, %v3394
  %v3397 = vtanh.pop %v3396
  %3399 = vrot.lane.b32.xlu0 %v3397, 64
  %v3400 = vpop.permute.xlu0 %3399
  %v3402 = vmul.f32 %v3381, %v3400
  %v3403 = vpack.c.bf16 %v3259, %v3259
  %v3405 = vrot.slane %v3403, 3
  %3406 = vrot.lane.b32.xlu0 %v3405, 32
  %v3407 = vpop.permute.xlu0 %3406
  %v3409 = vsel %vm2733, %v3407, 0
  %3411 = vmatpush.bf16.msra.mxu0 0
  %3412 = vmatpush.bf16.msra.mxu0 0
  %3413 = vmatpush.bf16.msra.mxu0 0
  %3414 = vmatpush.bf16.msra.mxu0 0
  %3415 = vmatpush.bf16.msra.mxu0 0
  %3416 = vmatpush.bf16.msra.mxu0 0
  %3417 = vmatpush.bf16.msra.mxu0 %v2796
  %3418 = vmatpush.bf16.msra.mxu0 %v2795
  %3419 = vmatmul.bf16.gmra.mxu0 %v3409
  %v3420 = vpop.f32.mrf.mxu0
  %v3421 = vadd.f32 0.0, %v3420
  %v3422 = vpop.f32.mrf.mxu0
  %3423 = vdwg.mxu0
  %v3425 = vrot.slane %v3421, 4
  %v3427 = vadd.f32 %v2711, %v3425
  %v3428 = vxor.u32 %v3427, 2147483648
  %v3429 = vmul.f32 %v3428, 1.442695
  %v3430 = vpow.pop %v3429
  %v3431 = vadd.f32 %v3430, 1.0
  %v3432 = vrcp.pop %v3431
  %v3433 = vmul.f32 %v3431, %v3432
  %v3434 = vsub.f32 1.0, %v3433
  %v3435 = vmul.f32 %v3432, %v3434
  %v3436 = vadd.f32 %v3432, %v3435
  %vm3437 = vweird.f32 %v3431
  %vm3438 = vweird.f32 %v3432
  %vm3439 = vmor %vm3437, %vm3438
  %v3440 = vsel %vm3439, %v3432, %v3436
  %v3441 = vand.u32 2147483647, %v3431
  %vm3442 = vcmp.eq.f32.partialorder %v3441, 8.507059e+37
  %v3443 = vand.u32 %v3431, 2147483648
  %v3444 = vor.u32 1.1754944e-38, %v3443
  %v3445 = vsel %vm3442, %v3444, %v3440
  %v3446 = vmul.f32 1.0, %v3445
  %v3447 = vtanh.pop %v3427
  %v3449 = vrot.slane %v3253, 2
  %v3451 = vmul.f32 %v3446, %v3449
  %3453 = vrot.lane.b32.xlu0 %v3447, 64
  %v3454 = vpop.permute.xlu0 %3453
  %v3456 = vmul.f32 %v3446, %v3454
  %3458 = vrot.lane.b32.xlu0 %v3456, 32
  %v3459 = vpop.permute.xlu0 %3458
  %v3461 = vadd.f32 %v3451, %v3459
  %v3462 = vtanh.pop %v3461
  %3464 = vrot.lane.b32.xlu0 %v3462, 64
  %v3465 = vpop.permute.xlu0 %3464
  %v3467 = vmul.f32 %v3446, %v3465
  %v3468 = vld [vmem:[%s21 + $0x60] sm:$0xf]
  %v3469 = vld [vmem:[%s21 + $0x64] sm:$0xf]
  %v3470 = vld [vmem:[%s21 + $0x68] sm:$0xf]
  %v3471 = vld [vmem:[%s21 + $0x6c] sm:$0xf]
  %v3472 = vmax.f32 %v3402, 0.0
  %v3473 = vpack.c.bf16 %v3472, %v3472
  %v3475 = vrot.slane %v3473, 3
  %3476 = vrot.lane.b32.xlu0 %v3475, 32
  %v3477 = vpop.permute.xlu0 %3476
  %v3482 = vunpack.c.l.b16 %v3468
  %v3483 = vunpack.c.l.b16 %v3469
  %v3484 = vunpack.c.l.b16 %v3470
  %v3485 = vunpack.c.l.b16 %v3471
  %v3486 = vpack.c.b16 %v3483, %v3482
  %v3487 = vpack.c.b16 %v3485, %v3484
  %v3491 = vsel %vm2733, %v3477, 0
  %3493 = vmatpush.bf16.msra.mxu0 0
  %3494 = vmatpush.bf16.msra.mxu0 0
  %3495 = vmatpush.bf16.msra.mxu0 0
  %3496 = vmatpush.bf16.msra.mxu0 0
  %3497 = vmatpush.bf16.msra.mxu0 0
  %3498 = vmatpush.bf16.msra.mxu0 0
  %3499 = vmatpush.bf16.msra.mxu0 %v3487
  %3500 = vmatpush.bf16.msra.mxu0 %v3486
  %3501 = vmatmul.bf16.gmra.mxu0 %v3491
  %v3502 = vpop.f32.mrf.mxu0
  %v3503 = vadd.f32 0.0, %v3502
  %v3504 = vpop.f32.mrf.mxu0
  %3505 = vdwg.mxu0
  %v3506 = vadd.f32 %v3337, %v3503
  %v3507 = vld [vmem:[%s21 + $0xd0] sm:$0xf]
  %v3508 = vld [vmem:[%s21 + $0xd4] sm:$0xf]
  %v3509 = vld [vmem:[%s21 + $0xd8] sm:$0xf]
  %v3510 = vld [vmem:[%s21 + $0xdc] sm:$0xf]
  %v3511 = vmax.f32 %v3467, 0.0
  %v3512 = vpack.c.bf16 %v3511, %v3511
  %v3514 = vrot.slane %v3512, 2
  %3515 = vrot.lane.b32.xlu0 %v3514, 32
  %v3516 = vpop.permute.xlu0 %3515
  %v3521 = vunpack.c.l.b16 %v3507
  %v3522 = vunpack.c.l.b16 %v3508
  %v3523 = vunpack.c.l.b16 %v3509
  %v3524 = vunpack.c.l.b16 %v3510
  %v3525 = vpack.c.b16 %v3522, %v3521
  %v3526 = vpack.c.b16 %v3524, %v3523
  %v3530 = vsel %vm2733, %v3516, 0
  %3532 = vmatpush.bf16.msra.mxu0 0
  %3533 = vmatpush.bf16.msra.mxu0 0
  %3534 = vmatpush.bf16.msra.mxu0 0
  %3535 = vmatpush.bf16.msra.mxu0 0
  %3536 = vmatpush.bf16.msra.mxu0 0
  %3537 = vmatpush.bf16.msra.mxu0 0
  %3538 = vmatpush.bf16.msra.mxu0 %v3526
  %3539 = vmatpush.bf16.msra.mxu0 %v3525
  %3540 = vmatmul.bf16.gmra.mxu0 %v3530
  %v3541 = vpop.f32.mrf.mxu0
  %v3542 = vadd.f32 0.0, %v3541
  %v3543 = vpop.f32.mrf.mxu0
  %3544 = vdwg.mxu0
  %v3545 = vadd.f32 %v3506, %v3542
  %v3546 = vpack.c.bf16 %v3402, %v3402
  %v3548 = vrot.slane %v3546, 3
  %3549 = vrot.lane.b32.xlu0 %v3548, 32
  %v3550 = vpop.permute.xlu0 %3549
  %v3552 = vsel %vm2733, %v3550, 0
  %3554 = vmatpush.bf16.msra.mxu0 0
  %3555 = vmatpush.bf16.msra.mxu0 0
  %3556 = vmatpush.bf16.msra.mxu0 0
  %3557 = vmatpush.bf16.msra.mxu0 0
  %3558 = vmatpush.bf16.msra.mxu0 0
  %3559 = vmatpush.bf16.msra.mxu0 0
  %3560 = vmatpush.bf16.msra.mxu0 %v2730
  %3561 = vmatpush.bf16.msra.mxu0 %v2729
  %3562 = vmatmul.bf16.gmra.mxu0 %v3552
  %v3563 = vpop.f32.mrf.mxu0
  %v3564 = vadd.f32 0.0, %v3563
  %v3565 = vpop.f32.mrf.mxu0
  %3566 = vdwg.mxu0
  %v3567 = vadd.f32 %v2604, %v3564
  %v3568 = vxor.u32 %v3567, 2147483648
  %v3569 = vmul.f32 %v3568, 1.442695
  %v3570 = vpow.pop %v3569
  %v3571 = vadd.f32 %v3570, 1.0
  %v3572 = vrcp.pop %v3571
  %v3573 = vmul.f32 %v3571, %v3572
  %v3574 = vsub.f32 1.0, %v3573
  %v3575 = vmul.f32 %v3572, %v3574
  %v3576 = vadd.f32 %v3572, %v3575
  %vm3577 = vweird.f32 %v3571
  %vm3578 = vweird.f32 %v3572
  %vm3579 = vmor %vm3577, %vm3578
  %v3580 = vsel %vm3579, %v3572, %v3576
  %v3581 = vand.u32 2147483647, %v3571
  %vm3582 = vcmp.eq.f32.partialorder %v3581, 8.507059e+37
  %v3583 = vand.u32 %v3571, 2147483648
  %v3584 = vor.u32 1.1754944e-38, %v3583
  %v3585 = vsel %vm3582, %v3584, %v3580
  %v3586 = vmul.f32 1.0, %v3585
  %v3587 = vtanh.pop %v3567
  %v3589 = vrot.slane %v3396, 6
  %v3591 = vmul.f32 %v3586, %v3589
  %3593 = vrot.lane.b32.xlu0 %v3587, 64
  %v3594 = vpop.permute.xlu0 %3593
  %v3596 = vmul.f32 %v3586, %v3594
  %3598 = vrot.lane.b32.xlu0 %v3596, 32
  %v3599 = vpop.permute.xlu0 %3598
  %v3601 = vadd.f32 %v3591, %v3599
  %v3602 = vtanh.pop %v3601
  %3604 = vrot.lane.b32.xlu0 %v3602, 64
  %v3605 = vpop.permute.xlu0 %3604
  %v3607 = vmul.f32 %v3586, %v3605
  %v3608 = vpack.c.bf16 %v3467, %v3467
  %v3610 = vrot.slane %v3608, 2
  %3611 = vrot.lane.b32.xlu0 %v3610, 32
  %v3612 = vpop.permute.xlu0 %3611
  %v3614 = vsel %vm2733, %v3612, 0
  %3616 = vmatpush.bf16.msra.mxu0 0
  %3617 = vmatpush.bf16.msra.mxu0 0
  %3618 = vmatpush.bf16.msra.mxu0 0
  %3619 = vmatpush.bf16.msra.mxu0 0
  %3620 = vmatpush.bf16.msra.mxu0 0
  %3621 = vmatpush.bf16.msra.mxu0 0
  %3622 = vmatpush.bf16.msra.mxu0 %v2796
  %3623 = vmatpush.bf16.msra.mxu0 %v2795
  %3624 = vmatmul.bf16.gmra.mxu0 %v3614
  %v3625 = vpop.f32.mrf.mxu0
  %v3626 = vadd.f32 0.0, %v3625
  %v3627 = vpop.f32.mrf.mxu0
  %3628 = vdwg.mxu0
  %v3630 = vrot.slane %v3626, 6
  %v3632 = vadd.f32 %v2711, %v3630
  %v3633 = vxor.u32 %v3632, 2147483648
  %v3634 = vmul.f32 %v3633, 1.442695
  %v3635 = vpow.pop %v3634
  %v3636 = vadd.f32 %v3635, 1.0
  %v3637 = vrcp.pop %v3636
  %v3638 = vmul.f32 %v3636, %v3637
  %v3639 = vsub.f32 1.0, %v3638
  %v3640 = vmul.f32 %v3637, %v3639
  %v3641 = vadd.f32 %v3637, %v3640
  %vm3642 = vweird.f32 %v3636
  %vm3643 = vweird.f32 %v3637
  %vm3644 = vmor %vm3642, %vm3643
  %v3645 = vsel %vm3644, %v3637, %v3641
  %v3646 = vand.u32 2147483647, %v3636
  %vm3647 = vcmp.eq.f32.partialorder %v3646, 8.507059e+37
  %v3648 = vand.u32 %v3636, 2147483648
  %v3649 = vor.u32 1.1754944e-38, %v3648
  %v3650 = vsel %vm3647, %v3649, %v3645
  %v3651 = vmul.f32 1.0, %v3650
  %v3652 = vtanh.pop %v3632
  %v3654 = vrot.slane %v3461, 2
  %v3656 = vmul.f32 %v3651, %v3654
  %3658 = vrot.lane.b32.xlu0 %v3652, 64
  %v3659 = vpop.permute.xlu0 %3658
  %v3661 = vmul.f32 %v3651, %v3659
  %3663 = vrot.lane.b32.xlu0 %v3661, 32
  %v3664 = vpop.permute.xlu0 %3663
  %v3666 = vadd.f32 %v3656, %v3664
  %v3667 = vtanh.pop %v3666
  %3669 = vrot.lane.b32.xlu0 %v3667, 64
  %v3670 = vpop.permute.xlu0 %3669
  %v3672 = vmul.f32 %v3651, %v3670
  %v3673 = vld [vmem:[%s21 + $0x80] sm:$0xf]
  %v3674 = vld [vmem:[%s21 + $0x84] sm:$0xf]
  %v3675 = vld [vmem:[%s21 + $0x88] sm:$0xf]
  %v3676 = vld [vmem:[%s21 + $0x8c] sm:$0xf]
  %v3677 = vmax.f32 %v3607, 0.0
  %v3678 = vpack.c.bf16 %v3677, %v3677
  %3680 = vrot.lane.b32.xlu0 %v3678, 32
  %v3681 = vpop.permute.xlu0 %3680
  %v3686 = vunpack.c.l.b16 %v3673
  %v3687 = vunpack.c.l.b16 %v3674
  %v3688 = vunpack.c.l.b16 %v3675
  %v3689 = vunpack.c.l.b16 %v3676
  %v3690 = vpack.c.b16 %v3687, %v3686
  %v3691 = vpack.c.b16 %v3689, %v3688
  %v3695 = vsel %vm2733, %v3681, 0
  %3697 = vmatpush.bf16.msra.mxu0 0
  %3698 = vmatpush.bf16.msra.mxu0 0
  %3699 = vmatpush.bf16.msra.mxu0 0
  %3700 = vmatpush.bf16.msra.mxu0 0
  %3701 = vmatpush.bf16.msra.mxu0 0
  %3702 = vmatpush.bf16.msra.mxu0 0
  %3703 = vmatpush.bf16.msra.mxu0 %v3691
  %3704 = vmatpush.bf16.msra.mxu0 %v3690
  %3705 = vmatmul.bf16.gmra.mxu0 %v3695
  %v3706 = vpop.f32.mrf.mxu0
  %v3707 = vadd.f32 0.0, %v3706
  %v3708 = vpop.f32.mrf.mxu0
  %3709 = vdwg.mxu0
  %v3710 = vadd.f32 %v3545, %v3707
  %v3711 = vld [vmem:[%s21 + $0xb0] sm:$0xf]
  %v3712 = vld [vmem:[%s21 + $0xb4] sm:$0xf]
  %v3713 = vld [vmem:[%s21 + $0xb8] sm:$0xf]
  %v3714 = vld [vmem:[%s21 + $0xbc] sm:$0xf]
  %v3715 = vmax.f32 %v3672, 0.0
  %v3716 = vpack.c.bf16 %v3715, %v3715
  %v3718 = vrot.slane %v3716, 1
  %3719 = vrot.lane.b32.xlu0 %v3718, 32
  %v3720 = vpop.permute.xlu0 %3719
  %v3725 = vunpack.c.l.b16 %v3711
  %v3726 = vunpack.c.l.b16 %v3712
  %v3727 = vunpack.c.l.b16 %v3713
  %v3728 = vunpack.c.l.b16 %v3714
  %v3729 = vpack.c.b16 %v3726, %v3725
  %v3730 = vpack.c.b16 %v3728, %v3727
  %v3734 = vsel %vm2733, %v3720, 0
  %3736 = vmatpush.bf16.msra.mxu0 0
  %3737 = vmatpush.bf16.msra.mxu0 0
  %3738 = vmatpush.bf16.msra.mxu0 0
  %3739 = vmatpush.bf16.msra.mxu0 0
  %3740 = vmatpush.bf16.msra.mxu0 0
  %3741 = vmatpush.bf16.msra.mxu0 0
  %3742 = vmatpush.bf16.msra.mxu0 %v3730
  %3743 = vmatpush.bf16.msra.mxu0 %v3729
  %3744 = vmatmul.bf16.gmra.mxu0 %v3734
  %v3745 = vpop.f32.mrf.mxu0
  %v3746 = vadd.f32 0.0, %v3745
  %v3747 = vpop.f32.mrf.mxu0
  %3748 = vdwg.mxu0
  %v3749 = vadd.f32 %v3710, %v3746
  %v3750 = vpack.c.bf16 %v3607, %v3607
  %3752 = vrot.lane.b32.xlu0 %v3750, 32
  %v3753 = vpop.permute.xlu0 %3752
  %v3755 = vsel %vm2733, %v3753, 0
  %3757 = vmatpush.bf16.msra.mxu0 0
  %3758 = vmatpush.bf16.msra.mxu0 0
  %3759 = vmatpush.bf16.msra.mxu0 0
  %3760 = vmatpush.bf16.msra.mxu0 0
  %3761 = vmatpush.bf16.msra.mxu0 0
  %3762 = vmatpush.bf16.msra.mxu0 0
  %3763 = vmatpush.bf16.msra.mxu0 %v2730
  %3764 = vmatpush.bf16.msra.mxu0 %v2729
  %3765 = vmatmul.bf16.gmra.mxu0 %v3755
  %v3766 = vpop.f32.mrf.mxu0
  %v3767 = vadd.f32 0.0, %v3766
  %v3768 = vpop.f32.mrf.mxu0
  %3769 = vdwg.mxu0
  %v3771 = vrot.slane %v3767, 6
  %v3773 = vadd.f32 %v2604, %v3771
  %v3774 = vxor.u32 %v3773, 2147483648
  %v3775 = vmul.f32 %v3774, 1.442695
  %v3776 = vpow.pop %v3775
  %v3777 = vadd.f32 %v3776, 1.0
  %v3778 = vrcp.pop %v3777
  %v3779 = vmul.f32 %v3777, %v3778
  %v3780 = vsub.f32 1.0, %v3779
  %v3781 = vmul.f32 %v3778, %v3780
  %v3782 = vadd.f32 %v3778, %v3781
  %vm3783 = vweird.f32 %v3777
  %vm3784 = vweird.f32 %v3778
  %vm3785 = vmor %vm3783, %vm3784
  %v3786 = vsel %vm3785, %v3778, %v3782
  %v3787 = vand.u32 2147483647, %v3777
  %vm3788 = vcmp.eq.f32.partialorder %v3787, 8.507059e+37
  %v3789 = vand.u32 %v3777, 2147483648
  %v3790 = vor.u32 1.1754944e-38, %v3789
  %v3791 = vsel %vm3788, %v3790, %v3786
  %v3792 = vmul.f32 1.0, %v3791
  %v3793 = vtanh.pop %v3773
  %v3795 = vrot.slane %v3601, 6
  %v3797 = vmul.f32 %v3792, %v3795
  %3799 = vrot.lane.b32.xlu0 %v3793, 64
  %v3800 = vpop.permute.xlu0 %3799
  %v3802 = vmul.f32 %v3792, %v3800
  %3804 = vrot.lane.b32.xlu0 %v3802, 32
  %v3805 = vpop.permute.xlu0 %3804
  %v3807 = vadd.f32 %v3797, %v3805
  %v3808 = vtanh.pop %v3807
  %3810 = vrot.lane.b32.xlu0 %v3808, 64
  %v3811 = vpop.permute.xlu0 %3810
  %v3813 = vmul.f32 %v3792, %v3811
  %v3814 = vpack.c.bf16 %v3672, %v3672
  %v3816 = vrot.slane %v3814, 1
  %3817 = vrot.lane.b32.xlu0 %v3816, 32
  %v3818 = vpop.permute.xlu0 %3817
  %v3820 = vsel %vm2733, %v3818, 0
  %3822 = vmatpush.bf16.msra.mxu0 0
  %3823 = vmatpush.bf16.msra.mxu0 0
  %3824 = vmatpush.bf16.msra.mxu0 0
  %3825 = vmatpush.bf16.msra.mxu0 0
  %3826 = vmatpush.bf16.msra.mxu0 0
  %3827 = vmatpush.bf16.msra.mxu0 0
  %3828 = vmatpush.bf16.msra.mxu0 %v2796
  %3829 = vmatpush.bf16.msra.mxu0 %v2795
  %3830 = vmatmul.bf16.gmra.mxu0 %v3820
  %v3831 = vpop.f32.mrf.mxu0
  %v3832 = vadd.f32 0.0, %v3831
  %v3833 = vpop.f32.mrf.mxu0
  %3834 = vdwg.mxu0
  %v3835 = vadd.f32 %v2711, %v3832
  %v3836 = vxor.u32 %v3835, 2147483648
  %v3837 = vmul.f32 %v3836, 1.442695
  %v3838 = vpow.pop %v3837
  %v3839 = vadd.f32 %v3838, 1.0
  %v3840 = vrcp.pop %v3839
  %v3841 = vmul.f32 %v3839, %v3840
  %v3842 = vsub.f32 1.0, %v3841
  %v3843 = vmul.f32 %v3840, %v3842
  %v3844 = vadd.f32 %v3840, %v3843
  %vm3845 = vweird.f32 %v3839
  %vm3846 = vweird.f32 %v3840
  %vm3847 = vmor %vm3845, %vm3846
  %v3848 = vsel %vm3847, %v3840, %v3844
  %v3849 = vand.u32 2147483647, %v3839
  %vm3850 = vcmp.eq.f32.partialorder %v3849, 8.507059e+37
  %v3851 = vand.u32 %v3839, 2147483648
  %v3852 = vor.u32 1.1754944e-38, %v3851
  %v3853 = vsel %vm3850, %v3852, %v3848
  %v3854 = vmul.f32 1.0, %v3853
  %v3855 = vtanh.pop %v3835
  %v3857 = vrot.slane %v3666, 2
  %v3859 = vmul.f32 %v3854, %v3857
  %3861 = vrot.lane.b32.xlu0 %v3855, 64
  %v3862 = vpop.permute.xlu0 %3861
  %v3864 = vmul.f32 %v3854, %v3862
  %3866 = vrot.lane.b32.xlu0 %v3864, 32
  %v3867 = vpop.permute.xlu0 %3866
  %v3869 = vadd.f32 %v3859, %v3867
  %v3870 = vtanh.pop %v3869
  %3872 = vrot.lane.b32.xlu0 %v3870, 64
  %v3873 = vpop.permute.xlu0 %3872
  %v3875 = vmul.f32 %v3854, %v3873
  %v3876 = vld [vmem:[%s21 + $0xa0] sm:$0xf]
  %v3877 = vld [vmem:[%s21 + $0xa4] sm:$0xf]
  %v3878 = vld [vmem:[%s21 + $0xa8] sm:$0xf]
  %v3879 = vld [vmem:[%s21 + $0xac] sm:$0xf]
  %v3880 = vmax.f32 %v3813, 0.0
  %v3881 = vpack.c.bf16 %v3880, %v3880
  %v3883 = vrot.slane %v3881, 1
  %3884 = vrot.lane.b32.xlu0 %v3883, 32
  %v3885 = vpop.permute.xlu0 %3884
  %v3890 = vunpack.c.l.b16 %v3876
  %v3891 = vunpack.c.l.b16 %v3877
  %v3892 = vunpack.c.l.b16 %v3878
  %v3893 = vunpack.c.l.b16 %v3879
  %v3894 = vpack.c.b16 %v3891, %v3890
  %v3895 = vpack.c.b16 %v3893, %v3892
  %v3899 = vsel %vm2733, %v3885, 0
  %3901 = vmatpush.bf16.msra.mxu0 0
  %3902 = vmatpush.bf16.msra.mxu0 0
  %3903 = vmatpush.bf16.msra.mxu0 0
  %3904 = vmatpush.bf16.msra.mxu0 0
  %3905 = vmatpush.bf16.msra.mxu0 0
  %3906 = vmatpush.bf16.msra.mxu0 0
  %3907 = vmatpush.bf16.msra.mxu0 %v3895
  %3908 = vmatpush.bf16.msra.mxu0 %v3894
  %3909 = vmatmul.bf16.gmra.mxu0 %v3899
  %v3910 = vpop.f32.mrf.mxu0
  %v3911 = vadd.f32 0.0, %v3910
  %v3912 = vpop.f32.mrf.mxu0
  %3913 = vdwg.mxu0
  %v3914 = vadd.f32 %v3749, %v3911
  %v3915 = vld [vmem:[%s21 + $0x90] sm:$0xf]
  %v3916 = vld [vmem:[%s21 + $0x94] sm:$0xf]
  %v3917 = vld [vmem:[%s21 + $0x98] sm:$0xf]
  %v3918 = vld [vmem:[%s21 + $0x9c] sm:$0xf]
  %v3919 = vmax.f32 %v3875, 0.0
  %v3920 = vpack.c.bf16 %v3919, %v3919
  %3922 = vrot.lane.b32.xlu0 %v3920, 32
  %v3923 = vpop.permute.xlu0 %3922
  %v3928 = vunpack.c.l.b16 %v3915
  %v3929 = vunpack.c.l.b16 %v3916
  %v3930 = vunpack.c.l.b16 %v3917
  %v3931 = vunpack.c.l.b16 %v3918
  %v3932 = vpack.c.b16 %v3929, %v3928
  %v3933 = vpack.c.b16 %v3931, %v3930
  %v3937 = vsel %vm2733, %v3923, 0
  %3939 = vmatpush.bf16.msra.mxu0 0
  %3940 = vmatpush.bf16.msra.mxu0 0
  %3941 = vmatpush.bf16.msra.mxu0 0
  %3942 = vmatpush.bf16.msra.mxu0 0
  %3943 = vmatpush.bf16.msra.mxu0 0
  %3944 = vmatpush.bf16.msra.mxu0 0
  %3945 = vmatpush.bf16.msra.mxu0 %v3933
  %3946 = vmatpush.bf16.msra.mxu0 %v3932
  %3947 = vmatmul.bf16.gmra.mxu0 %v3937
  %v3948 = vpop.f32.mrf.mxu0
  %v3949 = vadd.f32 0.0, %v3948
  %v3950 = vpop.f32.mrf.mxu0
  %3951 = vdwg.mxu0
  %v3952 = vadd.f32 %v3914, %v3949
  %v3953 = vpack.c.bf16 %v3813, %v3813
  %v3955 = vrot.slane %v3953, 1
  %3956 = vrot.lane.b32.xlu0 %v3955, 32
  %v3957 = vpop.permute.xlu0 %3956
  %v3959 = vsel %vm2733, %v3957, 0
  %3961 = vmatpush.bf16.msra.mxu0 0
  %3962 = vmatpush.bf16.msra.mxu0 0
  %3963 = vmatpush.bf16.msra.mxu0 0
  %3964 = vmatpush.bf16.msra.mxu0 0
  %3965 = vmatpush.bf16.msra.mxu0 0
  %3966 = vmatpush.bf16.msra.mxu0 0
  %3967 = vmatpush.bf16.msra.mxu0 %v2730
  %3968 = vmatpush.bf16.msra.mxu0 %v2729
  %3969 = vmatmul.bf16.gmra.mxu0 %v3959
  %v3970 = vpop.f32.mrf.mxu0
  %v3971 = vadd.f32 0.0, %v3970
  %v3972 = vpop.f32.mrf.mxu0
  %3973 = vdwg.mxu0
  %v3975 = vrot.slane %v3971, 4
  %v3977 = vadd.f32 %v2604, %v3975
  %v3978 = vxor.u32 %v3977, 2147483648
  %v3979 = vmul.f32 %v3978, 1.442695
  %v3980 = vpow.pop %v3979
  %v3981 = vadd.f32 %v3980, 1.0
  %v3982 = vrcp.pop %v3981
  %v3983 = vmul.f32 %v3981, %v3982
  %v3984 = vsub.f32 1.0, %v3983
  %v3985 = vmul.f32 %v3982, %v3984
  %v3986 = vadd.f32 %v3982, %v3985
  %vm3987 = vweird.f32 %v3981
  %vm3988 = vweird.f32 %v3982
  %vm3989 = vmor %vm3987, %vm3988
  %v3990 = vsel %vm3989, %v3982, %v3986
  %v3991 = vand.u32 2147483647, %v3981
  %vm3992 = vcmp.eq.f32.partialorder %v3991, 8.507059e+37
  %v3993 = vand.u32 %v3981, 2147483648
  %v3994 = vor.u32 1.1754944e-38, %v3993
  %v3995 = vsel %vm3992, %v3994, %v3990
  %v3996 = vmul.f32 1.0, %v3995
  %v3997 = vtanh.pop %v3977
  %v3999 = vrot.slane %v3807, 6
  %v4001 = vmul.f32 %v3996, %v3999
  %4003 = vrot.lane.b32.xlu0 %v3997, 64
  %v4004 = vpop.permute.xlu0 %4003
  %v4006 = vmul.f32 %v3996, %v4004
  %4008 = vrot.lane.b32.xlu0 %v4006, 32
  %v4009 = vpop.permute.xlu0 %4008
  %v4011 = vadd.f32 %v4001, %v4009
  %v4012 = vtanh.pop %v4011
  %4014 = vrot.lane.b32.xlu0 %v4012, 64
  %v4015 = vpop.permute.xlu0 %4014
  %v4017 = vmul.f32 %v3996, %v4015
  %v4018 = vpack.c.bf16 %v3875, %v3875
  %4020 = vrot.lane.b32.xlu0 %v4018, 32
  %v4021 = vpop.permute.xlu0 %4020
  %v4023 = vsel %vm2733, %v4021, 0
  %4025 = vmatpush.bf16.msra.mxu0 0
  %4026 = vmatpush.bf16.msra.mxu0 0
  %4027 = vmatpush.bf16.msra.mxu0 0
  %4028 = vmatpush.bf16.msra.mxu0 0
  %4029 = vmatpush.bf16.msra.mxu0 0
  %4030 = vmatpush.bf16.msra.mxu0 0
  %4031 = vmatpush.bf16.msra.mxu0 %v2796
  %4032 = vmatpush.bf16.msra.mxu0 %v2795
  %4033 = vmatmul.bf16.gmra.mxu0 %v4023
  %v4034 = vpop.f32.mrf.mxu0
  %v4035 = vadd.f32 0.0, %v4034
  %v4036 = vpop.f32.mrf.mxu0
  %4037 = vdwg.mxu0
  %v4039 = vrot.slane %v4035, 2
  %v4041 = vadd.f32 %v2710, %v4039
  %v4042 = vxor.u32 %v4041, 2147483648
  %v4043 = vmul.f32 %v4042, 1.442695
  %v4044 = vpow.pop %v4043
  %v4045 = vadd.f32 %v4044, 1.0
  %v4046 = vrcp.pop %v4045
  %v4047 = vmul.f32 %v4045, %v4046
  %v4048 = vsub.f32 1.0, %v4047
  %v4049 = vmul.f32 %v4046, %v4048
  %v4050 = vadd.f32 %v4046, %v4049
  %vm4051 = vweird.f32 %v4045
  %vm4052 = vweird.f32 %v4046
  %vm4053 = vmor %vm4051, %vm4052
  %v4054 = vsel %vm4053, %v4046, %v4050
  %v4055 = vand.u32 2147483647, %v4045
  %vm4056 = vcmp.eq.f32.partialorder %v4055, 8.507059e+37
  %v4057 = vand.u32 %v4045, 2147483648
  %v4058 = vor.u32 1.1754944e-38, %v4057
  %v4059 = vsel %vm4056, %v4058, %v4054
  %v4060 = vmul.f32 1.0, %v4059
  %v4061 = vtanh.pop %v4041
  %v4063 = vrot.slane %v3869, 2
  %v4065 = vmul.f32 %v4060, %v4063
  %4067 = vrot.lane.b32.xlu0 %v4061, 64
  %v4068 = vpop.permute.xlu0 %4067
  %v4070 = vmul.f32 %v4060, %v4068
  %4072 = vrot.lane.b32.xlu0 %v4070, 32
  %v4073 = vpop.permute.xlu0 %4072
  %v4075 = vadd.f32 %v4065, %v4073
  %v4076 = vtanh.pop %v4075
  %4078 = vrot.lane.b32.xlu0 %v4076, 64
  %v4079 = vpop.permute.xlu0 %4078
  %v4081 = vmul.f32 %v4060, %v4079
  %v4082 = vld [vmem:[%s21 + $0xc0] sm:$0xf]
  %v4083 = vld [vmem:[%s21 + $0xc4] sm:$0xf]
  %v4084 = vld [vmem:[%s21 + $0xc8] sm:$0xf]
  %v4085 = vld [vmem:[%s21 + $0xcc] sm:$0xf]
  %v4086 = vmax.f32 %v4017, 0.0
  %v4087 = vpack.c.bf16 %v4086, %v4086
  %v4089 = vrot.slane %v4087, 2
  %4090 = vrot.lane.b32.xlu0 %v4089, 32
  %v4091 = vpop.permute.xlu0 %4090
  %v4096 = vunpack.c.l.b16 %v4082
  %v4097 = vunpack.c.l.b16 %v4083
  %v4098 = vunpack.c.l.b16 %v4084
  %v4099 = vunpack.c.l.b16 %v4085
  %v4100 = vpack.c.b16 %v4097, %v4096
  %v4101 = vpack.c.b16 %v4099, %v4098
  %v4105 = vsel %vm2733, %v4091, 0
  %4107 = vmatpush.bf16.msra.mxu0 0
  %4108 = vmatpush.bf16.msra.mxu0 0
  %4109 = vmatpush.bf16.msra.mxu0 0
  %4110 = vmatpush.bf16.msra.mxu0 0
  %4111 = vmatpush.bf16.msra.mxu0 0
  %4112 = vmatpush.bf16.msra.mxu0 0
  %4113 = vmatpush.bf16.msra.mxu0 %v4101
  %4114 = vmatpush.bf16.msra.mxu0 %v4100
  %4115 = vmatmul.bf16.gmra.mxu0 %v4105
  %v4116 = vpop.f32.mrf.mxu0
  %v4117 = vadd.f32 0.0, %v4116
  %v4118 = vpop.f32.mrf.mxu0
  %4119 = vdwg.mxu0
  %v4120 = vadd.f32 %v3952, %v4117
  %v4121 = vld [vmem:[%s21 + $0x70] sm:$0xf]
  %v4122 = vld [vmem:[%s21 + $0x74] sm:$0xf]
  %v4123 = vld [vmem:[%s21 + $0x78] sm:$0xf]
  %v4124 = vld [vmem:[%s21 + $0x7c] sm:$0xf]
  %v4125 = vmax.f32 %v4081, 0.0
  %v4126 = vpack.c.bf16 %v4125, %v4125
  %v4128 = vrot.slane %v4126, 3
  %4129 = vrot.lane.b32.xlu0 %v4128, 32
  %v4130 = vpop.permute.xlu0 %4129
  %v4135 = vunpack.c.l.b16 %v4121
  %v4136 = vunpack.c.l.b16 %v4122
  %v4137 = vunpack.c.l.b16 %v4123
  %v4138 = vunpack.c.l.b16 %v4124
  %v4139 = vpack.c.b16 %v4136, %v4135
  %v4140 = vpack.c.b16 %v4138, %v4137
  %v4144 = vsel %vm2733, %v4130, 0
  %4146 = vmatpush.bf16.msra.mxu0 0
  %4147 = vmatpush.bf16.msra.mxu0 0
  %4148 = vmatpush.bf16.msra.mxu0 0
  %4149 = vmatpush.bf16.msra.mxu0 0
  %4150 = vmatpush.bf16.msra.mxu0 0
  %4151 = vmatpush.bf16.msra.mxu0 0
  %4152 = vmatpush.bf16.msra.mxu0 %v4140
  %4153 = vmatpush.bf16.msra.mxu0 %v4139
  %4154 = vmatmul.bf16.gmra.mxu0 %v4144
  %v4155 = vpop.f32.mrf.mxu0
  %v4156 = vadd.f32 0.0, %v4155
  %v4157 = vpop.f32.mrf.mxu0
  %4158 = vdwg.mxu0
  %v4159 = vadd.f32 %v4120, %v4156
  %v4160 = vpack.c.bf16 %v4017, %v4017
  %v4162 = vrot.slane %v4160, 2
  %4163 = vrot.lane.b32.xlu0 %v4162, 32
  %v4164 = vpop.permute.xlu0 %4163
  %v4166 = vsel %vm2733, %v4164, 0
  %4168 = vmatpush.bf16.msra.mxu0 0
  %4169 = vmatpush.bf16.msra.mxu0 0
  %4170 = vmatpush.bf16.msra.mxu0 0
  %4171 = vmatpush.bf16.msra.mxu0 0
  %4172 = vmatpush.bf16.msra.mxu0 0
  %4173 = vmatpush.bf16.msra.mxu0 0
  %4174 = vmatpush.bf16.msra.mxu0 %v2730
  %4175 = vmatpush.bf16.msra.mxu0 %v2729
  %4176 = vmatmul.bf16.gmra.mxu0 %v4166
  %v4177 = vpop.f32.mrf.mxu0
  %v4178 = vadd.f32 0.0, %v4177
  %v4179 = vpop.f32.mrf.mxu0
  %4180 = vdwg.mxu0
  %v4182 = vrot.slane %v4178, 2
  %v4184 = vadd.f32 %v2604, %v4182
  %v4185 = vxor.u32 %v4184, 2147483648
  %v4186 = vmul.f32 %v4185, 1.442695
  %v4187 = vpow.pop %v4186
  %v4188 = vadd.f32 %v4187, 1.0
  %v4189 = vrcp.pop %v4188
  %v4190 = vmul.f32 %v4188, %v4189
  %v4191 = vsub.f32 1.0, %v4190
  %v4192 = vmul.f32 %v4189, %v4191
  %v4193 = vadd.f32 %v4189, %v4192
  %vm4194 = vweird.f32 %v4188
  %vm4195 = vweird.f32 %v4189
  %vm4196 = vmor %vm4194, %vm4195
  %v4197 = vsel %vm4196, %v4189, %v4193
  %v4198 = vand.u32 2147483647, %v4188
  %vm4199 = vcmp.eq.f32.partialorder %v4198, 8.507059e+37
  %v4200 = vand.u32 %v4188, 2147483648
  %v4201 = vor.u32 1.1754944e-38, %v4200
  %v4202 = vsel %vm4199, %v4201, %v4197
  %v4203 = vmul.f32 1.0, %v4202
  %v4204 = vtanh.pop %v4184
  %v4206 = vrot.slane %v4011, 6
  %v4208 = vmul.f32 %v4203, %v4206
  %4210 = vrot.lane.b32.xlu0 %v4204, 64
  %v4211 = vpop.permute.xlu0 %4210
  %v4213 = vmul.f32 %v4203, %v4211
  %4215 = vrot.lane.b32.xlu0 %v4213, 32
  %v4216 = vpop.permute.xlu0 %4215
  %v4218 = vadd.f32 %v4208, %v4216
  %v4219 = vtanh.pop %v4218
  %4221 = vrot.lane.b32.xlu0 %v4219, 64
  %v4222 = vpop.permute.xlu0 %4221
  %v4224 = vmul.f32 %v4203, %v4222
  %v4225 = vpack.c.bf16 %v4081, %v4081
  %v4227 = vrot.slane %v4225, 3
  %4228 = vrot.lane.b32.xlu0 %v4227, 32
  %v4229 = vpop.permute.xlu0 %4228
  %v4231 = vsel %vm2733, %v4229, 0
  %4233 = vmatpush.bf16.msra.mxu0 0
  %4234 = vmatpush.bf16.msra.mxu0 0
  %4235 = vmatpush.bf16.msra.mxu0 0
  %4236 = vmatpush.bf16.msra.mxu0 0
  %4237 = vmatpush.bf16.msra.mxu0 0
  %4238 = vmatpush.bf16.msra.mxu0 0
  %4239 = vmatpush.bf16.msra.mxu0 %v2796
  %4240 = vmatpush.bf16.msra.mxu0 %v2795
  %4241 = vmatmul.bf16.gmra.mxu0 %v4231
  %v4242 = vpop.f32.mrf.mxu0
  %v4243 = vadd.f32 0.0, %v4242
  %v4244 = vpop.f32.mrf.mxu0
  %4245 = vdwg.mxu0
  %v4247 = vrot.slane %v4243, 4
  %v4249 = vadd.f32 %v2710, %v4247
  %v4250 = vxor.u32 %v4249, 2147483648
  %v4251 = vmul.f32 %v4250, 1.442695
  %v4252 = vpow.pop %v4251
  %v4253 = vadd.f32 %v4252, 1.0
  %v4254 = vrcp.pop %v4253
  %v4255 = vmul.f32 %v4253, %v4254
  %v4256 = vsub.f32 1.0, %v4255
  %v4257 = vmul.f32 %v4254, %v4256
  %v4258 = vadd.f32 %v4254, %v4257
  %vm4259 = vweird.f32 %v4253
  %vm4260 = vweird.f32 %v4254
  %vm4261 = vmor %vm4259, %vm4260
  %v4262 = vsel %vm4261, %v4254, %v4258
  %v4263 = vand.u32 2147483647, %v4253
  %vm4264 = vcmp.eq.f32.partialorder %v4263, 8.507059e+37
  %v4265 = vand.u32 %v4253, 2147483648
  %v4266 = vor.u32 1.1754944e-38, %v4265
  %v4267 = vsel %vm4264, %v4266, %v4262
  %v4268 = vmul.f32 1.0, %v4267
  %v4269 = vtanh.pop %v4249
  %v4271 = vrot.slane %v4075, 2
  %v4273 = vmul.f32 %v4268, %v4271
  %4275 = vrot.lane.b32.xlu0 %v4269, 64
  %v4276 = vpop.permute.xlu0 %4275
  %v4278 = vmul.f32 %v4268, %v4276
  %4280 = vrot.lane.b32.xlu0 %v4278, 32
  %v4281 = vpop.permute.xlu0 %4280
  %v4283 = vadd.f32 %v4273, %v4281
  %v4284 = vtanh.pop %v4283
  %4286 = vrot.lane.b32.xlu0 %v4284, 64
  %v4287 = vpop.permute.xlu0 %4286
  %v4289 = vmul.f32 %v4268, %v4287
  %v4290 = vld [vmem:[%s21 + $0xe0] sm:$0xf]
  %v4291 = vld [vmem:[%s21 + $0xe4] sm:$0xf]
  %v4292 = vld [vmem:[%s21 + $0xe8] sm:$0xf]
  %v4293 = vld [vmem:[%s21 + $0xec] sm:$0xf]
  %v4294 = vmax.f32 %v4224, 0.0
  %v4295 = vpack.c.bf16 %v4294, %v4294
  %v4297 = vrot.slane %v4295, 3
  %4298 = vrot.lane.b32.xlu0 %v4297, 32
  %v4299 = vpop.permute.xlu0 %4298
  %v4304 = vunpack.c.l.b16 %v4290
  %v4305 = vunpack.c.l.b16 %v4291
  %v4306 = vunpack.c.l.b16 %v4292
  %v4307 = vunpack.c.l.b16 %v4293
  %v4308 = vpack.c.b16 %v4305, %v4304
  %v4309 = vpack.c.b16 %v4307, %v4306
  %v4313 = vsel %vm2733, %v4299, 0
  %4315 = vmatpush.bf16.msra.mxu0 0
  %4316 = vmatpush.bf16.msra.mxu0 0
  %4317 = vmatpush.bf16.msra.mxu0 0
  %4318 = vmatpush.bf16.msra.mxu0 0
  %4319 = vmatpush.bf16.msra.mxu0 0
  %4320 = vmatpush.bf16.msra.mxu0 0
  %4321 = vmatpush.bf16.msra.mxu0 %v4309
  %4322 = vmatpush.bf16.msra.mxu0 %v4308
  %4323 = vmatmul.bf16.gmra.mxu0 %v4313
  %v4324 = vpop.f32.mrf.mxu0
  %v4325 = vadd.f32 0.0, %v4324
  %v4326 = vpop.f32.mrf.mxu0
  %4327 = vdwg.mxu0
  %v4328 = vadd.f32 %v4159, %v4325
  %v4329 = vld [vmem:[%s21 + $0x50] sm:$0xf]
  %v4330 = vld [vmem:[%s21 + $0x54] sm:$0xf]
  %v4331 = vld [vmem:[%s21 + $0x58] sm:$0xf]
  %v4332 = vld [vmem:[%s21 + $0x5c] sm:$0xf]
  %v4333 = vmax.f32 %v4289, 0.0
  %v4334 = vpack.c.bf16 %v4333, %v4333
  %v4336 = vrot.slane %v4334, 2
  %4337 = vrot.lane.b32.xlu0 %v4336, 32
  %v4338 = vpop.permute.xlu0 %4337
  %v4343 = vunpack.c.l.b16 %v4329
  %v4344 = vunpack.c.l.b16 %v4330
  %v4345 = vunpack.c.l.b16 %v4331
  %v4346 = vunpack.c.l.b16 %v4332
  %v4347 = vpack.c.b16 %v4344, %v4343
  %v4348 = vpack.c.b16 %v4346, %v4345
  %v4352 = vsel %vm2733, %v4338, 0
  %4354 = vmatpush.bf16.msra.mxu0 0
  %4355 = vmatpush.bf16.msra.mxu0 0
  %4356 = vmatpush.bf16.msra.mxu0 0
  %4357 = vmatpush.bf16.msra.mxu0 0
  %4358 = vmatpush.bf16.msra.mxu0 0
  %4359 = vmatpush.bf16.msra.mxu0 0
  %4360 = vmatpush.bf16.msra.mxu0 %v4348
  %4361 = vmatpush.bf16.msra.mxu0 %v4347
  %4362 = vmatmul.bf16.gmra.mxu0 %v4352
  %v4363 = vpop.f32.mrf.mxu0
  %v4364 = vadd.f32 0.0, %v4363
  %v4365 = vpop.f32.mrf.mxu0
  %4366 = vdwg.mxu0
  %v4367 = vadd.f32 %v4328, %v4364
  %v4368 = vpack.c.bf16 %v4224, %v4224
  %v4370 = vrot.slane %v4368, 3
  %4371 = vrot.lane.b32.xlu0 %v4370, 32
  %v4372 = vpop.permute.xlu0 %4371
  %v4374 = vsel %vm2733, %v4372, 0
  %4376 = vmatpush.bf16.msra.mxu0 0
  %4377 = vmatpush.bf16.msra.mxu0 0
  %4378 = vmatpush.bf16.msra.mxu0 0
  %4379 = vmatpush.bf16.msra.mxu0 0
  %4380 = vmatpush.bf16.msra.mxu0 0
  %4381 = vmatpush.bf16.msra.mxu0 0
  %4382 = vmatpush.bf16.msra.mxu0 %v2730
  %4383 = vmatpush.bf16.msra.mxu0 %v2729
  %4384 = vmatmul.bf16.gmra.mxu0 %v4374
  %v4385 = vpop.f32.mrf.mxu0
  %v4386 = vadd.f32 0.0, %v4385
  %v4387 = vpop.f32.mrf.mxu0
  %4388 = vdwg.mxu0
  %v4389 = vadd.f32 %v2605, %v4386
  %v4390 = vxor.u32 %v4389, 2147483648
  %v4391 = vmul.f32 %v4390, 1.442695
  %v4392 = vpow.pop %v4391
  %v4393 = vadd.f32 %v4392, 1.0
  %v4394 = vrcp.pop %v4393
  %v4395 = vmul.f32 %v4393, %v4394
  %v4396 = vsub.f32 1.0, %v4395
  %v4397 = vmul.f32 %v4394, %v4396
  %v4398 = vadd.f32 %v4394, %v4397
  %vm4399 = vweird.f32 %v4393
  %vm4400 = vweird.f32 %v4394
  %vm4401 = vmor %vm4399, %vm4400
  %v4402 = vsel %vm4401, %v4394, %v4398
  %v4403 = vand.u32 2147483647, %v4393
  %vm4404 = vcmp.eq.f32.partialorder %v4403, 8.507059e+37
  %v4405 = vand.u32 %v4393, 2147483648
  %v4406 = vor.u32 1.1754944e-38, %v4405
  %v4407 = vsel %vm4404, %v4406, %v4402
  %v4408 = vmul.f32 1.0, %v4407
  %v4409 = vtanh.pop %v4389
  %v4411 = vrot.slane %v4218, 6
  %v4413 = vmul.f32 %v4408, %v4411
  %4415 = vrot.lane.b32.xlu0 %v4409, 64
  %v4416 = vpop.permute.xlu0 %4415
  %v4418 = vmul.f32 %v4408, %v4416
  %4420 = vrot.lane.b32.xlu0 %v4418, 32
  %v4421 = vpop.permute.xlu0 %4420
  %v4423 = vadd.f32 %v4413, %v4421
  %v4424 = vtanh.pop %v4423
  %4426 = vrot.lane.b32.xlu0 %v4424, 64
  %v4427 = vpop.permute.xlu0 %4426
  %v4429 = vmul.f32 %v4408, %v4427
  %v4430 = vpack.c.bf16 %v4289, %v4289
  %v4432 = vrot.slane %v4430, 2
  %4433 = vrot.lane.b32.xlu0 %v4432, 32
  %v4434 = vpop.permute.xlu0 %4433
  %v4436 = vsel %vm2733, %v4434, 0
  %4438 = vmatpush.bf16.msra.mxu0 0
  %4439 = vmatpush.bf16.msra.mxu0 0
  %4440 = vmatpush.bf16.msra.mxu0 0
  %4441 = vmatpush.bf16.msra.mxu0 0
  %4442 = vmatpush.bf16.msra.mxu0 0
  %4443 = vmatpush.bf16.msra.mxu0 0
  %4444 = vmatpush.bf16.msra.mxu0 %v2796
  %4445 = vmatpush.bf16.msra.mxu0 %v2795
  %4446 = vmatmul.bf16.gmra.mxu0 %v4436
  %v4447 = vpop.f32.mrf.mxu0
  %v4448 = vadd.f32 0.0, %v4447
  %v4449 = vpop.f32.mrf.mxu0
  %4450 = vdwg.mxu0
  %v4452 = vrot.slane %v4448, 6
  %v4454 = vadd.f32 %v2710, %v4452
  %v4455 = vxor.u32 %v4454, 2147483648
  %v4456 = vmul.f32 %v4455, 1.442695
  %v4457 = vpow.pop %v4456
  %v4458 = vadd.f32 %v4457, 1.0
  %v4459 = vrcp.pop %v4458
  %v4460 = vmul.f32 %v4458, %v4459
  %v4461 = vsub.f32 1.0, %v4460
  %v4462 = vmul.f32 %v4459, %v4461
  %v4463 = vadd.f32 %v4459, %v4462
  %vm4464 = vweird.f32 %v4458
  %vm4465 = vweird.f32 %v4459
  %vm4466 = vmor %vm4464, %vm4465
  %v4467 = vsel %vm4466, %v4459, %v4463
  %v4468 = vand.u32 2147483647, %v4458
  %vm4469 = vcmp.eq.f32.partialorder %v4468, 8.507059e+37
  %v4470 = vand.u32 %v4458, 2147483648
  %v4471 = vor.u32 1.1754944e-38, %v4470
  %v4472 = vsel %vm4469, %v4471, %v4467
  %v4473 = vmul.f32 1.0, %v4472
  %v4474 = vtanh.pop %v4454
  %v4476 = vrot.slane %v4283, 2
  %v4478 = vmul.f32 %v4473, %v4476
  %4480 = vrot.lane.b32.xlu0 %v4474, 64
  %v4481 = vpop.permute.xlu0 %4480
  %v4483 = vmul.f32 %v4473, %v4481
  %4485 = vrot.lane.b32.xlu0 %v4483, 32
  %v4486 = vpop.permute.xlu0 %4485
  %v4488 = vadd.f32 %v4478, %v4486
  %v4489 = vtanh.pop %v4488
  %4491 = vrot.lane.b32.xlu0 %v4489, 64
  %v4492 = vpop.permute.xlu0 %4491
  %v4494 = vmul.f32 %v4473, %v4492
  %v4495 = vld [vmem:[%s21 + $0x100] sm:$0xf]
  %v4496 = vld [vmem:[%s21 + $0x104] sm:$0xf]
  %v4497 = vld [vmem:[%s21 + $0x108] sm:$0xf]
  %v4498 = vld [vmem:[%s21 + $0x10c] sm:$0xf]
  %v4499 = vmax.f32 %v4429, 0.0
  %v4500 = vpack.c.bf16 %v4499, %v4499
  %4502 = vrot.lane.b32.xlu0 %v4500, 32
  %v4503 = vpop.permute.xlu0 %4502
  %v4508 = vunpack.c.l.b16 %v4495
  %v4509 = vunpack.c.l.b16 %v4496
  %v4510 = vunpack.c.l.b16 %v4497
  %v4511 = vunpack.c.l.b16 %v4498
  %v4512 = vpack.c.b16 %v4509, %v4508
  %v4513 = vpack.c.b16 %v4511, %v4510
  %v4517 = vsel %vm2733, %v4503, 0
  %4519 = vmatpush.bf16.msra.mxu0 0
  %4520 = vmatpush.bf16.msra.mxu0 0
  %4521 = vmatpush.bf16.msra.mxu0 0
  %4522 = vmatpush.bf16.msra.mxu0 0
  %4523 = vmatpush.bf16.msra.mxu0 0
  %4524 = vmatpush.bf16.msra.mxu0 0
  %4525 = vmatpush.bf16.msra.mxu0 %v4513
  %4526 = vmatpush.bf16.msra.mxu0 %v4512
  %4527 = vmatmul.bf16.gmra.mxu0 %v4517
  %v4528 = vpop.f32.mrf.mxu0
  %v4529 = vadd.f32 0.0, %v4528
  %v4530 = vpop.f32.mrf.mxu0
  %4531 = vdwg.mxu0
  %v4532 = vadd.f32 %v4367, %v4529
  %v4533 = vld [vmem:[%s21 + $0x30] sm:$0xf]
  %v4534 = vld [vmem:[%s21 + $0x34] sm:$0xf]
  %v4535 = vld [vmem:[%s21 + $0x38] sm:$0xf]
  %v4536 = vld [vmem:[%s21 + $0x3c] sm:$0xf]
  %v4537 = vmax.f32 %v4494, 0.0
  %v4538 = vpack.c.bf16 %v4537, %v4537
  %v4540 = vrot.slane %v4538, 1
  %4541 = vrot.lane.b32.xlu0 %v4540, 32
  %v4542 = vpop.permute.xlu0 %4541
  %v4547 = vunpack.c.l.b16 %v4533
  %v4548 = vunpack.c.l.b16 %v4534
  %v4549 = vunpack.c.l.b16 %v4535
  %v4550 = vunpack.c.l.b16 %v4536
  %v4551 = vpack.c.b16 %v4548, %v4547
  %v4552 = vpack.c.b16 %v4550, %v4549
  %v4556 = vsel %vm2733, %v4542, 0
  %4558 = vmatpush.bf16.msra.mxu0 0
  %4559 = vmatpush.bf16.msra.mxu0 0
  %4560 = vmatpush.bf16.msra.mxu0 0
  %4561 = vmatpush.bf16.msra.mxu0 0
  %4562 = vmatpush.bf16.msra.mxu0 0
  %4563 = vmatpush.bf16.msra.mxu0 0
  %4564 = vmatpush.bf16.msra.mxu0 %v4552
  %4565 = vmatpush.bf16.msra.mxu0 %v4551
  %4566 = vmatmul.bf16.gmra.mxu0 %v4556
  %v4567 = vpop.f32.mrf.mxu0
  %v4568 = vadd.f32 0.0, %v4567
  %v4569 = vpop.f32.mrf.mxu0
  %4570 = vdwg.mxu0
  %v4571 = vadd.f32 %v4532, %v4568
  %v4572 = vpack.c.bf16 %v4429, %v4429
  %4574 = vrot.lane.b32.xlu0 %v4572, 32
  %v4575 = vpop.permute.xlu0 %4574
  %v4577 = vsel %vm2733, %v4575, 0
  %4579 = vmatpush.bf16.msra.mxu0 0
  %4580 = vmatpush.bf16.msra.mxu0 0
  %4581 = vmatpush.bf16.msra.mxu0 0
  %4582 = vmatpush.bf16.msra.mxu0 0
  %4583 = vmatpush.bf16.msra.mxu0 0
  %4584 = vmatpush.bf16.msra.mxu0 0
  %4585 = vmatpush.bf16.msra.mxu0 %v2730
  %4586 = vmatpush.bf16.msra.mxu0 %v2729
  %4587 = vmatmul.bf16.gmra.mxu0 %v4577
  %v4588 = vpop.f32.mrf.mxu0
  %v4589 = vadd.f32 0.0, %v4588
  %v4590 = vpop.f32.mrf.mxu0
  %4591 = vdwg.mxu0
  %v4593 = vrot.slane %v4589, 6
  %v4595 = vadd.f32 %v2605, %v4593
  %v4596 = vxor.u32 %v4595, 2147483648
  %v4597 = vmul.f32 %v4596, 1.442695
  %v4598 = vpow.pop %v4597
  %v4599 = vadd.f32 %v4598, 1.0
  %v4600 = vrcp.pop %v4599
  %v4601 = vmul.f32 %v4599, %v4600
  %v4602 = vsub.f32 1.0, %v4601
  %v4603 = vmul.f32 %v4600, %v4602
  %v4604 = vadd.f32 %v4600, %v4603
  %vm4605 = vweird.f32 %v4599
  %vm4606 = vweird.f32 %v4600
  %vm4607 = vmor %vm4605, %vm4606
  %v4608 = vsel %vm4607, %v4600, %v4604
  %v4609 = vand.u32 2147483647, %v4599
  %vm4610 = vcmp.eq.f32.partialorder %v4609, 8.507059e+37
  %v4611 = vand.u32 %v4599, 2147483648
  %v4612 = vor.u32 1.1754944e-38, %v4611
  %v4613 = vsel %vm4610, %v4612, %v4608
  %v4614 = vmul.f32 1.0, %v4613
  %v4615 = vtanh.pop %v4595
  %v4617 = vrot.slane %v4423, 6
  %v4619 = vmul.f32 %v4614, %v4617
  %4621 = vrot.lane.b32.xlu0 %v4615, 64
  %v4622 = vpop.permute.xlu0 %4621
  %v4624 = vmul.f32 %v4614, %v4622
  %4626 = vrot.lane.b32.xlu0 %v4624, 32
  %v4627 = vpop.permute.xlu0 %4626
  %v4629 = vadd.f32 %v4619, %v4627
  %v4630 = vtanh.pop %v4629
  %4632 = vrot.lane.b32.xlu0 %v4630, 64
  %v4633 = vpop.permute.xlu0 %4632
  %v4635 = vmul.f32 %v4614, %v4633
  %v4636 = vpack.c.bf16 %v4494, %v4494
  %v4638 = vrot.slane %v4636, 1
  %4639 = vrot.lane.b32.xlu0 %v4638, 32
  %v4640 = vpop.permute.xlu0 %4639
  %v4642 = vsel %vm2733, %v4640, 0
  %4644 = vmatpush.bf16.msra.mxu0 0
  %4645 = vmatpush.bf16.msra.mxu0 0
  %4646 = vmatpush.bf16.msra.mxu0 0
  %4647 = vmatpush.bf16.msra.mxu0 0
  %4648 = vmatpush.bf16.msra.mxu0 0
  %4649 = vmatpush.bf16.msra.mxu0 0
  %4650 = vmatpush.bf16.msra.mxu0 %v2796
  %4651 = vmatpush.bf16.msra.mxu0 %v2795
  %4652 = vmatmul.bf16.gmra.mxu0 %v4642
  %v4653 = vpop.f32.mrf.mxu0
  %v4654 = vadd.f32 0.0, %v4653
  %v4655 = vpop.f32.mrf.mxu0
  %4656 = vdwg.mxu0
  %v4657 = vadd.f32 %v2710, %v4654
  %v4658 = vxor.u32 %v4657, 2147483648
  %v4659 = vmul.f32 %v4658, 1.442695
  %v4660 = vpow.pop %v4659
  %v4661 = vadd.f32 %v4660, 1.0
  %v4662 = vrcp.pop %v4661
  %v4663 = vmul.f32 %v4661, %v4662
  %v4664 = vsub.f32 1.0, %v4663
  %v4665 = vmul.f32 %v4662, %v4664
  %v4666 = vadd.f32 %v4662, %v4665
  %vm4667 = vweird.f32 %v4661
  %vm4668 = vweird.f32 %v4662
  %vm4669 = vmor %vm4667, %vm4668
  %v4670 = vsel %vm4669, %v4662, %v4666
  %v4671 = vand.u32 2147483647, %v4661
  %vm4672 = vcmp.eq.f32.partialorder %v4671, 8.507059e+37
  %v4673 = vand.u32 %v4661, 2147483648
  %v4674 = vor.u32 1.1754944e-38, %v4673
  %v4675 = vsel %vm4672, %v4674, %v4670
  %v4676 = vmul.f32 1.0, %v4675
  %v4677 = vtanh.pop %v4657
  %v4679 = vrot.slane %v4488, 2
  %v4681 = vmul.f32 %v4676, %v4679
  %4683 = vrot.lane.b32.xlu0 %v4677, 64
  %v4684 = vpop.permute.xlu0 %4683
  %v4686 = vmul.f32 %v4676, %v4684
  %4688 = vrot.lane.b32.xlu0 %v4686, 32
  %v4689 = vpop.permute.xlu0 %4688
  %v4691 = vadd.f32 %v4681, %v4689
  %v4692 = vtanh.pop %v4691
  %4694 = vrot.lane.b32.xlu0 %v4692, 64
  %v4695 = vpop.permute.xlu0 %4694
  %v4697 = vmul.f32 %v4676, %v4695
  %v4698 = vld [vmem:[%s21 + $0x120] sm:$0xf]
  %v4699 = vld [vmem:[%s21 + $0x124] sm:$0xf]
  %v4700 = vld [vmem:[%s21 + $0x128] sm:$0xf]
  %v4701 = vld [vmem:[%s21 + $0x12c] sm:$0xf]
  %v4702 = vmax.f32 %v4635, 0.0
  %v4703 = vpack.c.bf16 %v4702, %v4702
  %v4705 = vrot.slane %v4703, 1
  %4706 = vrot.lane.b32.xlu0 %v4705, 32
  %v4707 = vpop.permute.xlu0 %4706
  %v4712 = vunpack.c.l.b16 %v4698
  %v4713 = vunpack.c.l.b16 %v4699
  %v4714 = vunpack.c.l.b16 %v4700
  %v4715 = vunpack.c.l.b16 %v4701
  %v4716 = vpack.c.b16 %v4713, %v4712
  %v4717 = vpack.c.b16 %v4715, %v4714
  %v4721 = vsel %vm2733, %v4707, 0
  %4723 = vmatpush.bf16.msra.mxu0 0
  %4724 = vmatpush.bf16.msra.mxu0 0
  %4725 = vmatpush.bf16.msra.mxu0 0
  %4726 = vmatpush.bf16.msra.mxu0 0
  %4727 = vmatpush.bf16.msra.mxu0 0
  %4728 = vmatpush.bf16.msra.mxu0 0
  %4729 = vmatpush.bf16.msra.mxu0 %v4717
  %4730 = vmatpush.bf16.msra.mxu0 %v4716
  %4731 = vmatmul.bf16.gmra.mxu0 %v4721
  %v4732 = vpop.f32.mrf.mxu0
  %v4733 = vadd.f32 0.0, %v4732
  %v4734 = vpop.f32.mrf.mxu0
  %4735 = vdwg.mxu0
  %v4736 = vadd.f32 %v4571, %v4733
  %v4737 = vld [vmem:[%s21 + $0x10] sm:$0xf]
  %v4738 = vld [vmem:[%s21 + $0x14] sm:$0xf]
  %v4739 = vld [vmem:[%s21 + $0x18] sm:$0xf]
  %v4740 = vld [vmem:[%s21 + $0x1c] sm:$0xf]
  %v4741 = vmax.f32 %v4697, 0.0
  %v4742 = vpack.c.bf16 %v4741, %v4741
  %4744 = vrot.lane.b32.xlu0 %v4742, 32
  %v4745 = vpop.permute.xlu0 %4744
  %v4750 = vunpack.c.l.b16 %v4737
  %v4751 = vunpack.c.l.b16 %v4738
  %v4752 = vunpack.c.l.b16 %v4739
  %v4753 = vunpack.c.l.b16 %v4740
  %v4754 = vpack.c.b16 %v4751, %v4750
  %v4755 = vpack.c.b16 %v4753, %v4752
  %v4759 = vsel %vm2733, %v4745, 0
  %4761 = vmatpush.bf16.msra.mxu0 0
  %4762 = vmatpush.bf16.msra.mxu0 0
  %4763 = vmatpush.bf16.msra.mxu0 0
  %4764 = vmatpush.bf16.msra.mxu0 0
  %4765 = vmatpush.bf16.msra.mxu0 0
  %4766 = vmatpush.bf16.msra.mxu0 0
  %4767 = vmatpush.bf16.msra.mxu0 %v4755
  %4768 = vmatpush.bf16.msra.mxu0 %v4754
  %4769 = vmatmul.bf16.gmra.mxu0 %v4759
  %v4770 = vpop.f32.mrf.mxu0
  %v4771 = vadd.f32 0.0, %v4770
  %v4772 = vpop.f32.mrf.mxu0
  %4773 = vdwg.mxu0
  %v4774 = vadd.f32 %v4736, %v4771
  %v4775 = vld [vmem:[%s22] sm:$0x1]
  %v4777 = vperm.slane %v4775, 0
  %v4779 = vadd.f32 %v4774, %v4777
  %v4780 = vmax.f32 %v4779, 0.0
  %v4781 = vpack.c.bf16 %v4780, %v4780
  %v4782 = vld [vmem:[%s23] sm:$0xf]
  %v4783 = vld [vmem:[%s23 + $0x4] sm:$0xf]
  %v4784 = vld [vmem:[%s23 + $0x8] sm:$0xf]
  %v4785 = vld [vmem:[%s23 + $0xc] sm:$0xf]
  %v4786 = vld [vmem:[%s23 + $0x10] sm:$0xf]
  %v4787 = vld [vmem:[%s23 + $0x14] sm:$0xf]
  %v4788 = vld [vmem:[%s23 + $0x18] sm:$0xf]
  %v4789 = vld [vmem:[%s23 + $0x1c] sm:$0xf]
  %v4790 = vld [vmem:[%s23 + $0x20] sm:$0xf]
  %v4791 = vld [vmem:[%s23 + $0x24] sm:$0xf]
  %v4792 = vld [vmem:[%s23 + $0x28] sm:$0xf]
  %v4793 = vld [vmem:[%s23 + $0x2c] sm:$0xf]
  %v4794 = vld [vmem:[%s23 + $0x30] sm:$0xf]
  %v4795 = vld [vmem:[%s23 + $0x34] sm:$0xf]
  %v4796 = vld [vmem:[%s23 + $0x38] sm:$0xf]
  %v4797 = vld [vmem:[%s23 + $0x3c] sm:$0xf]
  %v4798 = vld [vmem:[%s24] sm:$0x1]
  %v4800 = vperm.slane %v4798, 0
  %v4818 = vunpack.c.l.b16 %v4782
  %v4819 = vunpack.c.l.b16 %v4783
  %v4820 = vunpack.c.l.b16 %v4784
  %v4821 = vunpack.c.l.b16 %v4785
  %v4822 = vunpack.c.l.b16 %v4786
  %v4823 = vunpack.c.l.b16 %v4787
  %v4824 = vunpack.c.l.b16 %v4788
  %v4825 = vunpack.c.l.b16 %v4789
  %v4826 = vunpack.c.l.b16 %v4790
  %v4827 = vunpack.c.l.b16 %v4791
  %v4828 = vunpack.c.l.b16 %v4792
  %v4829 = vunpack.c.l.b16 %v4793
  %v4830 = vunpack.c.l.b16 %v4794
  %v4831 = vunpack.c.l.b16 %v4795
  %v4832 = vunpack.c.l.b16 %v4796
  %v4833 = vunpack.c.l.b16 %v4797
  %v4834 = vpack.c.b16 %v4819, %v4818
  %v4835 = vpack.c.b16 %v4821, %v4820
  %v4836 = vpack.c.b16 %v4823, %v4822
  %v4837 = vpack.c.b16 %v4825, %v4824
  %v4838 = vpack.c.b16 %v4827, %v4826
  %v4839 = vpack.c.b16 %v4829, %v4828
  %v4840 = vpack.c.b16 %v4831, %v4830
  %v4841 = vpack.c.b16 %v4833, %v4832
  %4850 = vmatpush.bf16.msra.mxu0 %v4841
  %4851 = vmatpush.bf16.msra.mxu0 %v4840
  %4852 = vmatpush.bf16.msra.mxu0 %v4839
  %4853 = vmatpush.bf16.msra.mxu0 %v4838
  %4854 = vmatpush.bf16.msra.mxu0 %v4837
  %4855 = vmatpush.bf16.msra.mxu0 %v4836
  %4856 = vmatpush.bf16.msra.mxu0 %v4835
  %4857 = vmatpush.bf16.msra.mxu0 %v4834
  %4858 = vmatmul.bf16.gmra.mxu0 %v4781
  %v4859 = vpop.f32.mrf.mxu0
  %v4860 = vadd.f32 %v4800, %v4859
  %v4861 = vpop.f32.mrf.mxu0
  %4862 = vdwg.mxu0
  %v4863 = vmax.f32 %v4860, 0.0
  %v4864 = vld [vmem:[%s25] sm:$0x1]
  %v4866 = vperm.slane %v4864, 0
  %v4868 = vmul.f32 %v4863, %v4866
  %vm4869 = vcmask 254976
  %v4870 = vsel %vm4869, %v4868, 0.0
  %4871 = vadd.xlane.f32.xlu0 %v4870
  %v4872 = vpop.xlane.xlu0 %4871
  %v4873 = vld [vmem:[#allocation6] sm:$0x1]
  %v4875 = vperm.slane %v4873, 0
  %v4877 = vadd.f32 %v4872, %v4875
  %vm4878 = vcmask 1024
  %4879 = vst.msk [vmem:[%s27] sm:$0x3] %vm4878, %v4877
  // Predicated region
  $region110: #{cnn_bilstm_forward.1} parent=0 // pred_check
    _
  $region111: #{cnn_bilstm_forward.1} parent=0 // pred_check_branch
    %4881 = sbr.rel (0) target = $region113
  $region112: #{cnn_bilstm_forward.1} parent=0 // pred_region
    _
  $region113: #{cnn_bilstm_forward.1} parent=0 // pred_fallthru
    _
  // Predicated region
  $region114: #{cnn_bilstm_forward.1} parent=0 // pred_check
    _
  $region115: #{cnn_bilstm_forward.1} parent=0 // pred_check_branch
    %4883 = sbr.rel (0) target = $region117
  $region116: #{cnn_bilstm_forward.1} parent=0 // pred_region
    _
  $region117: #{cnn_bilstm_forward.1} parent=0 // pred_fallthru
    _

</llo_original>
